<compile_context>
chip_gen: v6e
topology: v6e:2x2x1
jax: 0.10.0
libtpu: 0.0.40
codegen_flags: <defaults>
</compile_context>

<pallas_src>
import numpy as np

import jax
import jax.numpy as jnp
from jax import lax
from jax.experimental import pallas as pl
from jax.experimental.pallas import tpu as pltpu

# ---------------- model hyper-parameters (CAM_NFDecoder constructor args) ----------------
MOTION_FEATURES = 32        # motion_features (encoder / LSTM hidden)
RNN_LAYERS = 1
VELOCITY_CONST = 0.5
FEEDBACK_FEATURES = 32      # dynamic GRU hidden size
FEEDBACK_LENGTH = 6         # GRU input = feedback_length * 2
LC_MLP_FEATURES = (32, 32)
DECODER_MLP_FEATURES = (32, 32)
ATT_HEADS = 1

# ---- packed-operand layout constants ----
# w32 blob (224, 32): row offsets
_W32_ATT_OUT = 0
_W32_LC0 = 32
_W32_LC1 = 64
_W32_DEC1_LC = 96
_W32_DEC1_DYN = 128
_W32_DEC2 = 160
_W32_DEC3 = 192
# b32 blob (8, 32): row indices
_B32_LN_G, _B32_LN_B, _B32_ATT_OUT, _B32_LC0, _B32_LC1, _B32_DEC1, _B32_DEC2, _B32_DEC3 = range(8)
# b96 blob (3, 96): row indices
_B96_QKV, _B96_GRU_IH, _B96_GRU_HH = range(3)
# GRU block-diagonal packing: LHS = [window(2F) | pad(4) | h(HG)] -> K = 48
#   RHS (48, 224): rows 0:2F -> cols 0:96 = W_ih ; rows 16:48 -> cols 128:224 = W_hh
_GRU_HH_ROW = 2 * FEEDBACK_LENGTH + 4     # 16 (8-aligned row start of the Whh block)
_GRU_K = _GRU_HH_ROW + FEEDBACK_FEATURES  # 48
_GRU_GH_COL = 128                         # vreg-aligned lane start of the gh block


# ---------------- in-kernel helpers (elementwise only) ----------------
def _softplus(x):
    # matches torch.nn.Softplus(beta=1, threshold=20)
    return jnp.where(x > 20.0, x, jnp.log(1.0 + jnp.exp(jnp.minimum(x, 20.0))))


def _sigmoid(x):
    # tanh-based sigmoid: keeps the gate nonlinearity on the EUP, no VPU divide.
    return 0.5 * (jnp.tanh(0.5 * x) + 1.0)


def _expm2x2(a, b, c, d):
    """expm of [[a,b],[c,d]] columnwise.  Write sigma_hat = tau*I + Nmat with Nmat^2 = delta*I;
    expm = e^tau * (C(delta) I + S(delta) Nmat) where C(x)=cosh(sqrt x), S(x)=sinh(sqrt x)/sqrt x
    are entire (covers the oscillatory delta<0 case).  5-term Taylor on delta/4^6 followed by
    6 double-angle steps + one EUP exp.  Accurate for moderate |delta| (trained sigma_hat)."""
    tau = 0.5 * (a + d)
    hd = 0.5 * (a - d)
    delta = hd * hd + b * c
    xs = delta * (1.0 / 4096.0)
    C = 1.0 + xs * (1.0 / 2.0 + xs * (1.0 / 24.0 + xs * (1.0 / 720.0 + xs * (1.0 / 40320.0))))
    S = 1.0 + xs * (1.0 / 6.0 + xs * (1.0 / 120.0 + xs * (1.0 / 5040.0 + xs * (1.0 / 362880.0))))
    for _ in range(6):            # C(4d) = 2C(d)^2 - 1 ; S(4d) = S(d) * C(d)
        S = S * C
        C = 2.0 * C * C - 1.0
    et = jnp.exp(tau)
    return et * (C + S * hd), et * (S * b), et * (S * c), et * (C - S * hd)


# ================= the single fused kernel =================
def _fused_kernel(gih_ref, len_ref, mask_ref, rowmap_ref, pv_ref, z_ref,
                  whh_ref, wqkv_ref, gruw_ref, w32_ref, b32_ref, b96_ref,
                  enc_ref, out_ref):
    T_past, A, _ = gih_ref.shape
    D = MOTION_FEATURES
    HG = FEEDBACK_FEATURES
    F = FEEDBACK_LENGTH
    N, ZW = z_ref.shape
    T_dec = ZW // 2
    DH = D // ATT_HEADS
    scale = 1.0 / float(np.sqrt(DH))

    # ---------- phase 1: encoder LSTM over past steps (fully unrolled) ----------
    # Input-side gates (x @ Wih + b) were hoisted to one batched XLA matmul in the wrapper,
    # so only h @ Whh remains on the serial chain.
    lens = len_ref[...]                                                   # (A, 1) int32
    h = jnp.zeros((A, D), jnp.float32)
    c = jnp.zeros((A, D), jnp.float32)
    h_last = jnp.zeros((A, D), jnp.float32)
    for t in range(T_past):
        gates = gih_ref[t] + jnp.dot(h, whh_ref[...],
                                     preferred_element_type=jnp.float32)  # (A, 4D)
        i = _sigmoid(gates[:, 0 * D:1 * D])
        f = _sigmoid(gates[:, 1 * D:2 * D])
        g = jnp.tanh(gates[:, 2 * D:3 * D])
        o = _sigmoid(gates[:, 3 * D:4 * D])
        c = f * c + i * g
        h = o * jnp.tanh(c)
        # packed-sequence equivalent: keep the hidden at each agent's last valid step
        # (assumes 1 <= past_traj_len <= T_past)
        h_last = jnp.where(lens == (t + 1), h, h_last)

    # ---------- phase 2: LayerNorm + masked cross-agent attention + residual + lc MLP ----------
    b32 = b32_ref[...]                                                    # (8, 32)
    x = h_last
    mu_ln = jnp.mean(x, axis=-1, keepdims=True)
    var = jnp.mean((x - mu_ln) ** 2, axis=-1, keepdims=True)
    xn = ((x - mu_ln) / jnp.sqrt(var + 1e-6) * b32[_B32_LN_G:_B32_LN_G + 1, :]
          + b32[_B32_LN_B:_B32_LN_B + 1, :])
    # fused q|k|v projection: one (A,32)@(32,96) matmul
    qkv = (jnp.dot(xn, wqkv_ref[...], preferred_element_type=jnp.float32)
           + b96_ref[_B96_QKV:_B96_QKV + 1, :])                           # (A, 96)
    q = qkv[:, 0:DH]
    k = qkv[:, DH:2 * DH]
    v = qkv[:, 2 * DH:3 * DH]
    scores = lax.dot_general(q, k, (((1,), (1,)), ((), ())),
                             preferred_element_type=jnp.float32) * scale  # (A, A)
    scores = jnp.where(mask_ref[...] > 0.5, scores, -1e30)
    smax = jnp.max(scores, axis=-1, keepdims=True)
    ex = jnp.exp(scores - smax)
    attn = ex / jnp.sum(ex, axis=-1, keepdims=True)
    att = jnp.dot(attn, v, preferred_element_type=jnp.float32)
    att_out = (jnp.dot(att, w32_ref[_W32_ATT_OUT:_W32_ATT_OUT + D, :],
                       preferred_element_type=jnp.float32)
               + b32[_B32_ATT_OUT:_B32_ATT_OUT + 1, :])
    enc = x + att_out                                                     # residual
    enc_ref[...] = enc

    # local-context MLP (Linear+Softplus x2) + hoisted flow-decoder lc projection (W1_lc, b1)
    h1 = _softplus(jnp.dot(enc, w32_ref[_W32_LC0:_W32_LC0 + D, :],
                           preferred_element_type=jnp.float32) + b32[_B32_LC0:_B32_LC0 + 1, :])
    h2 = _softplus(jnp.dot(h1, w32_ref[_W32_LC1:_W32_LC1 + D, :],
                           preferred_element_type=jnp.float32) + b32[_B32_LC1:_B32_LC1 + 1, :])
    lc_proj_a = (jnp.dot(h2, w32_ref[_W32_DEC1_LC:_W32_DEC1_LC + D, :],
                         preferred_element_type=jnp.float32)
                 + b32[_B32_DEC1:_B32_DEC1 + 1, :])                       # (A, 32)

    # static pred-mask selection + repeat_interleave(candidates) as one one-hot matmul
    rowmap = rowmap_ref[...]                                              # (N, A) one-hot rows
    lc_proj = jnp.dot(rowmap, lc_proj_a, preferred_element_type=jnp.float32)   # (N, 32)
    pv = jnp.dot(rowmap, pv_ref[...], preferred_element_type=jnp.float32)      # (N, 4)
    x_prev = pv[:, 0:2]
    dx = pv[:, 2:4]

    # ---------- phase 3: autoregressive NF decoder (fully unrolled) ----------
    b_ih = b96_ref[_B96_GRU_IH:_B96_GRU_IH + 1, :]                        # (1, 96)
    b_hh = b96_ref[_B96_GRU_HH:_B96_GRU_HH + 1, :]                        # (1, 96)
    dw1 = w32_ref[_W32_DEC1_DYN:_W32_DEC1_DYN + HG, :]
    dw2 = w32_ref[_W32_DEC2:_W32_DEC2 + 32, :]
    dw3 = w32_ref[_W32_DEC3:_W32_DEC3 + 32, :]
    db2 = b32[_B32_DEC2:_B32_DEC2 + 1, :]
    db3 = b32[_B32_DEC3:_B32_DEC3 + 1, :]
    zf = z_ref[...]                                                       # (N, 2*T_dec)

    hg = jnp.zeros((N, HG), jnp.float32)
    zero2 = jnp.zeros((N, 2), jnp.float32)
    pad4 = jnp.zeros((N, _GRU_HH_ROW - 2 * F), jnp.float32)
    window = [zero2] * F                                                  # sliding feedback window

    for ts in range(T_dec):
        # state-feedback window (same index arithmetic as the PyTorch loop)
        if ts < F:
            window[ts] = x_prev
        else:
            window = window[1:] + [x_prev]

        # --- dynamics GRU cell: one block-diagonal matmul gives [gi | _ | gh] ---
        lhs = jnp.concatenate(window + [pad4, hg], axis=-1)               # (N, 48)
        gg = jnp.dot(lhs, gruw_ref[...], preferred_element_type=jnp.float32)   # (N, 224)
        gi = gg[:, 0:3 * HG] + b_ih
        gh = gg[:, _GRU_GH_COL:_GRU_GH_COL + 3 * HG] + b_hh
        r = _sigmoid(gi[:, 0:HG] + gh[:, 0:HG])
        zt = _sigmoid(gi[:, HG:2 * HG] + gh[:, HG:2 * HG])
        n = jnp.tanh(gi[:, 2 * HG:3 * HG] + r * gh[:, 2 * HG:3 * HG])
        hg = (1.0 - zt) * n + zt * hg

        # --- DynamicDecoder MLP on cat([dynamics_encoding, local_context]) ---
        a1 = _softplus(jnp.dot(hg, dw1, preferred_element_type=jnp.float32) + lc_proj)
        a2 = _softplus(jnp.dot(a1, dw2, preferred_element_type=jnp.float32) + db2)
        res = jnp.dot(a2, dw3, preferred_element_type=jnp.float32) + db3  # (N, 32), cols 0..5 used

        mu = x_prev + VELOCITY_CONST * dx + res[:, 0:2]                   # Verlet wrapper
        s00, s01, s10, s11 = _expm2x2(res[:, 2:3], res[:, 3:4], res[:, 4:5], res[:, 5:6])

        # --- flow step: x = mu + sigma @ z ---
        z0 = zf[:, 2 * ts:2 * ts + 1]
        z1 = zf[:, 2 * ts + 1:2 * ts + 2]
        g0 = mu[:, 0:1] + s00 * z0 + s01 * z1
        g1 = mu[:, 1:2] + s10 * z0 + s11 * z1

        # direct static 8-lane slice store into the VMEM-resident packed output
        out_ref[:, 8 * ts:8 * ts + 8] = jnp.concatenate(
            [g0, g1, mu[:, 0:1], mu[:, 1:2], s00, s01, s10, s11], axis=-1)

        gen = jnp.concatenate([g0, g1], axis=-1)
        dx = gen - x_prev
        x_prev = gen


def cam_nf_call(gates_ih, lens, mask, rowmap, start_pv, z_flat, p):
    """One fused pallas_call, no grid: every operand is a whole-array VMEM-resident block."""
    T_past, A, _ = gates_ih.shape
    N, ZW = z_flat.shape
    T_dec = ZW // 2
    D = MOTION_FEATURES
    vmem = pl.BlockSpec(memory_space=pltpu.MemorySpace.VMEM)
    return pl.pallas_call(
        _fused_kernel,
        out_shape=(jax.ShapeDtypeStruct((A, D), jnp.float32),        # agent_encoding
                   jax.ShapeDtypeStruct((N, 8 * T_dec), jnp.float32)),  # packed [gen|mu|sigma]
        in_specs=[vmem] * 12,
        out_specs=(vmem, vmem),
    )(gates_ih, lens, mask, rowmap, start_pv, z_flat,
      p["lstm_whh"], p["att_wqkv"], p["gru_w"], p["w32"], p["b32"], p["b96"])


# ================= glue: parameters, mask, full forward =================
def init_params(key):
    D = MOTION_FEATURES
    HG = FEEDBACK_FEATURES
    DLC = LC_MLP_FEATURES[-1]
    M1, M2 = DECODER_MLP_FEATURES
    F2 = 2 * FEEDBACK_LENGTH
    keys = list(jax.random.split(key, 20))

    def lin(k, fi, fo):
        k1, k2 = jax.random.split(k)
        bd = 1.0 / np.sqrt(fi)
        return (jax.random.uniform(k1, (fi, fo), jnp.float32, -bd, bd),
                jax.random.uniform(k2, (1, fo), jnp.float32, -bd, bd))

    p = {}
    # trajectory embedding + encoder LSTM (ih/hh biases folded into one)
    p["emb_w"], p["emb_b"] = lin(keys[0], 2, D)
    bd = 1.0 / np.sqrt(D)
    p["lstm_wih"] = jax.random.uniform(keys[1], (D, 4 * D), jnp.float32, -bd, bd)
    p["lstm_whh"] = jax.random.uniform(keys[2], (D, 4 * D), jnp.float32, -bd, bd)
    b_ih = jax.random.uniform(keys[3], (1, 4 * D), jnp.float32, -bd, bd)
    b_hh = jax.random.uniform(keys[4], (1, 4 * D), jnp.float32, -bd, bd)
    p["lstm_b"] = b_ih + b_hh

    # LayerNorm + attention + lc MLP + decoder lc projection
    ln_g = jnp.ones((1, D), jnp.float32)
    ln_b = jnp.zeros((1, D), jnp.float32)
    DH = D // ATT_HEADS
    att_wq, att_bq = lin(keys[5], D, DH)
    att_wk, att_bk = lin(keys[6], D, DH)
    att_wv, att_bv = lin(keys[7], D, DH)
    att_wo, att_bo = lin(keys[8], DH, D)
    lc_w0, lc_b0 = lin(keys[9], D, LC_MLP_FEATURES[0])
    lc_w1, lc_b1 = lin(keys[10], LC_MLP_FEATURES[0], LC_MLP_FEATURES[1])

    # dynamics GRU + flow decoder MLP
    bd = 1.0 / np.sqrt(HG)
    gru_wih = jax.random.uniform(keys[11], (F2, 3 * HG), jnp.float32, -bd, bd)
    gru_whh = jax.random.uniform(keys[12], (HG, 3 * HG), jnp.float32, -bd, bd)
    gru_bih = jax.random.uniform(keys[13], (1, 3 * HG), jnp.float32, -bd, bd)
    gru_bhh = jax.random.uniform(keys[14], (1, 3 * HG), jnp.float32, -bd, bd)
    w1, dec_b1 = lin(keys[15], HG + DLC, M1)
    dec_w1_dyn = w1[:HG]
    dec_w1_lc = w1[HG:]
    dec_w2, dec_b2 = lin(keys[16], M1, M2)
    dec_w3, dec_b3 = lin(keys[17], M2, 6)

    # ---- packed kernel operands ----
    p["att_wqkv"] = jnp.concatenate([att_wq, att_wk, att_wv], axis=1)               # (32, 96)
    att_bqkv = jnp.concatenate([att_bq, att_bk, att_bv], axis=1)                    # (1, 96)
    p["b96"] = jnp.concatenate([att_bqkv, gru_bih, gru_bhh], axis=0)                # (3, 96)

    w3_pad = jnp.zeros((M2, M1), jnp.float32).at[:, 0:6].set(dec_w3)
    b3_pad = jnp.zeros((1, M1), jnp.float32).at[:, 0:6].set(dec_b3)
    p["w32"] = jnp.concatenate(
        [att_wo, lc_w0, lc_w1, dec_w1_lc, dec_w1_dyn, dec_w2, w3_pad], axis=0)      # (224, 32)
    p["b32"] = jnp.concatenate(
        [ln_g, ln_b, att_bo, lc_b0, lc_b1, dec_b1, dec_b2, b3_pad], axis=0)         # (8, 32)

    # block-diagonal GRU weight: rows 0:12 -> gi lanes 0:96 ; rows 16:48 -> gh lanes 128:224
    gw = jnp.zeros((_GRU_K, _GRU_GH_COL + 3 * HG), jnp.float32)
    gw = gw.at[0:F2, 0:3 * HG].set(gru_wih)
    gw = gw.at[_GRU_HH_ROW:_GRU_HH_ROW + HG, _GRU_GH_COL:_GRU_GH_COL + 3 * HG].set(gru_whh)
    p["gru_w"] = gw                                                                 # (48, 224)
    return p


def build_attention_mask(num_past_agents):
    A = int(np.sum(num_past_agents))
    m = np.zeros((A, A), dtype=np.float32)
    s = 0
    for nn in num_past_agents:
        e = s + int(nn)
        m[s:e, s:e] = 1.0
        s = e
    return m


def cam_nfdecoder_forward(params, past_traj, past_traj_len, past_num_agents,
                          decode_start_pos, decode_start_vel,
                          decoding_steps, num_candidates, past_to_pred_mask, z):
    A, T_past, _ = past_traj.shape
    D = MOTION_FEATURES

    # ---- hoisted, batched trajectory embedding + LSTM input projection (time-invariant) ----
    # TODO(synk): AgentEncoderLSTM trajectory embedding assumed Linear(2, D) + ReLU.
    past_tm = jnp.transpose(past_traj, (1, 0, 2)).reshape(T_past * A, 2)
    emb = jnp.maximum(jnp.dot(past_tm, params["emb_w"]) + params["emb_b"], 0.0)
    gates_ih = (jnp.dot(emb, params["lstm_wih"]) + params["lstm_b"]).reshape(T_past, A, 4 * D)

    lens = jnp.asarray(past_traj_len, jnp.int32).reshape(A, 1)
    mask = jnp.asarray(build_attention_mask(past_num_agents))

    # static one-hot row map: decoder row (pred_agent, candidate) -> past-agent row
    pred_idx = np.where(np.asarray(past_to_pred_mask))[0]
    A_pred = len(pred_idx)
    C = num_candidates
    N = A_pred * C
    rowmap_np = np.zeros((N, A), dtype=np.float32)
    rowmap_np[np.arange(N), np.repeat(pred_idx, C)] = 1.0
    rowmap = jnp.asarray(rowmap_np)

    start_pv = jnp.concatenate([decode_start_pos, decode_start_vel], axis=-1)     # (A, 4)
    T = decoding_steps
    z_flat = z.reshape(N, 2 * T)                                  # lane-major resident noise

    agent_encoding, packed = cam_nf_call(gates_ih, lens, mask, rowmap, start_pv, z_flat, params)

    # unpack: pure reshapes/slices, rows are already (agent, candidate)-major
    packed = packed.reshape(A_pred, C, T, 8)
    gen_traj = packed[..., 0:2]
    mu = packed[..., 2:4]
    sigma = packed[..., 4:8].reshape(A_pred, C, T, 2, 2)
    return gen_traj, z, mu, sigma, agent_encoding


if __name__ == "__main__":
    key = jax.random.PRNGKey(0)
    pkey, dkey = jax.random.split(key)
    params = init_params(pkey)

    num_past_agents = np.array([2, 2], dtype=np.int64)                     # two episodes
    A = int(num_past_agents.sum())                                         # 4 past agents
    T_PAST = 8
    decoding_steps = 8
    num_candidates = 4
    past_to_pred_mask = np.array([True, True, False, True])
    A_pred = int(past_to_pred_mask.sum())

    k1, k2, k3, k4 = jax.random.split(dkey, 4)
    past_traj = jax.random.normal(k1, (A, T_PAST, 2), jnp.float32)
    past_traj_len = jnp.array([8, 6, 8, 7], dtype=jnp.int32)
    decode_start_pos = jax.random.normal(k2, (A, 2), jnp.float32)
    decode_start_vel = 0.1 * jax.random.normal(k3, (A, 2), jnp.float32)
    # source noise z (PyTorch draws it with .normal_(); here passed in explicitly)
    z = jax.random.normal(k4, (A_pred, num_candidates, decoding_steps, 2), jnp.float32)

    outs = cam_nfdecoder_forward(params, past_traj, past_traj_len, num_past_agents,
                                 decode_start_pos, decode_start_vel,
                                 decoding_steps, num_candidates, past_to_pred_mask, z)
    gen_traj, z_out, mu, sigma, agent_encoding = [jax.block_until_ready(o) for o in outs]

    gen_np = np.asarray(gen_traj)
    mu_np = np.asarray(mu)
    sig_np = np.asarray(sigma)
    z_np = np.asarray(z_out)

    assert gen_traj.shape == (A_pred, num_candidates, decoding_steps, 2)
    assert mu.shape == (A_pred, num_candidates, decoding_steps, 2)
    assert sigma.shape == (A_pred, num_candidates, decoding_steps, 2, 2)
    assert agent_encoding.shape == (A, MOTION_FEATURES)
    assert np.all(np.isfinite(gen_np)) and np.all(np.isfinite(sig_np)) and np.all(np.isfinite(mu_np))
    # flow consistency among the packed outputs: gen == mu + sigma @ z (verifies lane packing,
    # output unpacking and the z reindexing end-to-end).
    recon = mu_np + np.einsum("actij,actj->acti", sig_np, z_np)
    assert np.max(np.abs(recon - gen_np)) < 1e-4
    # expm(sigma_hat) always has det = exp(trace(sigma_hat)) > 0
    det = sig_np[..., 0, 0] * sig_np[..., 1, 1] - sig_np[..., 0, 1] * sig_np[..., 1, 0]
    assert np.all(det > 0.0)
    print("KERNEL_OK")
</pallas_src>

<mosaic_0001>
module attributes {stable_mosaic.version = 11 : i64} {
  func.func @_fused_kernel(%arg0: memref<8x4x128xf32, #tpu.memory_space<vmem>>, %arg1: memref<4x1xi32, #tpu.memory_space<vmem>>, %arg2: memref<4x4xf32, #tpu.memory_space<vmem>>, %arg3: memref<12x4xf32, #tpu.memory_space<vmem>>, %arg4: memref<4x4xf32, #tpu.memory_space<vmem>>, %arg5: memref<12x16xf32, #tpu.memory_space<vmem>>, %arg6: memref<32x128xf32, #tpu.memory_space<vmem>>, %arg7: memref<32x96xf32, #tpu.memory_space<vmem>>, %arg8: memref<48x224xf32, #tpu.memory_space<vmem>>, %arg9: memref<224x32xf32, #tpu.memory_space<vmem>>, %arg10: memref<8x32xf32, #tpu.memory_space<vmem>>, %arg11: memref<3x96xf32, #tpu.memory_space<vmem>>, %arg12: memref<4x32xf32, #tpu.memory_space<vmem>>, %arg13: memref<12x64xf32, #tpu.memory_space<vmem>>) attributes {dimension_semantics = [], scalar_prefetch = 0 : i64, scratch_operands = 0 : i64, tpu.core_type = #tpu.core_type<tc>} {
    %c0 = arith.constant 0 : index
    %c0_0 = arith.constant 0 : index
    %0 = vector.load %arg1[%c0, %c0_0] : memref<4x1xi32, #tpu.memory_space<vmem>>, vector<4x1xi32>
    %cst = arith.constant 0.000000e+00 : f32
    %1 = vector.broadcast %cst : f32 to vector<4x32xf32>
    %cst_1 = arith.constant 0.000000e+00 : f32
    %2 = vector.broadcast %cst_1 : f32 to vector<4x32xf32>
    %cst_2 = arith.constant 0.000000e+00 : f32
    %3 = vector.broadcast %cst_2 : f32 to vector<4x32xf32>
    %c0_3 = arith.constant 0 : index
    %c0_4 = arith.constant 0 : index
    %c0_5 = arith.constant 0 : index
    %4 = vector.load %arg0[%c0_3, %c0_4, %c0_5] : memref<8x4x128xf32, #tpu.memory_space<vmem>>, vector<1x4x128xf32>
    %5 = vector.shape_cast %4 : vector<1x4x128xf32> to vector<4x128xf32>
    %c0_6 = arith.constant 0 : index
    %c0_7 = arith.constant 0 : index
    %6 = vector.load %arg6[%c0_6, %c0_7] : memref<32x128xf32, #tpu.memory_space<vmem>>, vector<32x128xf32>
    %cst_8 = arith.constant dense<0.000000e+00> : vector<4x128xf32>
    %7 = tpu.matmul %1, %6, %cst_8 {dimension_numbers = #tpu.dot_dimension_numbers<[1], [0], [0], [1], [0, 0, 1, 1], [], []>} : vector<4x32xf32>, vector<32x128xf32>, vector<4x128xf32> -> vector<4x128xf32>
    %8 = arith.addf %5, %7 : vector<4x128xf32>
    %9 = vector.extract_strided_slice %8 {offsets = [0, 0], sizes = [4, 32], strides = [1, 1]} : vector<4x128xf32> to vector<4x32xf32>
    %cst_9 = arith.constant 5.000000e-01 : f32
    %10 = vector.broadcast %cst_9 : f32 to vector<4x32xf32>
    %11 = arith.mulf %10, %9 : vector<4x32xf32>
    %12 = math.tanh %11 : vector<4x32xf32>
    %cst_10 = arith.constant 1.000000e+00 : f32
    %13 = vector.broadcast %cst_10 : f32 to vector<4x32xf32>
    %14 = arith.addf %12, %13 : vector<4x32xf32>
    %cst_11 = arith.constant 5.000000e-01 : f32
    %15 = vector.broadcast %cst_11 : f32 to vector<4x32xf32>
    %16 = arith.mulf %15, %14 : vector<4x32xf32>
    %17 = vector.extract_strided_slice %8 {offsets = [0, 32], sizes = [4, 32], strides = [1, 1]} : vector<4x128xf32> to vector<4x32xf32>
    %cst_12 = arith.constant 5.000000e-01 : f32
    %18 = vector.broadcast %cst_12 : f32 to vector<4x32xf32>
    %19 = arith.mulf %18, %17 : vector<4x32xf32>
    %20 = math.tanh %19 : vector<4x32xf32>
    %cst_13 = arith.constant 1.000000e+00 : f32
    %21 = vector.broadcast %cst_13 : f32 to vector<4x32xf32>
    %22 = arith.addf %20, %21 : vector<4x32xf32>
    %cst_14 = arith.constant 5.000000e-01 : f32
    %23 = vector.broadcast %cst_14 : f32 to vector<4x32xf32>
    %24 = arith.mulf %23, %22 : vector<4x32xf32>
    %25 = vector.extract_strided_slice %8 {offsets = [0, 64], sizes = [4, 32], strides = [1, 1]} : vector<4x128xf32> to vector<4x32xf32>
    %26 = math.tanh %25 : vector<4x32xf32>
    %27 = vector.extract_strided_slice %8 {offsets = [0, 96], sizes = [4, 32], strides = [1, 1]} : vector<4x128xf32> to vector<4x32xf32>
    %cst_15 = arith.constant 5.000000e-01 : f32
    %28 = vector.broadcast %cst_15 : f32 to vector<4x32xf32>
    %29 = arith.mulf %28, %27 : vector<4x32xf32>
    %30 = math.tanh %29 : vector<4x32xf32>
    %cst_16 = arith.constant 1.000000e+00 : f32
    %31 = vector.broadcast %cst_16 : f32 to vector<4x32xf32>
    %32 = arith.addf %30, %31 : vector<4x32xf32>
    %cst_17 = arith.constant 5.000000e-01 : f32
    %33 = vector.broadcast %cst_17 : f32 to vector<4x32xf32>
    %34 = arith.mulf %33, %32 : vector<4x32xf32>
    %35 = arith.mulf %24, %2 : vector<4x32xf32>
    %36 = arith.mulf %16, %26 : vector<4x32xf32>
    %37 = arith.addf %35, %36 : vector<4x32xf32>
    %38 = math.tanh %37 : vector<4x32xf32>
    %39 = arith.mulf %34, %38 : vector<4x32xf32>
    %c1_i32 = arith.constant 1 : i32
    %40 = vector.broadcast %c1_i32 : i32 to vector<4x1xi32>
    %41 = arith.cmpi eq, %0, %40 : vector<4x1xi32>
    %42 = vector.shape_cast %41 : vector<4x1xi1> to vector<4x1xi1>
    %43 = vector.broadcast %42 : vector<4x1xi1> to vector<4x32xi1>
    %44 = arith.select %43, %39, %3 : vector<4x32xi1>, vector<4x32xf32>
    %c1 = arith.constant 1 : index
    %c0_18 = arith.constant 0 : index
    %c0_19 = arith.constant 0 : index
    %45 = vector.load %arg0[%c1, %c0_18, %c0_19] : memref<8x4x128xf32, #tpu.memory_space<vmem>>, vector<1x4x128xf32>
    %46 = vector.shape_cast %45 : vector<1x4x128xf32> to vector<4x128xf32>
    %c0_20 = arith.constant 0 : index
    %c0_21 = arith.constant 0 : index
    %47 = vector.load %arg6[%c0_20, %c0_21] : memref<32x128xf32, #tpu.memory_space<vmem>>, vector<32x128xf32>
    %cst_22 = arith.constant dense<0.000000e+00> : vector<4x128xf32>
    %48 = tpu.matmul %39, %47, %cst_22 {dimension_numbers = #tpu.dot_dimension_numbers<[1], [0], [0], [1], [0, 0, 1, 1], [], []>} : vector<4x32xf32>, vector<32x128xf32>, vector<4x128xf32> -> vector<4x128xf32>
    %49 = arith.addf %46, %48 : vector<4x128xf32>
    %50 = vector.extract_strided_slice %49 {offsets = [0, 0], sizes = [4, 32], strides = [1, 1]} : vector<4x128xf32> to vector<4x32xf32>
    %cst_23 = arith.constant 5.000000e-01 : f32
    %51 = vector.broadcast %cst_23 : f32 to vector<4x32xf32>
    %52 = arith.mulf %51, %50 : vector<4x32xf32>
    %53 = math.tanh %52 : vector<4x32xf32>
    %cst_24 = arith.constant 1.000000e+00 : f32
    %54 = vector.broadcast %cst_24 : f32 to vector<4x32xf32>
    %55 = arith.addf %53, %54 : vector<4x32xf32>
    %cst_25 = arith.constant 5.000000e-01 : f32
    %56 = vector.broadcast %cst_25 : f32 to vector<4x32xf32>
    %57 = arith.mulf %56, %55 : vector<4x32xf32>
    %58 = vector.extract_strided_slice %49 {offsets = [0, 32], sizes = [4, 32], strides = [1, 1]} : vector<4x128xf32> to vector<4x32xf32>
    %cst_26 = arith.constant 5.000000e-01 : f32
    %59 = vector.broadcast %cst_26 : f32 to vector<4x32xf32>
    %60 = arith.mulf %59, %58 : vector<4x32xf32>
    %61 = math.tanh %60 : vector<4x32xf32>
    %cst_27 = arith.constant 1.000000e+00 : f32
    %62 = vector.broadcast %cst_27 : f32 to vector<4x32xf32>
    %63 = arith.addf %61, %62 : vector<4x32xf32>
    %cst_28 = arith.constant 5.000000e-01 : f32
    %64 = vector.broadcast %cst_28 : f32 to vector<4x32xf32>
    %65 = arith.mulf %64, %63 : vector<4x32xf32>
    %66 = vector.extract_strided_slice %49 {offsets = [0, 64], sizes = [4, 32], strides = [1, 1]} : vector<4x128xf32> to vector<4x32xf32>
    %67 = math.tanh %66 : vector<4x32xf32>
    %68 = vector.extract_strided_slice %49 {offsets = [0, 96], sizes = [4, 32], strides = [1, 1]} : vector<4x128xf32> to vector<4x32xf32>
    %cst_29 = arith.constant 5.000000e-01 : f32
    %69 = vector.broadcast %cst_29 : f32 to vector<4x32xf32>
    %70 = arith.mulf %69, %68 : vector<4x32xf32>
    %71 = math.tanh %70 : vector<4x32xf32>
    %cst_30 = arith.constant 1.000000e+00 : f32
    %72 = vector.broadcast %cst_30 : f32 to vector<4x32xf32>
    %73 = arith.addf %71, %72 : vector<4x32xf32>
    %cst_31 = arith.constant 5.000000e-01 : f32
    %74 = vector.broadcast %cst_31 : f32 to vector<4x32xf32>
    %75 = arith.mulf %74, %73 : vector<4x32xf32>
    %76 = arith.mulf %65, %37 : vector<4x32xf32>
    %77 = arith.mulf %57, %67 : vector<4x32xf32>
    %78 = arith.addf %76, %77 : vector<4x32xf32>
    %79 = math.tanh %78 : vector<4x32xf32>
    %80 = arith.mulf %75, %79 : vector<4x32xf32>
    %c2_i32 = arith.constant 2 : i32
    %81 = vector.broadcast %c2_i32 : i32 to vector<4x1xi32>
    %82 = arith.cmpi eq, %0, %81 : vector<4x1xi32>
    %83 = vector.shape_cast %82 : vector<4x1xi1> to vector<4x1xi1>
    %84 = vector.broadcast %83 : vector<4x1xi1> to vector<4x32xi1>
    %85 = arith.select %84, %80, %44 : vector<4x32xi1>, vector<4x32xf32>
    %c2 = arith.constant 2 : index
    %c0_32 = arith.constant 0 : index
    %c0_33 = arith.constant 0 : index
    %86 = vector.load %arg0[%c2, %c0_32, %c0_33] : memref<8x4x128xf32, #tpu.memory_space<vmem>>, vector<1x4x128xf32>
    %87 = vector.shape_cast %86 : vector<1x4x128xf32> to vector<4x128xf32>
    %c0_34 = arith.constant 0 : index
    %c0_35 = arith.constant 0 : index
    %88 = vector.load %arg6[%c0_34, %c0_35] : memref<32x128xf32, #tpu.memory_space<vmem>>, vector<32x128xf32>
    %cst_36 = arith.constant dense<0.000000e+00> : vector<4x128xf32>
    %89 = tpu.matmul %80, %88, %cst_36 {dimension_numbers = #tpu.dot_dimension_numbers<[1], [0], [0], [1], [0, 0, 1, 1], [], []>} : vector<4x32xf32>, vector<32x128xf32>, vector<4x128xf32> -> vector<4x128xf32>
    %90 = arith.addf %87, %89 : vector<4x128xf32>
    %91 = vector.extract_strided_slice %90 {offsets = [0, 0], sizes = [4, 32], strides = [1, 1]} : vector<4x128xf32> to vector<4x32xf32>
    %cst_37 = arith.constant 5.000000e-01 : f32
    %92 = vector.broadcast %cst_37 : f32 to vector<4x32xf32>
    %93 = arith.mulf %92, %91 : vector<4x32xf32>
    %94 = math.tanh %93 : vector<4x32xf32>
    %cst_38 = arith.constant 1.000000e+00 : f32
    %95 = vector.broadcast %cst_38 : f32 to vector<4x32xf32>
    %96 = arith.addf %94, %95 : vector<4x32xf32>
    %cst_39 = arith.constant 5.000000e-01 : f32
    %97 = vector.broadcast %cst_39 : f32 to vector<4x32xf32>
    %98 = arith.mulf %97, %96 : vector<4x32xf32>
    %99 = vector.extract_strided_slice %90 {offsets = [0, 32], sizes = [4, 32], strides = [1, 1]} : vector<4x128xf32> to vector<4x32xf32>
    %cst_40 = arith.constant 5.000000e-01 : f32
    %100 = vector.broadcast %cst_40 : f32 to vector<4x32xf32>
    %101 = arith.mulf %100, %99 : vector<4x32xf32>
    %102 = math.tanh %101 : vector<4x32xf32>
    %cst_41 = arith.constant 1.000000e+00 : f32
    %103 = vector.broadcast %cst_41 : f32 to vector<4x32xf32>
    %104 = arith.addf %102, %103 : vector<4x32xf32>
    %cst_42 = arith.constant 5.000000e-01 : f32
    %105 = vector.broadcast %cst_42 : f32 to vector<4x32xf32>
    %106 = arith.mulf %105, %104 : vector<4x32xf32>
    %107 = vector.extract_strided_slice %90 {offsets = [0, 64], sizes = [4, 32], strides = [1, 1]} : vector<4x128xf32> to vector<4x32xf32>
    %108 = math.tanh %107 : vector<4x32xf32>
    %109 = vector.extract_strided_slice %90 {offsets = [0, 96], sizes = [4, 32], strides = [1, 1]} : vector<4x128xf32> to vector<4x32xf32>
    %cst_43 = arith.constant 5.000000e-01 : f32
    %110 = vector.broadcast %cst_43 : f32 to vector<4x32xf32>
    %111 = arith.mulf %110, %109 : vector<4x32xf32>
    %112 = math.tanh %111 : vector<4x32xf32>
    %cst_44 = arith.constant 1.000000e+00 : f32
    %113 = vector.broadcast %cst_44 : f32 to vector<4x32xf32>
    %114 = arith.addf %112, %113 : vector<4x32xf32>
    %cst_45 = arith.constant 5.000000e-01 : f32
    %115 = vector.broadcast %cst_45 : f32 to vector<4x32xf32>
    %116 = arith.mulf %115, %114 : vector<4x32xf32>
    %117 = arith.mulf %106, %78 : vector<4x32xf32>
    %118 = arith.mulf %98, %108 : vector<4x32xf32>
    %119 = arith.addf %117, %118 : vector<4x32xf32>
    %120 = math.tanh %119 : vector<4x32xf32>
    %121 = arith.mulf %116, %120 : vector<4x32xf32>
    %c3_i32 = arith.constant 3 : i32
    %122 = vector.broadcast %c3_i32 : i32 to vector<4x1xi32>
    %123 = arith.cmpi eq, %0, %122 : vector<4x1xi32>
    %124 = vector.shape_cast %123 : vector<4x1xi1> to vector<4x1xi1>
    %125 = vector.broadcast %124 : vector<4x1xi1> to vector<4x32xi1>
    %126 = arith.select %125, %121, %85 : vector<4x32xi1>, vector<4x32xf32>
    %c3 = arith.constant 3 : index
    %c0_46 = arith.constant 0 : index
    %c0_47 = arith.constant 0 : index
    %127 = vector.load %arg0[%c3, %c0_46, %c0_47] : memref<8x4x128xf32, #tpu.memory_space<vmem>>, vector<1x4x128xf32>
    %128 = vector.shape_cast %127 : vector<1x4x128xf32> to vector<4x128xf32>
    %c0_48 = arith.constant 0 : index
    %c0_49 = arith.constant 0 : index
    %129 = vector.load %arg6[%c0_48, %c0_49] : memref<32x128xf32, #tpu.memory_space<vmem>>, vector<32x128xf32>
    %cst_50 = arith.constant dense<0.000000e+00> : vector<4x128xf32>
    %130 = tpu.matmul %121, %129, %cst_50 {dimension_numbers = #tpu.dot_dimension_numbers<[1], [0], [0], [1], [0, 0, 1, 1], [], []>} : vector<4x32xf32>, vector<32x128xf32>, vector<4x128xf32> -> vector<4x128xf32>
    %131 = arith.addf %128, %130 : vector<4x128xf32>
    %132 = vector.extract_strided_slice %131 {offsets = [0, 0], sizes = [4, 32], strides = [1, 1]} : vector<4x128xf32> to vector<4x32xf32>
    %cst_51 = arith.constant 5.000000e-01 : f32
    %133 = vector.broadcast %cst_51 : f32 to vector<4x32xf32>
    %134 = arith.mulf %133, %132 : vector<4x32xf32>
    %135 = math.tanh %134 : vector<4x32xf32>
    %cst_52 = arith.constant 1.000000e+00 : f32
    %136 = vector.broadcast %cst_52 : f32 to vector<4x32xf32>
    %137 = arith.addf %135, %136 : vector<4x32xf32>
    %cst_53 = arith.constant 5.000000e-01 : f32
    %138 = vector.broadcast %cst_53 : f32 to vector<4x32xf32>
    %139 = arith.mulf %138, %137 : vector<4x32xf32>
    %140 = vector.extract_strided_slice %131 {offsets = [0, 32], sizes = [4, 32], strides = [1, 1]} : vector<4x128xf32> to vector<4x32xf32>
    %cst_54 = arith.constant 5.000000e-01 : f32
    %141 = vector.broadcast %cst_54 : f32 to vector<4x32xf32>
    %142 = arith.mulf %141, %140 : vector<4x32xf32>
    %143 = math.tanh %142 : vector<4x32xf32>
    %cst_55 = arith.constant 1.000000e+00 : f32
    %144 = vector.broadcast %cst_55 : f32 to vector<4x32xf32>
    %145 = arith.addf %143, %144 : vector<4x32xf32>
    %cst_56 = arith.constant 5.000000e-01 : f32
    %146 = vector.broadcast %cst_56 : f32 to vector<4x32xf32>
    %147 = arith.mulf %146, %145 : vector<4x32xf32>
    %148 = vector.extract_strided_slice %131 {offsets = [0, 64], sizes = [4, 32], strides = [1, 1]} : vector<4x128xf32> to vector<4x32xf32>
    %149 = math.tanh %148 : vector<4x32xf32>
    %150 = vector.extract_strided_slice %131 {offsets = [0, 96], sizes = [4, 32], strides = [1, 1]} : vector<4x128xf32> to vector<4x32xf32>
    %cst_57 = arith.constant 5.000000e-01 : f32
    %151 = vector.broadcast %cst_57 : f32 to vector<4x32xf32>
    %152 = arith.mulf %151, %150 : vector<4x32xf32>
    %153 = math.tanh %152 : vector<4x32xf32>
    %cst_58 = arith.constant 1.000000e+00 : f32
    %154 = vector.broadcast %cst_58 : f32 to vector<4x32xf32>
    %155 = arith.addf %153, %154 : vector<4x32xf32>
    %cst_59 = arith.constant 5.000000e-01 : f32
    %156 = vector.broadcast %cst_59 : f32 to vector<4x32xf32>
    %157 = arith.mulf %156, %155 : vector<4x32xf32>
    %158 = arith.mulf %147, %119 : vector<4x32xf32>
    %159 = arith.mulf %139, %149 : vector<4x32xf32>
    %160 = arith.addf %158, %159 : vector<4x32xf32>
    %161 = math.tanh %160 : vector<4x32xf32>
    %162 = arith.mulf %157, %161 : vector<4x32xf32>
    %c4_i32 = arith.constant 4 : i32
    %163 = vector.broadcast %c4_i32 : i32 to vector<4x1xi32>
    %164 = arith.cmpi eq, %0, %163 : vector<4x1xi32>
    %165 = vector.shape_cast %164 : vector<4x1xi1> to vector<4x1xi1>
    %166 = vector.broadcast %165 : vector<4x1xi1> to vector<4x32xi1>
    %167 = arith.select %166, %162, %126 : vector<4x32xi1>, vector<4x32xf32>
    %c4 = arith.constant 4 : index
    %c0_60 = arith.constant 0 : index
    %c0_61 = arith.constant 0 : index
    %168 = vector.load %arg0[%c4, %c0_60, %c0_61] : memref<8x4x128xf32, #tpu.memory_space<vmem>>, vector<1x4x128xf32>
    %169 = vector.shape_cast %168 : vector<1x4x128xf32> to vector<4x128xf32>
    %c0_62 = arith.constant 0 : index
    %c0_63 = arith.constant 0 : index
    %170 = vector.load %arg6[%c0_62, %c0_63] : memref<32x128xf32, #tpu.memory_space<vmem>>, vector<32x128xf32>
    %cst_64 = arith.constant dense<0.000000e+00> : vector<4x128xf32>
    %171 = tpu.matmul %162, %170, %cst_64 {dimension_numbers = #tpu.dot_dimension_numbers<[1], [0], [0], [1], [0, 0, 1, 1], [], []>} : vector<4x32xf32>, vector<32x128xf32>, vector<4x128xf32> -> vector<4x128xf32>
    %172 = arith.addf %169, %171 : vector<4x128xf32>
    %173 = vector.extract_strided_slice %172 {offsets = [0, 0], sizes = [4, 32], strides = [1, 1]} : vector<4x128xf32> to vector<4x32xf32>
    %cst_65 = arith.constant 5.000000e-01 : f32
    %174 = vector.broadcast %cst_65 : f32 to vector<4x32xf32>
    %175 = arith.mulf %174, %173 : vector<4x32xf32>
    %176 = math.tanh %175 : vector<4x32xf32>
    %cst_66 = arith.constant 1.000000e+00 : f32
    %177 = vector.broadcast %cst_66 : f32 to vector<4x32xf32>
    %178 = arith.addf %176, %177 : vector<4x32xf32>
    %cst_67 = arith.constant 5.000000e-01 : f32
    %179 = vector.broadcast %cst_67 : f32 to vector<4x32xf32>
    %180 = arith.mulf %179, %178 : vector<4x32xf32>
    %181 = vector.extract_strided_slice %172 {offsets = [0, 32], sizes = [4, 32], strides = [1, 1]} : vector<4x128xf32> to vector<4x32xf32>
    %cst_68 = arith.constant 5.000000e-01 : f32
    %182 = vector.broadcast %cst_68 : f32 to vector<4x32xf32>
    %183 = arith.mulf %182, %181 : vector<4x32xf32>
    %184 = math.tanh %183 : vector<4x32xf32>
    %cst_69 = arith.constant 1.000000e+00 : f32
    %185 = vector.broadcast %cst_69 : f32 to vector<4x32xf32>
    %186 = arith.addf %184, %185 : vector<4x32xf32>
    %cst_70 = arith.constant 5.000000e-01 : f32
    %187 = vector.broadcast %cst_70 : f32 to vector<4x32xf32>
    %188 = arith.mulf %187, %186 : vector<4x32xf32>
    %189 = vector.extract_strided_slice %172 {offsets = [0, 64], sizes = [4, 32], strides = [1, 1]} : vector<4x128xf32> to vector<4x32xf32>
    %190 = math.tanh %189 : vector<4x32xf32>
    %191 = vector.extract_strided_slice %172 {offsets = [0, 96], sizes = [4, 32], strides = [1, 1]} : vector<4x128xf32> to vector<4x32xf32>
    %cst_71 = arith.constant 5.000000e-01 : f32
    %192 = vector.broadcast %cst_71 : f32 to vector<4x32xf32>
    %193 = arith.mulf %192, %191 : vector<4x32xf32>
    %194 = math.tanh %193 : vector<4x32xf32>
    %cst_72 = arith.constant 1.000000e+00 : f32
    %195 = vector.broadcast %cst_72 : f32 to vector<4x32xf32>
    %196 = arith.addf %194, %195 : vector<4x32xf32>
    %cst_73 = arith.constant 5.000000e-01 : f32
    %197 = vector.broadcast %cst_73 : f32 to vector<4x32xf32>
    %198 = arith.mulf %197, %196 : vector<4x32xf32>
    %199 = arith.mulf %188, %160 : vector<4x32xf32>
    %200 = arith.mulf %180, %190 : vector<4x32xf32>
    %201 = arith.addf %199, %200 : vector<4x32xf32>
    %202 = math.tanh %201 : vector<4x32xf32>
    %203 = arith.mulf %198, %202 : vector<4x32xf32>
    %c5_i32 = arith.constant 5 : i32
    %204 = vector.broadcast %c5_i32 : i32 to vector<4x1xi32>
    %205 = arith.cmpi eq, %0, %204 : vector<4x1xi32>
    %206 = vector.shape_cast %205 : vector<4x1xi1> to vector<4x1xi1>
    %207 = vector.broadcast %206 : vector<4x1xi1> to vector<4x32xi1>
    %208 = arith.select %207, %203, %167 : vector<4x32xi1>, vector<4x32xf32>
    %c5 = arith.constant 5 : index
    %c0_74 = arith.constant 0 : index
    %c0_75 = arith.constant 0 : index
    %209 = vector.load %arg0[%c5, %c0_74, %c0_75] : memref<8x4x128xf32, #tpu.memory_space<vmem>>, vector<1x4x128xf32>
    %210 = vector.shape_cast %209 : vector<1x4x128xf32> to vector<4x128xf32>
    %c0_76 = arith.constant 0 : index
    %c0_77 = arith.constant 0 : index
    %211 = vector.load %arg6[%c0_76, %c0_77] : memref<32x128xf32, #tpu.memory_space<vmem>>, vector<32x128xf32>
    %cst_78 = arith.constant dense<0.000000e+00> : vector<4x128xf32>
    %212 = tpu.matmul %203, %211, %cst_78 {dimension_numbers = #tpu.dot_dimension_numbers<[1], [0], [0], [1], [0, 0, 1, 1], [], []>} : vector<4x32xf32>, vector<32x128xf32>, vector<4x128xf32> -> vector<4x128xf32>
    %213 = arith.addf %210, %212 : vector<4x128xf32>
    %214 = vector.extract_strided_slice %213 {offsets = [0, 0], sizes = [4, 32], strides = [1, 1]} : vector<4x128xf32> to vector<4x32xf32>
    %cst_79 = arith.constant 5.000000e-01 : f32
    %215 = vector.broadcast %cst_79 : f32 to vector<4x32xf32>
    %216 = arith.mulf %215, %214 : vector<4x32xf32>
    %217 = math.tanh %216 : vector<4x32xf32>
    %cst_80 = arith.constant 1.000000e+00 : f32
    %218 = vector.broadcast %cst_80 : f32 to vector<4x32xf32>
    %219 = arith.addf %217, %218 : vector<4x32xf32>
    %cst_81 = arith.constant 5.000000e-01 : f32
    %220 = vector.broadcast %cst_81 : f32 to vector<4x32xf32>
    %221 = arith.mulf %220, %219 : vector<4x32xf32>
    %222 = vector.extract_strided_slice %213 {offsets = [0, 32], sizes = [4, 32], strides = [1, 1]} : vector<4x128xf32> to vector<4x32xf32>
    %cst_82 = arith.constant 5.000000e-01 : f32
    %223 = vector.broadcast %cst_82 : f32 to vector<4x32xf32>
    %224 = arith.mulf %223, %222 : vector<4x32xf32>
    %225 = math.tanh %224 : vector<4x32xf32>
    %cst_83 = arith.constant 1.000000e+00 : f32
    %226 = vector.broadcast %cst_83 : f32 to vector<4x32xf32>
    %227 = arith.addf %225, %226 : vector<4x32xf32>
    %cst_84 = arith.constant 5.000000e-01 : f32
    %228 = vector.broadcast %cst_84 : f32 to vector<4x32xf32>
    %229 = arith.mulf %228, %227 : vector<4x32xf32>
    %230 = vector.extract_strided_slice %213 {offsets = [0, 64], sizes = [4, 32], strides = [1, 1]} : vector<4x128xf32> to vector<4x32xf32>
    %231 = math.tanh %230 : vector<4x32xf32>
    %232 = vector.extract_strided_slice %213 {offsets = [0, 96], sizes = [4, 32], strides = [1, 1]} : vector<4x128xf32> to vector<4x32xf32>
    %cst_85 = arith.constant 5.000000e-01 : f32
    %233 = vector.broadcast %cst_85 : f32 to vector<4x32xf32>
    %234 = arith.mulf %233, %232 : vector<4x32xf32>
    %235 = math.tanh %234 : vector<4x32xf32>
    %cst_86 = arith.constant 1.000000e+00 : f32
    %236 = vector.broadcast %cst_86 : f32 to vector<4x32xf32>
    %237 = arith.addf %235, %236 : vector<4x32xf32>
    %cst_87 = arith.constant 5.000000e-01 : f32
    %238 = vector.broadcast %cst_87 : f32 to vector<4x32xf32>
    %239 = arith.mulf %238, %237 : vector<4x32xf32>
    %240 = arith.mulf %229, %201 : vector<4x32xf32>
    %241 = arith.mulf %221, %231 : vector<4x32xf32>
    %242 = arith.addf %240, %241 : vector<4x32xf32>
    %243 = math.tanh %242 : vector<4x32xf32>
    %244 = arith.mulf %239, %243 : vector<4x32xf32>
    %c6_i32 = arith.constant 6 : i32
    %245 = vector.broadcast %c6_i32 : i32 to vector<4x1xi32>
    %246 = arith.cmpi eq, %0, %245 : vector<4x1xi32>
    %247 = vector.shape_cast %246 : vector<4x1xi1> to vector<4x1xi1>
    %248 = vector.broadcast %247 : vector<4x1xi1> to vector<4x32xi1>
    %249 = arith.select %248, %244, %208 : vector<4x32xi1>, vector<4x32xf32>
    %c6 = arith.constant 6 : index
    %c0_88 = arith.constant 0 : index
    %c0_89 = arith.constant 0 : index
    %250 = vector.load %arg0[%c6, %c0_88, %c0_89] : memref<8x4x128xf32, #tpu.memory_space<vmem>>, vector<1x4x128xf32>
    %251 = vector.shape_cast %250 : vector<1x4x128xf32> to vector<4x128xf32>
    %c0_90 = arith.constant 0 : index
    %c0_91 = arith.constant 0 : index
    %252 = vector.load %arg6[%c0_90, %c0_91] : memref<32x128xf32, #tpu.memory_space<vmem>>, vector<32x128xf32>
    %cst_92 = arith.constant dense<0.000000e+00> : vector<4x128xf32>
    %253 = tpu.matmul %244, %252, %cst_92 {dimension_numbers = #tpu.dot_dimension_numbers<[1], [0], [0], [1], [0, 0, 1, 1], [], []>} : vector<4x32xf32>, vector<32x128xf32>, vector<4x128xf32> -> vector<4x128xf32>
    %254 = arith.addf %251, %253 : vector<4x128xf32>
    %255 = vector.extract_strided_slice %254 {offsets = [0, 0], sizes = [4, 32], strides = [1, 1]} : vector<4x128xf32> to vector<4x32xf32>
    %cst_93 = arith.constant 5.000000e-01 : f32
    %256 = vector.broadcast %cst_93 : f32 to vector<4x32xf32>
    %257 = arith.mulf %256, %255 : vector<4x32xf32>
    %258 = math.tanh %257 : vector<4x32xf32>
    %cst_94 = arith.constant 1.000000e+00 : f32
    %259 = vector.broadcast %cst_94 : f32 to vector<4x32xf32>
    %260 = arith.addf %258, %259 : vector<4x32xf32>
    %cst_95 = arith.constant 5.000000e-01 : f32
    %261 = vector.broadcast %cst_95 : f32 to vector<4x32xf32>
    %262 = arith.mulf %261, %260 : vector<4x32xf32>
    %263 = vector.extract_strided_slice %254 {offsets = [0, 32], sizes = [4, 32], strides = [1, 1]} : vector<4x128xf32> to vector<4x32xf32>
    %cst_96 = arith.constant 5.000000e-01 : f32
    %264 = vector.broadcast %cst_96 : f32 to vector<4x32xf32>
    %265 = arith.mulf %264, %263 : vector<4x32xf32>
    %266 = math.tanh %265 : vector<4x32xf32>
    %cst_97 = arith.constant 1.000000e+00 : f32
    %267 = vector.broadcast %cst_97 : f32 to vector<4x32xf32>
    %268 = arith.addf %266, %267 : vector<4x32xf32>
    %cst_98 = arith.constant 5.000000e-01 : f32
    %269 = vector.broadcast %cst_98 : f32 to vector<4x32xf32>
    %270 = arith.mulf %269, %268 : vector<4x32xf32>
    %271 = vector.extract_strided_slice %254 {offsets = [0, 64], sizes = [4, 32], strides = [1, 1]} : vector<4x128xf32> to vector<4x32xf32>
    %272 = math.tanh %271 : vector<4x32xf32>
    %273 = vector.extract_strided_slice %254 {offsets = [0, 96], sizes = [4, 32], strides = [1, 1]} : vector<4x128xf32> to vector<4x32xf32>
    %cst_99 = arith.constant 5.000000e-01 : f32
    %274 = vector.broadcast %cst_99 : f32 to vector<4x32xf32>
    %275 = arith.mulf %274, %273 : vector<4x32xf32>
    %276 = math.tanh %275 : vector<4x32xf32>
    %cst_100 = arith.constant 1.000000e+00 : f32
    %277 = vector.broadcast %cst_100 : f32 to vector<4x32xf32>
    %278 = arith.addf %276, %277 : vector<4x32xf32>
    %cst_101 = arith.constant 5.000000e-01 : f32
    %279 = vector.broadcast %cst_101 : f32 to vector<4x32xf32>
    %280 = arith.mulf %279, %278 : vector<4x32xf32>
    %281 = arith.mulf %270, %242 : vector<4x32xf32>
    %282 = arith.mulf %262, %272 : vector<4x32xf32>
    %283 = arith.addf %281, %282 : vector<4x32xf32>
    %284 = math.tanh %283 : vector<4x32xf32>
    %285 = arith.mulf %280, %284 : vector<4x32xf32>
    %c7_i32 = arith.constant 7 : i32
    %286 = vector.broadcast %c7_i32 : i32 to vector<4x1xi32>
    %287 = arith.cmpi eq, %0, %286 : vector<4x1xi32>
    %288 = vector.shape_cast %287 : vector<4x1xi1> to vector<4x1xi1>
    %289 = vector.broadcast %288 : vector<4x1xi1> to vector<4x32xi1>
    %290 = arith.select %289, %285, %249 : vector<4x32xi1>, vector<4x32xf32>
    %c7 = arith.constant 7 : index
    %c0_102 = arith.constant 0 : index
    %c0_103 = arith.constant 0 : index
    %291 = vector.load %arg0[%c7, %c0_102, %c0_103] : memref<8x4x128xf32, #tpu.memory_space<vmem>>, vector<1x4x128xf32>
    %292 = vector.shape_cast %291 : vector<1x4x128xf32> to vector<4x128xf32>
    %c0_104 = arith.constant 0 : index
    %c0_105 = arith.constant 0 : index
    %293 = vector.load %arg6[%c0_104, %c0_105] : memref<32x128xf32, #tpu.memory_space<vmem>>, vector<32x128xf32>
    %cst_106 = arith.constant dense<0.000000e+00> : vector<4x128xf32>
    %294 = tpu.matmul %285, %293, %cst_106 {dimension_numbers = #tpu.dot_dimension_numbers<[1], [0], [0], [1], [0, 0, 1, 1], [], []>} : vector<4x32xf32>, vector<32x128xf32>, vector<4x128xf32> -> vector<4x128xf32>
    %295 = arith.addf %292, %294 : vector<4x128xf32>
    %296 = vector.extract_strided_slice %295 {offsets = [0, 0], sizes = [4, 32], strides = [1, 1]} : vector<4x128xf32> to vector<4x32xf32>
    %cst_107 = arith.constant 5.000000e-01 : f32
    %297 = vector.broadcast %cst_107 : f32 to vector<4x32xf32>
    %298 = arith.mulf %297, %296 : vector<4x32xf32>
    %299 = math.tanh %298 : vector<4x32xf32>
    %cst_108 = arith.constant 1.000000e+00 : f32
    %300 = vector.broadcast %cst_108 : f32 to vector<4x32xf32>
    %301 = arith.addf %299, %300 : vector<4x32xf32>
    %cst_109 = arith.constant 5.000000e-01 : f32
    %302 = vector.broadcast %cst_109 : f32 to vector<4x32xf32>
    %303 = arith.mulf %302, %301 : vector<4x32xf32>
    %304 = vector.extract_strided_slice %295 {offsets = [0, 32], sizes = [4, 32], strides = [1, 1]} : vector<4x128xf32> to vector<4x32xf32>
    %cst_110 = arith.constant 5.000000e-01 : f32
    %305 = vector.broadcast %cst_110 : f32 to vector<4x32xf32>
    %306 = arith.mulf %305, %304 : vector<4x32xf32>
    %307 = math.tanh %306 : vector<4x32xf32>
    %cst_111 = arith.constant 1.000000e+00 : f32
    %308 = vector.broadcast %cst_111 : f32 to vector<4x32xf32>
    %309 = arith.addf %307, %308 : vector<4x32xf32>
    %cst_112 = arith.constant 5.000000e-01 : f32
    %310 = vector.broadcast %cst_112 : f32 to vector<4x32xf32>
    %311 = arith.mulf %310, %309 : vector<4x32xf32>
    %312 = vector.extract_strided_slice %295 {offsets = [0, 64], sizes = [4, 32], strides = [1, 1]} : vector<4x128xf32> to vector<4x32xf32>
    %313 = math.tanh %312 : vector<4x32xf32>
    %314 = vector.extract_strided_slice %295 {offsets = [0, 96], sizes = [4, 32], strides = [1, 1]} : vector<4x128xf32> to vector<4x32xf32>
    %cst_113 = arith.constant 5.000000e-01 : f32
    %315 = vector.broadcast %cst_113 : f32 to vector<4x32xf32>
    %316 = arith.mulf %315, %314 : vector<4x32xf32>
    %317 = math.tanh %316 : vector<4x32xf32>
    %cst_114 = arith.constant 1.000000e+00 : f32
    %318 = vector.broadcast %cst_114 : f32 to vector<4x32xf32>
    %319 = arith.addf %317, %318 : vector<4x32xf32>
    %cst_115 = arith.constant 5.000000e-01 : f32
    %320 = vector.broadcast %cst_115 : f32 to vector<4x32xf32>
    %321 = arith.mulf %320, %319 : vector<4x32xf32>
    %322 = arith.mulf %311, %283 : vector<4x32xf32>
    %323 = arith.mulf %303, %313 : vector<4x32xf32>
    %324 = arith.addf %322, %323 : vector<4x32xf32>
    %325 = math.tanh %324 : vector<4x32xf32>
    %326 = arith.mulf %321, %325 : vector<4x32xf32>
    %c8_i32 = arith.constant 8 : i32
    %327 = vector.broadcast %c8_i32 : i32 to vector<4x1xi32>
    %328 = arith.cmpi eq, %0, %327 : vector<4x1xi32>
    %329 = vector.shape_cast %328 : vector<4x1xi1> to vector<4x1xi1>
    %330 = vector.broadcast %329 : vector<4x1xi1> to vector<4x32xi1>
    %331 = arith.select %330, %326, %290 : vector<4x32xi1>, vector<4x32xf32>
    %c0_116 = arith.constant 0 : index
    %c0_117 = arith.constant 0 : index
    %332 = vector.load %arg10[%c0_116, %c0_117] : memref<8x32xf32, #tpu.memory_space<vmem>>, vector<8x32xf32>
    %cst_118 = arith.constant dense<0.000000e+00> : vector<4xf32>
    %333 = vector.multi_reduction <add>, %331, %cst_118 [1] : vector<4x32xf32> to vector<4xf32>
    %334 = vector.shape_cast %333 : vector<4xf32> to vector<4x1xf32>
    %cst_119 = arith.constant 3.200000e+01 : f32
    %335 = vector.broadcast %cst_119 : f32 to vector<4x1xf32>
    %336 = arith.divf %334, %335 : vector<4x1xf32>
    %337 = vector.broadcast %336 : vector<4x1xf32> to vector<4x32xf32>
    %338 = arith.subf %331, %337 : vector<4x32xf32>
    %339 = arith.mulf %338, %338 : vector<4x32xf32>
    %cst_120 = arith.constant dense<0.000000e+00> : vector<4xf32>
    %340 = vector.multi_reduction <add>, %339, %cst_120 [1] : vector<4x32xf32> to vector<4xf32>
    %341 = vector.shape_cast %340 : vector<4xf32> to vector<4x1xf32>
    %cst_121 = arith.constant 3.200000e+01 : f32
    %342 = vector.broadcast %cst_121 : f32 to vector<4x1xf32>
    %343 = arith.divf %341, %342 : vector<4x1xf32>
    %344 = vector.broadcast %336 : vector<4x1xf32> to vector<4x32xf32>
    %345 = arith.subf %331, %344 : vector<4x32xf32>
    %cst_122 = arith.constant 9.99999997E-7 : f32
    %346 = vector.broadcast %cst_122 : f32 to vector<4x1xf32>
    %347 = arith.addf %343, %346 : vector<4x1xf32>
    %348 = math.sqrt %347 : vector<4x1xf32>
    %349 = vector.broadcast %348 : vector<4x1xf32> to vector<4x32xf32>
    %350 = arith.divf %345, %349 : vector<4x32xf32>
    %351 = vector.extract_strided_slice %332 {offsets = [0, 0], sizes = [1, 32], strides = [1, 1]} : vector<8x32xf32> to vector<1x32xf32>
    %352 = vector.broadcast %351 : vector<1x32xf32> to vector<4x32xf32>
    %353 = arith.mulf %350, %352 : vector<4x32xf32>
    %354 = vector.extract_strided_slice %332 {offsets = [1, 0], sizes = [1, 32], strides = [1, 1]} : vector<8x32xf32> to vector<1x32xf32>
    %355 = vector.broadcast %354 : vector<1x32xf32> to vector<4x32xf32>
    %356 = arith.addf %353, %355 : vector<4x32xf32>
    %c0_123 = arith.constant 0 : index
    %c0_124 = arith.constant 0 : index
    %357 = vector.load %arg7[%c0_123, %c0_124] : memref<32x96xf32, #tpu.memory_space<vmem>>, vector<32x96xf32>
    %cst_125 = arith.constant dense<0.000000e+00> : vector<4x96xf32>
    %358 = tpu.matmul %356, %357, %cst_125 {dimension_numbers = #tpu.dot_dimension_numbers<[1], [0], [0], [1], [0, 0, 1, 1], [], []>} : vector<4x32xf32>, vector<32x96xf32>, vector<4x96xf32> -> vector<4x96xf32>
    %c0_126 = arith.constant 0 : index
    %c0_127 = arith.constant 0 : index
    %359 = vector.load %arg11[%c0_126, %c0_127] : memref<3x96xf32, #tpu.memory_space<vmem>>, vector<1x96xf32>
    %360 = vector.broadcast %359 : vector<1x96xf32> to vector<4x96xf32>
    %361 = arith.addf %358, %360 : vector<4x96xf32>
    %362 = vector.extract_strided_slice %361 {offsets = [0, 0], sizes = [4, 32], strides = [1, 1]} : vector<4x96xf32> to vector<4x32xf32>
    %363 = vector.extract_strided_slice %361 {offsets = [0, 32], sizes = [4, 32], strides = [1, 1]} : vector<4x96xf32> to vector<4x32xf32>
    %364 = vector.extract_strided_slice %361 {offsets = [0, 64], sizes = [4, 32], strides = [1, 1]} : vector<4x96xf32> to vector<4x32xf32>
    %cst_128 = arith.constant dense<0.000000e+00> : vector<4x4xf32>
    %365 = tpu.matmul %362, %363, %cst_128 {dimension_numbers = #tpu.dot_dimension_numbers<[1], [1], [0], [0], [0, 0, 1, 0], [], []>} : vector<4x32xf32>, vector<4x32xf32>, vector<4x4xf32> -> vector<4x4xf32>
    %cst_129 = arith.constant 0.176776692 : f32
    %366 = vector.broadcast %cst_129 : f32 to vector<4x4xf32>
    %367 = arith.mulf %365, %366 : vector<4x4xf32>
    %c0_130 = arith.constant 0 : index
    %c0_131 = arith.constant 0 : index
    %368 = vector.load %arg2[%c0_130, %c0_131] : memref<4x4xf32, #tpu.memory_space<vmem>>, vector<4x4xf32>
    %cst_132 = arith.constant 5.000000e-01 : f32
    %369 = vector.broadcast %cst_132 : f32 to vector<4x4xf32>
    %370 = arith.cmpf ogt, %368, %369 : vector<4x4xf32>
    %cst_133 = arith.constant -1.000000e+30 : f32
    %371 = vector.broadcast %cst_133 : f32 to vector<4x4xf32>
    %372 = arith.select %370, %367, %371 : vector<4x4xi1>, vector<4x4xf32>
    %cst_134 = arith.constant dense<0xFF800000> : vector<4xf32>
    %373 = vector.multi_reduction <maximumf>, %372, %cst_134 [1] : vector<4x4xf32> to vector<4xf32>
    %374 = vector.shape_cast %373 : vector<4xf32> to vector<4x1xf32>
    %375 = vector.broadcast %374 : vector<4x1xf32> to vector<4x4xf32>
    %376 = arith.subf %372, %375 : vector<4x4xf32>
    %377 = math.exp %376 : vector<4x4xf32>
    %cst_135 = arith.constant dense<0.000000e+00> : vector<4xf32>
    %378 = vector.multi_reduction <add>, %377, %cst_135 [1] : vector<4x4xf32> to vector<4xf32>
    %379 = vector.shape_cast %378 : vector<4xf32> to vector<4x1xf32>
    %380 = vector.broadcast %379 : vector<4x1xf32> to vector<4x4xf32>
    %381 = arith.divf %377, %380 : vector<4x4xf32>
    %cst_136 = arith.constant dense<0.000000e+00> : vector<4x32xf32>
    %382 = tpu.matmul %381, %364, %cst_136 {dimension_numbers = #tpu.dot_dimension_numbers<[1], [0], [0], [1], [0, 0, 1, 1], [], []>} : vector<4x4xf32>, vector<4x32xf32>, vector<4x32xf32> -> vector<4x32xf32>
    %c0_137 = arith.constant 0 : index
    %c0_138 = arith.constant 0 : index
    %383 = vector.load %arg9[%c0_137, %c0_138] : memref<224x32xf32, #tpu.memory_space<vmem>>, vector<32x32xf32>
    %cst_139 = arith.constant dense<0.000000e+00> : vector<4x32xf32>
    %384 = tpu.matmul %382, %383, %cst_139 {dimension_numbers = #tpu.dot_dimension_numbers<[1], [0], [0], [1], [0, 0, 1, 1], [], []>} : vector<4x32xf32>, vector<32x32xf32>, vector<4x32xf32> -> vector<4x32xf32>
    %385 = vector.extract_strided_slice %332 {offsets = [2, 0], sizes = [1, 32], strides = [1, 1]} : vector<8x32xf32> to vector<1x32xf32>
    %386 = vector.broadcast %385 : vector<1x32xf32> to vector<4x32xf32>
    %387 = arith.addf %384, %386 : vector<4x32xf32>
    %388 = arith.addf %331, %387 : vector<4x32xf32>
    %c0_140 = arith.constant 0 : index
    %c0_141 = arith.constant 0 : index
    %389 = vector.load %arg12[%c0_140, %c0_141] : memref<4x32xf32, #tpu.memory_space<vmem>>, vector<4x32xf32>
    tpu.vector_store %arg12[%c0_140, %c0_141], %388 {strides = array<i32>} : memref<4x32xf32, #tpu.memory_space<vmem>>, vector<4x32xf32>,
    %c32 = arith.constant 32 : index
    %c0_142 = arith.constant 0 : index
    %390 = vector.load %arg9[%c32, %c0_142] : memref<224x32xf32, #tpu.memory_space<vmem>>, vector<32x32xf32>
    %cst_143 = arith.constant dense<0.000000e+00> : vector<4x32xf32>
    %391 = tpu.matmul %388, %390, %cst_143 {dimension_numbers = #tpu.dot_dimension_numbers<[1], [0], [0], [1], [0, 0, 1, 1], [], []>} : vector<4x32xf32>, vector<32x32xf32>, vector<4x32xf32> -> vector<4x32xf32>
    %392 = vector.extract_strided_slice %332 {offsets = [3, 0], sizes = [1, 32], strides = [1, 1]} : vector<8x32xf32> to vector<1x32xf32>
    %393 = vector.broadcast %392 : vector<1x32xf32> to vector<4x32xf32>
    %394 = arith.addf %391, %393 : vector<4x32xf32>
    %cst_144 = arith.constant 2.000000e+01 : f32
    %395 = vector.broadcast %cst_144 : f32 to vector<4x32xf32>
    %396 = arith.cmpf ogt, %394, %395 : vector<4x32xf32>
    %cst_145 = arith.constant 2.000000e+01 : f32
    %397 = vector.broadcast %cst_145 : f32 to vector<4x32xf32>
    %398 = arith.minimumf %394, %397 : vector<4x32xf32>
    %399 = math.exp %398 : vector<4x32xf32>
    %cst_146 = arith.constant 1.000000e+00 : f32
    %400 = vector.broadcast %cst_146 : f32 to vector<4x32xf32>
    %401 = arith.addf %400, %399 : vector<4x32xf32>
    %402 = math.log %401 : vector<4x32xf32>
    %403 = arith.select %396, %394, %402 : vector<4x32xi1>, vector<4x32xf32>
    %c64 = arith.constant 64 : index
    %c0_147 = arith.constant 0 : index
    %404 = vector.load %arg9[%c64, %c0_147] : memref<224x32xf32, #tpu.memory_space<vmem>>, vector<32x32xf32>
    %cst_148 = arith.constant dense<0.000000e+00> : vector<4x32xf32>
    %405 = tpu.matmul %403, %404, %cst_148 {dimension_numbers = #tpu.dot_dimension_numbers<[1], [0], [0], [1], [0, 0, 1, 1], [], []>} : vector<4x32xf32>, vector<32x32xf32>, vector<4x32xf32> -> vector<4x32xf32>
    %406 = vector.extract_strided_slice %332 {offsets = [4, 0], sizes = [1, 32], strides = [1, 1]} : vector<8x32xf32> to vector<1x32xf32>
    %407 = vector.broadcast %406 : vector<1x32xf32> to vector<4x32xf32>
    %408 = arith.addf %405, %407 : vector<4x32xf32>
    %cst_149 = arith.constant 2.000000e+01 : f32
    %409 = vector.broadcast %cst_149 : f32 to vector<4x32xf32>
    %410 = arith.cmpf ogt, %408, %409 : vector<4x32xf32>
    %cst_150 = arith.constant 2.000000e+01 : f32
    %411 = vector.broadcast %cst_150 : f32 to vector<4x32xf32>
    %412 = arith.minimumf %408, %411 : vector<4x32xf32>
    %413 = math.exp %412 : vector<4x32xf32>
    %cst_151 = arith.constant 1.000000e+00 : f32
    %414 = vector.broadcast %cst_151 : f32 to vector<4x32xf32>
    %415 = arith.addf %414, %413 : vector<4x32xf32>
    %416 = math.log %415 : vector<4x32xf32>
    %417 = arith.select %410, %408, %416 : vector<4x32xi1>, vector<4x32xf32>
    %c96 = arith.constant 96 : index
    %c0_152 = arith.constant 0 : index
    %418 = vector.load %arg9[%c96, %c0_152] : memref<224x32xf32, #tpu.memory_space<vmem>>, vector<32x32xf32>
    %cst_153 = arith.constant dense<0.000000e+00> : vector<4x32xf32>
    %419 = tpu.matmul %417, %418, %cst_153 {dimension_numbers = #tpu.dot_dimension_numbers<[1], [0], [0], [1], [0, 0, 1, 1], [], []>} : vector<4x32xf32>, vector<32x32xf32>, vector<4x32xf32> -> vector<4x32xf32>
    %420 = vector.extract_strided_slice %332 {offsets = [5, 0], sizes = [1, 32], strides = [1, 1]} : vector<8x32xf32> to vector<1x32xf32>
    %421 = vector.broadcast %420 : vector<1x32xf32> to vector<4x32xf32>
    %422 = arith.addf %419, %421 : vector<4x32xf32>
    %c0_154 = arith.constant 0 : index
    %c0_155 = arith.constant 0 : index
    %423 = vector.load %arg3[%c0_154, %c0_155] : memref<12x4xf32, #tpu.memory_space<vmem>>, vector<12x4xf32>
    %cst_156 = arith.constant dense<0.000000e+00> : vector<12x32xf32>
    %424 = tpu.matmul %423, %422, %cst_156 {dimension_numbers = #tpu.dot_dimension_numbers<[1], [0], [0], [1], [0, 0, 1, 1], [], []>} : vector<12x4xf32>, vector<4x32xf32>, vector<12x32xf32> -> vector<12x32xf32>
    %c0_157 = arith.constant 0 : index
    %c0_158 = arith.constant 0 : index
    %425 = vector.load %arg4[%c0_157, %c0_158] : memref<4x4xf32, #tpu.memory_space<vmem>>, vector<4x4xf32>
    %cst_159 = arith.constant dense<0.000000e+00> : vector<12x4xf32>
    %426 = tpu.matmul %423, %425, %cst_159 {dimension_numbers = #tpu.dot_dimension_numbers<[1], [0], [0], [1], [0, 0, 1, 1], [], []>} : vector<12x4xf32>, vector<4x4xf32>, vector<12x4xf32> -> vector<12x4xf32>
    %427 = vector.extract_strided_slice %426 {offsets = [0, 0], sizes = [12, 2], strides = [1, 1]} : vector<12x4xf32> to vector<12x2xf32>
    %428 = vector.extract_strided_slice %426 {offsets = [0, 2], sizes = [12, 2], strides = [1, 1]} : vector<12x4xf32> to vector<12x2xf32>
    %c1_160 = arith.constant 1 : index
    %c0_161 = arith.constant 0 : index
    %429 = vector.load %arg11[%c1_160, %c0_161] : memref<3x96xf32, #tpu.memory_space<vmem>>, vector<1x96xf32>
    %c2_162 = arith.constant 2 : index
    %c0_163 = arith.constant 0 : index
    %430 = vector.load %arg11[%c2_162, %c0_163] : memref<3x96xf32, #tpu.memory_space<vmem>>, vector<1x96xf32>
    %c128 = arith.constant 128 : index
    %c0_164 = arith.constant 0 : index
    %431 = vector.load %arg9[%c128, %c0_164] : memref<224x32xf32, #tpu.memory_space<vmem>>, vector<32x32xf32>
    %c160 = arith.constant 160 : index
    %c0_165 = arith.constant 0 : index
    %432 = vector.load %arg9[%c160, %c0_165] : memref<224x32xf32, #tpu.memory_space<vmem>>, vector<32x32xf32>
    %c192 = arith.constant 192 : index
    %c0_166 = arith.constant 0 : index
    %433 = vector.load %arg9[%c192, %c0_166] : memref<224x32xf32, #tpu.memory_space<vmem>>, vector<32x32xf32>
    %434 = vector.extract_strided_slice %332 {offsets = [6, 0], sizes = [1, 32], strides = [1, 1]} : vector<8x32xf32> to vector<1x32xf32>
    %435 = vector.extract_strided_slice %332 {offsets = [7, 0], sizes = [1, 32], strides = [1, 1]} : vector<8x32xf32> to vector<1x32xf32>
    %c0_167 = arith.constant 0 : index
    %c0_168 = arith.constant 0 : index
    %436 = vector.load %arg5[%c0_167, %c0_168] : memref<12x16xf32, #tpu.memory_space<vmem>>, vector<12x16xf32>
    %cst_169 = arith.constant 0.000000e+00 : f32
    %437 = vector.broadcast %cst_169 : f32 to vector<12x32xf32>
    %cst_170 = arith.constant 0.000000e+00 : f32
    %438 = vector.broadcast %cst_170 : f32 to vector<12x2xf32>
    %cst_171 = arith.constant 0.000000e+00 : f32
    %439 = vector.broadcast %cst_171 : f32 to vector<12x4xf32>
    %440 = tpu.concatenate %427, %438, %438, %438, %438, %438, %439, %437 in 1 : vector<12x2xf32>, vector<12x2xf32>, vector<12x2xf32>, vector<12x2xf32>, vector<12x2xf32>, vector<12x2xf32>, vector<12x4xf32>, vector<12x32xf32> -> vector<12x48xf32>
    %c0_172 = arith.constant 0 : index
    %c0_173 = arith.constant 0 : index
    %441 = vector.load %arg8[%c0_172, %c0_173] : memref<48x224xf32, #tpu.memory_space<vmem>>, vector<48x224xf32>
    %cst_174 = arith.constant dense<0.000000e+00> : vector<12x224xf32>
    %442 = tpu.matmul %440, %441, %cst_174 {dimension_numbers = #tpu.dot_dimension_numbers<[1], [0], [0], [1], [0, 0, 1, 1], [], []>} : vector<12x48xf32>, vector<48x224xf32>, vector<12x224xf32> -> vector<12x224xf32>
    %443 = vector.extract_strided_slice %442 {offsets = [0, 0], sizes = [12, 96], strides = [1, 1]} : vector<12x224xf32> to vector<12x96xf32>
    %444 = vector.broadcast %429 : vector<1x96xf32> to vector<12x96xf32>
    %445 = arith.addf %443, %444 : vector<12x96xf32>
    %446 = vector.extract_strided_slice %442 {offsets = [0, 128], sizes = [12, 96], strides = [1, 1]} : vector<12x224xf32> to vector<12x96xf32>
    %447 = vector.broadcast %430 : vector<1x96xf32> to vector<12x96xf32>
    %448 = arith.addf %446, %447 : vector<12x96xf32>
    %449 = vector.extract_strided_slice %445 {offsets = [0, 0], sizes = [12, 32], strides = [1, 1]} : vector<12x96xf32> to vector<12x32xf32>
    %450 = vector.extract_strided_slice %448 {offsets = [0, 0], sizes = [12, 32], strides = [1, 1]} : vector<12x96xf32> to vector<12x32xf32>
    %451 = arith.addf %449, %450 : vector<12x32xf32>
    %cst_175 = arith.constant 5.000000e-01 : f32
    %452 = vector.broadcast %cst_175 : f32 to vector<12x32xf32>
    %453 = arith.mulf %452, %451 : vector<12x32xf32>
    %454 = math.tanh %453 : vector<12x32xf32>
    %cst_176 = arith.constant 1.000000e+00 : f32
    %455 = vector.broadcast %cst_176 : f32 to vector<12x32xf32>
    %456 = arith.addf %454, %455 : vector<12x32xf32>
    %cst_177 = arith.constant 5.000000e-01 : f32
    %457 = vector.broadcast %cst_177 : f32 to vector<12x32xf32>
    %458 = arith.mulf %457, %456 : vector<12x32xf32>
    %459 = vector.extract_strided_slice %445 {offsets = [0, 32], sizes = [12, 32], strides = [1, 1]} : vector<12x96xf32> to vector<12x32xf32>
    %460 = vector.extract_strided_slice %448 {offsets = [0, 32], sizes = [12, 32], strides = [1, 1]} : vector<12x96xf32> to vector<12x32xf32>
    %461 = arith.addf %459, %460 : vector<12x32xf32>
    %cst_178 = arith.constant 5.000000e-01 : f32
    %462 = vector.broadcast %cst_178 : f32 to vector<12x32xf32>
    %463 = arith.mulf %462, %461 : vector<12x32xf32>
    %464 = math.tanh %463 : vector<12x32xf32>
    %cst_179 = arith.constant 1.000000e+00 : f32
    %465 = vector.broadcast %cst_179 : f32 to vector<12x32xf32>
    %466 = arith.addf %464, %465 : vector<12x32xf32>
    %cst_180 = arith.constant 5.000000e-01 : f32
    %467 = vector.broadcast %cst_180 : f32 to vector<12x32xf32>
    %468 = arith.mulf %467, %466 : vector<12x32xf32>
    %469 = vector.extract_strided_slice %445 {offsets = [0, 64], sizes = [12, 32], strides = [1, 1]} : vector<12x96xf32> to vector<12x32xf32>
    %470 = vector.extract_strided_slice %448 {offsets = [0, 64], sizes = [12, 32], strides = [1, 1]} : vector<12x96xf32> to vector<12x32xf32>
    %471 = arith.mulf %458, %470 : vector<12x32xf32>
    %472 = arith.addf %469, %471 : vector<12x32xf32>
    %473 = math.tanh %472 : vector<12x32xf32>
    %cst_181 = arith.constant 1.000000e+00 : f32
    %474 = vector.broadcast %cst_181 : f32 to vector<12x32xf32>
    %475 = arith.subf %474, %468 : vector<12x32xf32>
    %476 = arith.mulf %475, %473 : vector<12x32xf32>
    %477 = arith.mulf %468, %437 : vector<12x32xf32>
    %478 = arith.addf %476, %477 : vector<12x32xf32>
    %cst_182 = arith.constant dense<0.000000e+00> : vector<12x32xf32>
    %479 = tpu.matmul %478, %431, %cst_182 {dimension_numbers = #tpu.dot_dimension_numbers<[1], [0], [0], [1], [0, 0, 1, 1], [], []>} : vector<12x32xf32>, vector<32x32xf32>, vector<12x32xf32> -> vector<12x32xf32>
    %480 = arith.addf %479, %424 : vector<12x32xf32>
    %cst_183 = arith.constant 2.000000e+01 : f32
    %481 = vector.broadcast %cst_183 : f32 to vector<12x32xf32>
    %482 = arith.cmpf ogt, %480, %481 : vector<12x32xf32>
    %cst_184 = arith.constant 2.000000e+01 : f32
    %483 = vector.broadcast %cst_184 : f32 to vector<12x32xf32>
    %484 = arith.minimumf %480, %483 : vector<12x32xf32>
    %485 = math.exp %484 : vector<12x32xf32>
    %cst_185 = arith.constant 1.000000e+00 : f32
    %486 = vector.broadcast %cst_185 : f32 to vector<12x32xf32>
    %487 = arith.addf %486, %485 : vector<12x32xf32>
    %488 = math.log %487 : vector<12x32xf32>
    %489 = arith.select %482, %480, %488 : vector<12x32xi1>, vector<12x32xf32>
    %cst_186 = arith.constant dense<0.000000e+00> : vector<12x32xf32>
    %490 = tpu.matmul %489, %432, %cst_186 {dimension_numbers = #tpu.dot_dimension_numbers<[1], [0], [0], [1], [0, 0, 1, 1], [], []>} : vector<12x32xf32>, vector<32x32xf32>, vector<12x32xf32> -> vector<12x32xf32>
    %491 = vector.broadcast %434 : vector<1x32xf32> to vector<12x32xf32>
    %492 = arith.addf %490, %491 : vector<12x32xf32>
    %cst_187 = arith.constant 2.000000e+01 : f32
    %493 = vector.broadcast %cst_187 : f32 to vector<12x32xf32>
    %494 = arith.cmpf ogt, %492, %493 : vector<12x32xf32>
    %cst_188 = arith.constant 2.000000e+01 : f32
    %495 = vector.broadcast %cst_188 : f32 to vector<12x32xf32>
    %496 = arith.minimumf %492, %495 : vector<12x32xf32>
    %497 = math.exp %496 : vector<12x32xf32>
    %cst_189 = arith.constant 1.000000e+00 : f32
    %498 = vector.broadcast %cst_189 : f32 to vector<12x32xf32>
    %499 = arith.addf %498, %497 : vector<12x32xf32>
    %500 = math.log %499 : vector<12x32xf32>
    %501 = arith.select %494, %492, %500 : vector<12x32xi1>, vector<12x32xf32>
    %cst_190 = arith.constant dense<0.000000e+00> : vector<12x32xf32>
    %502 = tpu.matmul %501, %433, %cst_190 {dimension_numbers = #tpu.dot_dimension_numbers<[1], [0], [0], [1], [0, 0, 1, 1], [], []>} : vector<12x32xf32>, vector<32x32xf32>, vector<12x32xf32> -> vector<12x32xf32>
    %503 = vector.broadcast %435 : vector<1x32xf32> to vector<12x32xf32>
    %504 = arith.addf %502, %503 : vector<12x32xf32>
    %cst_191 = arith.constant 5.000000e-01 : f32
    %505 = vector.broadcast %cst_191 : f32 to vector<12x2xf32>
    %506 = arith.mulf %505, %428 : vector<12x2xf32>
    %507 = arith.addf %427, %506 : vector<12x2xf32>
    %508 = vector.extract_strided_slice %504 {offsets = [0, 0], sizes = [12, 2], strides = [1, 1]} : vector<12x32xf32> to vector<12x2xf32>
    %509 = arith.addf %507, %508 : vector<12x2xf32>
    %510 = vector.extract_strided_slice %504 {offsets = [0, 2], sizes = [12, 1], strides = [1, 1]} : vector<12x32xf32> to vector<12x1xf32>
    %511 = vector.extract_strided_slice %504 {offsets = [0, 3], sizes = [12, 1], strides = [1, 1]} : vector<12x32xf32> to vector<12x1xf32>
    %512 = vector.extract_strided_slice %504 {offsets = [0, 4], sizes = [12, 1], strides = [1, 1]} : vector<12x32xf32> to vector<12x1xf32>
    %513 = vector.extract_strided_slice %504 {offsets = [0, 5], sizes = [12, 1], strides = [1, 1]} : vector<12x32xf32> to vector<12x1xf32>
    %514 = arith.addf %510, %513 : vector<12x1xf32>
    %cst_192 = arith.constant 5.000000e-01 : f32
    %515 = vector.broadcast %cst_192 : f32 to vector<12x1xf32>
    %516 = arith.mulf %515, %514 : vector<12x1xf32>
    %517 = arith.subf %510, %513 : vector<12x1xf32>
    %cst_193 = arith.constant 5.000000e-01 : f32
    %518 = vector.broadcast %cst_193 : f32 to vector<12x1xf32>
    %519 = arith.mulf %518, %517 : vector<12x1xf32>
    %520 = arith.mulf %519, %519 : vector<12x1xf32>
    %521 = arith.mulf %511, %512 : vector<12x1xf32>
    %522 = arith.addf %520, %521 : vector<12x1xf32>
    %cst_194 = arith.constant 2.44140625E-4 : f32
    %523 = vector.broadcast %cst_194 : f32 to vector<12x1xf32>
    %524 = arith.mulf %522, %523 : vector<12x1xf32>
    %cst_195 = arith.constant 2.48015876E-5 : f32
    %525 = vector.broadcast %cst_195 : f32 to vector<12x1xf32>
    %526 = arith.mulf %524, %525 : vector<12x1xf32>
    %cst_196 = arith.constant 0.00138888892 : f32
    %527 = vector.broadcast %cst_196 : f32 to vector<12x1xf32>
    %528 = arith.addf %527, %526 : vector<12x1xf32>
    %529 = arith.mulf %524, %528 : vector<12x1xf32>
    %cst_197 = arith.constant 0.0416666679 : f32
    %530 = vector.broadcast %cst_197 : f32 to vector<12x1xf32>
    %531 = arith.addf %530, %529 : vector<12x1xf32>
    %532 = arith.mulf %524, %531 : vector<12x1xf32>
    %cst_198 = arith.constant 5.000000e-01 : f32
    %533 = vector.broadcast %cst_198 : f32 to vector<12x1xf32>
    %534 = arith.addf %533, %532 : vector<12x1xf32>
    %535 = arith.mulf %524, %534 : vector<12x1xf32>
    %cst_199 = arith.constant 1.000000e+00 : f32
    %536 = vector.broadcast %cst_199 : f32 to vector<12x1xf32>
    %537 = arith.addf %536, %535 : vector<12x1xf32>
    %cst_200 = arith.constant 2.75573188E-6 : f32
    %538 = vector.broadcast %cst_200 : f32 to vector<12x1xf32>
    %539 = arith.mulf %524, %538 : vector<12x1xf32>
    %cst_201 = arith.constant 1.98412701E-4 : f32
    %540 = vector.broadcast %cst_201 : f32 to vector<12x1xf32>
    %541 = arith.addf %540, %539 : vector<12x1xf32>
    %542 = arith.mulf %524, %541 : vector<12x1xf32>
    %cst_202 = arith.constant 0.00833333377 : f32
    %543 = vector.broadcast %cst_202 : f32 to vector<12x1xf32>
    %544 = arith.addf %543, %542 : vector<12x1xf32>
    %545 = arith.mulf %524, %544 : vector<12x1xf32>
    %cst_203 = arith.constant 0.166666672 : f32
    %546 = vector.broadcast %cst_203 : f32 to vector<12x1xf32>
    %547 = arith.addf %546, %545 : vector<12x1xf32>
    %548 = arith.mulf %524, %547 : vector<12x1xf32>
    %cst_204 = arith.constant 1.000000e+00 : f32
    %549 = vector.broadcast %cst_204 : f32 to vector<12x1xf32>
    %550 = arith.addf %549, %548 : vector<12x1xf32>
    %551 = arith.mulf %550, %537 : vector<12x1xf32>
    %cst_205 = arith.constant 2.000000e+00 : f32
    %552 = vector.broadcast %cst_205 : f32 to vector<12x1xf32>
    %553 = arith.mulf %552, %537 : vector<12x1xf32>
    %554 = arith.mulf %553, %537 : vector<12x1xf32>
    %cst_206 = arith.constant 1.000000e+00 : f32
    %555 = vector.broadcast %cst_206 : f32 to vector<12x1xf32>
    %556 = arith.subf %554, %555 : vector<12x1xf32>
    %557 = arith.mulf %551, %556 : vector<12x1xf32>
    %cst_207 = arith.constant 2.000000e+00 : f32
    %558 = vector.broadcast %cst_207 : f32 to vector<12x1xf32>
    %559 = arith.mulf %558, %556 : vector<12x1xf32>
    %560 = arith.mulf %559, %556 : vector<12x1xf32>
    %cst_208 = arith.constant 1.000000e+00 : f32
    %561 = vector.broadcast %cst_208 : f32 to vector<12x1xf32>
    %562 = arith.subf %560, %561 : vector<12x1xf32>
    %563 = arith.mulf %557, %562 : vector<12x1xf32>
    %cst_209 = arith.constant 2.000000e+00 : f32
    %564 = vector.broadcast %cst_209 : f32 to vector<12x1xf32>
    %565 = arith.mulf %564, %562 : vector<12x1xf32>
    %566 = arith.mulf %565, %562 : vector<12x1xf32>
    %cst_210 = arith.constant 1.000000e+00 : f32
    %567 = vector.broadcast %cst_210 : f32 to vector<12x1xf32>
    %568 = arith.subf %566, %567 : vector<12x1xf32>
    %569 = arith.mulf %563, %568 : vector<12x1xf32>
    %cst_211 = arith.constant 2.000000e+00 : f32
    %570 = vector.broadcast %cst_211 : f32 to vector<12x1xf32>
    %571 = arith.mulf %570, %568 : vector<12x1xf32>
    %572 = arith.mulf %571, %568 : vector<12x1xf32>
    %cst_212 = arith.constant 1.000000e+00 : f32
    %573 = vector.broadcast %cst_212 : f32 to vector<12x1xf32>
    %574 = arith.subf %572, %573 : vector<12x1xf32>
    %575 = arith.mulf %569, %574 : vector<12x1xf32>
    %cst_213 = arith.constant 2.000000e+00 : f32
    %576 = vector.broadcast %cst_213 : f32 to vector<12x1xf32>
    %577 = arith.mulf %576, %574 : vector<12x1xf32>
    %578 = arith.mulf %577, %574 : vector<12x1xf32>
    %cst_214 = arith.constant 1.000000e+00 : f32
    %579 = vector.broadcast %cst_214 : f32 to vector<12x1xf32>
    %580 = arith.subf %578, %579 : vector<12x1xf32>
    %581 = arith.mulf %575, %580 : vector<12x1xf32>
    %cst_215 = arith.constant 2.000000e+00 : f32
    %582 = vector.broadcast %cst_215 : f32 to vector<12x1xf32>
    %583 = arith.mulf %582, %580 : vector<12x1xf32>
    %584 = arith.mulf %583, %580 : vector<12x1xf32>
    %cst_216 = arith.constant 1.000000e+00 : f32
    %585 = vector.broadcast %cst_216 : f32 to vector<12x1xf32>
    %586 = arith.subf %584, %585 : vector<12x1xf32>
    %587 = math.exp %516 : vector<12x1xf32>
    %588 = arith.mulf %581, %519 : vector<12x1xf32>
    %589 = arith.addf %586, %588 : vector<12x1xf32>
    %590 = arith.mulf %587, %589 : vector<12x1xf32>
    %591 = arith.mulf %581, %511 : vector<12x1xf32>
    %592 = arith.mulf %587, %591 : vector<12x1xf32>
    %593 = arith.mulf %581, %512 : vector<12x1xf32>
    %594 = arith.mulf %587, %593 : vector<12x1xf32>
    %595 = arith.mulf %581, %519 : vector<12x1xf32>
    %596 = arith.subf %586, %595 : vector<12x1xf32>
    %597 = arith.mulf %587, %596 : vector<12x1xf32>
    %598 = vector.extract_strided_slice %436 {offsets = [0, 0], sizes = [12, 1], strides = [1, 1]} : vector<12x16xf32> to vector<12x1xf32>
    %599 = vector.extract_strided_slice %436 {offsets = [0, 1], sizes = [12, 1], strides = [1, 1]} : vector<12x16xf32> to vector<12x1xf32>
    %600 = vector.extract_strided_slice %509 {offsets = [0, 0], sizes = [12, 1], strides = [1, 1]} : vector<12x2xf32> to vector<12x1xf32>
    %601 = arith.mulf %590, %598 : vector<12x1xf32>
    %602 = arith.addf %600, %601 : vector<12x1xf32>
    %603 = arith.mulf %592, %599 : vector<12x1xf32>
    %604 = arith.addf %602, %603 : vector<12x1xf32>
    %605 = vector.extract_strided_slice %509 {offsets = [0, 1], sizes = [12, 1], strides = [1, 1]} : vector<12x2xf32> to vector<12x1xf32>
    %606 = arith.mulf %594, %598 : vector<12x1xf32>
    %607 = arith.addf %605, %606 : vector<12x1xf32>
    %608 = arith.mulf %597, %599 : vector<12x1xf32>
    %609 = arith.addf %607, %608 : vector<12x1xf32>
    %610 = vector.extract_strided_slice %509 {offsets = [0, 0], sizes = [12, 1], strides = [1, 1]} : vector<12x2xf32> to vector<12x1xf32>
    %611 = vector.extract_strided_slice %509 {offsets = [0, 1], sizes = [12, 1], strides = [1, 1]} : vector<12x2xf32> to vector<12x1xf32>
    %612 = tpu.concatenate %604, %609, %610, %611, %590, %592, %594, %597 in 1 : vector<12x1xf32>, vector<12x1xf32>, vector<12x1xf32>, vector<12x1xf32>, vector<12x1xf32>, vector<12x1xf32>, vector<12x1xf32>, vector<12x1xf32> -> vector<12x8xf32>
    %c0_217 = arith.constant 0 : index
    %c0_218 = arith.constant 0 : index
    %613 = vector.load %arg13[%c0_217, %c0_218] : memref<12x64xf32, #tpu.memory_space<vmem>>, vector<12x8xf32>
    tpu.vector_store %arg13[%c0_217, %c0_218], %612 {strides = array<i32>} : memref<12x64xf32, #tpu.memory_space<vmem>>, vector<12x8xf32>,
    %614 = tpu.concatenate %604, %609 in 1 : vector<12x1xf32>, vector<12x1xf32> -> vector<12x2xf32>
    %615 = arith.subf %614, %427 : vector<12x2xf32>
    %616 = tpu.concatenate %427, %614, %438, %438, %438, %438, %439, %478 in 1 : vector<12x2xf32>, vector<12x2xf32>, vector<12x2xf32>, vector<12x2xf32>, vector<12x2xf32>, vector<12x2xf32>, vector<12x4xf32>, vector<12x32xf32> -> vector<12x48xf32>
    %c0_219 = arith.constant 0 : index
    %c0_220 = arith.constant 0 : index
    %617 = vector.load %arg8[%c0_219, %c0_220] : memref<48x224xf32, #tpu.memory_space<vmem>>, vector<48x224xf32>
    %cst_221 = arith.constant dense<0.000000e+00> : vector<12x224xf32>
    %618 = tpu.matmul %616, %617, %cst_221 {dimension_numbers = #tpu.dot_dimension_numbers<[1], [0], [0], [1], [0, 0, 1, 1], [], []>} : vector<12x48xf32>, vector<48x224xf32>, vector<12x224xf32> -> vector<12x224xf32>
    %619 = vector.extract_strided_slice %618 {offsets = [0, 0], sizes = [12, 96], strides = [1, 1]} : vector<12x224xf32> to vector<12x96xf32>
    %620 = vector.broadcast %429 : vector<1x96xf32> to vector<12x96xf32>
    %621 = arith.addf %619, %620 : vector<12x96xf32>
    %622 = vector.extract_strided_slice %618 {offsets = [0, 128], sizes = [12, 96], strides = [1, 1]} : vector<12x224xf32> to vector<12x96xf32>
    %623 = vector.broadcast %430 : vector<1x96xf32> to vector<12x96xf32>
    %624 = arith.addf %622, %623 : vector<12x96xf32>
    %625 = vector.extract_strided_slice %621 {offsets = [0, 0], sizes = [12, 32], strides = [1, 1]} : vector<12x96xf32> to vector<12x32xf32>
    %626 = vector.extract_strided_slice %624 {offsets = [0, 0], sizes = [12, 32], strides = [1, 1]} : vector<12x96xf32> to vector<12x32xf32>
    %627 = arith.addf %625, %626 : vector<12x32xf32>
    %cst_222 = arith.constant 5.000000e-01 : f32
    %628 = vector.broadcast %cst_222 : f32 to vector<12x32xf32>
    %629 = arith.mulf %628, %627 : vector<12x32xf32>
    %630 = math.tanh %629 : vector<12x32xf32>
    %cst_223 = arith.constant 1.000000e+00 : f32
    %631 = vector.broadcast %cst_223 : f32 to vector<12x32xf32>
    %632 = arith.addf %630, %631 : vector<12x32xf32>
    %cst_224 = arith.constant 5.000000e-01 : f32
    %633 = vector.broadcast %cst_224 : f32 to vector<12x32xf32>
    %634 = arith.mulf %633, %632 : vector<12x32xf32>
    %635 = vector.extract_strided_slice %621 {offsets = [0, 32], sizes = [12, 32], strides = [1, 1]} : vector<12x96xf32> to vector<12x32xf32>
    %636 = vector.extract_strided_slice %624 {offsets = [0, 32], sizes = [12, 32], strides = [1, 1]} : vector<12x96xf32> to vector<12x32xf32>
    %637 = arith.addf %635, %636 : vector<12x32xf32>
    %cst_225 = arith.constant 5.000000e-01 : f32
    %638 = vector.broadcast %cst_225 : f32 to vector<12x32xf32>
    %639 = arith.mulf %638, %637 : vector<12x32xf32>
    %640 = math.tanh %639 : vector<12x32xf32>
    %cst_226 = arith.constant 1.000000e+00 : f32
    %641 = vector.broadcast %cst_226 : f32 to vector<12x32xf32>
    %642 = arith.addf %640, %641 : vector<12x32xf32>
    %cst_227 = arith.constant 5.000000e-01 : f32
    %643 = vector.broadcast %cst_227 : f32 to vector<12x32xf32>
    %644 = arith.mulf %643, %642 : vector<12x32xf32>
    %645 = vector.extract_strided_slice %621 {offsets = [0, 64], sizes = [12, 32], strides = [1, 1]} : vector<12x96xf32> to vector<12x32xf32>
    %646 = vector.extract_strided_slice %624 {offsets = [0, 64], sizes = [12, 32], strides = [1, 1]} : vector<12x96xf32> to vector<12x32xf32>
    %647 = arith.mulf %634, %646 : vector<12x32xf32>
    %648 = arith.addf %645, %647 : vector<12x32xf32>
    %649 = math.tanh %648 : vector<12x32xf32>
    %cst_228 = arith.constant 1.000000e+00 : f32
    %650 = vector.broadcast %cst_228 : f32 to vector<12x32xf32>
    %651 = arith.subf %650, %644 : vector<12x32xf32>
    %652 = arith.mulf %651, %649 : vector<12x32xf32>
    %653 = arith.mulf %644, %478 : vector<12x32xf32>
    %654 = arith.addf %652, %653 : vector<12x32xf32>
    %cst_229 = arith.constant dense<0.000000e+00> : vector<12x32xf32>
    %655 = tpu.matmul %654, %431, %cst_229 {dimension_numbers = #tpu.dot_dimension_numbers<[1], [0], [0], [1], [0, 0, 1, 1], [], []>} : vector<12x32xf32>, vector<32x32xf32>, vector<12x32xf32> -> vector<12x32xf32>
    %656 = arith.addf %655, %424 : vector<12x32xf32>
    %cst_230 = arith.constant 2.000000e+01 : f32
    %657 = vector.broadcast %cst_230 : f32 to vector<12x32xf32>
    %658 = arith.cmpf ogt, %656, %657 : vector<12x32xf32>
    %cst_231 = arith.constant 2.000000e+01 : f32
    %659 = vector.broadcast %cst_231 : f32 to vector<12x32xf32>
    %660 = arith.minimumf %656, %659 : vector<12x32xf32>
    %661 = math.exp %660 : vector<12x32xf32>
    %cst_232 = arith.constant 1.000000e+00 : f32
    %662 = vector.broadcast %cst_232 : f32 to vector<12x32xf32>
    %663 = arith.addf %662, %661 : vector<12x32xf32>
    %664 = math.log %663 : vector<12x32xf32>
    %665 = arith.select %658, %656, %664 : vector<12x32xi1>, vector<12x32xf32>
    %cst_233 = arith.constant dense<0.000000e+00> : vector<12x32xf32>
    %666 = tpu.matmul %665, %432, %cst_233 {dimension_numbers = #tpu.dot_dimension_numbers<[1], [0], [0], [1], [0, 0, 1, 1], [], []>} : vector<12x32xf32>, vector<32x32xf32>, vector<12x32xf32> -> vector<12x32xf32>
    %667 = vector.broadcast %434 : vector<1x32xf32> to vector<12x32xf32>
    %668 = arith.addf %666, %667 : vector<12x32xf32>
    %cst_234 = arith.constant 2.000000e+01 : f32
    %669 = vector.broadcast %cst_234 : f32 to vector<12x32xf32>
    %670 = arith.cmpf ogt, %668, %669 : vector<12x32xf32>
    %cst_235 = arith.constant 2.000000e+01 : f32
    %671 = vector.broadcast %cst_235 : f32 to vector<12x32xf32>
    %672 = arith.minimumf %668, %671 : vector<12x32xf32>
    %673 = math.exp %672 : vector<12x32xf32>
    %cst_236 = arith.constant 1.000000e+00 : f32
    %674 = vector.broadcast %cst_236 : f32 to vector<12x32xf32>
    %675 = arith.addf %674, %673 : vector<12x32xf32>
    %676 = math.log %675 : vector<12x32xf32>
    %677 = arith.select %670, %668, %676 : vector<12x32xi1>, vector<12x32xf32>
    %cst_237 = arith.constant dense<0.000000e+00> : vector<12x32xf32>
    %678 = tpu.matmul %677, %433, %cst_237 {dimension_numbers = #tpu.dot_dimension_numbers<[1], [0], [0], [1], [0, 0, 1, 1], [], []>} : vector<12x32xf32>, vector<32x32xf32>, vector<12x32xf32> -> vector<12x32xf32>
    %679 = vector.broadcast %435 : vector<1x32xf32> to vector<12x32xf32>
    %680 = arith.addf %678, %679 : vector<12x32xf32>
    %cst_238 = arith.constant 5.000000e-01 : f32
    %681 = vector.broadcast %cst_238 : f32 to vector<12x2xf32>
    %682 = arith.mulf %681, %615 : vector<12x2xf32>
    %683 = arith.addf %614, %682 : vector<12x2xf32>
    %684 = vector.extract_strided_slice %680 {offsets = [0, 0], sizes = [12, 2], strides = [1, 1]} : vector<12x32xf32> to vector<12x2xf32>
    %685 = arith.addf %683, %684 : vector<12x2xf32>
    %686 = vector.extract_strided_slice %680 {offsets = [0, 2], sizes = [12, 1], strides = [1, 1]} : vector<12x32xf32> to vector<12x1xf32>
    %687 = vector.extract_strided_slice %680 {offsets = [0, 3], sizes = [12, 1], strides = [1, 1]} : vector<12x32xf32> to vector<12x1xf32>
    %688 = vector.extract_strided_slice %680 {offsets = [0, 4], sizes = [12, 1], strides = [1, 1]} : vector<12x32xf32> to vector<12x1xf32>
    %689 = vector.extract_strided_slice %680 {offsets = [0, 5], sizes = [12, 1], strides = [1, 1]} : vector<12x32xf32> to vector<12x1xf32>
    %690 = arith.addf %686, %689 : vector<12x1xf32>
    %cst_239 = arith.constant 5.000000e-01 : f32
    %691 = vector.broadcast %cst_239 : f32 to vector<12x1xf32>
    %692 = arith.mulf %691, %690 : vector<12x1xf32>
    %693 = arith.subf %686, %689 : vector<12x1xf32>
    %cst_240 = arith.constant 5.000000e-01 : f32
    %694 = vector.broadcast %cst_240 : f32 to vector<12x1xf32>
    %695 = arith.mulf %694, %693 : vector<12x1xf32>
    %696 = arith.mulf %695, %695 : vector<12x1xf32>
    %697 = arith.mulf %687, %688 : vector<12x1xf32>
    %698 = arith.addf %696, %697 : vector<12x1xf32>
    %cst_241 = arith.constant 2.44140625E-4 : f32
    %699 = vector.broadcast %cst_241 : f32 to vector<12x1xf32>
    %700 = arith.mulf %698, %699 : vector<12x1xf32>
    %cst_242 = arith.constant 2.48015876E-5 : f32
    %701 = vector.broadcast %cst_242 : f32 to vector<12x1xf32>
    %702 = arith.mulf %700, %701 : vector<12x1xf32>
    %cst_243 = arith.constant 0.00138888892 : f32
    %703 = vector.broadcast %cst_243 : f32 to vector<12x1xf32>
    %704 = arith.addf %703, %702 : vector<12x1xf32>
    %705 = arith.mulf %700, %704 : vector<12x1xf32>
    %cst_244 = arith.constant 0.0416666679 : f32
    %706 = vector.broadcast %cst_244 : f32 to vector<12x1xf32>
    %707 = arith.addf %706, %705 : vector<12x1xf32>
    %708 = arith.mulf %700, %707 : vector<12x1xf32>
    %cst_245 = arith.constant 5.000000e-01 : f32
    %709 = vector.broadcast %cst_245 : f32 to vector<12x1xf32>
    %710 = arith.addf %709, %708 : vector<12x1xf32>
    %711 = arith.mulf %700, %710 : vector<12x1xf32>
    %cst_246 = arith.constant 1.000000e+00 : f32
    %712 = vector.broadcast %cst_246 : f32 to vector<12x1xf32>
    %713 = arith.addf %712, %711 : vector<12x1xf32>
    %cst_247 = arith.constant 2.75573188E-6 : f32
    %714 = vector.broadcast %cst_247 : f32 to vector<12x1xf32>
    %715 = arith.mulf %700, %714 : vector<12x1xf32>
    %cst_248 = arith.constant 1.98412701E-4 : f32
    %716 = vector.broadcast %cst_248 : f32 to vector<12x1xf32>
    %717 = arith.addf %716, %715 : vector<12x1xf32>
    %718 = arith.mulf %700, %717 : vector<12x1xf32>
    %cst_249 = arith.constant 0.00833333377 : f32
    %719 = vector.broadcast %cst_249 : f32 to vector<12x1xf32>
    %720 = arith.addf %719, %718 : vector<12x1xf32>
    %721 = arith.mulf %700, %720 : vector<12x1xf32>
    %cst_250 = arith.constant 0.166666672 : f32
    %722 = vector.broadcast %cst_250 : f32 to vector<12x1xf32>
    %723 = arith.addf %722, %721 : vector<12x1xf32>
    %724 = arith.mulf %700, %723 : vector<12x1xf32>
    %cst_251 = arith.constant 1.000000e+00 : f32
    %725 = vector.broadcast %cst_251 : f32 to vector<12x1xf32>
    %726 = arith.addf %725, %724 : vector<12x1xf32>
    %727 = arith.mulf %726, %713 : vector<12x1xf32>
    %cst_252 = arith.constant 2.000000e+00 : f32
    %728 = vector.broadcast %cst_252 : f32 to vector<12x1xf32>
    %729 = arith.mulf %728, %713 : vector<12x1xf32>
    %730 = arith.mulf %729, %713 : vector<12x1xf32>
    %cst_253 = arith.constant 1.000000e+00 : f32
    %731 = vector.broadcast %cst_253 : f32 to vector<12x1xf32>
    %732 = arith.subf %730, %731 : vector<12x1xf32>
    %733 = arith.mulf %727, %732 : vector<12x1xf32>
    %cst_254 = arith.constant 2.000000e+00 : f32
    %734 = vector.broadcast %cst_254 : f32 to vector<12x1xf32>
    %735 = arith.mulf %734, %732 : vector<12x1xf32>
    %736 = arith.mulf %735, %732 : vector<12x1xf32>
    %cst_255 = arith.constant 1.000000e+00 : f32
    %737 = vector.broadcast %cst_255 : f32 to vector<12x1xf32>
    %738 = arith.subf %736, %737 : vector<12x1xf32>
    %739 = arith.mulf %733, %738 : vector<12x1xf32>
    %cst_256 = arith.constant 2.000000e+00 : f32
    %740 = vector.broadcast %cst_256 : f32 to vector<12x1xf32>
    %741 = arith.mulf %740, %738 : vector<12x1xf32>
    %742 = arith.mulf %741, %738 : vector<12x1xf32>
    %cst_257 = arith.constant 1.000000e+00 : f32
    %743 = vector.broadcast %cst_257 : f32 to vector<12x1xf32>
    %744 = arith.subf %742, %743 : vector<12x1xf32>
    %745 = arith.mulf %739, %744 : vector<12x1xf32>
    %cst_258 = arith.constant 2.000000e+00 : f32
    %746 = vector.broadcast %cst_258 : f32 to vector<12x1xf32>
    %747 = arith.mulf %746, %744 : vector<12x1xf32>
    %748 = arith.mulf %747, %744 : vector<12x1xf32>
    %cst_259 = arith.constant 1.000000e+00 : f32
    %749 = vector.broadcast %cst_259 : f32 to vector<12x1xf32>
    %750 = arith.subf %748, %749 : vector<12x1xf32>
    %751 = arith.mulf %745, %750 : vector<12x1xf32>
    %cst_260 = arith.constant 2.000000e+00 : f32
    %752 = vector.broadcast %cst_260 : f32 to vector<12x1xf32>
    %753 = arith.mulf %752, %750 : vector<12x1xf32>
    %754 = arith.mulf %753, %750 : vector<12x1xf32>
    %cst_261 = arith.constant 1.000000e+00 : f32
    %755 = vector.broadcast %cst_261 : f32 to vector<12x1xf32>
    %756 = arith.subf %754, %755 : vector<12x1xf32>
    %757 = arith.mulf %751, %756 : vector<12x1xf32>
    %cst_262 = arith.constant 2.000000e+00 : f32
    %758 = vector.broadcast %cst_262 : f32 to vector<12x1xf32>
    %759 = arith.mulf %758, %756 : vector<12x1xf32>
    %760 = arith.mulf %759, %756 : vector<12x1xf32>
    %cst_263 = arith.constant 1.000000e+00 : f32
    %761 = vector.broadcast %cst_263 : f32 to vector<12x1xf32>
    %762 = arith.subf %760, %761 : vector<12x1xf32>
    %763 = math.exp %692 : vector<12x1xf32>
    %764 = arith.mulf %757, %695 : vector<12x1xf32>
    %765 = arith.addf %762, %764 : vector<12x1xf32>
    %766 = arith.mulf %763, %765 : vector<12x1xf32>
    %767 = arith.mulf %757, %687 : vector<12x1xf32>
    %768 = arith.mulf %763, %767 : vector<12x1xf32>
    %769 = arith.mulf %757, %688 : vector<12x1xf32>
    %770 = arith.mulf %763, %769 : vector<12x1xf32>
    %771 = arith.mulf %757, %695 : vector<12x1xf32>
    %772 = arith.subf %762, %771 : vector<12x1xf32>
    %773 = arith.mulf %763, %772 : vector<12x1xf32>
    %774 = vector.extract_strided_slice %436 {offsets = [0, 2], sizes = [12, 1], strides = [1, 1]} : vector<12x16xf32> to vector<12x1xf32>
    %775 = vector.extract_strided_slice %436 {offsets = [0, 3], sizes = [12, 1], strides = [1, 1]} : vector<12x16xf32> to vector<12x1xf32>
    %776 = vector.extract_strided_slice %685 {offsets = [0, 0], sizes = [12, 1], strides = [1, 1]} : vector<12x2xf32> to vector<12x1xf32>
    %777 = arith.mulf %766, %774 : vector<12x1xf32>
    %778 = arith.addf %776, %777 : vector<12x1xf32>
    %779 = arith.mulf %768, %775 : vector<12x1xf32>
    %780 = arith.addf %778, %779 : vector<12x1xf32>
    %781 = vector.extract_strided_slice %685 {offsets = [0, 1], sizes = [12, 1], strides = [1, 1]} : vector<12x2xf32> to vector<12x1xf32>
    %782 = arith.mulf %770, %774 : vector<12x1xf32>
    %783 = arith.addf %781, %782 : vector<12x1xf32>
    %784 = arith.mulf %773, %775 : vector<12x1xf32>
    %785 = arith.addf %783, %784 : vector<12x1xf32>
    %786 = vector.extract_strided_slice %685 {offsets = [0, 0], sizes = [12, 1], strides = [1, 1]} : vector<12x2xf32> to vector<12x1xf32>
    %787 = vector.extract_strided_slice %685 {offsets = [0, 1], sizes = [12, 1], strides = [1, 1]} : vector<12x2xf32> to vector<12x1xf32>
    %788 = tpu.concatenate %780, %785, %786, %787, %766, %768, %770, %773 in 1 : vector<12x1xf32>, vector<12x1xf32>, vector<12x1xf32>, vector<12x1xf32>, vector<12x1xf32>, vector<12x1xf32>, vector<12x1xf32>, vector<12x1xf32> -> vector<12x8xf32>
    %c0_264 = arith.constant 0 : index
    %c8 = arith.constant 8 : index
    %789 = vector.load %arg13[%c0_264, %c8] : memref<12x64xf32, #tpu.memory_space<vmem>>, vector<12x8xf32>
    tpu.vector_store %arg13[%c0_264, %c8], %788 {strides = array<i32>} : memref<12x64xf32, #tpu.memory_space<vmem>>, vector<12x8xf32>,
    %790 = tpu.concatenate %780, %785 in 1 : vector<12x1xf32>, vector<12x1xf32> -> vector<12x2xf32>
    %791 = arith.subf %790, %614 : vector<12x2xf32>
    %792 = tpu.concatenate %427, %614, %790, %438, %438, %438, %439, %654 in 1 : vector<12x2xf32>, vector<12x2xf32>, vector<12x2xf32>, vector<12x2xf32>, vector<12x2xf32>, vector<12x2xf32>, vector<12x4xf32>, vector<12x32xf32> -> vector<12x48xf32>
    %c0_265 = arith.constant 0 : index
    %c0_266 = arith.constant 0 : index
    %793 = vector.load %arg8[%c0_265, %c0_266] : memref<48x224xf32, #tpu.memory_space<vmem>>, vector<48x224xf32>
    %cst_267 = arith.constant dense<0.000000e+00> : vector<12x224xf32>
    %794 = tpu.matmul %792, %793, %cst_267 {dimension_numbers = #tpu.dot_dimension_numbers<[1], [0], [0], [1], [0, 0, 1, 1], [], []>} : vector<12x48xf32>, vector<48x224xf32>, vector<12x224xf32> -> vector<12x224xf32>
    %795 = vector.extract_strided_slice %794 {offsets = [0, 0], sizes = [12, 96], strides = [1, 1]} : vector<12x224xf32> to vector<12x96xf32>
    %796 = vector.broadcast %429 : vector<1x96xf32> to vector<12x96xf32>
    %797 = arith.addf %795, %796 : vector<12x96xf32>
    %798 = vector.extract_strided_slice %794 {offsets = [0, 128], sizes = [12, 96], strides = [1, 1]} : vector<12x224xf32> to vector<12x96xf32>
    %799 = vector.broadcast %430 : vector<1x96xf32> to vector<12x96xf32>
    %800 = arith.addf %798, %799 : vector<12x96xf32>
    %801 = vector.extract_strided_slice %797 {offsets = [0, 0], sizes = [12, 32], strides = [1, 1]} : vector<12x96xf32> to vector<12x32xf32>
    %802 = vector.extract_strided_slice %800 {offsets = [0, 0], sizes = [12, 32], strides = [1, 1]} : vector<12x96xf32> to vector<12x32xf32>
    %803 = arith.addf %801, %802 : vector<12x32xf32>
    %cst_268 = arith.constant 5.000000e-01 : f32
    %804 = vector.broadcast %cst_268 : f32 to vector<12x32xf32>
    %805 = arith.mulf %804, %803 : vector<12x32xf32>
    %806 = math.tanh %805 : vector<12x32xf32>
    %cst_269 = arith.constant 1.000000e+00 : f32
    %807 = vector.broadcast %cst_269 : f32 to vector<12x32xf32>
    %808 = arith.addf %806, %807 : vector<12x32xf32>
    %cst_270 = arith.constant 5.000000e-01 : f32
    %809 = vector.broadcast %cst_270 : f32 to vector<12x32xf32>
    %810 = arith.mulf %809, %808 : vector<12x32xf32>
    %811 = vector.extract_strided_slice %797 {offsets = [0, 32], sizes = [12, 32], strides = [1, 1]} : vector<12x96xf32> to vector<12x32xf32>
    %812 = vector.extract_strided_slice %800 {offsets = [0, 32], sizes = [12, 32], strides = [1, 1]} : vector<12x96xf32> to vector<12x32xf32>
    %813 = arith.addf %811, %812 : vector<12x32xf32>
    %cst_271 = arith.constant 5.000000e-01 : f32
    %814 = vector.broadcast %cst_271 : f32 to vector<12x32xf32>
    %815 = arith.mulf %814, %813 : vector<12x32xf32>
    %816 = math.tanh %815 : vector<12x32xf32>
    %cst_272 = arith.constant 1.000000e+00 : f32
    %817 = vector.broadcast %cst_272 : f32 to vector<12x32xf32>
    %818 = arith.addf %816, %817 : vector<12x32xf32>
    %cst_273 = arith.constant 5.000000e-01 : f32
    %819 = vector.broadcast %cst_273 : f32 to vector<12x32xf32>
    %820 = arith.mulf %819, %818 : vector<12x32xf32>
    %821 = vector.extract_strided_slice %797 {offsets = [0, 64], sizes = [12, 32], strides = [1, 1]} : vector<12x96xf32> to vector<12x32xf32>
    %822 = vector.extract_strided_slice %800 {offsets = [0, 64], sizes = [12, 32], strides = [1, 1]} : vector<12x96xf32> to vector<12x32xf32>
    %823 = arith.mulf %810, %822 : vector<12x32xf32>
    %824 = arith.addf %821, %823 : vector<12x32xf32>
    %825 = math.tanh %824 : vector<12x32xf32>
    %cst_274 = arith.constant 1.000000e+00 : f32
    %826 = vector.broadcast %cst_274 : f32 to vector<12x32xf32>
    %827 = arith.subf %826, %820 : vector<12x32xf32>
    %828 = arith.mulf %827, %825 : vector<12x32xf32>
    %829 = arith.mulf %820, %654 : vector<12x32xf32>
    %830 = arith.addf %828, %829 : vector<12x32xf32>
    %cst_275 = arith.constant dense<0.000000e+00> : vector<12x32xf32>
    %831 = tpu.matmul %830, %431, %cst_275 {dimension_numbers = #tpu.dot_dimension_numbers<[1], [0], [0], [1], [0, 0, 1, 1], [], []>} : vector<12x32xf32>, vector<32x32xf32>, vector<12x32xf32> -> vector<12x32xf32>
    %832 = arith.addf %831, %424 : vector<12x32xf32>
    %cst_276 = arith.constant 2.000000e+01 : f32
    %833 = vector.broadcast %cst_276 : f32 to vector<12x32xf32>
    %834 = arith.cmpf ogt, %832, %833 : vector<12x32xf32>
    %cst_277 = arith.constant 2.000000e+01 : f32
    %835 = vector.broadcast %cst_277 : f32 to vector<12x32xf32>
    %836 = arith.minimumf %832, %835 : vector<12x32xf32>
    %837 = math.exp %836 : vector<12x32xf32>
    %cst_278 = arith.constant 1.000000e+00 : f32
    %838 = vector.broadcast %cst_278 : f32 to vector<12x32xf32>
    %839 = arith.addf %838, %837 : vector<12x32xf32>
    %840 = math.log %839 : vector<12x32xf32>
    %841 = arith.select %834, %832, %840 : vector<12x32xi1>, vector<12x32xf32>
    %cst_279 = arith.constant dense<0.000000e+00> : vector<12x32xf32>
    %842 = tpu.matmul %841, %432, %cst_279 {dimension_numbers = #tpu.dot_dimension_numbers<[1], [0], [0], [1], [0, 0, 1, 1], [], []>} : vector<12x32xf32>, vector<32x32xf32>, vector<12x32xf32> -> vector<12x32xf32>
    %843 = vector.broadcast %434 : vector<1x32xf32> to vector<12x32xf32>
    %844 = arith.addf %842, %843 : vector<12x32xf32>
    %cst_280 = arith.constant 2.000000e+01 : f32
    %845 = vector.broadcast %cst_280 : f32 to vector<12x32xf32>
    %846 = arith.cmpf ogt, %844, %845 : vector<12x32xf32>
    %cst_281 = arith.constant 2.000000e+01 : f32
    %847 = vector.broadcast %cst_281 : f32 to vector<12x32xf32>
    %848 = arith.minimumf %844, %847 : vector<12x32xf32>
    %849 = math.exp %848 : vector<12x32xf32>
    %cst_282 = arith.constant 1.000000e+00 : f32
    %850 = vector.broadcast %cst_282 : f32 to vector<12x32xf32>
    %851 = arith.addf %850, %849 : vector<12x32xf32>
    %852 = math.log %851 : vector<12x32xf32>
    %853 = arith.select %846, %844, %852 : vector<12x32xi1>, vector<12x32xf32>
    %cst_283 = arith.constant dense<0.000000e+00> : vector<12x32xf32>
    %854 = tpu.matmul %853, %433, %cst_283 {dimension_numbers = #tpu.dot_dimension_numbers<[1], [0], [0], [1], [0, 0, 1, 1], [], []>} : vector<12x32xf32>, vector<32x32xf32>, vector<12x32xf32> -> vector<12x32xf32>
    %855 = vector.broadcast %435 : vector<1x32xf32> to vector<12x32xf32>
    %856 = arith.addf %854, %855 : vector<12x32xf32>
    %cst_284 = arith.constant 5.000000e-01 : f32
    %857 = vector.broadcast %cst_284 : f32 to vector<12x2xf32>
    %858 = arith.mulf %857, %791 : vector<12x2xf32>
    %859 = arith.addf %790, %858 : vector<12x2xf32>
    %860 = vector.extract_strided_slice %856 {offsets = [0, 0], sizes = [12, 2], strides = [1, 1]} : vector<12x32xf32> to vector<12x2xf32>
    %861 = arith.addf %859, %860 : vector<12x2xf32>
    %862 = vector.extract_strided_slice %856 {offsets = [0, 2], sizes = [12, 1], strides = [1, 1]} : vector<12x32xf32> to vector<12x1xf32>
    %863 = vector.extract_strided_slice %856 {offsets = [0, 3], sizes = [12, 1], strides = [1, 1]} : vector<12x32xf32> to vector<12x1xf32>
    %864 = vector.extract_strided_slice %856 {offsets = [0, 4], sizes = [12, 1], strides = [1, 1]} : vector<12x32xf32> to vector<12x1xf32>
    %865 = vector.extract_strided_slice %856 {offsets = [0, 5], sizes = [12, 1], strides = [1, 1]} : vector<12x32xf32> to vector<12x1xf32>
    %866 = arith.addf %862, %865 : vector<12x1xf32>
    %cst_285 = arith.constant 5.000000e-01 : f32
    %867 = vector.broadcast %cst_285 : f32 to vector<12x1xf32>
    %868 = arith.mulf %867, %866 : vector<12x1xf32>
    %869 = arith.subf %862, %865 : vector<12x1xf32>
    %cst_286 = arith.constant 5.000000e-01 : f32
    %870 = vector.broadcast %cst_286 : f32 to vector<12x1xf32>
    %871 = arith.mulf %870, %869 : vector<12x1xf32>
    %872 = arith.mulf %871, %871 : vector<12x1xf32>
    %873 = arith.mulf %863, %864 : vector<12x1xf32>
    %874 = arith.addf %872, %873 : vector<12x1xf32>
    %cst_287 = arith.constant 2.44140625E-4 : f32
    %875 = vector.broadcast %cst_287 : f32 to vector<12x1xf32>
    %876 = arith.mulf %874, %875 : vector<12x1xf32>
    %cst_288 = arith.constant 2.48015876E-5 : f32
    %877 = vector.broadcast %cst_288 : f32 to vector<12x1xf32>
    %878 = arith.mulf %876, %877 : vector<12x1xf32>
    %cst_289 = arith.constant 0.00138888892 : f32
    %879 = vector.broadcast %cst_289 : f32 to vector<12x1xf32>
    %880 = arith.addf %879, %878 : vector<12x1xf32>
    %881 = arith.mulf %876, %880 : vector<12x1xf32>
    %cst_290 = arith.constant 0.0416666679 : f32
    %882 = vector.broadcast %cst_290 : f32 to vector<12x1xf32>
    %883 = arith.addf %882, %881 : vector<12x1xf32>
    %884 = arith.mulf %876, %883 : vector<12x1xf32>
    %cst_291 = arith.constant 5.000000e-01 : f32
    %885 = vector.broadcast %cst_291 : f32 to vector<12x1xf32>
    %886 = arith.addf %885, %884 : vector<12x1xf32>
    %887 = arith.mulf %876, %886 : vector<12x1xf32>
    %cst_292 = arith.constant 1.000000e+00 : f32
    %888 = vector.broadcast %cst_292 : f32 to vector<12x1xf32>
    %889 = arith.addf %888, %887 : vector<12x1xf32>
    %cst_293 = arith.constant 2.75573188E-6 : f32
    %890 = vector.broadcast %cst_293 : f32 to vector<12x1xf32>
    %891 = arith.mulf %876, %890 : vector<12x1xf32>
    %cst_294 = arith.constant 1.98412701E-4 : f32
    %892 = vector.broadcast %cst_294 : f32 to vector<12x1xf32>
    %893 = arith.addf %892, %891 : vector<12x1xf32>
    %894 = arith.mulf %876, %893 : vector<12x1xf32>
    %cst_295 = arith.constant 0.00833333377 : f32
    %895 = vector.broadcast %cst_295 : f32 to vector<12x1xf32>
    %896 = arith.addf %895, %894 : vector<12x1xf32>
    %897 = arith.mulf %876, %896 : vector<12x1xf32>
    %cst_296 = arith.constant 0.166666672 : f32
    %898 = vector.broadcast %cst_296 : f32 to vector<12x1xf32>
    %899 = arith.addf %898, %897 : vector<12x1xf32>
    %900 = arith.mulf %876, %899 : vector<12x1xf32>
    %cst_297 = arith.constant 1.000000e+00 : f32
    %901 = vector.broadcast %cst_297 : f32 to vector<12x1xf32>
    %902 = arith.addf %901, %900 : vector<12x1xf32>
    %903 = arith.mulf %902, %889 : vector<12x1xf32>
    %cst_298 = arith.constant 2.000000e+00 : f32
    %904 = vector.broadcast %cst_298 : f32 to vector<12x1xf32>
    %905 = arith.mulf %904, %889 : vector<12x1xf32>
    %906 = arith.mulf %905, %889 : vector<12x1xf32>
    %cst_299 = arith.constant 1.000000e+00 : f32
    %907 = vector.broadcast %cst_299 : f32 to vector<12x1xf32>
    %908 = arith.subf %906, %907 : vector<12x1xf32>
    %909 = arith.mulf %903, %908 : vector<12x1xf32>
    %cst_300 = arith.constant 2.000000e+00 : f32
    %910 = vector.broadcast %cst_300 : f32 to vector<12x1xf32>
    %911 = arith.mulf %910, %908 : vector<12x1xf32>
    %912 = arith.mulf %911, %908 : vector<12x1xf32>
    %cst_301 = arith.constant 1.000000e+00 : f32
    %913 = vector.broadcast %cst_301 : f32 to vector<12x1xf32>
    %914 = arith.subf %912, %913 : vector<12x1xf32>
    %915 = arith.mulf %909, %914 : vector<12x1xf32>
    %cst_302 = arith.constant 2.000000e+00 : f32
    %916 = vector.broadcast %cst_302 : f32 to vector<12x1xf32>
    %917 = arith.mulf %916, %914 : vector<12x1xf32>
    %918 = arith.mulf %917, %914 : vector<12x1xf32>
    %cst_303 = arith.constant 1.000000e+00 : f32
    %919 = vector.broadcast %cst_303 : f32 to vector<12x1xf32>
    %920 = arith.subf %918, %919 : vector<12x1xf32>
    %921 = arith.mulf %915, %920 : vector<12x1xf32>
    %cst_304 = arith.constant 2.000000e+00 : f32
    %922 = vector.broadcast %cst_304 : f32 to vector<12x1xf32>
    %923 = arith.mulf %922, %920 : vector<12x1xf32>
    %924 = arith.mulf %923, %920 : vector<12x1xf32>
    %cst_305 = arith.constant 1.000000e+00 : f32
    %925 = vector.broadcast %cst_305 : f32 to vector<12x1xf32>
    %926 = arith.subf %924, %925 : vector<12x1xf32>
    %927 = arith.mulf %921, %926 : vector<12x1xf32>
    %cst_306 = arith.constant 2.000000e+00 : f32
    %928 = vector.broadcast %cst_306 : f32 to vector<12x1xf32>
    %929 = arith.mulf %928, %926 : vector<12x1xf32>
    %930 = arith.mulf %929, %926 : vector<12x1xf32>
    %cst_307 = arith.constant 1.000000e+00 : f32
    %931 = vector.broadcast %cst_307 : f32 to vector<12x1xf32>
    %932 = arith.subf %930, %931 : vector<12x1xf32>
    %933 = arith.mulf %927, %932 : vector<12x1xf32>
    %cst_308 = arith.constant 2.000000e+00 : f32
    %934 = vector.broadcast %cst_308 : f32 to vector<12x1xf32>
    %935 = arith.mulf %934, %932 : vector<12x1xf32>
    %936 = arith.mulf %935, %932 : vector<12x1xf32>
    %cst_309 = arith.constant 1.000000e+00 : f32
    %937 = vector.broadcast %cst_309 : f32 to vector<12x1xf32>
    %938 = arith.subf %936, %937 : vector<12x1xf32>
    %939 = math.exp %868 : vector<12x1xf32>
    %940 = arith.mulf %933, %871 : vector<12x1xf32>
    %941 = arith.addf %938, %940 : vector<12x1xf32>
    %942 = arith.mulf %939, %941 : vector<12x1xf32>
    %943 = arith.mulf %933, %863 : vector<12x1xf32>
    %944 = arith.mulf %939, %943 : vector<12x1xf32>
    %945 = arith.mulf %933, %864 : vector<12x1xf32>
    %946 = arith.mulf %939, %945 : vector<12x1xf32>
    %947 = arith.mulf %933, %871 : vector<12x1xf32>
    %948 = arith.subf %938, %947 : vector<12x1xf32>
    %949 = arith.mulf %939, %948 : vector<12x1xf32>
    %950 = vector.extract_strided_slice %436 {offsets = [0, 4], sizes = [12, 1], strides = [1, 1]} : vector<12x16xf32> to vector<12x1xf32>
    %951 = vector.extract_strided_slice %436 {offsets = [0, 5], sizes = [12, 1], strides = [1, 1]} : vector<12x16xf32> to vector<12x1xf32>
    %952 = vector.extract_strided_slice %861 {offsets = [0, 0], sizes = [12, 1], strides = [1, 1]} : vector<12x2xf32> to vector<12x1xf32>
    %953 = arith.mulf %942, %950 : vector<12x1xf32>
    %954 = arith.addf %952, %953 : vector<12x1xf32>
    %955 = arith.mulf %944, %951 : vector<12x1xf32>
    %956 = arith.addf %954, %955 : vector<12x1xf32>
    %957 = vector.extract_strided_slice %861 {offsets = [0, 1], sizes = [12, 1], strides = [1, 1]} : vector<12x2xf32> to vector<12x1xf32>
    %958 = arith.mulf %946, %950 : vector<12x1xf32>
    %959 = arith.addf %957, %958 : vector<12x1xf32>
    %960 = arith.mulf %949, %951 : vector<12x1xf32>
    %961 = arith.addf %959, %960 : vector<12x1xf32>
    %962 = vector.extract_strided_slice %861 {offsets = [0, 0], sizes = [12, 1], strides = [1, 1]} : vector<12x2xf32> to vector<12x1xf32>
    %963 = vector.extract_strided_slice %861 {offsets = [0, 1], sizes = [12, 1], strides = [1, 1]} : vector<12x2xf32> to vector<12x1xf32>
    %964 = tpu.concatenate %956, %961, %962, %963, %942, %944, %946, %949 in 1 : vector<12x1xf32>, vector<12x1xf32>, vector<12x1xf32>, vector<12x1xf32>, vector<12x1xf32>, vector<12x1xf32>, vector<12x1xf32>, vector<12x1xf32> -> vector<12x8xf32>
    %c0_310 = arith.constant 0 : index
    %c16 = arith.constant 16 : index
    %965 = vector.load %arg13[%c0_310, %c16] : memref<12x64xf32, #tpu.memory_space<vmem>>, vector<12x8xf32>
    tpu.vector_store %arg13[%c0_310, %c16], %964 {strides = array<i32>} : memref<12x64xf32, #tpu.memory_space<vmem>>, vector<12x8xf32>,
    %966 = tpu.concatenate %956, %961 in 1 : vector<12x1xf32>, vector<12x1xf32> -> vector<12x2xf32>
    %967 = arith.subf %966, %790 : vector<12x2xf32>
    %968 = tpu.concatenate %427, %614, %790, %966, %438, %438, %439, %830 in 1 : vector<12x2xf32>, vector<12x2xf32>, vector<12x2xf32>, vector<12x2xf32>, vector<12x2xf32>, vector<12x2xf32>, vector<12x4xf32>, vector<12x32xf32> -> vector<12x48xf32>
    %c0_311 = arith.constant 0 : index
    %c0_312 = arith.constant 0 : index
    %969 = vector.load %arg8[%c0_311, %c0_312] : memref<48x224xf32, #tpu.memory_space<vmem>>, vector<48x224xf32>
    %cst_313 = arith.constant dense<0.000000e+00> : vector<12x224xf32>
    %970 = tpu.matmul %968, %969, %cst_313 {dimension_numbers = #tpu.dot_dimension_numbers<[1], [0], [0], [1], [0, 0, 1, 1], [], []>} : vector<12x48xf32>, vector<48x224xf32>, vector<12x224xf32> -> vector<12x224xf32>
    %971 = vector.extract_strided_slice %970 {offsets = [0, 0], sizes = [12, 96], strides = [1, 1]} : vector<12x224xf32> to vector<12x96xf32>
    %972 = vector.broadcast %429 : vector<1x96xf32> to vector<12x96xf32>
    %973 = arith.addf %971, %972 : vector<12x96xf32>
    %974 = vector.extract_strided_slice %970 {offsets = [0, 128], sizes = [12, 96], strides = [1, 1]} : vector<12x224xf32> to vector<12x96xf32>
    %975 = vector.broadcast %430 : vector<1x96xf32> to vector<12x96xf32>
    %976 = arith.addf %974, %975 : vector<12x96xf32>
    %977 = vector.extract_strided_slice %973 {offsets = [0, 0], sizes = [12, 32], strides = [1, 1]} : vector<12x96xf32> to vector<12x32xf32>
    %978 = vector.extract_strided_slice %976 {offsets = [0, 0], sizes = [12, 32], strides = [1, 1]} : vector<12x96xf32> to vector<12x32xf32>
    %979 = arith.addf %977, %978 : vector<12x32xf32>
    %cst_314 = arith.constant 5.000000e-01 : f32
    %980 = vector.broadcast %cst_314 : f32 to vector<12x32xf32>
    %981 = arith.mulf %980, %979 : vector<12x32xf32>
    %982 = math.tanh %981 : vector<12x32xf32>
    %cst_315 = arith.constant 1.000000e+00 : f32
    %983 = vector.broadcast %cst_315 : f32 to vector<12x32xf32>
    %984 = arith.addf %982, %983 : vector<12x32xf32>
    %cst_316 = arith.constant 5.000000e-01 : f32
    %985 = vector.broadcast %cst_316 : f32 to vector<12x32xf32>
    %986 = arith.mulf %985, %984 : vector<12x32xf32>
    %987 = vector.extract_strided_slice %973 {offsets = [0, 32], sizes = [12, 32], strides = [1, 1]} : vector<12x96xf32> to vector<12x32xf32>
    %988 = vector.extract_strided_slice %976 {offsets = [0, 32], sizes = [12, 32], strides = [1, 1]} : vector<12x96xf32> to vector<12x32xf32>
    %989 = arith.addf %987, %988 : vector<12x32xf32>
    %cst_317 = arith.constant 5.000000e-01 : f32
    %990 = vector.broadcast %cst_317 : f32 to vector<12x32xf32>
    %991 = arith.mulf %990, %989 : vector<12x32xf32>
    %992 = math.tanh %991 : vector<12x32xf32>
    %cst_318 = arith.constant 1.000000e+00 : f32
    %993 = vector.broadcast %cst_318 : f32 to vector<12x32xf32>
    %994 = arith.addf %992, %993 : vector<12x32xf32>
    %cst_319 = arith.constant 5.000000e-01 : f32
    %995 = vector.broadcast %cst_319 : f32 to vector<12x32xf32>
    %996 = arith.mulf %995, %994 : vector<12x32xf32>
    %997 = vector.extract_strided_slice %973 {offsets = [0, 64], sizes = [12, 32], strides = [1, 1]} : vector<12x96xf32> to vector<12x32xf32>
    %998 = vector.extract_strided_slice %976 {offsets = [0, 64], sizes = [12, 32], strides = [1, 1]} : vector<12x96xf32> to vector<12x32xf32>
    %999 = arith.mulf %986, %998 : vector<12x32xf32>
    %1000 = arith.addf %997, %999 : vector<12x32xf32>
    %1001 = math.tanh %1000 : vector<12x32xf32>
    %cst_320 = arith.constant 1.000000e+00 : f32
    %1002 = vector.broadcast %cst_320 : f32 to vector<12x32xf32>
    %1003 = arith.subf %1002, %996 : vector<12x32xf32>
    %1004 = arith.mulf %1003, %1001 : vector<12x32xf32>
    %1005 = arith.mulf %996, %830 : vector<12x32xf32>
    %1006 = arith.addf %1004, %1005 : vector<12x32xf32>
    %cst_321 = arith.constant dense<0.000000e+00> : vector<12x32xf32>
    %1007 = tpu.matmul %1006, %431, %cst_321 {dimension_numbers = #tpu.dot_dimension_numbers<[1], [0], [0], [1], [0, 0, 1, 1], [], []>} : vector<12x32xf32>, vector<32x32xf32>, vector<12x32xf32> -> vector<12x32xf32>
    %1008 = arith.addf %1007, %424 : vector<12x32xf32>
    %cst_322 = arith.constant 2.000000e+01 : f32
    %1009 = vector.broadcast %cst_322 : f32 to vector<12x32xf32>
    %1010 = arith.cmpf ogt, %1008, %1009 : vector<12x32xf32>
    %cst_323 = arith.constant 2.000000e+01 : f32
    %1011 = vector.broadcast %cst_323 : f32 to vector<12x32xf32>
    %1012 = arith.minimumf %1008, %1011 : vector<12x32xf32>
    %1013 = math.exp %1012 : vector<12x32xf32>
    %cst_324 = arith.constant 1.000000e+00 : f32
    %1014 = vector.broadcast %cst_324 : f32 to vector<12x32xf32>
    %1015 = arith.addf %1014, %1013 : vector<12x32xf32>
    %1016 = math.log %1015 : vector<12x32xf32>
    %1017 = arith.select %1010, %1008, %1016 : vector<12x32xi1>, vector<12x32xf32>
    %cst_325 = arith.constant dense<0.000000e+00> : vector<12x32xf32>
    %1018 = tpu.matmul %1017, %432, %cst_325 {dimension_numbers = #tpu.dot_dimension_numbers<[1], [0], [0], [1], [0, 0, 1, 1], [], []>} : vector<12x32xf32>, vector<32x32xf32>, vector<12x32xf32> -> vector<12x32xf32>
    %1019 = vector.broadcast %434 : vector<1x32xf32> to vector<12x32xf32>
    %1020 = arith.addf %1018, %1019 : vector<12x32xf32>
    %cst_326 = arith.constant 2.000000e+01 : f32
    %1021 = vector.broadcast %cst_326 : f32 to vector<12x32xf32>
    %1022 = arith.cmpf ogt, %1020, %1021 : vector<12x32xf32>
    %cst_327 = arith.constant 2.000000e+01 : f32
    %1023 = vector.broadcast %cst_327 : f32 to vector<12x32xf32>
    %1024 = arith.minimumf %1020, %1023 : vector<12x32xf32>
    %1025 = math.exp %1024 : vector<12x32xf32>
    %cst_328 = arith.constant 1.000000e+00 : f32
    %1026 = vector.broadcast %cst_328 : f32 to vector<12x32xf32>
    %1027 = arith.addf %1026, %1025 : vector<12x32xf32>
    %1028 = math.log %1027 : vector<12x32xf32>
    %1029 = arith.select %1022, %1020, %1028 : vector<12x32xi1>, vector<12x32xf32>
    %cst_329 = arith.constant dense<0.000000e+00> : vector<12x32xf32>
    %1030 = tpu.matmul %1029, %433, %cst_329 {dimension_numbers = #tpu.dot_dimension_numbers<[1], [0], [0], [1], [0, 0, 1, 1], [], []>} : vector<12x32xf32>, vector<32x32xf32>, vector<12x32xf32> -> vector<12x32xf32>
    %1031 = vector.broadcast %435 : vector<1x32xf32> to vector<12x32xf32>
    %1032 = arith.addf %1030, %1031 : vector<12x32xf32>
    %cst_330 = arith.constant 5.000000e-01 : f32
    %1033 = vector.broadcast %cst_330 : f32 to vector<12x2xf32>
    %1034 = arith.mulf %1033, %967 : vector<12x2xf32>
    %1035 = arith.addf %966, %1034 : vector<12x2xf32>
    %1036 = vector.extract_strided_slice %1032 {offsets = [0, 0], sizes = [12, 2], strides = [1, 1]} : vector<12x32xf32> to vector<12x2xf32>
    %1037 = arith.addf %1035, %1036 : vector<12x2xf32>
    %1038 = vector.extract_strided_slice %1032 {offsets = [0, 2], sizes = [12, 1], strides = [1, 1]} : vector<12x32xf32> to vector<12x1xf32>
    %1039 = vector.extract_strided_slice %1032 {offsets = [0, 3], sizes = [12, 1], strides = [1, 1]} : vector<12x32xf32> to vector<12x1xf32>
    %1040 = vector.extract_strided_slice %1032 {offsets = [0, 4], sizes = [12, 1], strides = [1, 1]} : vector<12x32xf32> to vector<12x1xf32>
    %1041 = vector.extract_strided_slice %1032 {offsets = [0, 5], sizes = [12, 1], strides = [1, 1]} : vector<12x32xf32> to vector<12x1xf32>
    %1042 = arith.addf %1038, %1041 : vector<12x1xf32>
    %cst_331 = arith.constant 5.000000e-01 : f32
    %1043 = vector.broadcast %cst_331 : f32 to vector<12x1xf32>
    %1044 = arith.mulf %1043, %1042 : vector<12x1xf32>
    %1045 = arith.subf %1038, %1041 : vector<12x1xf32>
    %cst_332 = arith.constant 5.000000e-01 : f32
    %1046 = vector.broadcast %cst_332 : f32 to vector<12x1xf32>
    %1047 = arith.mulf %1046, %1045 : vector<12x1xf32>
    %1048 = arith.mulf %1047, %1047 : vector<12x1xf32>
    %1049 = arith.mulf %1039, %1040 : vector<12x1xf32>
    %1050 = arith.addf %1048, %1049 : vector<12x1xf32>
    %cst_333 = arith.constant 2.44140625E-4 : f32
    %1051 = vector.broadcast %cst_333 : f32 to vector<12x1xf32>
    %1052 = arith.mulf %1050, %1051 : vector<12x1xf32>
    %cst_334 = arith.constant 2.48015876E-5 : f32
    %1053 = vector.broadcast %cst_334 : f32 to vector<12x1xf32>
    %1054 = arith.mulf %1052, %1053 : vector<12x1xf32>
    %cst_335 = arith.constant 0.00138888892 : f32
    %1055 = vector.broadcast %cst_335 : f32 to vector<12x1xf32>
    %1056 = arith.addf %1055, %1054 : vector<12x1xf32>
    %1057 = arith.mulf %1052, %1056 : vector<12x1xf32>
    %cst_336 = arith.constant 0.0416666679 : f32
    %1058 = vector.broadcast %cst_336 : f32 to vector<12x1xf32>
    %1059 = arith.addf %1058, %1057 : vector<12x1xf32>
    %1060 = arith.mulf %1052, %1059 : vector<12x1xf32>
    %cst_337 = arith.constant 5.000000e-01 : f32
    %1061 = vector.broadcast %cst_337 : f32 to vector<12x1xf32>
    %1062 = arith.addf %1061, %1060 : vector<12x1xf32>
    %1063 = arith.mulf %1052, %1062 : vector<12x1xf32>
    %cst_338 = arith.constant 1.000000e+00 : f32
    %1064 = vector.broadcast %cst_338 : f32 to vector<12x1xf32>
    %1065 = arith.addf %1064, %1063 : vector<12x1xf32>
    %cst_339 = arith.constant 2.75573188E-6 : f32
    %1066 = vector.broadcast %cst_339 : f32 to vector<12x1xf32>
    %1067 = arith.mulf %1052, %1066 : vector<12x1xf32>
    %cst_340 = arith.constant 1.98412701E-4 : f32
    %1068 = vector.broadcast %cst_340 : f32 to vector<12x1xf32>
    %1069 = arith.addf %1068, %1067 : vector<12x1xf32>
    %1070 = arith.mulf %1052, %1069 : vector<12x1xf32>
    %cst_341 = arith.constant 0.00833333377 : f32
    %1071 = vector.broadcast %cst_341 : f32 to vector<12x1xf32>
    %1072 = arith.addf %1071, %1070 : vector<12x1xf32>
    %1073 = arith.mulf %1052, %1072 : vector<12x1xf32>
    %cst_342 = arith.constant 0.166666672 : f32
    %1074 = vector.broadcast %cst_342 : f32 to vector<12x1xf32>
    %1075 = arith.addf %1074, %1073 : vector<12x1xf32>
    %1076 = arith.mulf %1052, %1075 : vector<12x1xf32>
    %cst_343 = arith.constant 1.000000e+00 : f32
    %1077 = vector.broadcast %cst_343 : f32 to vector<12x1xf32>
    %1078 = arith.addf %1077, %1076 : vector<12x1xf32>
    %1079 = arith.mulf %1078, %1065 : vector<12x1xf32>
    %cst_344 = arith.constant 2.000000e+00 : f32
    %1080 = vector.broadcast %cst_344 : f32 to vector<12x1xf32>
    %1081 = arith.mulf %1080, %1065 : vector<12x1xf32>
    %1082 = arith.mulf %1081, %1065 : vector<12x1xf32>
    %cst_345 = arith.constant 1.000000e+00 : f32
    %1083 = vector.broadcast %cst_345 : f32 to vector<12x1xf32>
    %1084 = arith.subf %1082, %1083 : vector<12x1xf32>
    %1085 = arith.mulf %1079, %1084 : vector<12x1xf32>
    %cst_346 = arith.constant 2.000000e+00 : f32
    %1086 = vector.broadcast %cst_346 : f32 to vector<12x1xf32>
    %1087 = arith.mulf %1086, %1084 : vector<12x1xf32>
    %1088 = arith.mulf %1087, %1084 : vector<12x1xf32>
    %cst_347 = arith.constant 1.000000e+00 : f32
    %1089 = vector.broadcast %cst_347 : f32 to vector<12x1xf32>
    %1090 = arith.subf %1088, %1089 : vector<12x1xf32>
    %1091 = arith.mulf %1085, %1090 : vector<12x1xf32>
    %cst_348 = arith.constant 2.000000e+00 : f32
    %1092 = vector.broadcast %cst_348 : f32 to vector<12x1xf32>
    %1093 = arith.mulf %1092, %1090 : vector<12x1xf32>
    %1094 = arith.mulf %1093, %1090 : vector<12x1xf32>
    %cst_349 = arith.constant 1.000000e+00 : f32
    %1095 = vector.broadcast %cst_349 : f32 to vector<12x1xf32>
    %1096 = arith.subf %1094, %1095 : vector<12x1xf32>
    %1097 = arith.mulf %1091, %1096 : vector<12x1xf32>
    %cst_350 = arith.constant 2.000000e+00 : f32
    %1098 = vector.broadcast %cst_350 : f32 to vector<12x1xf32>
    %1099 = arith.mulf %1098, %1096 : vector<12x1xf32>
    %1100 = arith.mulf %1099, %1096 : vector<12x1xf32>
    %cst_351 = arith.constant 1.000000e+00 : f32
    %1101 = vector.broadcast %cst_351 : f32 to vector<12x1xf32>
    %1102 = arith.subf %1100, %1101 : vector<12x1xf32>
    %1103 = arith.mulf %1097, %1102 : vector<12x1xf32>
    %cst_352 = arith.constant 2.000000e+00 : f32
    %1104 = vector.broadcast %cst_352 : f32 to vector<12x1xf32>
    %1105 = arith.mulf %1104, %1102 : vector<12x1xf32>
    %1106 = arith.mulf %1105, %1102 : vector<12x1xf32>
    %cst_353 = arith.constant 1.000000e+00 : f32
    %1107 = vector.broadcast %cst_353 : f32 to vector<12x1xf32>
    %1108 = arith.subf %1106, %1107 : vector<12x1xf32>
    %1109 = arith.mulf %1103, %1108 : vector<12x1xf32>
    %cst_354 = arith.constant 2.000000e+00 : f32
    %1110 = vector.broadcast %cst_354 : f32 to vector<12x1xf32>
    %1111 = arith.mulf %1110, %1108 : vector<12x1xf32>
    %1112 = arith.mulf %1111, %1108 : vector<12x1xf32>
    %cst_355 = arith.constant 1.000000e+00 : f32
    %1113 = vector.broadcast %cst_355 : f32 to vector<12x1xf32>
    %1114 = arith.subf %1112, %1113 : vector<12x1xf32>
    %1115 = math.exp %1044 : vector<12x1xf32>
    %1116 = arith.mulf %1109, %1047 : vector<12x1xf32>
    %1117 = arith.addf %1114, %1116 : vector<12x1xf32>
    %1118 = arith.mulf %1115, %1117 : vector<12x1xf32>
    %1119 = arith.mulf %1109, %1039 : vector<12x1xf32>
    %1120 = arith.mulf %1115, %1119 : vector<12x1xf32>
    %1121 = arith.mulf %1109, %1040 : vector<12x1xf32>
    %1122 = arith.mulf %1115, %1121 : vector<12x1xf32>
    %1123 = arith.mulf %1109, %1047 : vector<12x1xf32>
    %1124 = arith.subf %1114, %1123 : vector<12x1xf32>
    %1125 = arith.mulf %1115, %1124 : vector<12x1xf32>
    %1126 = vector.extract_strided_slice %436 {offsets = [0, 6], sizes = [12, 1], strides = [1, 1]} : vector<12x16xf32> to vector<12x1xf32>
    %1127 = vector.extract_strided_slice %436 {offsets = [0, 7], sizes = [12, 1], strides = [1, 1]} : vector<12x16xf32> to vector<12x1xf32>
    %1128 = vector.extract_strided_slice %1037 {offsets = [0, 0], sizes = [12, 1], strides = [1, 1]} : vector<12x2xf32> to vector<12x1xf32>
    %1129 = arith.mulf %1118, %1126 : vector<12x1xf32>
    %1130 = arith.addf %1128, %1129 : vector<12x1xf32>
    %1131 = arith.mulf %1120, %1127 : vector<12x1xf32>
    %1132 = arith.addf %1130, %1131 : vector<12x1xf32>
    %1133 = vector.extract_strided_slice %1037 {offsets = [0, 1], sizes = [12, 1], strides = [1, 1]} : vector<12x2xf32> to vector<12x1xf32>
    %1134 = arith.mulf %1122, %1126 : vector<12x1xf32>
    %1135 = arith.addf %1133, %1134 : vector<12x1xf32>
    %1136 = arith.mulf %1125, %1127 : vector<12x1xf32>
    %1137 = arith.addf %1135, %1136 : vector<12x1xf32>
    %1138 = vector.extract_strided_slice %1037 {offsets = [0, 0], sizes = [12, 1], strides = [1, 1]} : vector<12x2xf32> to vector<12x1xf32>
    %1139 = vector.extract_strided_slice %1037 {offsets = [0, 1], sizes = [12, 1], strides = [1, 1]} : vector<12x2xf32> to vector<12x1xf32>
    %1140 = tpu.concatenate %1132, %1137, %1138, %1139, %1118, %1120, %1122, %1125 in 1 : vector<12x1xf32>, vector<12x1xf32>, vector<12x1xf32>, vector<12x1xf32>, vector<12x1xf32>, vector<12x1xf32>, vector<12x1xf32>, vector<12x1xf32> -> vector<12x8xf32>
    %c0_356 = arith.constant 0 : index
    %c24 = arith.constant 24 : index
    %1141 = vector.load %arg13[%c0_356, %c24] : memref<12x64xf32, #tpu.memory_space<vmem>>, vector<12x8xf32>
    tpu.vector_store %arg13[%c0_356, %c24], %1140 {strides = array<i32>} : memref<12x64xf32, #tpu.memory_space<vmem>>, vector<12x8xf32>,
    %1142 = tpu.concatenate %1132, %1137 in 1 : vector<12x1xf32>, vector<12x1xf32> -> vector<12x2xf32>
    %1143 = arith.subf %1142, %966 : vector<12x2xf32>
    %1144 = tpu.concatenate %427, %614, %790, %966, %1142, %438, %439, %1006 in 1 : vector<12x2xf32>, vector<12x2xf32>, vector<12x2xf32>, vector<12x2xf32>, vector<12x2xf32>, vector<12x2xf32>, vector<12x4xf32>, vector<12x32xf32> -> vector<12x48xf32>
    %c0_357 = arith.constant 0 : index
    %c0_358 = arith.constant 0 : index
    %1145 = vector.load %arg8[%c0_357, %c0_358] : memref<48x224xf32, #tpu.memory_space<vmem>>, vector<48x224xf32>
    %cst_359 = arith.constant dense<0.000000e+00> : vector<12x224xf32>
    %1146 = tpu.matmul %1144, %1145, %cst_359 {dimension_numbers = #tpu.dot_dimension_numbers<[1], [0], [0], [1], [0, 0, 1, 1], [], []>} : vector<12x48xf32>, vector<48x224xf32>, vector<12x224xf32> -> vector<12x224xf32>
    %1147 = vector.extract_strided_slice %1146 {offsets = [0, 0], sizes = [12, 96], strides = [1, 1]} : vector<12x224xf32> to vector<12x96xf32>
    %1148 = vector.broadcast %429 : vector<1x96xf32> to vector<12x96xf32>
    %1149 = arith.addf %1147, %1148 : vector<12x96xf32>
    %1150 = vector.extract_strided_slice %1146 {offsets = [0, 128], sizes = [12, 96], strides = [1, 1]} : vector<12x224xf32> to vector<12x96xf32>
    %1151 = vector.broadcast %430 : vector<1x96xf32> to vector<12x96xf32>
    %1152 = arith.addf %1150, %1151 : vector<12x96xf32>
    %1153 = vector.extract_strided_slice %1149 {offsets = [0, 0], sizes = [12, 32], strides = [1, 1]} : vector<12x96xf32> to vector<12x32xf32>
    %1154 = vector.extract_strided_slice %1152 {offsets = [0, 0], sizes = [12, 32], strides = [1, 1]} : vector<12x96xf32> to vector<12x32xf32>
    %1155 = arith.addf %1153, %1154 : vector<12x32xf32>
    %cst_360 = arith.constant 5.000000e-01 : f32
    %1156 = vector.broadcast %cst_360 : f32 to vector<12x32xf32>
    %1157 = arith.mulf %1156, %1155 : vector<12x32xf32>
    %1158 = math.tanh %1157 : vector<12x32xf32>
    %cst_361 = arith.constant 1.000000e+00 : f32
    %1159 = vector.broadcast %cst_361 : f32 to vector<12x32xf32>
    %1160 = arith.addf %1158, %1159 : vector<12x32xf32>
    %cst_362 = arith.constant 5.000000e-01 : f32
    %1161 = vector.broadcast %cst_362 : f32 to vector<12x32xf32>
    %1162 = arith.mulf %1161, %1160 : vector<12x32xf32>
    %1163 = vector.extract_strided_slice %1149 {offsets = [0, 32], sizes = [12, 32], strides = [1, 1]} : vector<12x96xf32> to vector<12x32xf32>
    %1164 = vector.extract_strided_slice %1152 {offsets = [0, 32], sizes = [12, 32], strides = [1, 1]} : vector<12x96xf32> to vector<12x32xf32>
    %1165 = arith.addf %1163, %1164 : vector<12x32xf32>
    %cst_363 = arith.constant 5.000000e-01 : f32
    %1166 = vector.broadcast %cst_363 : f32 to vector<12x32xf32>
    %1167 = arith.mulf %1166, %1165 : vector<12x32xf32>
    %1168 = math.tanh %1167 : vector<12x32xf32>
    %cst_364 = arith.constant 1.000000e+00 : f32
    %1169 = vector.broadcast %cst_364 : f32 to vector<12x32xf32>
    %1170 = arith.addf %1168, %1169 : vector<12x32xf32>
    %cst_365 = arith.constant 5.000000e-01 : f32
    %1171 = vector.broadcast %cst_365 : f32 to vector<12x32xf32>
    %1172 = arith.mulf %1171, %1170 : vector<12x32xf32>
    %1173 = vector.extract_strided_slice %1149 {offsets = [0, 64], sizes = [12, 32], strides = [1, 1]} : vector<12x96xf32> to vector<12x32xf32>
    %1174 = vector.extract_strided_slice %1152 {offsets = [0, 64], sizes = [12, 32], strides = [1, 1]} : vector<12x96xf32> to vector<12x32xf32>
    %1175 = arith.mulf %1162, %1174 : vector<12x32xf32>
    %1176 = arith.addf %1173, %1175 : vector<12x32xf32>
    %1177 = math.tanh %1176 : vector<12x32xf32>
    %cst_366 = arith.constant 1.000000e+00 : f32
    %1178 = vector.broadcast %cst_366 : f32 to vector<12x32xf32>
    %1179 = arith.subf %1178, %1172 : vector<12x32xf32>
    %1180 = arith.mulf %1179, %1177 : vector<12x32xf32>
    %1181 = arith.mulf %1172, %1006 : vector<12x32xf32>
    %1182 = arith.addf %1180, %1181 : vector<12x32xf32>
    %cst_367 = arith.constant dense<0.000000e+00> : vector<12x32xf32>
    %1183 = tpu.matmul %1182, %431, %cst_367 {dimension_numbers = #tpu.dot_dimension_numbers<[1], [0], [0], [1], [0, 0, 1, 1], [], []>} : vector<12x32xf32>, vector<32x32xf32>, vector<12x32xf32> -> vector<12x32xf32>
    %1184 = arith.addf %1183, %424 : vector<12x32xf32>
    %cst_368 = arith.constant 2.000000e+01 : f32
    %1185 = vector.broadcast %cst_368 : f32 to vector<12x32xf32>
    %1186 = arith.cmpf ogt, %1184, %1185 : vector<12x32xf32>
    %cst_369 = arith.constant 2.000000e+01 : f32
    %1187 = vector.broadcast %cst_369 : f32 to vector<12x32xf32>
    %1188 = arith.minimumf %1184, %1187 : vector<12x32xf32>
    %1189 = math.exp %1188 : vector<12x32xf32>
    %cst_370 = arith.constant 1.000000e+00 : f32
    %1190 = vector.broadcast %cst_370 : f32 to vector<12x32xf32>
    %1191 = arith.addf %1190, %1189 : vector<12x32xf32>
    %1192 = math.log %1191 : vector<12x32xf32>
    %1193 = arith.select %1186, %1184, %1192 : vector<12x32xi1>, vector<12x32xf32>
    %cst_371 = arith.constant dense<0.000000e+00> : vector<12x32xf32>
    %1194 = tpu.matmul %1193, %432, %cst_371 {dimension_numbers = #tpu.dot_dimension_numbers<[1], [0], [0], [1], [0, 0, 1, 1], [], []>} : vector<12x32xf32>, vector<32x32xf32>, vector<12x32xf32> -> vector<12x32xf32>
    %1195 = vector.broadcast %434 : vector<1x32xf32> to vector<12x32xf32>
    %1196 = arith.addf %1194, %1195 : vector<12x32xf32>
    %cst_372 = arith.constant 2.000000e+01 : f32
    %1197 = vector.broadcast %cst_372 : f32 to vector<12x32xf32>
    %1198 = arith.cmpf ogt, %1196, %1197 : vector<12x32xf32>
    %cst_373 = arith.constant 2.000000e+01 : f32
    %1199 = vector.broadcast %cst_373 : f32 to vector<12x32xf32>
    %1200 = arith.minimumf %1196, %1199 : vector<12x32xf32>
    %1201 = math.exp %1200 : vector<12x32xf32>
    %cst_374 = arith.constant 1.000000e+00 : f32
    %1202 = vector.broadcast %cst_374 : f32 to vector<12x32xf32>
    %1203 = arith.addf %1202, %1201 : vector<12x32xf32>
    %1204 = math.log %1203 : vector<12x32xf32>
    %1205 = arith.select %1198, %1196, %1204 : vector<12x32xi1>, vector<12x32xf32>
    %cst_375 = arith.constant dense<0.000000e+00> : vector<12x32xf32>
    %1206 = tpu.matmul %1205, %433, %cst_375 {dimension_numbers = #tpu.dot_dimension_numbers<[1], [0], [0], [1], [0, 0, 1, 1], [], []>} : vector<12x32xf32>, vector<32x32xf32>, vector<12x32xf32> -> vector<12x32xf32>
    %1207 = vector.broadcast %435 : vector<1x32xf32> to vector<12x32xf32>
    %1208 = arith.addf %1206, %1207 : vector<12x32xf32>
    %cst_376 = arith.constant 5.000000e-01 : f32
    %1209 = vector.broadcast %cst_376 : f32 to vector<12x2xf32>
    %1210 = arith.mulf %1209, %1143 : vector<12x2xf32>
    %1211 = arith.addf %1142, %1210 : vector<12x2xf32>
    %1212 = vector.extract_strided_slice %1208 {offsets = [0, 0], sizes = [12, 2], strides = [1, 1]} : vector<12x32xf32> to vector<12x2xf32>
    %1213 = arith.addf %1211, %1212 : vector<12x2xf32>
    %1214 = vector.extract_strided_slice %1208 {offsets = [0, 2], sizes = [12, 1], strides = [1, 1]} : vector<12x32xf32> to vector<12x1xf32>
    %1215 = vector.extract_strided_slice %1208 {offsets = [0, 3], sizes = [12, 1], strides = [1, 1]} : vector<12x32xf32> to vector<12x1xf32>
    %1216 = vector.extract_strided_slice %1208 {offsets = [0, 4], sizes = [12, 1], strides = [1, 1]} : vector<12x32xf32> to vector<12x1xf32>
    %1217 = vector.extract_strided_slice %1208 {offsets = [0, 5], sizes = [12, 1], strides = [1, 1]} : vector<12x32xf32> to vector<12x1xf32>
    %1218 = arith.addf %1214, %1217 : vector<12x1xf32>
    %cst_377 = arith.constant 5.000000e-01 : f32
    %1219 = vector.broadcast %cst_377 : f32 to vector<12x1xf32>
    %1220 = arith.mulf %1219, %1218 : vector<12x1xf32>
    %1221 = arith.subf %1214, %1217 : vector<12x1xf32>
    %cst_378 = arith.constant 5.000000e-01 : f32
    %1222 = vector.broadcast %cst_378 : f32 to vector<12x1xf32>
    %1223 = arith.mulf %1222, %1221 : vector<12x1xf32>
    %1224 = arith.mulf %1223, %1223 : vector<12x1xf32>
    %1225 = arith.mulf %1215, %1216 : vector<12x1xf32>
    %1226 = arith.addf %1224, %1225 : vector<12x1xf32>
    %cst_379 = arith.constant 2.44140625E-4 : f32
    %1227 = vector.broadcast %cst_379 : f32 to vector<12x1xf32>
    %1228 = arith.mulf %1226, %1227 : vector<12x1xf32>
    %cst_380 = arith.constant 2.48015876E-5 : f32
    %1229 = vector.broadcast %cst_380 : f32 to vector<12x1xf32>
    %1230 = arith.mulf %1228, %1229 : vector<12x1xf32>
    %cst_381 = arith.constant 0.00138888892 : f32
    %1231 = vector.broadcast %cst_381 : f32 to vector<12x1xf32>
    %1232 = arith.addf %1231, %1230 : vector<12x1xf32>
    %1233 = arith.mulf %1228, %1232 : vector<12x1xf32>
    %cst_382 = arith.constant 0.0416666679 : f32
    %1234 = vector.broadcast %cst_382 : f32 to vector<12x1xf32>
    %1235 = arith.addf %1234, %1233 : vector<12x1xf32>
    %1236 = arith.mulf %1228, %1235 : vector<12x1xf32>
    %cst_383 = arith.constant 5.000000e-01 : f32
    %1237 = vector.broadcast %cst_383 : f32 to vector<12x1xf32>
    %1238 = arith.addf %1237, %1236 : vector<12x1xf32>
    %1239 = arith.mulf %1228, %1238 : vector<12x1xf32>
    %cst_384 = arith.constant 1.000000e+00 : f32
    %1240 = vector.broadcast %cst_384 : f32 to vector<12x1xf32>
    %1241 = arith.addf %1240, %1239 : vector<12x1xf32>
    %cst_385 = arith.constant 2.75573188E-6 : f32
    %1242 = vector.broadcast %cst_385 : f32 to vector<12x1xf32>
    %1243 = arith.mulf %1228, %1242 : vector<12x1xf32>
    %cst_386 = arith.constant 1.98412701E-4 : f32
    %1244 = vector.broadcast %cst_386 : f32 to vector<12x1xf32>
    %1245 = arith.addf %1244, %1243 : vector<12x1xf32>
    %1246 = arith.mulf %1228, %1245 : vector<12x1xf32>
    %cst_387 = arith.constant 0.00833333377 : f32
    %1247 = vector.broadcast %cst_387 : f32 to vector<12x1xf32>
    %1248 = arith.addf %1247, %1246 : vector<12x1xf32>
    %1249 = arith.mulf %1228, %1248 : vector<12x1xf32>
    %cst_388 = arith.constant 0.166666672 : f32
    %1250 = vector.broadcast %cst_388 : f32 to vector<12x1xf32>
    %1251 = arith.addf %1250, %1249 : vector<12x1xf32>
    %1252 = arith.mulf %1228, %1251 : vector<12x1xf32>
    %cst_389 = arith.constant 1.000000e+00 : f32
    %1253 = vector.broadcast %cst_389 : f32 to vector<12x1xf32>
    %1254 = arith.addf %1253, %1252 : vector<12x1xf32>
    %1255 = arith.mulf %1254, %1241 : vector<12x1xf32>
    %cst_390 = arith.constant 2.000000e+00 : f32
    %1256 = vector.broadcast %cst_390 : f32 to vector<12x1xf32>
    %1257 = arith.mulf %1256, %1241 : vector<12x1xf32>
    %1258 = arith.mulf %1257, %1241 : vector<12x1xf32>
    %cst_391 = arith.constant 1.000000e+00 : f32
    %1259 = vector.broadcast %cst_391 : f32 to vector<12x1xf32>
    %1260 = arith.subf %1258, %1259 : vector<12x1xf32>
    %1261 = arith.mulf %1255, %1260 : vector<12x1xf32>
    %cst_392 = arith.constant 2.000000e+00 : f32
    %1262 = vector.broadcast %cst_392 : f32 to vector<12x1xf32>
    %1263 = arith.mulf %1262, %1260 : vector<12x1xf32>
    %1264 = arith.mulf %1263, %1260 : vector<12x1xf32>
    %cst_393 = arith.constant 1.000000e+00 : f32
    %1265 = vector.broadcast %cst_393 : f32 to vector<12x1xf32>
    %1266 = arith.subf %1264, %1265 : vector<12x1xf32>
    %1267 = arith.mulf %1261, %1266 : vector<12x1xf32>
    %cst_394 = arith.constant 2.000000e+00 : f32
    %1268 = vector.broadcast %cst_394 : f32 to vector<12x1xf32>
    %1269 = arith.mulf %1268, %1266 : vector<12x1xf32>
    %1270 = arith.mulf %1269, %1266 : vector<12x1xf32>
    %cst_395 = arith.constant 1.000000e+00 : f32
    %1271 = vector.broadcast %cst_395 : f32 to vector<12x1xf32>
    %1272 = arith.subf %1270, %1271 : vector<12x1xf32>
    %1273 = arith.mulf %1267, %1272 : vector<12x1xf32>
    %cst_396 = arith.constant 2.000000e+00 : f32
    %1274 = vector.broadcast %cst_396 : f32 to vector<12x1xf32>
    %1275 = arith.mulf %1274, %1272 : vector<12x1xf32>
    %1276 = arith.mulf %1275, %1272 : vector<12x1xf32>
    %cst_397 = arith.constant 1.000000e+00 : f32
    %1277 = vector.broadcast %cst_397 : f32 to vector<12x1xf32>
    %1278 = arith.subf %1276, %1277 : vector<12x1xf32>
    %1279 = arith.mulf %1273, %1278 : vector<12x1xf32>
    %cst_398 = arith.constant 2.000000e+00 : f32
    %1280 = vector.broadcast %cst_398 : f32 to vector<12x1xf32>
    %1281 = arith.mulf %1280, %1278 : vector<12x1xf32>
    %1282 = arith.mulf %1281, %1278 : vector<12x1xf32>
    %cst_399 = arith.constant 1.000000e+00 : f32
    %1283 = vector.broadcast %cst_399 : f32 to vector<12x1xf32>
    %1284 = arith.subf %1282, %1283 : vector<12x1xf32>
    %1285 = arith.mulf %1279, %1284 : vector<12x1xf32>
    %cst_400 = arith.constant 2.000000e+00 : f32
    %1286 = vector.broadcast %cst_400 : f32 to vector<12x1xf32>
    %1287 = arith.mulf %1286, %1284 : vector<12x1xf32>
    %1288 = arith.mulf %1287, %1284 : vector<12x1xf32>
    %cst_401 = arith.constant 1.000000e+00 : f32
    %1289 = vector.broadcast %cst_401 : f32 to vector<12x1xf32>
    %1290 = arith.subf %1288, %1289 : vector<12x1xf32>
    %1291 = math.exp %1220 : vector<12x1xf32>
    %1292 = arith.mulf %1285, %1223 : vector<12x1xf32>
    %1293 = arith.addf %1290, %1292 : vector<12x1xf32>
    %1294 = arith.mulf %1291, %1293 : vector<12x1xf32>
    %1295 = arith.mulf %1285, %1215 : vector<12x1xf32>
    %1296 = arith.mulf %1291, %1295 : vector<12x1xf32>
    %1297 = arith.mulf %1285, %1216 : vector<12x1xf32>
    %1298 = arith.mulf %1291, %1297 : vector<12x1xf32>
    %1299 = arith.mulf %1285, %1223 : vector<12x1xf32>
    %1300 = arith.subf %1290, %1299 : vector<12x1xf32>
    %1301 = arith.mulf %1291, %1300 : vector<12x1xf32>
    %1302 = vector.extract_strided_slice %436 {offsets = [0, 8], sizes = [12, 1], strides = [1, 1]} : vector<12x16xf32> to vector<12x1xf32>
    %1303 = vector.extract_strided_slice %436 {offsets = [0, 9], sizes = [12, 1], strides = [1, 1]} : vector<12x16xf32> to vector<12x1xf32>
    %1304 = vector.extract_strided_slice %1213 {offsets = [0, 0], sizes = [12, 1], strides = [1, 1]} : vector<12x2xf32> to vector<12x1xf32>
    %1305 = arith.mulf %1294, %1302 : vector<12x1xf32>
    %1306 = arith.addf %1304, %1305 : vector<12x1xf32>
    %1307 = arith.mulf %1296, %1303 : vector<12x1xf32>
    %1308 = arith.addf %1306, %1307 : vector<12x1xf32>
    %1309 = vector.extract_strided_slice %1213 {offsets = [0, 1], sizes = [12, 1], strides = [1, 1]} : vector<12x2xf32> to vector<12x1xf32>
    %1310 = arith.mulf %1298, %1302 : vector<12x1xf32>
    %1311 = arith.addf %1309, %1310 : vector<12x1xf32>
    %1312 = arith.mulf %1301, %1303 : vector<12x1xf32>
    %1313 = arith.addf %1311, %1312 : vector<12x1xf32>
    %1314 = vector.extract_strided_slice %1213 {offsets = [0, 0], sizes = [12, 1], strides = [1, 1]} : vector<12x2xf32> to vector<12x1xf32>
    %1315 = vector.extract_strided_slice %1213 {offsets = [0, 1], sizes = [12, 1], strides = [1, 1]} : vector<12x2xf32> to vector<12x1xf32>
    %1316 = tpu.concatenate %1308, %1313, %1314, %1315, %1294, %1296, %1298, %1301 in 1 : vector<12x1xf32>, vector<12x1xf32>, vector<12x1xf32>, vector<12x1xf32>, vector<12x1xf32>, vector<12x1xf32>, vector<12x1xf32>, vector<12x1xf32> -> vector<12x8xf32>
    %c0_402 = arith.constant 0 : index
    %c32_403 = arith.constant 32 : index
    %1317 = vector.load %arg13[%c0_402, %c32_403] : memref<12x64xf32, #tpu.memory_space<vmem>>, vector<12x8xf32>
    tpu.vector_store %arg13[%c0_402, %c32_403], %1316 {strides = array<i32>} : memref<12x64xf32, #tpu.memory_space<vmem>>, vector<12x8xf32>,
    %1318 = tpu.concatenate %1308, %1313 in 1 : vector<12x1xf32>, vector<12x1xf32> -> vector<12x2xf32>
    %1319 = arith.subf %1318, %1142 : vector<12x2xf32>
    %1320 = tpu.concatenate %427, %614, %790, %966, %1142, %1318, %439, %1182 in 1 : vector<12x2xf32>, vector<12x2xf32>, vector<12x2xf32>, vector<12x2xf32>, vector<12x2xf32>, vector<12x2xf32>, vector<12x4xf32>, vector<12x32xf32> -> vector<12x48xf32>
    %c0_404 = arith.constant 0 : index
    %c0_405 = arith.constant 0 : index
    %1321 = vector.load %arg8[%c0_404, %c0_405] : memref<48x224xf32, #tpu.memory_space<vmem>>, vector<48x224xf32>
    %cst_406 = arith.constant dense<0.000000e+00> : vector<12x224xf32>
    %1322 = tpu.matmul %1320, %1321, %cst_406 {dimension_numbers = #tpu.dot_dimension_numbers<[1], [0], [0], [1], [0, 0, 1, 1], [], []>} : vector<12x48xf32>, vector<48x224xf32>, vector<12x224xf32> -> vector<12x224xf32>
    %1323 = vector.extract_strided_slice %1322 {offsets = [0, 0], sizes = [12, 96], strides = [1, 1]} : vector<12x224xf32> to vector<12x96xf32>
    %1324 = vector.broadcast %429 : vector<1x96xf32> to vector<12x96xf32>
    %1325 = arith.addf %1323, %1324 : vector<12x96xf32>
    %1326 = vector.extract_strided_slice %1322 {offsets = [0, 128], sizes = [12, 96], strides = [1, 1]} : vector<12x224xf32> to vector<12x96xf32>
    %1327 = vector.broadcast %430 : vector<1x96xf32> to vector<12x96xf32>
    %1328 = arith.addf %1326, %1327 : vector<12x96xf32>
    %1329 = vector.extract_strided_slice %1325 {offsets = [0, 0], sizes = [12, 32], strides = [1, 1]} : vector<12x96xf32> to vector<12x32xf32>
    %1330 = vector.extract_strided_slice %1328 {offsets = [0, 0], sizes = [12, 32], strides = [1, 1]} : vector<12x96xf32> to vector<12x32xf32>
    %1331 = arith.addf %1329, %1330 : vector<12x32xf32>
    %cst_407 = arith.constant 5.000000e-01 : f32
    %1332 = vector.broadcast %cst_407 : f32 to vector<12x32xf32>
    %1333 = arith.mulf %1332, %1331 : vector<12x32xf32>
    %1334 = math.tanh %1333 : vector<12x32xf32>
    %cst_408 = arith.constant 1.000000e+00 : f32
    %1335 = vector.broadcast %cst_408 : f32 to vector<12x32xf32>
    %1336 = arith.addf %1334, %1335 : vector<12x32xf32>
    %cst_409 = arith.constant 5.000000e-01 : f32
    %1337 = vector.broadcast %cst_409 : f32 to vector<12x32xf32>
    %1338 = arith.mulf %1337, %1336 : vector<12x32xf32>
    %1339 = vector.extract_strided_slice %1325 {offsets = [0, 32], sizes = [12, 32], strides = [1, 1]} : vector<12x96xf32> to vector<12x32xf32>
    %1340 = vector.extract_strided_slice %1328 {offsets = [0, 32], sizes = [12, 32], strides = [1, 1]} : vector<12x96xf32> to vector<12x32xf32>
    %1341 = arith.addf %1339, %1340 : vector<12x32xf32>
    %cst_410 = arith.constant 5.000000e-01 : f32
    %1342 = vector.broadcast %cst_410 : f32 to vector<12x32xf32>
    %1343 = arith.mulf %1342, %1341 : vector<12x32xf32>
    %1344 = math.tanh %1343 : vector<12x32xf32>
    %cst_411 = arith.constant 1.000000e+00 : f32
    %1345 = vector.broadcast %cst_411 : f32 to vector<12x32xf32>
    %1346 = arith.addf %1344, %1345 : vector<12x32xf32>
    %cst_412 = arith.constant 5.000000e-01 : f32
    %1347 = vector.broadcast %cst_412 : f32 to vector<12x32xf32>
    %1348 = arith.mulf %1347, %1346 : vector<12x32xf32>
    %1349 = vector.extract_strided_slice %1325 {offsets = [0, 64], sizes = [12, 32], strides = [1, 1]} : vector<12x96xf32> to vector<12x32xf32>
    %1350 = vector.extract_strided_slice %1328 {offsets = [0, 64], sizes = [12, 32], strides = [1, 1]} : vector<12x96xf32> to vector<12x32xf32>
    %1351 = arith.mulf %1338, %1350 : vector<12x32xf32>
    %1352 = arith.addf %1349, %1351 : vector<12x32xf32>
    %1353 = math.tanh %1352 : vector<12x32xf32>
    %cst_413 = arith.constant 1.000000e+00 : f32
    %1354 = vector.broadcast %cst_413 : f32 to vector<12x32xf32>
    %1355 = arith.subf %1354, %1348 : vector<12x32xf32>
    %1356 = arith.mulf %1355, %1353 : vector<12x32xf32>
    %1357 = arith.mulf %1348, %1182 : vector<12x32xf32>
    %1358 = arith.addf %1356, %1357 : vector<12x32xf32>
    %cst_414 = arith.constant dense<0.000000e+00> : vector<12x32xf32>
    %1359 = tpu.matmul %1358, %431, %cst_414 {dimension_numbers = #tpu.dot_dimension_numbers<[1], [0], [0], [1], [0, 0, 1, 1], [], []>} : vector<12x32xf32>, vector<32x32xf32>, vector<12x32xf32> -> vector<12x32xf32>
    %1360 = arith.addf %1359, %424 : vector<12x32xf32>
    %cst_415 = arith.constant 2.000000e+01 : f32
    %1361 = vector.broadcast %cst_415 : f32 to vector<12x32xf32>
    %1362 = arith.cmpf ogt, %1360, %1361 : vector<12x32xf32>
    %cst_416 = arith.constant 2.000000e+01 : f32
    %1363 = vector.broadcast %cst_416 : f32 to vector<12x32xf32>
    %1364 = arith.minimumf %1360, %1363 : vector<12x32xf32>
    %1365 = math.exp %1364 : vector<12x32xf32>
    %cst_417 = arith.constant 1.000000e+00 : f32
    %1366 = vector.broadcast %cst_417 : f32 to vector<12x32xf32>
    %1367 = arith.addf %1366, %1365 : vector<12x32xf32>
    %1368 = math.log %1367 : vector<12x32xf32>
    %1369 = arith.select %1362, %1360, %1368 : vector<12x32xi1>, vector<12x32xf32>
    %cst_418 = arith.constant dense<0.000000e+00> : vector<12x32xf32>
    %1370 = tpu.matmul %1369, %432, %cst_418 {dimension_numbers = #tpu.dot_dimension_numbers<[1], [0], [0], [1], [0, 0, 1, 1], [], []>} : vector<12x32xf32>, vector<32x32xf32>, vector<12x32xf32> -> vector<12x32xf32>
    %1371 = vector.broadcast %434 : vector<1x32xf32> to vector<12x32xf32>
    %1372 = arith.addf %1370, %1371 : vector<12x32xf32>
    %cst_419 = arith.constant 2.000000e+01 : f32
    %1373 = vector.broadcast %cst_419 : f32 to vector<12x32xf32>
    %1374 = arith.cmpf ogt, %1372, %1373 : vector<12x32xf32>
    %cst_420 = arith.constant 2.000000e+01 : f32
    %1375 = vector.broadcast %cst_420 : f32 to vector<12x32xf32>
    %1376 = arith.minimumf %1372, %1375 : vector<12x32xf32>
    %1377 = math.exp %1376 : vector<12x32xf32>
    %cst_421 = arith.constant 1.000000e+00 : f32
    %1378 = vector.broadcast %cst_421 : f32 to vector<12x32xf32>
    %1379 = arith.addf %1378, %1377 : vector<12x32xf32>
    %1380 = math.log %1379 : vector<12x32xf32>
    %1381 = arith.select %1374, %1372, %1380 : vector<12x32xi1>, vector<12x32xf32>
    %cst_422 = arith.constant dense<0.000000e+00> : vector<12x32xf32>
    %1382 = tpu.matmul %1381, %433, %cst_422 {dimension_numbers = #tpu.dot_dimension_numbers<[1], [0], [0], [1], [0, 0, 1, 1], [], []>} : vector<12x32xf32>, vector<32x32xf32>, vector<12x32xf32> -> vector<12x32xf32>
    %1383 = vector.broadcast %435 : vector<1x32xf32> to vector<12x32xf32>
    %1384 = arith.addf %1382, %1383 : vector<12x32xf32>
    %cst_423 = arith.constant 5.000000e-01 : f32
    %1385 = vector.broadcast %cst_423 : f32 to vector<12x2xf32>
    %1386 = arith.mulf %1385, %1319 : vector<12x2xf32>
    %1387 = arith.addf %1318, %1386 : vector<12x2xf32>
    %1388 = vector.extract_strided_slice %1384 {offsets = [0, 0], sizes = [12, 2], strides = [1, 1]} : vector<12x32xf32> to vector<12x2xf32>
    %1389 = arith.addf %1387, %1388 : vector<12x2xf32>
    %1390 = vector.extract_strided_slice %1384 {offsets = [0, 2], sizes = [12, 1], strides = [1, 1]} : vector<12x32xf32> to vector<12x1xf32>
    %1391 = vector.extract_strided_slice %1384 {offsets = [0, 3], sizes = [12, 1], strides = [1, 1]} : vector<12x32xf32> to vector<12x1xf32>
    %1392 = vector.extract_strided_slice %1384 {offsets = [0, 4], sizes = [12, 1], strides = [1, 1]} : vector<12x32xf32> to vector<12x1xf32>
    %1393 = vector.extract_strided_slice %1384 {offsets = [0, 5], sizes = [12, 1], strides = [1, 1]} : vector<12x32xf32> to vector<12x1xf32>
    %1394 = arith.addf %1390, %1393 : vector<12x1xf32>
    %cst_424 = arith.constant 5.000000e-01 : f32
    %1395 = vector.broadcast %cst_424 : f32 to vector<12x1xf32>
    %1396 = arith.mulf %1395, %1394 : vector<12x1xf32>
    %1397 = arith.subf %1390, %1393 : vector<12x1xf32>
    %cst_425 = arith.constant 5.000000e-01 : f32
    %1398 = vector.broadcast %cst_425 : f32 to vector<12x1xf32>
    %1399 = arith.mulf %1398, %1397 : vector<12x1xf32>
    %1400 = arith.mulf %1399, %1399 : vector<12x1xf32>
    %1401 = arith.mulf %1391, %1392 : vector<12x1xf32>
    %1402 = arith.addf %1400, %1401 : vector<12x1xf32>
    %cst_426 = arith.constant 2.44140625E-4 : f32
    %1403 = vector.broadcast %cst_426 : f32 to vector<12x1xf32>
    %1404 = arith.mulf %1402, %1403 : vector<12x1xf32>
    %cst_427 = arith.constant 2.48015876E-5 : f32
    %1405 = vector.broadcast %cst_427 : f32 to vector<12x1xf32>
    %1406 = arith.mulf %1404, %1405 : vector<12x1xf32>
    %cst_428 = arith.constant 0.00138888892 : f32
    %1407 = vector.broadcast %cst_428 : f32 to vector<12x1xf32>
    %1408 = arith.addf %1407, %1406 : vector<12x1xf32>
    %1409 = arith.mulf %1404, %1408 : vector<12x1xf32>
    %cst_429 = arith.constant 0.0416666679 : f32
    %1410 = vector.broadcast %cst_429 : f32 to vector<12x1xf32>
    %1411 = arith.addf %1410, %1409 : vector<12x1xf32>
    %1412 = arith.mulf %1404, %1411 : vector<12x1xf32>
    %cst_430 = arith.constant 5.000000e-01 : f32
    %1413 = vector.broadcast %cst_430 : f32 to vector<12x1xf32>
    %1414 = arith.addf %1413, %1412 : vector<12x1xf32>
    %1415 = arith.mulf %1404, %1414 : vector<12x1xf32>
    %cst_431 = arith.constant 1.000000e+00 : f32
    %1416 = vector.broadcast %cst_431 : f32 to vector<12x1xf32>
    %1417 = arith.addf %1416, %1415 : vector<12x1xf32>
    %cst_432 = arith.constant 2.75573188E-6 : f32
    %1418 = vector.broadcast %cst_432 : f32 to vector<12x1xf32>
    %1419 = arith.mulf %1404, %1418 : vector<12x1xf32>
    %cst_433 = arith.constant 1.98412701E-4 : f32
    %1420 = vector.broadcast %cst_433 : f32 to vector<12x1xf32>
    %1421 = arith.addf %1420, %1419 : vector<12x1xf32>
    %1422 = arith.mulf %1404, %1421 : vector<12x1xf32>
    %cst_434 = arith.constant 0.00833333377 : f32
    %1423 = vector.broadcast %cst_434 : f32 to vector<12x1xf32>
    %1424 = arith.addf %1423, %1422 : vector<12x1xf32>
    %1425 = arith.mulf %1404, %1424 : vector<12x1xf32>
    %cst_435 = arith.constant 0.166666672 : f32
    %1426 = vector.broadcast %cst_435 : f32 to vector<12x1xf32>
    %1427 = arith.addf %1426, %1425 : vector<12x1xf32>
    %1428 = arith.mulf %1404, %1427 : vector<12x1xf32>
    %cst_436 = arith.constant 1.000000e+00 : f32
    %1429 = vector.broadcast %cst_436 : f32 to vector<12x1xf32>
    %1430 = arith.addf %1429, %1428 : vector<12x1xf32>
    %1431 = arith.mulf %1430, %1417 : vector<12x1xf32>
    %cst_437 = arith.constant 2.000000e+00 : f32
    %1432 = vector.broadcast %cst_437 : f32 to vector<12x1xf32>
    %1433 = arith.mulf %1432, %1417 : vector<12x1xf32>
    %1434 = arith.mulf %1433, %1417 : vector<12x1xf32>
    %cst_438 = arith.constant 1.000000e+00 : f32
    %1435 = vector.broadcast %cst_438 : f32 to vector<12x1xf32>
    %1436 = arith.subf %1434, %1435 : vector<12x1xf32>
    %1437 = arith.mulf %1431, %1436 : vector<12x1xf32>
    %cst_439 = arith.constant 2.000000e+00 : f32
    %1438 = vector.broadcast %cst_439 : f32 to vector<12x1xf32>
    %1439 = arith.mulf %1438, %1436 : vector<12x1xf32>
    %1440 = arith.mulf %1439, %1436 : vector<12x1xf32>
    %cst_440 = arith.constant 1.000000e+00 : f32
    %1441 = vector.broadcast %cst_440 : f32 to vector<12x1xf32>
    %1442 = arith.subf %1440, %1441 : vector<12x1xf32>
    %1443 = arith.mulf %1437, %1442 : vector<12x1xf32>
    %cst_441 = arith.constant 2.000000e+00 : f32
    %1444 = vector.broadcast %cst_441 : f32 to vector<12x1xf32>
    %1445 = arith.mulf %1444, %1442 : vector<12x1xf32>
    %1446 = arith.mulf %1445, %1442 : vector<12x1xf32>
    %cst_442 = arith.constant 1.000000e+00 : f32
    %1447 = vector.broadcast %cst_442 : f32 to vector<12x1xf32>
    %1448 = arith.subf %1446, %1447 : vector<12x1xf32>
    %1449 = arith.mulf %1443, %1448 : vector<12x1xf32>
    %cst_443 = arith.constant 2.000000e+00 : f32
    %1450 = vector.broadcast %cst_443 : f32 to vector<12x1xf32>
    %1451 = arith.mulf %1450, %1448 : vector<12x1xf32>
    %1452 = arith.mulf %1451, %1448 : vector<12x1xf32>
    %cst_444 = arith.constant 1.000000e+00 : f32
    %1453 = vector.broadcast %cst_444 : f32 to vector<12x1xf32>
    %1454 = arith.subf %1452, %1453 : vector<12x1xf32>
    %1455 = arith.mulf %1449, %1454 : vector<12x1xf32>
    %cst_445 = arith.constant 2.000000e+00 : f32
    %1456 = vector.broadcast %cst_445 : f32 to vector<12x1xf32>
    %1457 = arith.mulf %1456, %1454 : vector<12x1xf32>
    %1458 = arith.mulf %1457, %1454 : vector<12x1xf32>
    %cst_446 = arith.constant 1.000000e+00 : f32
    %1459 = vector.broadcast %cst_446 : f32 to vector<12x1xf32>
    %1460 = arith.subf %1458, %1459 : vector<12x1xf32>
    %1461 = arith.mulf %1455, %1460 : vector<12x1xf32>
    %cst_447 = arith.constant 2.000000e+00 : f32
    %1462 = vector.broadcast %cst_447 : f32 to vector<12x1xf32>
    %1463 = arith.mulf %1462, %1460 : vector<12x1xf32>
    %1464 = arith.mulf %1463, %1460 : vector<12x1xf32>
    %cst_448 = arith.constant 1.000000e+00 : f32
    %1465 = vector.broadcast %cst_448 : f32 to vector<12x1xf32>
    %1466 = arith.subf %1464, %1465 : vector<12x1xf32>
    %1467 = math.exp %1396 : vector<12x1xf32>
    %1468 = arith.mulf %1461, %1399 : vector<12x1xf32>
    %1469 = arith.addf %1466, %1468 : vector<12x1xf32>
    %1470 = arith.mulf %1467, %1469 : vector<12x1xf32>
    %1471 = arith.mulf %1461, %1391 : vector<12x1xf32>
    %1472 = arith.mulf %1467, %1471 : vector<12x1xf32>
    %1473 = arith.mulf %1461, %1392 : vector<12x1xf32>
    %1474 = arith.mulf %1467, %1473 : vector<12x1xf32>
    %1475 = arith.mulf %1461, %1399 : vector<12x1xf32>
    %1476 = arith.subf %1466, %1475 : vector<12x1xf32>
    %1477 = arith.mulf %1467, %1476 : vector<12x1xf32>
    %1478 = vector.extract_strided_slice %436 {offsets = [0, 10], sizes = [12, 1], strides = [1, 1]} : vector<12x16xf32> to vector<12x1xf32>
    %1479 = vector.extract_strided_slice %436 {offsets = [0, 11], sizes = [12, 1], strides = [1, 1]} : vector<12x16xf32> to vector<12x1xf32>
    %1480 = vector.extract_strided_slice %1389 {offsets = [0, 0], sizes = [12, 1], strides = [1, 1]} : vector<12x2xf32> to vector<12x1xf32>
    %1481 = arith.mulf %1470, %1478 : vector<12x1xf32>
    %1482 = arith.addf %1480, %1481 : vector<12x1xf32>
    %1483 = arith.mulf %1472, %1479 : vector<12x1xf32>
    %1484 = arith.addf %1482, %1483 : vector<12x1xf32>
    %1485 = vector.extract_strided_slice %1389 {offsets = [0, 1], sizes = [12, 1], strides = [1, 1]} : vector<12x2xf32> to vector<12x1xf32>
    %1486 = arith.mulf %1474, %1478 : vector<12x1xf32>
    %1487 = arith.addf %1485, %1486 : vector<12x1xf32>
    %1488 = arith.mulf %1477, %1479 : vector<12x1xf32>
    %1489 = arith.addf %1487, %1488 : vector<12x1xf32>
    %1490 = vector.extract_strided_slice %1389 {offsets = [0, 0], sizes = [12, 1], strides = [1, 1]} : vector<12x2xf32> to vector<12x1xf32>
    %1491 = vector.extract_strided_slice %1389 {offsets = [0, 1], sizes = [12, 1], strides = [1, 1]} : vector<12x2xf32> to vector<12x1xf32>
    %1492 = tpu.concatenate %1484, %1489, %1490, %1491, %1470, %1472, %1474, %1477 in 1 : vector<12x1xf32>, vector<12x1xf32>, vector<12x1xf32>, vector<12x1xf32>, vector<12x1xf32>, vector<12x1xf32>, vector<12x1xf32>, vector<12x1xf32> -> vector<12x8xf32>
    %c0_449 = arith.constant 0 : index
    %c40 = arith.constant 40 : index
    %1493 = vector.load %arg13[%c0_449, %c40] : memref<12x64xf32, #tpu.memory_space<vmem>>, vector<12x8xf32>
    tpu.vector_store %arg13[%c0_449, %c40], %1492 {strides = array<i32>} : memref<12x64xf32, #tpu.memory_space<vmem>>, vector<12x8xf32>,
    %1494 = tpu.concatenate %1484, %1489 in 1 : vector<12x1xf32>, vector<12x1xf32> -> vector<12x2xf32>
    %1495 = arith.subf %1494, %1318 : vector<12x2xf32>
    %1496 = tpu.concatenate %614, %790, %966, %1142, %1318, %1494, %439, %1358 in 1 : vector<12x2xf32>, vector<12x2xf32>, vector<12x2xf32>, vector<12x2xf32>, vector<12x2xf32>, vector<12x2xf32>, vector<12x4xf32>, vector<12x32xf32> -> vector<12x48xf32>
    %c0_450 = arith.constant 0 : index
    %c0_451 = arith.constant 0 : index
    %1497 = vector.load %arg8[%c0_450, %c0_451] : memref<48x224xf32, #tpu.memory_space<vmem>>, vector<48x224xf32>
    %cst_452 = arith.constant dense<0.000000e+00> : vector<12x224xf32>
    %1498 = tpu.matmul %1496, %1497, %cst_452 {dimension_numbers = #tpu.dot_dimension_numbers<[1], [0], [0], [1], [0, 0, 1, 1], [], []>} : vector<12x48xf32>, vector<48x224xf32>, vector<12x224xf32> -> vector<12x224xf32>
    %1499 = vector.extract_strided_slice %1498 {offsets = [0, 0], sizes = [12, 96], strides = [1, 1]} : vector<12x224xf32> to vector<12x96xf32>
    %1500 = vector.broadcast %429 : vector<1x96xf32> to vector<12x96xf32>
    %1501 = arith.addf %1499, %1500 : vector<12x96xf32>
    %1502 = vector.extract_strided_slice %1498 {offsets = [0, 128], sizes = [12, 96], strides = [1, 1]} : vector<12x224xf32> to vector<12x96xf32>
    %1503 = vector.broadcast %430 : vector<1x96xf32> to vector<12x96xf32>
    %1504 = arith.addf %1502, %1503 : vector<12x96xf32>
    %1505 = vector.extract_strided_slice %1501 {offsets = [0, 0], sizes = [12, 32], strides = [1, 1]} : vector<12x96xf32> to vector<12x32xf32>
    %1506 = vector.extract_strided_slice %1504 {offsets = [0, 0], sizes = [12, 32], strides = [1, 1]} : vector<12x96xf32> to vector<12x32xf32>
    %1507 = arith.addf %1505, %1506 : vector<12x32xf32>
    %cst_453 = arith.constant 5.000000e-01 : f32
    %1508 = vector.broadcast %cst_453 : f32 to vector<12x32xf32>
    %1509 = arith.mulf %1508, %1507 : vector<12x32xf32>
    %1510 = math.tanh %1509 : vector<12x32xf32>
    %cst_454 = arith.constant 1.000000e+00 : f32
    %1511 = vector.broadcast %cst_454 : f32 to vector<12x32xf32>
    %1512 = arith.addf %1510, %1511 : vector<12x32xf32>
    %cst_455 = arith.constant 5.000000e-01 : f32
    %1513 = vector.broadcast %cst_455 : f32 to vector<12x32xf32>
    %1514 = arith.mulf %1513, %1512 : vector<12x32xf32>
    %1515 = vector.extract_strided_slice %1501 {offsets = [0, 32], sizes = [12, 32], strides = [1, 1]} : vector<12x96xf32> to vector<12x32xf32>
    %1516 = vector.extract_strided_slice %1504 {offsets = [0, 32], sizes = [12, 32], strides = [1, 1]} : vector<12x96xf32> to vector<12x32xf32>
    %1517 = arith.addf %1515, %1516 : vector<12x32xf32>
    %cst_456 = arith.constant 5.000000e-01 : f32
    %1518 = vector.broadcast %cst_456 : f32 to vector<12x32xf32>
    %1519 = arith.mulf %1518, %1517 : vector<12x32xf32>
    %1520 = math.tanh %1519 : vector<12x32xf32>
    %cst_457 = arith.constant 1.000000e+00 : f32
    %1521 = vector.broadcast %cst_457 : f32 to vector<12x32xf32>
    %1522 = arith.addf %1520, %1521 : vector<12x32xf32>
    %cst_458 = arith.constant 5.000000e-01 : f32
    %1523 = vector.broadcast %cst_458 : f32 to vector<12x32xf32>
    %1524 = arith.mulf %1523, %1522 : vector<12x32xf32>
    %1525 = vector.extract_strided_slice %1501 {offsets = [0, 64], sizes = [12, 32], strides = [1, 1]} : vector<12x96xf32> to vector<12x32xf32>
    %1526 = vector.extract_strided_slice %1504 {offsets = [0, 64], sizes = [12, 32], strides = [1, 1]} : vector<12x96xf32> to vector<12x32xf32>
    %1527 = arith.mulf %1514, %1526 : vector<12x32xf32>
    %1528 = arith.addf %1525, %1527 : vector<12x32xf32>
    %1529 = math.tanh %1528 : vector<12x32xf32>
    %cst_459 = arith.constant 1.000000e+00 : f32
    %1530 = vector.broadcast %cst_459 : f32 to vector<12x32xf32>
    %1531 = arith.subf %1530, %1524 : vector<12x32xf32>
    %1532 = arith.mulf %1531, %1529 : vector<12x32xf32>
    %1533 = arith.mulf %1524, %1358 : vector<12x32xf32>
    %1534 = arith.addf %1532, %1533 : vector<12x32xf32>
    %cst_460 = arith.constant dense<0.000000e+00> : vector<12x32xf32>
    %1535 = tpu.matmul %1534, %431, %cst_460 {dimension_numbers = #tpu.dot_dimension_numbers<[1], [0], [0], [1], [0, 0, 1, 1], [], []>} : vector<12x32xf32>, vector<32x32xf32>, vector<12x32xf32> -> vector<12x32xf32>
    %1536 = arith.addf %1535, %424 : vector<12x32xf32>
    %cst_461 = arith.constant 2.000000e+01 : f32
    %1537 = vector.broadcast %cst_461 : f32 to vector<12x32xf32>
    %1538 = arith.cmpf ogt, %1536, %1537 : vector<12x32xf32>
    %cst_462 = arith.constant 2.000000e+01 : f32
    %1539 = vector.broadcast %cst_462 : f32 to vector<12x32xf32>
    %1540 = arith.minimumf %1536, %1539 : vector<12x32xf32>
    %1541 = math.exp %1540 : vector<12x32xf32>
    %cst_463 = arith.constant 1.000000e+00 : f32
    %1542 = vector.broadcast %cst_463 : f32 to vector<12x32xf32>
    %1543 = arith.addf %1542, %1541 : vector<12x32xf32>
    %1544 = math.log %1543 : vector<12x32xf32>
    %1545 = arith.select %1538, %1536, %1544 : vector<12x32xi1>, vector<12x32xf32>
    %cst_464 = arith.constant dense<0.000000e+00> : vector<12x32xf32>
    %1546 = tpu.matmul %1545, %432, %cst_464 {dimension_numbers = #tpu.dot_dimension_numbers<[1], [0], [0], [1], [0, 0, 1, 1], [], []>} : vector<12x32xf32>, vector<32x32xf32>, vector<12x32xf32> -> vector<12x32xf32>
    %1547 = vector.broadcast %434 : vector<1x32xf32> to vector<12x32xf32>
    %1548 = arith.addf %1546, %1547 : vector<12x32xf32>
    %cst_465 = arith.constant 2.000000e+01 : f32
    %1549 = vector.broadcast %cst_465 : f32 to vector<12x32xf32>
    %1550 = arith.cmpf ogt, %1548, %1549 : vector<12x32xf32>
    %cst_466 = arith.constant 2.000000e+01 : f32
    %1551 = vector.broadcast %cst_466 : f32 to vector<12x32xf32>
    %1552 = arith.minimumf %1548, %1551 : vector<12x32xf32>
    %1553 = math.exp %1552 : vector<12x32xf32>
    %cst_467 = arith.constant 1.000000e+00 : f32
    %1554 = vector.broadcast %cst_467 : f32 to vector<12x32xf32>
    %1555 = arith.addf %1554, %1553 : vector<12x32xf32>
    %1556 = math.log %1555 : vector<12x32xf32>
    %1557 = arith.select %1550, %1548, %1556 : vector<12x32xi1>, vector<12x32xf32>
    %cst_468 = arith.constant dense<0.000000e+00> : vector<12x32xf32>
    %1558 = tpu.matmul %1557, %433, %cst_468 {dimension_numbers = #tpu.dot_dimension_numbers<[1], [0], [0], [1], [0, 0, 1, 1], [], []>} : vector<12x32xf32>, vector<32x32xf32>, vector<12x32xf32> -> vector<12x32xf32>
    %1559 = vector.broadcast %435 : vector<1x32xf32> to vector<12x32xf32>
    %1560 = arith.addf %1558, %1559 : vector<12x32xf32>
    %cst_469 = arith.constant 5.000000e-01 : f32
    %1561 = vector.broadcast %cst_469 : f32 to vector<12x2xf32>
    %1562 = arith.mulf %1561, %1495 : vector<12x2xf32>
    %1563 = arith.addf %1494, %1562 : vector<12x2xf32>
    %1564 = vector.extract_strided_slice %1560 {offsets = [0, 0], sizes = [12, 2], strides = [1, 1]} : vector<12x32xf32> to vector<12x2xf32>
    %1565 = arith.addf %1563, %1564 : vector<12x2xf32>
    %1566 = vector.extract_strided_slice %1560 {offsets = [0, 2], sizes = [12, 1], strides = [1, 1]} : vector<12x32xf32> to vector<12x1xf32>
    %1567 = vector.extract_strided_slice %1560 {offsets = [0, 3], sizes = [12, 1], strides = [1, 1]} : vector<12x32xf32> to vector<12x1xf32>
    %1568 = vector.extract_strided_slice %1560 {offsets = [0, 4], sizes = [12, 1], strides = [1, 1]} : vector<12x32xf32> to vector<12x1xf32>
    %1569 = vector.extract_strided_slice %1560 {offsets = [0, 5], sizes = [12, 1], strides = [1, 1]} : vector<12x32xf32> to vector<12x1xf32>
    %1570 = arith.addf %1566, %1569 : vector<12x1xf32>
    %cst_470 = arith.constant 5.000000e-01 : f32
    %1571 = vector.broadcast %cst_470 : f32 to vector<12x1xf32>
    %1572 = arith.mulf %1571, %1570 : vector<12x1xf32>
    %1573 = arith.subf %1566, %1569 : vector<12x1xf32>
    %cst_471 = arith.constant 5.000000e-01 : f32
    %1574 = vector.broadcast %cst_471 : f32 to vector<12x1xf32>
    %1575 = arith.mulf %1574, %1573 : vector<12x1xf32>
    %1576 = arith.mulf %1575, %1575 : vector<12x1xf32>
    %1577 = arith.mulf %1567, %1568 : vector<12x1xf32>
    %1578 = arith.addf %1576, %1577 : vector<12x1xf32>
    %cst_472 = arith.constant 2.44140625E-4 : f32
    %1579 = vector.broadcast %cst_472 : f32 to vector<12x1xf32>
    %1580 = arith.mulf %1578, %1579 : vector<12x1xf32>
    %cst_473 = arith.constant 2.48015876E-5 : f32
    %1581 = vector.broadcast %cst_473 : f32 to vector<12x1xf32>
    %1582 = arith.mulf %1580, %1581 : vector<12x1xf32>
    %cst_474 = arith.constant 0.00138888892 : f32
    %1583 = vector.broadcast %cst_474 : f32 to vector<12x1xf32>
    %1584 = arith.addf %1583, %1582 : vector<12x1xf32>
    %1585 = arith.mulf %1580, %1584 : vector<12x1xf32>
    %cst_475 = arith.constant 0.0416666679 : f32
    %1586 = vector.broadcast %cst_475 : f32 to vector<12x1xf32>
    %1587 = arith.addf %1586, %1585 : vector<12x1xf32>
    %1588 = arith.mulf %1580, %1587 : vector<12x1xf32>
    %cst_476 = arith.constant 5.000000e-01 : f32
    %1589 = vector.broadcast %cst_476 : f32 to vector<12x1xf32>
    %1590 = arith.addf %1589, %1588 : vector<12x1xf32>
    %1591 = arith.mulf %1580, %1590 : vector<12x1xf32>
    %cst_477 = arith.constant 1.000000e+00 : f32
    %1592 = vector.broadcast %cst_477 : f32 to vector<12x1xf32>
    %1593 = arith.addf %1592, %1591 : vector<12x1xf32>
    %cst_478 = arith.constant 2.75573188E-6 : f32
    %1594 = vector.broadcast %cst_478 : f32 to vector<12x1xf32>
    %1595 = arith.mulf %1580, %1594 : vector<12x1xf32>
    %cst_479 = arith.constant 1.98412701E-4 : f32
    %1596 = vector.broadcast %cst_479 : f32 to vector<12x1xf32>
    %1597 = arith.addf %1596, %1595 : vector<12x1xf32>
    %1598 = arith.mulf %1580, %1597 : vector<12x1xf32>
    %cst_480 = arith.constant 0.00833333377 : f32
    %1599 = vector.broadcast %cst_480 : f32 to vector<12x1xf32>
    %1600 = arith.addf %1599, %1598 : vector<12x1xf32>
    %1601 = arith.mulf %1580, %1600 : vector<12x1xf32>
    %cst_481 = arith.constant 0.166666672 : f32
    %1602 = vector.broadcast %cst_481 : f32 to vector<12x1xf32>
    %1603 = arith.addf %1602, %1601 : vector<12x1xf32>
    %1604 = arith.mulf %1580, %1603 : vector<12x1xf32>
    %cst_482 = arith.constant 1.000000e+00 : f32
    %1605 = vector.broadcast %cst_482 : f32 to vector<12x1xf32>
    %1606 = arith.addf %1605, %1604 : vector<12x1xf32>
    %1607 = arith.mulf %1606, %1593 : vector<12x1xf32>
    %cst_483 = arith.constant 2.000000e+00 : f32
    %1608 = vector.broadcast %cst_483 : f32 to vector<12x1xf32>
    %1609 = arith.mulf %1608, %1593 : vector<12x1xf32>
    %1610 = arith.mulf %1609, %1593 : vector<12x1xf32>
    %cst_484 = arith.constant 1.000000e+00 : f32
    %1611 = vector.broadcast %cst_484 : f32 to vector<12x1xf32>
    %1612 = arith.subf %1610, %1611 : vector<12x1xf32>
    %1613 = arith.mulf %1607, %1612 : vector<12x1xf32>
    %cst_485 = arith.constant 2.000000e+00 : f32
    %1614 = vector.broadcast %cst_485 : f32 to vector<12x1xf32>
    %1615 = arith.mulf %1614, %1612 : vector<12x1xf32>
    %1616 = arith.mulf %1615, %1612 : vector<12x1xf32>
    %cst_486 = arith.constant 1.000000e+00 : f32
    %1617 = vector.broadcast %cst_486 : f32 to vector<12x1xf32>
    %1618 = arith.subf %1616, %1617 : vector<12x1xf32>
    %1619 = arith.mulf %1613, %1618 : vector<12x1xf32>
    %cst_487 = arith.constant 2.000000e+00 : f32
    %1620 = vector.broadcast %cst_487 : f32 to vector<12x1xf32>
    %1621 = arith.mulf %1620, %1618 : vector<12x1xf32>
    %1622 = arith.mulf %1621, %1618 : vector<12x1xf32>
    %cst_488 = arith.constant 1.000000e+00 : f32
    %1623 = vector.broadcast %cst_488 : f32 to vector<12x1xf32>
    %1624 = arith.subf %1622, %1623 : vector<12x1xf32>
    %1625 = arith.mulf %1619, %1624 : vector<12x1xf32>
    %cst_489 = arith.constant 2.000000e+00 : f32
    %1626 = vector.broadcast %cst_489 : f32 to vector<12x1xf32>
    %1627 = arith.mulf %1626, %1624 : vector<12x1xf32>
    %1628 = arith.mulf %1627, %1624 : vector<12x1xf32>
    %cst_490 = arith.constant 1.000000e+00 : f32
    %1629 = vector.broadcast %cst_490 : f32 to vector<12x1xf32>
    %1630 = arith.subf %1628, %1629 : vector<12x1xf32>
    %1631 = arith.mulf %1625, %1630 : vector<12x1xf32>
    %cst_491 = arith.constant 2.000000e+00 : f32
    %1632 = vector.broadcast %cst_491 : f32 to vector<12x1xf32>
    %1633 = arith.mulf %1632, %1630 : vector<12x1xf32>
    %1634 = arith.mulf %1633, %1630 : vector<12x1xf32>
    %cst_492 = arith.constant 1.000000e+00 : f32
    %1635 = vector.broadcast %cst_492 : f32 to vector<12x1xf32>
    %1636 = arith.subf %1634, %1635 : vector<12x1xf32>
    %1637 = arith.mulf %1631, %1636 : vector<12x1xf32>
    %cst_493 = arith.constant 2.000000e+00 : f32
    %1638 = vector.broadcast %cst_493 : f32 to vector<12x1xf32>
    %1639 = arith.mulf %1638, %1636 : vector<12x1xf32>
    %1640 = arith.mulf %1639, %1636 : vector<12x1xf32>
    %cst_494 = arith.constant 1.000000e+00 : f32
    %1641 = vector.broadcast %cst_494 : f32 to vector<12x1xf32>
    %1642 = arith.subf %1640, %1641 : vector<12x1xf32>
    %1643 = math.exp %1572 : vector<12x1xf32>
    %1644 = arith.mulf %1637, %1575 : vector<12x1xf32>
    %1645 = arith.addf %1642, %1644 : vector<12x1xf32>
    %1646 = arith.mulf %1643, %1645 : vector<12x1xf32>
    %1647 = arith.mulf %1637, %1567 : vector<12x1xf32>
    %1648 = arith.mulf %1643, %1647 : vector<12x1xf32>
    %1649 = arith.mulf %1637, %1568 : vector<12x1xf32>
    %1650 = arith.mulf %1643, %1649 : vector<12x1xf32>
    %1651 = arith.mulf %1637, %1575 : vector<12x1xf32>
    %1652 = arith.subf %1642, %1651 : vector<12x1xf32>
    %1653 = arith.mulf %1643, %1652 : vector<12x1xf32>
    %1654 = vector.extract_strided_slice %436 {offsets = [0, 12], sizes = [12, 1], strides = [1, 1]} : vector<12x16xf32> to vector<12x1xf32>
    %1655 = vector.extract_strided_slice %436 {offsets = [0, 13], sizes = [12, 1], strides = [1, 1]} : vector<12x16xf32> to vector<12x1xf32>
    %1656 = vector.extract_strided_slice %1565 {offsets = [0, 0], sizes = [12, 1], strides = [1, 1]} : vector<12x2xf32> to vector<12x1xf32>
    %1657 = arith.mulf %1646, %1654 : vector<12x1xf32>
    %1658 = arith.addf %1656, %1657 : vector<12x1xf32>
    %1659 = arith.mulf %1648, %1655 : vector<12x1xf32>
    %1660 = arith.addf %1658, %1659 : vector<12x1xf32>
    %1661 = vector.extract_strided_slice %1565 {offsets = [0, 1], sizes = [12, 1], strides = [1, 1]} : vector<12x2xf32> to vector<12x1xf32>
    %1662 = arith.mulf %1650, %1654 : vector<12x1xf32>
    %1663 = arith.addf %1661, %1662 : vector<12x1xf32>
    %1664 = arith.mulf %1653, %1655 : vector<12x1xf32>
    %1665 = arith.addf %1663, %1664 : vector<12x1xf32>
    %1666 = vector.extract_strided_slice %1565 {offsets = [0, 0], sizes = [12, 1], strides = [1, 1]} : vector<12x2xf32> to vector<12x1xf32>
    %1667 = vector.extract_strided_slice %1565 {offsets = [0, 1], sizes = [12, 1], strides = [1, 1]} : vector<12x2xf32> to vector<12x1xf32>
    %1668 = tpu.concatenate %1660, %1665, %1666, %1667, %1646, %1648, %1650, %1653 in 1 : vector<12x1xf32>, vector<12x1xf32>, vector<12x1xf32>, vector<12x1xf32>, vector<12x1xf32>, vector<12x1xf32>, vector<12x1xf32>, vector<12x1xf32> -> vector<12x8xf32>
    %c0_495 = arith.constant 0 : index
    %c48 = arith.constant 48 : index
    %1669 = vector.load %arg13[%c0_495, %c48] : memref<12x64xf32, #tpu.memory_space<vmem>>, vector<12x8xf32>
    tpu.vector_store %arg13[%c0_495, %c48], %1668 {strides = array<i32>} : memref<12x64xf32, #tpu.memory_space<vmem>>, vector<12x8xf32>,
    %1670 = tpu.concatenate %1660, %1665 in 1 : vector<12x1xf32>, vector<12x1xf32> -> vector<12x2xf32>
    %1671 = arith.subf %1670, %1494 : vector<12x2xf32>
    %1672 = tpu.concatenate %790, %966, %1142, %1318, %1494, %1670, %439, %1534 in 1 : vector<12x2xf32>, vector<12x2xf32>, vector<12x2xf32>, vector<12x2xf32>, vector<12x2xf32>, vector<12x2xf32>, vector<12x4xf32>, vector<12x32xf32> -> vector<12x48xf32>
    %c0_496 = arith.constant 0 : index
    %c0_497 = arith.constant 0 : index
    %1673 = vector.load %arg8[%c0_496, %c0_497] : memref<48x224xf32, #tpu.memory_space<vmem>>, vector<48x224xf32>
    %cst_498 = arith.constant dense<0.000000e+00> : vector<12x224xf32>
    %1674 = tpu.matmul %1672, %1673, %cst_498 {dimension_numbers = #tpu.dot_dimension_numbers<[1], [0], [0], [1], [0, 0, 1, 1], [], []>} : vector<12x48xf32>, vector<48x224xf32>, vector<12x224xf32> -> vector<12x224xf32>
    %1675 = vector.extract_strided_slice %1674 {offsets = [0, 0], sizes = [12, 96], strides = [1, 1]} : vector<12x224xf32> to vector<12x96xf32>
    %1676 = vector.broadcast %429 : vector<1x96xf32> to vector<12x96xf32>
    %1677 = arith.addf %1675, %1676 : vector<12x96xf32>
    %1678 = vector.extract_strided_slice %1674 {offsets = [0, 128], sizes = [12, 96], strides = [1, 1]} : vector<12x224xf32> to vector<12x96xf32>
    %1679 = vector.broadcast %430 : vector<1x96xf32> to vector<12x96xf32>
    %1680 = arith.addf %1678, %1679 : vector<12x96xf32>
    %1681 = vector.extract_strided_slice %1677 {offsets = [0, 0], sizes = [12, 32], strides = [1, 1]} : vector<12x96xf32> to vector<12x32xf32>
    %1682 = vector.extract_strided_slice %1680 {offsets = [0, 0], sizes = [12, 32], strides = [1, 1]} : vector<12x96xf32> to vector<12x32xf32>
    %1683 = arith.addf %1681, %1682 : vector<12x32xf32>
    %cst_499 = arith.constant 5.000000e-01 : f32
    %1684 = vector.broadcast %cst_499 : f32 to vector<12x32xf32>
    %1685 = arith.mulf %1684, %1683 : vector<12x32xf32>
    %1686 = math.tanh %1685 : vector<12x32xf32>
    %cst_500 = arith.constant 1.000000e+00 : f32
    %1687 = vector.broadcast %cst_500 : f32 to vector<12x32xf32>
    %1688 = arith.addf %1686, %1687 : vector<12x32xf32>
    %cst_501 = arith.constant 5.000000e-01 : f32
    %1689 = vector.broadcast %cst_501 : f32 to vector<12x32xf32>
    %1690 = arith.mulf %1689, %1688 : vector<12x32xf32>
    %1691 = vector.extract_strided_slice %1677 {offsets = [0, 32], sizes = [12, 32], strides = [1, 1]} : vector<12x96xf32> to vector<12x32xf32>
    %1692 = vector.extract_strided_slice %1680 {offsets = [0, 32], sizes = [12, 32], strides = [1, 1]} : vector<12x96xf32> to vector<12x32xf32>
    %1693 = arith.addf %1691, %1692 : vector<12x32xf32>
    %cst_502 = arith.constant 5.000000e-01 : f32
    %1694 = vector.broadcast %cst_502 : f32 to vector<12x32xf32>
    %1695 = arith.mulf %1694, %1693 : vector<12x32xf32>
    %1696 = math.tanh %1695 : vector<12x32xf32>
    %cst_503 = arith.constant 1.000000e+00 : f32
    %1697 = vector.broadcast %cst_503 : f32 to vector<12x32xf32>
    %1698 = arith.addf %1696, %1697 : vector<12x32xf32>
    %cst_504 = arith.constant 5.000000e-01 : f32
    %1699 = vector.broadcast %cst_504 : f32 to vector<12x32xf32>
    %1700 = arith.mulf %1699, %1698 : vector<12x32xf32>
    %1701 = vector.extract_strided_slice %1677 {offsets = [0, 64], sizes = [12, 32], strides = [1, 1]} : vector<12x96xf32> to vector<12x32xf32>
    %1702 = vector.extract_strided_slice %1680 {offsets = [0, 64], sizes = [12, 32], strides = [1, 1]} : vector<12x96xf32> to vector<12x32xf32>
    %1703 = arith.mulf %1690, %1702 : vector<12x32xf32>
    %1704 = arith.addf %1701, %1703 : vector<12x32xf32>
    %1705 = math.tanh %1704 : vector<12x32xf32>
    %cst_505 = arith.constant 1.000000e+00 : f32
    %1706 = vector.broadcast %cst_505 : f32 to vector<12x32xf32>
    %1707 = arith.subf %1706, %1700 : vector<12x32xf32>
    %1708 = arith.mulf %1707, %1705 : vector<12x32xf32>
    %1709 = arith.mulf %1700, %1534 : vector<12x32xf32>
    %1710 = arith.addf %1708, %1709 : vector<12x32xf32>
    %cst_506 = arith.constant dense<0.000000e+00> : vector<12x32xf32>
    %1711 = tpu.matmul %1710, %431, %cst_506 {dimension_numbers = #tpu.dot_dimension_numbers<[1], [0], [0], [1], [0, 0, 1, 1], [], []>} : vector<12x32xf32>, vector<32x32xf32>, vector<12x32xf32> -> vector<12x32xf32>
    %1712 = arith.addf %1711, %424 : vector<12x32xf32>
    %cst_507 = arith.constant 2.000000e+01 : f32
    %1713 = vector.broadcast %cst_507 : f32 to vector<12x32xf32>
    %1714 = arith.cmpf ogt, %1712, %1713 : vector<12x32xf32>
    %cst_508 = arith.constant 2.000000e+01 : f32
    %1715 = vector.broadcast %cst_508 : f32 to vector<12x32xf32>
    %1716 = arith.minimumf %1712, %1715 : vector<12x32xf32>
    %1717 = math.exp %1716 : vector<12x32xf32>
    %cst_509 = arith.constant 1.000000e+00 : f32
    %1718 = vector.broadcast %cst_509 : f32 to vector<12x32xf32>
    %1719 = arith.addf %1718, %1717 : vector<12x32xf32>
    %1720 = math.log %1719 : vector<12x32xf32>
    %1721 = arith.select %1714, %1712, %1720 : vector<12x32xi1>, vector<12x32xf32>
    %cst_510 = arith.constant dense<0.000000e+00> : vector<12x32xf32>
    %1722 = tpu.matmul %1721, %432, %cst_510 {dimension_numbers = #tpu.dot_dimension_numbers<[1], [0], [0], [1], [0, 0, 1, 1], [], []>} : vector<12x32xf32>, vector<32x32xf32>, vector<12x32xf32> -> vector<12x32xf32>
    %1723 = vector.broadcast %434 : vector<1x32xf32> to vector<12x32xf32>
    %1724 = arith.addf %1722, %1723 : vector<12x32xf32>
    %cst_511 = arith.constant 2.000000e+01 : f32
    %1725 = vector.broadcast %cst_511 : f32 to vector<12x32xf32>
    %1726 = arith.cmpf ogt, %1724, %1725 : vector<12x32xf32>
    %cst_512 = arith.constant 2.000000e+01 : f32
    %1727 = vector.broadcast %cst_512 : f32 to vector<12x32xf32>
    %1728 = arith.minimumf %1724, %1727 : vector<12x32xf32>
    %1729 = math.exp %1728 : vector<12x32xf32>
    %cst_513 = arith.constant 1.000000e+00 : f32
    %1730 = vector.broadcast %cst_513 : f32 to vector<12x32xf32>
    %1731 = arith.addf %1730, %1729 : vector<12x32xf32>
    %1732 = math.log %1731 : vector<12x32xf32>
    %1733 = arith.select %1726, %1724, %1732 : vector<12x32xi1>, vector<12x32xf32>
    %cst_514 = arith.constant dense<0.000000e+00> : vector<12x32xf32>
    %1734 = tpu.matmul %1733, %433, %cst_514 {dimension_numbers = #tpu.dot_dimension_numbers<[1], [0], [0], [1], [0, 0, 1, 1], [], []>} : vector<12x32xf32>, vector<32x32xf32>, vector<12x32xf32> -> vector<12x32xf32>
    %1735 = vector.broadcast %435 : vector<1x32xf32> to vector<12x32xf32>
    %1736 = arith.addf %1734, %1735 : vector<12x32xf32>
    %cst_515 = arith.constant 5.000000e-01 : f32
    %1737 = vector.broadcast %cst_515 : f32 to vector<12x2xf32>
    %1738 = arith.mulf %1737, %1671 : vector<12x2xf32>
    %1739 = arith.addf %1670, %1738 : vector<12x2xf32>
    %1740 = vector.extract_strided_slice %1736 {offsets = [0, 0], sizes = [12, 2], strides = [1, 1]} : vector<12x32xf32> to vector<12x2xf32>
    %1741 = arith.addf %1739, %1740 : vector<12x2xf32>
    %1742 = vector.extract_strided_slice %1736 {offsets = [0, 2], sizes = [12, 1], strides = [1, 1]} : vector<12x32xf32> to vector<12x1xf32>
    %1743 = vector.extract_strided_slice %1736 {offsets = [0, 3], sizes = [12, 1], strides = [1, 1]} : vector<12x32xf32> to vector<12x1xf32>
    %1744 = vector.extract_strided_slice %1736 {offsets = [0, 4], sizes = [12, 1], strides = [1, 1]} : vector<12x32xf32> to vector<12x1xf32>
    %1745 = vector.extract_strided_slice %1736 {offsets = [0, 5], sizes = [12, 1], strides = [1, 1]} : vector<12x32xf32> to vector<12x1xf32>
    %1746 = arith.addf %1742, %1745 : vector<12x1xf32>
    %cst_516 = arith.constant 5.000000e-01 : f32
    %1747 = vector.broadcast %cst_516 : f32 to vector<12x1xf32>
    %1748 = arith.mulf %1747, %1746 : vector<12x1xf32>
    %1749 = arith.subf %1742, %1745 : vector<12x1xf32>
    %cst_517 = arith.constant 5.000000e-01 : f32
    %1750 = vector.broadcast %cst_517 : f32 to vector<12x1xf32>
    %1751 = arith.mulf %1750, %1749 : vector<12x1xf32>
    %1752 = arith.mulf %1751, %1751 : vector<12x1xf32>
    %1753 = arith.mulf %1743, %1744 : vector<12x1xf32>
    %1754 = arith.addf %1752, %1753 : vector<12x1xf32>
    %cst_518 = arith.constant 2.44140625E-4 : f32
    %1755 = vector.broadcast %cst_518 : f32 to vector<12x1xf32>
    %1756 = arith.mulf %1754, %1755 : vector<12x1xf32>
    %cst_519 = arith.constant 2.48015876E-5 : f32
    %1757 = vector.broadcast %cst_519 : f32 to vector<12x1xf32>
    %1758 = arith.mulf %1756, %1757 : vector<12x1xf32>
    %cst_520 = arith.constant 0.00138888892 : f32
    %1759 = vector.broadcast %cst_520 : f32 to vector<12x1xf32>
    %1760 = arith.addf %1759, %1758 : vector<12x1xf32>
    %1761 = arith.mulf %1756, %1760 : vector<12x1xf32>
    %cst_521 = arith.constant 0.0416666679 : f32
    %1762 = vector.broadcast %cst_521 : f32 to vector<12x1xf32>
    %1763 = arith.addf %1762, %1761 : vector<12x1xf32>
    %1764 = arith.mulf %1756, %1763 : vector<12x1xf32>
    %cst_522 = arith.constant 5.000000e-01 : f32
    %1765 = vector.broadcast %cst_522 : f32 to vector<12x1xf32>
    %1766 = arith.addf %1765, %1764 : vector<12x1xf32>
    %1767 = arith.mulf %1756, %1766 : vector<12x1xf32>
    %cst_523 = arith.constant 1.000000e+00 : f32
    %1768 = vector.broadcast %cst_523 : f32 to vector<12x1xf32>
    %1769 = arith.addf %1768, %1767 : vector<12x1xf32>
    %cst_524 = arith.constant 2.75573188E-6 : f32
    %1770 = vector.broadcast %cst_524 : f32 to vector<12x1xf32>
    %1771 = arith.mulf %1756, %1770 : vector<12x1xf32>
    %cst_525 = arith.constant 1.98412701E-4 : f32
    %1772 = vector.broadcast %cst_525 : f32 to vector<12x1xf32>
    %1773 = arith.addf %1772, %1771 : vector<12x1xf32>
    %1774 = arith.mulf %1756, %1773 : vector<12x1xf32>
    %cst_526 = arith.constant 0.00833333377 : f32
    %1775 = vector.broadcast %cst_526 : f32 to vector<12x1xf32>
    %1776 = arith.addf %1775, %1774 : vector<12x1xf32>
    %1777 = arith.mulf %1756, %1776 : vector<12x1xf32>
    %cst_527 = arith.constant 0.166666672 : f32
    %1778 = vector.broadcast %cst_527 : f32 to vector<12x1xf32>
    %1779 = arith.addf %1778, %1777 : vector<12x1xf32>
    %1780 = arith.mulf %1756, %1779 : vector<12x1xf32>
    %cst_528 = arith.constant 1.000000e+00 : f32
    %1781 = vector.broadcast %cst_528 : f32 to vector<12x1xf32>
    %1782 = arith.addf %1781, %1780 : vector<12x1xf32>
    %1783 = arith.mulf %1782, %1769 : vector<12x1xf32>
    %cst_529 = arith.constant 2.000000e+00 : f32
    %1784 = vector.broadcast %cst_529 : f32 to vector<12x1xf32>
    %1785 = arith.mulf %1784, %1769 : vector<12x1xf32>
    %1786 = arith.mulf %1785, %1769 : vector<12x1xf32>
    %cst_530 = arith.constant 1.000000e+00 : f32
    %1787 = vector.broadcast %cst_530 : f32 to vector<12x1xf32>
    %1788 = arith.subf %1786, %1787 : vector<12x1xf32>
    %1789 = arith.mulf %1783, %1788 : vector<12x1xf32>
    %cst_531 = arith.constant 2.000000e+00 : f32
    %1790 = vector.broadcast %cst_531 : f32 to vector<12x1xf32>
    %1791 = arith.mulf %1790, %1788 : vector<12x1xf32>
    %1792 = arith.mulf %1791, %1788 : vector<12x1xf32>
    %cst_532 = arith.constant 1.000000e+00 : f32
    %1793 = vector.broadcast %cst_532 : f32 to vector<12x1xf32>
    %1794 = arith.subf %1792, %1793 : vector<12x1xf32>
    %1795 = arith.mulf %1789, %1794 : vector<12x1xf32>
    %cst_533 = arith.constant 2.000000e+00 : f32
    %1796 = vector.broadcast %cst_533 : f32 to vector<12x1xf32>
    %1797 = arith.mulf %1796, %1794 : vector<12x1xf32>
    %1798 = arith.mulf %1797, %1794 : vector<12x1xf32>
    %cst_534 = arith.constant 1.000000e+00 : f32
    %1799 = vector.broadcast %cst_534 : f32 to vector<12x1xf32>
    %1800 = arith.subf %1798, %1799 : vector<12x1xf32>
    %1801 = arith.mulf %1795, %1800 : vector<12x1xf32>
    %cst_535 = arith.constant 2.000000e+00 : f32
    %1802 = vector.broadcast %cst_535 : f32 to vector<12x1xf32>
    %1803 = arith.mulf %1802, %1800 : vector<12x1xf32>
    %1804 = arith.mulf %1803, %1800 : vector<12x1xf32>
    %cst_536 = arith.constant 1.000000e+00 : f32
    %1805 = vector.broadcast %cst_536 : f32 to vector<12x1xf32>
    %1806 = arith.subf %1804, %1805 : vector<12x1xf32>
    %1807 = arith.mulf %1801, %1806 : vector<12x1xf32>
    %cst_537 = arith.constant 2.000000e+00 : f32
    %1808 = vector.broadcast %cst_537 : f32 to vector<12x1xf32>
    %1809 = arith.mulf %1808, %1806 : vector<12x1xf32>
    %1810 = arith.mulf %1809, %1806 : vector<12x1xf32>
    %cst_538 = arith.constant 1.000000e+00 : f32
    %1811 = vector.broadcast %cst_538 : f32 to vector<12x1xf32>
    %1812 = arith.subf %1810, %1811 : vector<12x1xf32>
    %1813 = arith.mulf %1807, %1812 : vector<12x1xf32>
    %cst_539 = arith.constant 2.000000e+00 : f32
    %1814 = vector.broadcast %cst_539 : f32 to vector<12x1xf32>
    %1815 = arith.mulf %1814, %1812 : vector<12x1xf32>
    %1816 = arith.mulf %1815, %1812 : vector<12x1xf32>
    %cst_540 = arith.constant 1.000000e+00 : f32
    %1817 = vector.broadcast %cst_540 : f32 to vector<12x1xf32>
    %1818 = arith.subf %1816, %1817 : vector<12x1xf32>
    %1819 = math.exp %1748 : vector<12x1xf32>
    %1820 = arith.mulf %1813, %1751 : vector<12x1xf32>
    %1821 = arith.addf %1818, %1820 : vector<12x1xf32>
    %1822 = arith.mulf %1819, %1821 : vector<12x1xf32>
    %1823 = arith.mulf %1813, %1743 : vector<12x1xf32>
    %1824 = arith.mulf %1819, %1823 : vector<12x1xf32>
    %1825 = arith.mulf %1813, %1744 : vector<12x1xf32>
    %1826 = arith.mulf %1819, %1825 : vector<12x1xf32>
    %1827 = arith.mulf %1813, %1751 : vector<12x1xf32>
    %1828 = arith.subf %1818, %1827 : vector<12x1xf32>
    %1829 = arith.mulf %1819, %1828 : vector<12x1xf32>
    %1830 = vector.extract_strided_slice %436 {offsets = [0, 14], sizes = [12, 1], strides = [1, 1]} : vector<12x16xf32> to vector<12x1xf32>
    %1831 = vector.extract_strided_slice %436 {offsets = [0, 15], sizes = [12, 1], strides = [1, 1]} : vector<12x16xf32> to vector<12x1xf32>
    %1832 = vector.extract_strided_slice %1741 {offsets = [0, 0], sizes = [12, 1], strides = [1, 1]} : vector<12x2xf32> to vector<12x1xf32>
    %1833 = arith.mulf %1822, %1830 : vector<12x1xf32>
    %1834 = arith.addf %1832, %1833 : vector<12x1xf32>
    %1835 = arith.mulf %1824, %1831 : vector<12x1xf32>
    %1836 = arith.addf %1834, %1835 : vector<12x1xf32>
    %1837 = vector.extract_strided_slice %1741 {offsets = [0, 1], sizes = [12, 1], strides = [1, 1]} : vector<12x2xf32> to vector<12x1xf32>
    %1838 = arith.mulf %1826, %1830 : vector<12x1xf32>
    %1839 = arith.addf %1837, %1838 : vector<12x1xf32>
    %1840 = arith.mulf %1829, %1831 : vector<12x1xf32>
    %1841 = arith.addf %1839, %1840 : vector<12x1xf32>
    %1842 = vector.extract_strided_slice %1741 {offsets = [0, 0], sizes = [12, 1], strides = [1, 1]} : vector<12x2xf32> to vector<12x1xf32>
    %1843 = vector.extract_strided_slice %1741 {offsets = [0, 1], sizes = [12, 1], strides = [1, 1]} : vector<12x2xf32> to vector<12x1xf32>
    %1844 = tpu.concatenate %1836, %1841, %1842, %1843, %1822, %1824, %1826, %1829 in 1 : vector<12x1xf32>, vector<12x1xf32>, vector<12x1xf32>, vector<12x1xf32>, vector<12x1xf32>, vector<12x1xf32>, vector<12x1xf32>, vector<12x1xf32> -> vector<12x8xf32>
    %c0_541 = arith.constant 0 : index
    %c56 = arith.constant 56 : index
    %1845 = vector.load %arg13[%c0_541, %c56] : memref<12x64xf32, #tpu.memory_space<vmem>>, vector<12x8xf32>
    tpu.vector_store %arg13[%c0_541, %c56], %1844 {strides = array<i32>} : memref<12x64xf32, #tpu.memory_space<vmem>>, vector<12x8xf32>,
    return
  }
}

</mosaic_0001>

<llo_original>
// kernel: tpu_custom_call.1
$region0: #{tpu_custom_call.1}
  #allocation0 [shape = 'u32[]', space=smem, size = 0x4, offset = 0x4, fixed_abs, tag = 'smem constant byte address 0x4 - core index']
  #allocation1 [shape = 'u32[144,128]{1,0:T(1,128)}', space=vmem, size = 0x12000, scoped, tag = 'internal scratch']
  %s0 = inlined_call_operand.vmem [shape: f32[8,4,128], index: 0, kind: input, shape index: {}]
  %s1 = inlined_call_operand.vmem [shape: s32[4,1], index: 1, kind: input, shape index: {}]
  %s2 = inlined_call_operand.vmem [shape: f32[4,4], index: 2, kind: input, shape index: {}]
  %s3 = inlined_call_operand.vmem [shape: f32[12,4], index: 3, kind: input, shape index: {}]
  %s4 = inlined_call_operand.vmem [shape: f32[4,4], index: 4, kind: input, shape index: {}]
  %s5 = inlined_call_operand.vmem [shape: f32[12,16], index: 5, kind: input, shape index: {}]
  %s6 = inlined_call_operand.vmem [shape: f32[32,128], index: 6, kind: input, shape index: {}]
  %s7 = inlined_call_operand.vmem [shape: f32[32,96], index: 7, kind: input, shape index: {}]
  %s8 = inlined_call_operand.vmem [shape: f32[48,224], index: 8, kind: input, shape index: {}]
  %s9 = inlined_call_operand.vmem [shape: f32[224,32], index: 9, kind: input, shape index: {}]
  %s10 = inlined_call_operand.vmem [shape: f32[8,32], index: 10, kind: input, shape index: {}]
  %s11 = inlined_call_operand.vmem [shape: f32[3,96], index: 11, kind: input, shape index: {}]
  %s12 = inlined_call_operand.hbm [shape: f32[4,32], index: 12, kind: output, shape index: {0}]
  %s13 = inlined_call_operand.hbm [shape: f32[12,64], index: 13, kind: output, shape index: {1}]
  %14 = xla_tuple %s12, %s13
  %s15 = sld [smem:[#allocation0]]
  $region66: #{tpu_custom_call.1} parent=0
    _
  %s17 = ssub.s32 1, %s15
  %s18 = scalar_select 0, %s17, %s15
  $region1: #{tpu_custom_call.1} parent=0
    #allocation2 [shape = 'u8[2048]{0}', space=vmem, size = 0x800, scoped, tag = 'output window, operand 0, single buffered']
    #allocation3 [shape = 's32[1]{0}', space=sflag, size = 0x4, scoped, tag = 'scoped memory for tpu_custom_call.1']
    #allocation4 [shape = 'u8[8192]{0}', space=vmem, size = 0x2000, scoped, tag = 'output window, operand 1, single buffered']
    #allocation5 [shape = 's32[1]{0}', space=sflag, size = 0x4, scoped, tag = 'scoped memory for tpu_custom_call.1']
    %19 = vsyncpa [#allocation3], 0
    %20 = vsyncpa [#allocation5], 0
    // Predicated region
    $region2: #{tpu_custom_call.1} parent=1 // pred_check
      _
    $region3: #{tpu_custom_call.1} parent=1 // pred_check_branch
      %22 = sbr.rel (0) target = $region5
    $region4: #{tpu_custom_call.1} parent=1 // pred_region
      _
    $region5: #{tpu_custom_call.1} parent=1 // pred_fallthru
      _
    // Predicated region
    $region6: #{tpu_custom_call.1} parent=1 // pred_check
      _
    $region7: #{tpu_custom_call.1} parent=1 // pred_check_branch
      %24 = sbr.rel (0) target = $region9
    $region8: #{tpu_custom_call.1} parent=1 // pred_region
      _
    $region9: #{tpu_custom_call.1} parent=1 // pred_fallthru
      _
    // Predicated region
    $region10: #{tpu_custom_call.1} parent=1 // pred_check
      _
    $region11: #{tpu_custom_call.1} parent=1 // pred_check_branch
      %26 = sbr.rel (0) target = $region13
    $region12: #{tpu_custom_call.1} parent=1 // pred_region
      _
    $region13: #{tpu_custom_call.1} parent=1 // pred_fallthru
      _
    // Predicated region
    $region14: #{tpu_custom_call.1} parent=1 // pred_check
      _
    $region15: #{tpu_custom_call.1} parent=1 // pred_check_branch
      %28 = sbr.rel (0) target = $region17
    $region16: #{tpu_custom_call.1} parent=1 // pred_region
      _
    $region17: #{tpu_custom_call.1} parent=1 // pred_fallthru
      _
    // Predicated region
    $region18: #{tpu_custom_call.1} parent=1 // pred_check
      _
    $region19: #{tpu_custom_call.1} parent=1 // pred_check_branch
      %30 = sbr.rel (0) target = $region21
    $region20: #{tpu_custom_call.1} parent=1 // pred_region
      _
    $region21: #{tpu_custom_call.1} parent=1 // pred_fallthru
      _
    // Predicated region
    $region22: #{tpu_custom_call.1} parent=1 // pred_check
      _
    $region23: #{tpu_custom_call.1} parent=1 // pred_check_branch
      %32 = sbr.rel (0) target = $region25
    $region24: #{tpu_custom_call.1} parent=1 // pred_region
      _
    $region25: #{tpu_custom_call.1} parent=1 // pred_fallthru
      _
    // Predicated region
    $region26: #{tpu_custom_call.1} parent=1 // pred_check
      _
    $region27: #{tpu_custom_call.1} parent=1 // pred_check_branch
      %34 = sbr.rel (0) target = $region29
    $region28: #{tpu_custom_call.1} parent=1 // pred_region
      _
    $region29: #{tpu_custom_call.1} parent=1 // pred_fallthru
      _
    // Predicated region
    $region30: #{tpu_custom_call.1} parent=1 // pred_check
      _
    $region31: #{tpu_custom_call.1} parent=1 // pred_check_branch
      %36 = sbr.rel (0) target = $region33
    $region32: #{tpu_custom_call.1} parent=1 // pred_region
      _
    $region33: #{tpu_custom_call.1} parent=1 // pred_fallthru
      _
    // Predicated region
    $region34: #{tpu_custom_call.1} parent=1 // pred_check
      _
    $region35: #{tpu_custom_call.1} parent=1 // pred_check_branch
      %38 = sbr.rel (0) target = $region37
    $region36: #{tpu_custom_call.1} parent=1 // pred_region
      _
    $region37: #{tpu_custom_call.1} parent=1 // pred_fallthru
      _
    // Predicated region
    $region38: #{tpu_custom_call.1} parent=1 // pred_check
      _
    $region39: #{tpu_custom_call.1} parent=1 // pred_check_branch
      %40 = sbr.rel (0) target = $region41
    $region40: #{tpu_custom_call.1} parent=1 // pred_region
      _
    $region41: #{tpu_custom_call.1} parent=1 // pred_fallthru
      _
    // Predicated region
    $region42: #{tpu_custom_call.1} parent=1 // pred_check
      _
    $region43: #{tpu_custom_call.1} parent=1 // pred_check_branch
      %42 = sbr.rel (0) target = $region45
    $region44: #{tpu_custom_call.1} parent=1 // pred_region
      _
    $region45: #{tpu_custom_call.1} parent=1 // pred_fallthru
      _
    // Predicated region
    $region46: #{tpu_custom_call.1} parent=1 // pred_check
      _
    $region47: #{tpu_custom_call.1} parent=1 // pred_check_branch
      %44 = sbr.rel (0) target = $region49
    $region48: #{tpu_custom_call.1} parent=1 // pred_region
      _
    $region49: #{tpu_custom_call.1} parent=1 // pred_fallthru
      _
    %v45 = vld [vmem:[%s1] sm:$0xf]
    %v46 = vld [vmem:[%s0] sm:$0xf]
    %v47 = vld [vmem:[%s6] sm:$0xff]
    %v48 = vld [vmem:[%s6 + $0x8] sm:$0xff]
    %v49 = vld [vmem:[%s6 + $0x10] sm:$0xff]
    %v50 = vld [vmem:[%s6 + $0x18] sm:$0xff]
    %vm51 = vcmask 261120
    %v53 = vsel %vm51, 0.0, 0
    %55 = vmatprep.subr.mxu0 0.0
    %56 = vmatpush1.msra.mxu0 0.0
    %57 = vmatprep.subr.mxu0 0.0
    %58 = vmatpush1.msra.mxu0 0.0
    %59 = vmatprep.subr.mxu0 0.0
    %60 = vmatpush1.msra.mxu0 0.0
    %61 = vmatprep.subr.mxu0 0.0
    %62 = vmatpush1.msra.mxu0 0.0
    %63 = vmatprep.subr.mxu0 0.0
    %64 = vmatpush1.msra.mxu0 0.0
    %65 = vmatprep.subr.mxu0 0.0
    %66 = vmatpush1.msra.mxu0 0.0
    %67 = vmatprep.subr.mxu0 0.0
    %68 = vmatpush1.msra.mxu0 0.0
    %69 = vmatprep.subr.mxu0 0.0
    %70 = vmatpush1.msra.mxu0 0.0
    %71 = vmatprep.subr.mxu0 0.0
    %72 = vmatpush1.msra.mxu0 0.0
    %73 = vmatprep.subr.mxu0 0.0
    %74 = vmatpush1.msra.mxu0 0.0
    %75 = vmatprep.subr.mxu0 0.0
    %76 = vmatpush1.msra.mxu0 0.0
    %77 = vmatprep.subr.mxu0 0.0
    %78 = vmatpush1.msra.mxu0 0.0
    %79 = vmatprep.subr.mxu0 0.0
    %80 = vmatpush1.msra.mxu0 %v50
    %81 = vmatprep.subr.mxu0 0.0
    %82 = vmatpush1.msra.mxu0 %v49
    %83 = vmatprep.subr.mxu0 0.0
    %84 = vmatpush1.msra.mxu0 %v48
    %85 = vmatprep.subr.mxu0 0.0
    %86 = vmatpush1.msra.mxu0 %v47
    %87 = vmatprep.subr.mxu0 0.0
    %88 = vmatpush2.msra.mxu0 0.0
    %89 = vmatprep.subr.mxu0 0.0
    %90 = vmatpush2.msra.mxu0 0.0
    %91 = vmatprep.subr.mxu0 0.0
    %92 = vmatpush2.msra.mxu0 0.0
    %93 = vmatprep.subr.mxu0 0.0
    %94 = vmatpush2.msra.mxu0 0.0
    %95 = vmatprep.subr.mxu0 0.0
    %96 = vmatpush2.msra.mxu0 0.0
    %97 = vmatprep.subr.mxu0 0.0
    %98 = vmatpush2.msra.mxu0 0.0
    %99 = vmatprep.subr.mxu0 0.0
    %100 = vmatpush2.msra.mxu0 0.0
    %101 = vmatprep.subr.mxu0 0.0
    %102 = vmatpush2.msra.mxu0 0.0
    %103 = vmatprep.subr.mxu0 0.0
    %104 = vmatpush2.msra.mxu0 0.0
    %105 = vmatprep.subr.mxu0 0.0
    %106 = vmatpush2.msra.mxu0 0.0
    %107 = vmatprep.subr.mxu0 0.0
    %108 = vmatpush2.msra.mxu0 0.0
    %109 = vmatprep.subr.mxu0 0.0
    %110 = vmatpush2.msra.mxu0 0.0
    %111 = vmatprep.subr.mxu0 0.0
    %112 = vmatpush2.msra.mxu0 0.0
    %113 = vmatprep.subr.mxu0 0.0
    %114 = vmatpush2.msra.mxu0 0.0
    %115 = vmatprep.subr.mxu0 0.0
    %116 = vmatpush2.msra.mxu0 0.0
    %117 = vmatprep.subr.mxu0 0.0
    %118 = vmatpush2.msra.mxu0 0.0
    %119 = vmatprep.mubr.f32.mxu0 0.0
    %120 = vmatmul.mubr.f32.gmra.mxu0 %v53
    %v121 = vpop.f32.mrf.mxu0
    %v122 = vadd.f32 0.0, %v121
    %v123 = vpop.f32.mrf.mxu0
    %124 = vdwg.mxu0
    %v125 = vadd.f32 %v46, %v122
    %v126 = vmul.f32 %v125, 0.5
    %v127 = vtanh.pop %v126
    %v128 = vadd.f32 %v127, 1.0
    %v129 = vmul.f32 %v128, 0.5
    %v130 = vtanh.pop %v125
    %v131 = vmul.f32 %v129, 0.0
    %133 = vrot.lane.b32.xlu0 %v130, 64
    %v134 = vpop.permute.xlu0 %133
    %v136 = vmul.f32 %v129, %v134
    %138 = vrot.lane.b32.xlu0 %v136, 32
    %v139 = vpop.permute.xlu0 %138
    %v141 = vadd.f32 %v131, %v139
    %v142 = vtanh.pop %v141
    %144 = vrot.lane.b32.xlu0 %v142, 64
    %v145 = vpop.permute.xlu0 %144
    %v147 = vmul.f32 %v129, %v145
    %vm148 = vcmp.eq.s32.totalorder %v45, 1
    %v149 = vsel %vm148, 1, 0
    %150 = vset.pattern.permute.xlu0 0
    %151 = vperm.xlu0 %150, %v149
    %v152 = vpop.permute.xlu0 %151
    %vm153 = vcmp.eq.s32.totalorder %v152, 1
    %v154 = vsel %vm153, %v147, 0.0
    %s155 = scalar_lea.vmem %s0, 4
    %v156 = vld [vmem:[%s155] sm:$0xf]
    %158 = vrot.lane.b32.xlu0 %v147, 32
    %v159 = vpop.permute.xlu0 %158
    %v160 = vsel %vm51, %v159, 0
    %162 = vmatprep.subr.mxu0 0.0
    %163 = vmatpush1.msra.mxu0 0.0
    %164 = vmatprep.subr.mxu0 0.0
    %165 = vmatpush1.msra.mxu0 0.0
    %166 = vmatprep.subr.mxu0 0.0
    %167 = vmatpush1.msra.mxu0 0.0
    %168 = vmatprep.subr.mxu0 0.0
    %169 = vmatpush1.msra.mxu0 0.0
    %170 = vmatprep.subr.mxu0 0.0
    %171 = vmatpush1.msra.mxu0 0.0
    %172 = vmatprep.subr.mxu0 0.0
    %173 = vmatpush1.msra.mxu0 0.0
    %174 = vmatprep.subr.mxu0 0.0
    %175 = vmatpush1.msra.mxu0 0.0
    %176 = vmatprep.subr.mxu0 0.0
    %177 = vmatpush1.msra.mxu0 0.0
    %178 = vmatprep.subr.mxu0 0.0
    %179 = vmatpush1.msra.mxu0 0.0
    %180 = vmatprep.subr.mxu0 0.0
    %181 = vmatpush1.msra.mxu0 0.0
    %182 = vmatprep.subr.mxu0 0.0
    %183 = vmatpush1.msra.mxu0 0.0
    %184 = vmatprep.subr.mxu0 0.0
    %185 = vmatpush1.msra.mxu0 0.0
    %186 = vmatprep.subr.mxu0 0.0
    %187 = vmatpush1.msra.mxu0 %v50
    %188 = vmatprep.subr.mxu0 0.0
    %189 = vmatpush1.msra.mxu0 %v49
    %190 = vmatprep.subr.mxu0 0.0
    %191 = vmatpush1.msra.mxu0 %v48
    %192 = vmatprep.subr.mxu0 0.0
    %193 = vmatpush1.msra.mxu0 %v47
    %194 = vmatprep.subr.mxu0 0.0
    %195 = vmatpush2.msra.mxu0 0.0
    %196 = vmatprep.subr.mxu0 0.0
    %197 = vmatpush2.msra.mxu0 0.0
    %198 = vmatprep.subr.mxu0 0.0
    %199 = vmatpush2.msra.mxu0 0.0
    %200 = vmatprep.subr.mxu0 0.0
    %201 = vmatpush2.msra.mxu0 0.0
    %202 = vmatprep.subr.mxu0 0.0
    %203 = vmatpush2.msra.mxu0 0.0
    %204 = vmatprep.subr.mxu0 0.0
    %205 = vmatpush2.msra.mxu0 0.0
    %206 = vmatprep.subr.mxu0 0.0
    %207 = vmatpush2.msra.mxu0 0.0
    %208 = vmatprep.subr.mxu0 0.0
    %209 = vmatpush2.msra.mxu0 0.0
    %210 = vmatprep.subr.mxu0 0.0
    %211 = vmatpush2.msra.mxu0 0.0
    %212 = vmatprep.subr.mxu0 0.0
    %213 = vmatpush2.msra.mxu0 0.0
    %214 = vmatprep.subr.mxu0 0.0
    %215 = vmatpush2.msra.mxu0 0.0
    %216 = vmatprep.subr.mxu0 0.0
    %217 = vmatpush2.msra.mxu0 0.0
    %218 = vmatprep.subr.mxu0 0.0
    %219 = vmatpush2.msra.mxu0 0.0
    %220 = vmatprep.subr.mxu0 0.0
    %221 = vmatpush2.msra.mxu0 0.0
    %222 = vmatprep.subr.mxu0 0.0
    %223 = vmatpush2.msra.mxu0 0.0
    %224 = vmatprep.subr.mxu0 0.0
    %225 = vmatpush2.msra.mxu0 0.0
    %226 = vmatprep.mubr.f32.mxu0 0.0
    %227 = vmatmul.mubr.f32.gmra.mxu0 %v160
    %v228 = vpop.f32.mrf.mxu0
    %v229 = vadd.f32 0.0, %v228
    %v230 = vpop.f32.mrf.mxu0
    %231 = vdwg.mxu0
    %v232 = vadd.f32 %v156, %v229
    %v233 = vmul.f32 %v232, 0.5
    %v234 = vtanh.pop %v233
    %v235 = vadd.f32 %v234, 1.0
    %v236 = vmul.f32 %v235, 0.5
    %v237 = vtanh.pop %v232
    %v238 = vmul.f32 %v236, %v141
    %240 = vrot.lane.b32.xlu0 %v237, 64
    %v241 = vpop.permute.xlu0 %240
    %v243 = vmul.f32 %v236, %v241
    %245 = vrot.lane.b32.xlu0 %v243, 32
    %v246 = vpop.permute.xlu0 %245
    %v248 = vadd.f32 %v238, %v246
    %v249 = vtanh.pop %v248
    %251 = vrot.lane.b32.xlu0 %v249, 64
    %v252 = vpop.permute.xlu0 %251
    %v254 = vmul.f32 %v236, %v252
    %vm255 = vcmp.eq.s32.totalorder %v45, 2
    %v256 = vsel %vm255, 1, 0
    %257 = vset.pattern.permute.xlu0 0
    %258 = vperm.xlu0 %257, %v256
    %v259 = vpop.permute.xlu0 %258
    %vm260 = vcmp.eq.s32.totalorder %v259, 1
    %v261 = vsel %vm260, %v254, %v154
    %s262 = scalar_lea.vmem %s0, 8
    %v263 = vld [vmem:[%s262] sm:$0xf]
    %265 = vrot.lane.b32.xlu0 %v254, 32
    %v266 = vpop.permute.xlu0 %265
    %v267 = vsel %vm51, %v266, 0
    %269 = vmatprep.subr.mxu0 0.0
    %270 = vmatpush1.msra.mxu0 0.0
    %271 = vmatprep.subr.mxu0 0.0
    %272 = vmatpush1.msra.mxu0 0.0
    %273 = vmatprep.subr.mxu0 0.0
    %274 = vmatpush1.msra.mxu0 0.0
    %275 = vmatprep.subr.mxu0 0.0
    %276 = vmatpush1.msra.mxu0 0.0
    %277 = vmatprep.subr.mxu0 0.0
    %278 = vmatpush1.msra.mxu0 0.0
    %279 = vmatprep.subr.mxu0 0.0
    %280 = vmatpush1.msra.mxu0 0.0
    %281 = vmatprep.subr.mxu0 0.0
    %282 = vmatpush1.msra.mxu0 0.0
    %283 = vmatprep.subr.mxu0 0.0
    %284 = vmatpush1.msra.mxu0 0.0
    %285 = vmatprep.subr.mxu0 0.0
    %286 = vmatpush1.msra.mxu0 0.0
    %287 = vmatprep.subr.mxu0 0.0
    %288 = vmatpush1.msra.mxu0 0.0
    %289 = vmatprep.subr.mxu0 0.0
    %290 = vmatpush1.msra.mxu0 0.0
    %291 = vmatprep.subr.mxu0 0.0
    %292 = vmatpush1.msra.mxu0 0.0
    %293 = vmatprep.subr.mxu0 0.0
    %294 = vmatpush1.msra.mxu0 %v50
    %295 = vmatprep.subr.mxu0 0.0
    %296 = vmatpush1.msra.mxu0 %v49
    %297 = vmatprep.subr.mxu0 0.0
    %298 = vmatpush1.msra.mxu0 %v48
    %299 = vmatprep.subr.mxu0 0.0
    %300 = vmatpush1.msra.mxu0 %v47
    %301 = vmatprep.subr.mxu0 0.0
    %302 = vmatpush2.msra.mxu0 0.0
    %303 = vmatprep.subr.mxu0 0.0
    %304 = vmatpush2.msra.mxu0 0.0
    %305 = vmatprep.subr.mxu0 0.0
    %306 = vmatpush2.msra.mxu0 0.0
    %307 = vmatprep.subr.mxu0 0.0
    %308 = vmatpush2.msra.mxu0 0.0
    %309 = vmatprep.subr.mxu0 0.0
    %310 = vmatpush2.msra.mxu0 0.0
    %311 = vmatprep.subr.mxu0 0.0
    %312 = vmatpush2.msra.mxu0 0.0
    %313 = vmatprep.subr.mxu0 0.0
    %314 = vmatpush2.msra.mxu0 0.0
    %315 = vmatprep.subr.mxu0 0.0
    %316 = vmatpush2.msra.mxu0 0.0
    %317 = vmatprep.subr.mxu0 0.0
    %318 = vmatpush2.msra.mxu0 0.0
    %319 = vmatprep.subr.mxu0 0.0
    %320 = vmatpush2.msra.mxu0 0.0
    %321 = vmatprep.subr.mxu0 0.0
    %322 = vmatpush2.msra.mxu0 0.0
    %323 = vmatprep.subr.mxu0 0.0
    %324 = vmatpush2.msra.mxu0 0.0
    %325 = vmatprep.subr.mxu0 0.0
    %326 = vmatpush2.msra.mxu0 0.0
    %327 = vmatprep.subr.mxu0 0.0
    %328 = vmatpush2.msra.mxu0 0.0
    %329 = vmatprep.subr.mxu0 0.0
    %330 = vmatpush2.msra.mxu0 0.0
    %331 = vmatprep.subr.mxu0 0.0
    %332 = vmatpush2.msra.mxu0 0.0
    %333 = vmatprep.mubr.f32.mxu0 0.0
    %334 = vmatmul.mubr.f32.gmra.mxu0 %v267
    %v335 = vpop.f32.mrf.mxu0
    %v336 = vadd.f32 0.0, %v335
    %v337 = vpop.f32.mrf.mxu0
    %338 = vdwg.mxu0
    %v339 = vadd.f32 %v263, %v336
    %v340 = vmul.f32 %v339, 0.5
    %v341 = vtanh.pop %v340
    %v342 = vadd.f32 %v341, 1.0
    %v343 = vmul.f32 %v342, 0.5
    %v344 = vtanh.pop %v339
    %v345 = vmul.f32 %v343, %v248
    %347 = vrot.lane.b32.xlu0 %v344, 64
    %v348 = vpop.permute.xlu0 %347
    %v350 = vmul.f32 %v343, %v348
    %352 = vrot.lane.b32.xlu0 %v350, 32
    %v353 = vpop.permute.xlu0 %352
    %v355 = vadd.f32 %v345, %v353
    %v356 = vtanh.pop %v355
    %358 = vrot.lane.b32.xlu0 %v356, 64
    %v359 = vpop.permute.xlu0 %358
    %v361 = vmul.f32 %v343, %v359
    %vm362 = vcmp.eq.s32.totalorder %v45, 3
    %v363 = vsel %vm362, 1, 0
    %364 = vset.pattern.permute.xlu0 0
    %365 = vperm.xlu0 %364, %v363
    %v366 = vpop.permute.xlu0 %365
    %vm367 = vcmp.eq.s32.totalorder %v366, 1
    %v368 = vsel %vm367, %v361, %v261
    %s369 = scalar_lea.vmem %s0, 12
    %v370 = vld [vmem:[%s369] sm:$0xf]
    %372 = vrot.lane.b32.xlu0 %v361, 32
    %v373 = vpop.permute.xlu0 %372
    %v374 = vsel %vm51, %v373, 0
    %376 = vmatprep.subr.mxu0 0.0
    %377 = vmatpush1.msra.mxu0 0.0
    %378 = vmatprep.subr.mxu0 0.0
    %379 = vmatpush1.msra.mxu0 0.0
    %380 = vmatprep.subr.mxu0 0.0
    %381 = vmatpush1.msra.mxu0 0.0
    %382 = vmatprep.subr.mxu0 0.0
    %383 = vmatpush1.msra.mxu0 0.0
    %384 = vmatprep.subr.mxu0 0.0
    %385 = vmatpush1.msra.mxu0 0.0
    %386 = vmatprep.subr.mxu0 0.0
    %387 = vmatpush1.msra.mxu0 0.0
    %388 = vmatprep.subr.mxu0 0.0
    %389 = vmatpush1.msra.mxu0 0.0
    %390 = vmatprep.subr.mxu0 0.0
    %391 = vmatpush1.msra.mxu0 0.0
    %392 = vmatprep.subr.mxu0 0.0
    %393 = vmatpush1.msra.mxu0 0.0
    %394 = vmatprep.subr.mxu0 0.0
    %395 = vmatpush1.msra.mxu0 0.0
    %396 = vmatprep.subr.mxu0 0.0
    %397 = vmatpush1.msra.mxu0 0.0
    %398 = vmatprep.subr.mxu0 0.0
    %399 = vmatpush1.msra.mxu0 0.0
    %400 = vmatprep.subr.mxu0 0.0
    %401 = vmatpush1.msra.mxu0 %v50
    %402 = vmatprep.subr.mxu0 0.0
    %403 = vmatpush1.msra.mxu0 %v49
    %404 = vmatprep.subr.mxu0 0.0
    %405 = vmatpush1.msra.mxu0 %v48
    %406 = vmatprep.subr.mxu0 0.0
    %407 = vmatpush1.msra.mxu0 %v47
    %408 = vmatprep.subr.mxu0 0.0
    %409 = vmatpush2.msra.mxu0 0.0
    %410 = vmatprep.subr.mxu0 0.0
    %411 = vmatpush2.msra.mxu0 0.0
    %412 = vmatprep.subr.mxu0 0.0
    %413 = vmatpush2.msra.mxu0 0.0
    %414 = vmatprep.subr.mxu0 0.0
    %415 = vmatpush2.msra.mxu0 0.0
    %416 = vmatprep.subr.mxu0 0.0
    %417 = vmatpush2.msra.mxu0 0.0
    %418 = vmatprep.subr.mxu0 0.0
    %419 = vmatpush2.msra.mxu0 0.0
    %420 = vmatprep.subr.mxu0 0.0
    %421 = vmatpush2.msra.mxu0 0.0
    %422 = vmatprep.subr.mxu0 0.0
    %423 = vmatpush2.msra.mxu0 0.0
    %424 = vmatprep.subr.mxu0 0.0
    %425 = vmatpush2.msra.mxu0 0.0
    %426 = vmatprep.subr.mxu0 0.0
    %427 = vmatpush2.msra.mxu0 0.0
    %428 = vmatprep.subr.mxu0 0.0
    %429 = vmatpush2.msra.mxu0 0.0
    %430 = vmatprep.subr.mxu0 0.0
    %431 = vmatpush2.msra.mxu0 0.0
    %432 = vmatprep.subr.mxu0 0.0
    %433 = vmatpush2.msra.mxu0 0.0
    %434 = vmatprep.subr.mxu0 0.0
    %435 = vmatpush2.msra.mxu0 0.0
    %436 = vmatprep.subr.mxu0 0.0
    %437 = vmatpush2.msra.mxu0 0.0
    %438 = vmatprep.subr.mxu0 0.0
    %439 = vmatpush2.msra.mxu0 0.0
    %440 = vmatprep.mubr.f32.mxu0 0.0
    %441 = vmatmul.mubr.f32.gmra.mxu0 %v374
    %v442 = vpop.f32.mrf.mxu0
    %v443 = vadd.f32 0.0, %v442
    %v444 = vpop.f32.mrf.mxu0
    %445 = vdwg.mxu0
    %v446 = vadd.f32 %v370, %v443
    %v447 = vmul.f32 %v446, 0.5
    %v448 = vtanh.pop %v447
    %v449 = vadd.f32 %v448, 1.0
    %v450 = vmul.f32 %v449, 0.5
    %v451 = vtanh.pop %v446
    %v452 = vmul.f32 %v450, %v355
    %454 = vrot.lane.b32.xlu0 %v451, 64
    %v455 = vpop.permute.xlu0 %454
    %v457 = vmul.f32 %v450, %v455
    %459 = vrot.lane.b32.xlu0 %v457, 32
    %v460 = vpop.permute.xlu0 %459
    %v462 = vadd.f32 %v452, %v460
    %v463 = vtanh.pop %v462
    %465 = vrot.lane.b32.xlu0 %v463, 64
    %v466 = vpop.permute.xlu0 %465
    %v468 = vmul.f32 %v450, %v466
    %vm469 = vcmp.eq.s32.totalorder %v45, 4
    %v470 = vsel %vm469, 1, 0
    %471 = vset.pattern.permute.xlu0 0
    %472 = vperm.xlu0 %471, %v470
    %v473 = vpop.permute.xlu0 %472
    %vm474 = vcmp.eq.s32.totalorder %v473, 1
    %v475 = vsel %vm474, %v468, %v368
    %s476 = scalar_lea.vmem %s0, 16
    %v477 = vld [vmem:[%s476] sm:$0xf]
    %479 = vrot.lane.b32.xlu0 %v468, 32
    %v480 = vpop.permute.xlu0 %479
    %v481 = vsel %vm51, %v480, 0
    %483 = vmatprep.subr.mxu0 0.0
    %484 = vmatpush1.msra.mxu0 0.0
    %485 = vmatprep.subr.mxu0 0.0
    %486 = vmatpush1.msra.mxu0 0.0
    %487 = vmatprep.subr.mxu0 0.0
    %488 = vmatpush1.msra.mxu0 0.0
    %489 = vmatprep.subr.mxu0 0.0
    %490 = vmatpush1.msra.mxu0 0.0
    %491 = vmatprep.subr.mxu0 0.0
    %492 = vmatpush1.msra.mxu0 0.0
    %493 = vmatprep.subr.mxu0 0.0
    %494 = vmatpush1.msra.mxu0 0.0
    %495 = vmatprep.subr.mxu0 0.0
    %496 = vmatpush1.msra.mxu0 0.0
    %497 = vmatprep.subr.mxu0 0.0
    %498 = vmatpush1.msra.mxu0 0.0
    %499 = vmatprep.subr.mxu0 0.0
    %500 = vmatpush1.msra.mxu0 0.0
    %501 = vmatprep.subr.mxu0 0.0
    %502 = vmatpush1.msra.mxu0 0.0
    %503 = vmatprep.subr.mxu0 0.0
    %504 = vmatpush1.msra.mxu0 0.0
    %505 = vmatprep.subr.mxu0 0.0
    %506 = vmatpush1.msra.mxu0 0.0
    %507 = vmatprep.subr.mxu0 0.0
    %508 = vmatpush1.msra.mxu0 %v50
    %509 = vmatprep.subr.mxu0 0.0
    %510 = vmatpush1.msra.mxu0 %v49
    %511 = vmatprep.subr.mxu0 0.0
    %512 = vmatpush1.msra.mxu0 %v48
    %513 = vmatprep.subr.mxu0 0.0
    %514 = vmatpush1.msra.mxu0 %v47
    %515 = vmatprep.subr.mxu0 0.0
    %516 = vmatpush2.msra.mxu0 0.0
    %517 = vmatprep.subr.mxu0 0.0
    %518 = vmatpush2.msra.mxu0 0.0
    %519 = vmatprep.subr.mxu0 0.0
    %520 = vmatpush2.msra.mxu0 0.0
    %521 = vmatprep.subr.mxu0 0.0
    %522 = vmatpush2.msra.mxu0 0.0
    %523 = vmatprep.subr.mxu0 0.0
    %524 = vmatpush2.msra.mxu0 0.0
    %525 = vmatprep.subr.mxu0 0.0
    %526 = vmatpush2.msra.mxu0 0.0
    %527 = vmatprep.subr.mxu0 0.0
    %528 = vmatpush2.msra.mxu0 0.0
    %529 = vmatprep.subr.mxu0 0.0
    %530 = vmatpush2.msra.mxu0 0.0
    %531 = vmatprep.subr.mxu0 0.0
    %532 = vmatpush2.msra.mxu0 0.0
    %533 = vmatprep.subr.mxu0 0.0
    %534 = vmatpush2.msra.mxu0 0.0
    %535 = vmatprep.subr.mxu0 0.0
    %536 = vmatpush2.msra.mxu0 0.0
    %537 = vmatprep.subr.mxu0 0.0
    %538 = vmatpush2.msra.mxu0 0.0
    %539 = vmatprep.subr.mxu0 0.0
    %540 = vmatpush2.msra.mxu0 0.0
    %541 = vmatprep.subr.mxu0 0.0
    %542 = vmatpush2.msra.mxu0 0.0
    %543 = vmatprep.subr.mxu0 0.0
    %544 = vmatpush2.msra.mxu0 0.0
    %545 = vmatprep.subr.mxu0 0.0
    %546 = vmatpush2.msra.mxu0 0.0
    %547 = vmatprep.mubr.f32.mxu0 0.0
    %548 = vmatmul.mubr.f32.gmra.mxu0 %v481
    %v549 = vpop.f32.mrf.mxu0
    %v550 = vadd.f32 0.0, %v549
    %v551 = vpop.f32.mrf.mxu0
    %552 = vdwg.mxu0
    %v553 = vadd.f32 %v477, %v550
    %v554 = vmul.f32 %v553, 0.5
    %v555 = vtanh.pop %v554
    %v556 = vadd.f32 %v555, 1.0
    %v557 = vmul.f32 %v556, 0.5
    %v558 = vtanh.pop %v553
    %v559 = vmul.f32 %v557, %v462
    %561 = vrot.lane.b32.xlu0 %v558, 64
    %v562 = vpop.permute.xlu0 %561
    %v564 = vmul.f32 %v557, %v562
    %566 = vrot.lane.b32.xlu0 %v564, 32
    %v567 = vpop.permute.xlu0 %566
    %v569 = vadd.f32 %v559, %v567
    %v570 = vtanh.pop %v569
    %572 = vrot.lane.b32.xlu0 %v570, 64
    %v573 = vpop.permute.xlu0 %572
    %v575 = vmul.f32 %v557, %v573
    %vm576 = vcmp.eq.s32.totalorder %v45, 5
    %v577 = vsel %vm576, 1, 0
    %578 = vset.pattern.permute.xlu0 0
    %579 = vperm.xlu0 %578, %v577
    %v580 = vpop.permute.xlu0 %579
    %vm581 = vcmp.eq.s32.totalorder %v580, 1
    %v582 = vsel %vm581, %v575, %v475
    %s583 = scalar_lea.vmem %s0, 20
    %v584 = vld [vmem:[%s583] sm:$0xf]
    %586 = vrot.lane.b32.xlu0 %v575, 32
    %v587 = vpop.permute.xlu0 %586
    %v588 = vsel %vm51, %v587, 0
    %590 = vmatprep.subr.mxu0 0.0
    %591 = vmatpush1.msra.mxu0 0.0
    %592 = vmatprep.subr.mxu0 0.0
    %593 = vmatpush1.msra.mxu0 0.0
    %594 = vmatprep.subr.mxu0 0.0
    %595 = vmatpush1.msra.mxu0 0.0
    %596 = vmatprep.subr.mxu0 0.0
    %597 = vmatpush1.msra.mxu0 0.0
    %598 = vmatprep.subr.mxu0 0.0
    %599 = vmatpush1.msra.mxu0 0.0
    %600 = vmatprep.subr.mxu0 0.0
    %601 = vmatpush1.msra.mxu0 0.0
    %602 = vmatprep.subr.mxu0 0.0
    %603 = vmatpush1.msra.mxu0 0.0
    %604 = vmatprep.subr.mxu0 0.0
    %605 = vmatpush1.msra.mxu0 0.0
    %606 = vmatprep.subr.mxu0 0.0
    %607 = vmatpush1.msra.mxu0 0.0
    %608 = vmatprep.subr.mxu0 0.0
    %609 = vmatpush1.msra.mxu0 0.0
    %610 = vmatprep.subr.mxu0 0.0
    %611 = vmatpush1.msra.mxu0 0.0
    %612 = vmatprep.subr.mxu0 0.0
    %613 = vmatpush1.msra.mxu0 0.0
    %614 = vmatprep.subr.mxu0 0.0
    %615 = vmatpush1.msra.mxu0 %v50
    %616 = vmatprep.subr.mxu0 0.0
    %617 = vmatpush1.msra.mxu0 %v49
    %618 = vmatprep.subr.mxu0 0.0
    %619 = vmatpush1.msra.mxu0 %v48
    %620 = vmatprep.subr.mxu0 0.0
    %621 = vmatpush1.msra.mxu0 %v47
    %622 = vmatprep.subr.mxu0 0.0
    %623 = vmatpush2.msra.mxu0 0.0
    %624 = vmatprep.subr.mxu0 0.0
    %625 = vmatpush2.msra.mxu0 0.0
    %626 = vmatprep.subr.mxu0 0.0
    %627 = vmatpush2.msra.mxu0 0.0
    %628 = vmatprep.subr.mxu0 0.0
    %629 = vmatpush2.msra.mxu0 0.0
    %630 = vmatprep.subr.mxu0 0.0
    %631 = vmatpush2.msra.mxu0 0.0
    %632 = vmatprep.subr.mxu0 0.0
    %633 = vmatpush2.msra.mxu0 0.0
    %634 = vmatprep.subr.mxu0 0.0
    %635 = vmatpush2.msra.mxu0 0.0
    %636 = vmatprep.subr.mxu0 0.0
    %637 = vmatpush2.msra.mxu0 0.0
    %638 = vmatprep.subr.mxu0 0.0
    %639 = vmatpush2.msra.mxu0 0.0
    %640 = vmatprep.subr.mxu0 0.0
    %641 = vmatpush2.msra.mxu0 0.0
    %642 = vmatprep.subr.mxu0 0.0
    %643 = vmatpush2.msra.mxu0 0.0
    %644 = vmatprep.subr.mxu0 0.0
    %645 = vmatpush2.msra.mxu0 0.0
    %646 = vmatprep.subr.mxu0 0.0
    %647 = vmatpush2.msra.mxu0 0.0
    %648 = vmatprep.subr.mxu0 0.0
    %649 = vmatpush2.msra.mxu0 0.0
    %650 = vmatprep.subr.mxu0 0.0
    %651 = vmatpush2.msra.mxu0 0.0
    %652 = vmatprep.subr.mxu0 0.0
    %653 = vmatpush2.msra.mxu0 0.0
    %654 = vmatprep.mubr.f32.mxu0 0.0
    %655 = vmatmul.mubr.f32.gmra.mxu0 %v588
    %v656 = vpop.f32.mrf.mxu0
    %v657 = vadd.f32 0.0, %v656
    %v658 = vpop.f32.mrf.mxu0
    %659 = vdwg.mxu0
    %v660 = vadd.f32 %v584, %v657
    %v661 = vmul.f32 %v660, 0.5
    %v662 = vtanh.pop %v661
    %v663 = vadd.f32 %v662, 1.0
    %v664 = vmul.f32 %v663, 0.5
    %v665 = vtanh.pop %v660
    %v666 = vmul.f32 %v664, %v569
    %668 = vrot.lane.b32.xlu0 %v665, 64
    %v669 = vpop.permute.xlu0 %668
    %v671 = vmul.f32 %v664, %v669
    %673 = vrot.lane.b32.xlu0 %v671, 32
    %v674 = vpop.permute.xlu0 %673
    %v676 = vadd.f32 %v666, %v674
    %v677 = vtanh.pop %v676
    %679 = vrot.lane.b32.xlu0 %v677, 64
    %v680 = vpop.permute.xlu0 %679
    %v682 = vmul.f32 %v664, %v680
    %vm683 = vcmp.eq.s32.totalorder %v45, 6
    %v684 = vsel %vm683, 1, 0
    %685 = vset.pattern.permute.xlu0 0
    %686 = vperm.xlu0 %685, %v684
    %v687 = vpop.permute.xlu0 %686
    %vm688 = vcmp.eq.s32.totalorder %v687, 1
    %v689 = vsel %vm688, %v682, %v582
    %s690 = scalar_lea.vmem %s0, 24
    %v691 = vld [vmem:[%s690] sm:$0xf]
    %693 = vrot.lane.b32.xlu0 %v682, 32
    %v694 = vpop.permute.xlu0 %693
    %v695 = vsel %vm51, %v694, 0
    %697 = vmatprep.subr.mxu0 0.0
    %698 = vmatpush1.msra.mxu0 0.0
    %699 = vmatprep.subr.mxu0 0.0
    %700 = vmatpush1.msra.mxu0 0.0
    %701 = vmatprep.subr.mxu0 0.0
    %702 = vmatpush1.msra.mxu0 0.0
    %703 = vmatprep.subr.mxu0 0.0
    %704 = vmatpush1.msra.mxu0 0.0
    %705 = vmatprep.subr.mxu0 0.0
    %706 = vmatpush1.msra.mxu0 0.0
    %707 = vmatprep.subr.mxu0 0.0
    %708 = vmatpush1.msra.mxu0 0.0
    %709 = vmatprep.subr.mxu0 0.0
    %710 = vmatpush1.msra.mxu0 0.0
    %711 = vmatprep.subr.mxu0 0.0
    %712 = vmatpush1.msra.mxu0 0.0
    %713 = vmatprep.subr.mxu0 0.0
    %714 = vmatpush1.msra.mxu0 0.0
    %715 = vmatprep.subr.mxu0 0.0
    %716 = vmatpush1.msra.mxu0 0.0
    %717 = vmatprep.subr.mxu0 0.0
    %718 = vmatpush1.msra.mxu0 0.0
    %719 = vmatprep.subr.mxu0 0.0
    %720 = vmatpush1.msra.mxu0 0.0
    %721 = vmatprep.subr.mxu0 0.0
    %722 = vmatpush1.msra.mxu0 %v50
    %723 = vmatprep.subr.mxu0 0.0
    %724 = vmatpush1.msra.mxu0 %v49
    %725 = vmatprep.subr.mxu0 0.0
    %726 = vmatpush1.msra.mxu0 %v48
    %727 = vmatprep.subr.mxu0 0.0
    %728 = vmatpush1.msra.mxu0 %v47
    %729 = vmatprep.subr.mxu0 0.0
    %730 = vmatpush2.msra.mxu0 0.0
    %731 = vmatprep.subr.mxu0 0.0
    %732 = vmatpush2.msra.mxu0 0.0
    %733 = vmatprep.subr.mxu0 0.0
    %734 = vmatpush2.msra.mxu0 0.0
    %735 = vmatprep.subr.mxu0 0.0
    %736 = vmatpush2.msra.mxu0 0.0
    %737 = vmatprep.subr.mxu0 0.0
    %738 = vmatpush2.msra.mxu0 0.0
    %739 = vmatprep.subr.mxu0 0.0
    %740 = vmatpush2.msra.mxu0 0.0
    %741 = vmatprep.subr.mxu0 0.0
    %742 = vmatpush2.msra.mxu0 0.0
    %743 = vmatprep.subr.mxu0 0.0
    %744 = vmatpush2.msra.mxu0 0.0
    %745 = vmatprep.subr.mxu0 0.0
    %746 = vmatpush2.msra.mxu0 0.0
    %747 = vmatprep.subr.mxu0 0.0
    %748 = vmatpush2.msra.mxu0 0.0
    %749 = vmatprep.subr.mxu0 0.0
    %750 = vmatpush2.msra.mxu0 0.0
    %751 = vmatprep.subr.mxu0 0.0
    %752 = vmatpush2.msra.mxu0 0.0
    %753 = vmatprep.subr.mxu0 0.0
    %754 = vmatpush2.msra.mxu0 0.0
    %755 = vmatprep.subr.mxu0 0.0
    %756 = vmatpush2.msra.mxu0 0.0
    %757 = vmatprep.subr.mxu0 0.0
    %758 = vmatpush2.msra.mxu0 0.0
    %759 = vmatprep.subr.mxu0 0.0
    %760 = vmatpush2.msra.mxu0 0.0
    %761 = vmatprep.mubr.f32.mxu0 0.0
    %762 = vmatmul.mubr.f32.gmra.mxu0 %v695
    %v763 = vpop.f32.mrf.mxu0
    %v764 = vadd.f32 0.0, %v763
    %v765 = vpop.f32.mrf.mxu0
    %766 = vdwg.mxu0
    %v767 = vadd.f32 %v691, %v764
    %v768 = vmul.f32 %v767, 0.5
    %v769 = vtanh.pop %v768
    %v770 = vadd.f32 %v769, 1.0
    %v771 = vmul.f32 %v770, 0.5
    %v772 = vtanh.pop %v767
    %v773 = vmul.f32 %v771, %v676
    %775 = vrot.lane.b32.xlu0 %v772, 64
    %v776 = vpop.permute.xlu0 %775
    %v778 = vmul.f32 %v771, %v776
    %780 = vrot.lane.b32.xlu0 %v778, 32
    %v781 = vpop.permute.xlu0 %780
    %v783 = vadd.f32 %v773, %v781
    %v784 = vtanh.pop %v783
    %786 = vrot.lane.b32.xlu0 %v784, 64
    %v787 = vpop.permute.xlu0 %786
    %v789 = vmul.f32 %v771, %v787
    %vm790 = vcmp.eq.s32.totalorder %v45, 7
    %v791 = vsel %vm790, 1, 0
    %792 = vset.pattern.permute.xlu0 0
    %793 = vperm.xlu0 %792, %v791
    %v794 = vpop.permute.xlu0 %793
    %vm795 = vcmp.eq.s32.totalorder %v794, 1
    %v796 = vsel %vm795, %v789, %v689
    %s797 = scalar_lea.vmem %s0, 28
    %v798 = vld [vmem:[%s797] sm:$0xf]
    %800 = vrot.lane.b32.xlu0 %v789, 32
    %v801 = vpop.permute.xlu0 %800
    %v802 = vsel %vm51, %v801, 0
    %804 = vmatprep.subr.mxu0 0.0
    %805 = vmatpush1.msra.mxu0 0.0
    %806 = vmatprep.subr.mxu0 0.0
    %807 = vmatpush1.msra.mxu0 0.0
    %808 = vmatprep.subr.mxu0 0.0
    %809 = vmatpush1.msra.mxu0 0.0
    %810 = vmatprep.subr.mxu0 0.0
    %811 = vmatpush1.msra.mxu0 0.0
    %812 = vmatprep.subr.mxu0 0.0
    %813 = vmatpush1.msra.mxu0 0.0
    %814 = vmatprep.subr.mxu0 0.0
    %815 = vmatpush1.msra.mxu0 0.0
    %816 = vmatprep.subr.mxu0 0.0
    %817 = vmatpush1.msra.mxu0 0.0
    %818 = vmatprep.subr.mxu0 0.0
    %819 = vmatpush1.msra.mxu0 0.0
    %820 = vmatprep.subr.mxu0 0.0
    %821 = vmatpush1.msra.mxu0 0.0
    %822 = vmatprep.subr.mxu0 0.0
    %823 = vmatpush1.msra.mxu0 0.0
    %824 = vmatprep.subr.mxu0 0.0
    %825 = vmatpush1.msra.mxu0 0.0
    %826 = vmatprep.subr.mxu0 0.0
    %827 = vmatpush1.msra.mxu0 0.0
    %828 = vmatprep.subr.mxu0 0.0
    %829 = vmatpush1.msra.mxu0 %v50
    %830 = vmatprep.subr.mxu0 0.0
    %831 = vmatpush1.msra.mxu0 %v49
    %832 = vmatprep.subr.mxu0 0.0
    %833 = vmatpush1.msra.mxu0 %v48
    %834 = vmatprep.subr.mxu0 0.0
    %835 = vmatpush1.msra.mxu0 %v47
    %836 = vmatprep.subr.mxu0 0.0
    %837 = vmatpush2.msra.mxu0 0.0
    %838 = vmatprep.subr.mxu0 0.0
    %839 = vmatpush2.msra.mxu0 0.0
    %840 = vmatprep.subr.mxu0 0.0
    %841 = vmatpush2.msra.mxu0 0.0
    %842 = vmatprep.subr.mxu0 0.0
    %843 = vmatpush2.msra.mxu0 0.0
    %844 = vmatprep.subr.mxu0 0.0
    %845 = vmatpush2.msra.mxu0 0.0
    %846 = vmatprep.subr.mxu0 0.0
    %847 = vmatpush2.msra.mxu0 0.0
    %848 = vmatprep.subr.mxu0 0.0
    %849 = vmatpush2.msra.mxu0 0.0
    %850 = vmatprep.subr.mxu0 0.0
    %851 = vmatpush2.msra.mxu0 0.0
    %852 = vmatprep.subr.mxu0 0.0
    %853 = vmatpush2.msra.mxu0 0.0
    %854 = vmatprep.subr.mxu0 0.0
    %855 = vmatpush2.msra.mxu0 0.0
    %856 = vmatprep.subr.mxu0 0.0
    %857 = vmatpush2.msra.mxu0 0.0
    %858 = vmatprep.subr.mxu0 0.0
    %859 = vmatpush2.msra.mxu0 0.0
    %860 = vmatprep.subr.mxu0 0.0
    %861 = vmatpush2.msra.mxu0 0.0
    %862 = vmatprep.subr.mxu0 0.0
    %863 = vmatpush2.msra.mxu0 0.0
    %864 = vmatprep.subr.mxu0 0.0
    %865 = vmatpush2.msra.mxu0 0.0
    %866 = vmatprep.subr.mxu0 0.0
    %867 = vmatpush2.msra.mxu0 0.0
    %868 = vmatprep.mubr.f32.mxu0 0.0
    %869 = vmatmul.mubr.f32.gmra.mxu0 %v802
    %v870 = vpop.f32.mrf.mxu0
    %v871 = vadd.f32 0.0, %v870
    %v872 = vpop.f32.mrf.mxu0
    %873 = vdwg.mxu0
    %v874 = vadd.f32 %v798, %v871
    %v875 = vmul.f32 %v874, 0.5
    %v876 = vtanh.pop %v875
    %v877 = vadd.f32 %v876, 1.0
    %v878 = vmul.f32 %v877, 0.5
    %v879 = vtanh.pop %v874
    %v880 = vmul.f32 %v878, %v783
    %882 = vrot.lane.b32.xlu0 %v879, 64
    %v883 = vpop.permute.xlu0 %882
    %v885 = vmul.f32 %v878, %v883
    %887 = vrot.lane.b32.xlu0 %v885, 32
    %v888 = vpop.permute.xlu0 %887
    %v890 = vadd.f32 %v880, %v888
    %v891 = vtanh.pop %v890
    %893 = vrot.lane.b32.xlu0 %v891, 64
    %v894 = vpop.permute.xlu0 %893
    %v896 = vmul.f32 %v878, %v894
    %vm897 = vcmp.eq.s32.totalorder %v45, 8
    %v898 = vsel %vm897, 1, 0
    %899 = vset.pattern.permute.xlu0 0
    %900 = vperm.xlu0 %899, %v898
    %v901 = vpop.permute.xlu0 %900
    %vm902 = vcmp.eq.s32.totalorder %v901, 1
    %v903 = vsel %vm902, %v896, %v796
    %v904 = vld [vmem:[%s10] sm:$0xff]
    %906 = vrot.lane.b32.xlu0 %v903, 32
    %v907 = vpop.permute.xlu0 %906
    %vm909 = vcmask 257024
    %v910 = vsel %vm909, %v907, 0.0
    %911 = vadd.xlane.f32.xlu0 %v910
    %v912 = vpop.xlane.xlu0 %911
    %v913 = vrcp.pop 32.0
    %v914 = vmul.f32 %v912, %v913
    %v915 = vsub.f32 %v903, %v914
    %v916 = vmul.f32 %v915, %v915
    %918 = vrot.lane.b32.xlu0 %v916, 32
    %v919 = vpop.permute.xlu0 %918
    %v921 = vsel %vm909, %v919, 0.0
    %922 = vadd.xlane.f32.xlu0 %v921
    %v923 = vpop.xlane.xlu0 %922
    %v924 = vmul.f32 %v923, %v913
    %v925 = vadd.f32 %v924, 1e-06
    %v926 = vrsqrt.pop %v925
    %v927 = vmul.f32 %v925, %v926
    %vm928 = vcmp.eq.f32.partialorder %v925, inf
    %v929 = vsel %vm928, %v925, %v927
    %vm930 = vcmp.eq.f32.partialorder %v925, 0.0
    %v931 = vand.u32 %v925, 2147483648
    %v932 = vsel %vm930, %v931, %v929
    %v933 = vrcp.pop %v932
    %v934 = vmul.f32 %v915, %v933
    %v935 = vlaneseq
    %v936 = vshrl.u32 %v935, 7
    %v937 = vsub.s32 0, %v936
    %v938 = vrot.slane %v904, %v937
    %940 = vrot.lane.b32.xlu0 %v938, 96
    %v941 = vpop.permute.xlu0 %940
    %v943 = vmul.f32 %v934, %v941
    %v944 = vlaneseq
    %v945 = vshrl.u32 %v944, 7
    %v946 = vsub.s32 1, %v945
    %v947 = vrot.slane %v904, %v946
    %949 = vrot.lane.b32.xlu0 %v947, 96
    %v950 = vpop.permute.xlu0 %949
    %v952 = vadd.f32 %v943, %v950
    %v953 = vld [vmem:[%s7] sm:$0xff]
    %v954 = vld [vmem:[%s7 + $0x8] sm:$0xff]
    %v955 = vld [vmem:[%s7 + $0x10] sm:$0xff]
    %v956 = vld [vmem:[%s7 + $0x18] sm:$0xff]
    %v957 = vld [vmem:[%s11] sm:$0x1]
    %v958 = vlaneseq
    %v959 = vshrl.u32 %v958, 7
    %v960 = vsub.s32 0, %v959
    %v961 = vrot.slane %v957, %v960
    %963 = vrot.lane.b32.xlu0 %v952, 32
    %v964 = vpop.permute.xlu0 %963
    %v965 = vsel %vm51, %v964, 0
    %967 = vmatprep.subr.mxu0 0.0
    %968 = vmatpush1.msra.mxu0 0.0
    %969 = vmatprep.subr.mxu0 0.0
    %970 = vmatpush1.msra.mxu0 0.0
    %971 = vmatprep.subr.mxu0 0.0
    %972 = vmatpush1.msra.mxu0 0.0
    %973 = vmatprep.subr.mxu0 0.0
    %974 = vmatpush1.msra.mxu0 0.0
    %975 = vmatprep.subr.mxu0 0.0
    %976 = vmatpush1.msra.mxu0 0.0
    %977 = vmatprep.subr.mxu0 0.0
    %978 = vmatpush1.msra.mxu0 0.0
    %979 = vmatprep.subr.mxu0 0.0
    %980 = vmatpush1.msra.mxu0 0.0
    %981 = vmatprep.subr.mxu0 0.0
    %982 = vmatpush1.msra.mxu0 0.0
    %983 = vmatprep.subr.mxu0 0.0
    %984 = vmatpush1.msra.mxu0 0.0
    %985 = vmatprep.subr.mxu0 0.0
    %986 = vmatpush1.msra.mxu0 0.0
    %987 = vmatprep.subr.mxu0 0.0
    %988 = vmatpush1.msra.mxu0 0.0
    %989 = vmatprep.subr.mxu0 0.0
    %990 = vmatpush1.msra.mxu0 0.0
    %991 = vmatprep.subr.mxu0 0.0
    %992 = vmatpush1.msra.mxu0 %v956
    %993 = vmatprep.subr.mxu0 0.0
    %994 = vmatpush1.msra.mxu0 %v955
    %995 = vmatprep.subr.mxu0 0.0
    %996 = vmatpush1.msra.mxu0 %v954
    %997 = vmatprep.subr.mxu0 0.0
    %998 = vmatpush1.msra.mxu0 %v953
    %999 = vmatprep.subr.mxu0 0.0
    %1000 = vmatpush2.msra.mxu0 0.0
    %1001 = vmatprep.subr.mxu0 0.0
    %1002 = vmatpush2.msra.mxu0 0.0
    %1003 = vmatprep.subr.mxu0 0.0
    %1004 = vmatpush2.msra.mxu0 0.0
    %1005 = vmatprep.subr.mxu0 0.0
    %1006 = vmatpush2.msra.mxu0 0.0
    %1007 = vmatprep.subr.mxu0 0.0
    %1008 = vmatpush2.msra.mxu0 0.0
    %1009 = vmatprep.subr.mxu0 0.0
    %1010 = vmatpush2.msra.mxu0 0.0
    %1011 = vmatprep.subr.mxu0 0.0
    %1012 = vmatpush2.msra.mxu0 0.0
    %1013 = vmatprep.subr.mxu0 0.0
    %1014 = vmatpush2.msra.mxu0 0.0
    %1015 = vmatprep.subr.mxu0 0.0
    %1016 = vmatpush2.msra.mxu0 0.0
    %1017 = vmatprep.subr.mxu0 0.0
    %1018 = vmatpush2.msra.mxu0 0.0
    %1019 = vmatprep.subr.mxu0 0.0
    %1020 = vmatpush2.msra.mxu0 0.0
    %1021 = vmatprep.subr.mxu0 0.0
    %1022 = vmatpush2.msra.mxu0 0.0
    %1023 = vmatprep.subr.mxu0 0.0
    %1024 = vmatpush2.msra.mxu0 0.0
    %1025 = vmatprep.subr.mxu0 0.0
    %1026 = vmatpush2.msra.mxu0 0.0
    %1027 = vmatprep.subr.mxu0 0.0
    %1028 = vmatpush2.msra.mxu0 0.0
    %1029 = vmatprep.subr.mxu0 0.0
    %1030 = vmatpush2.msra.mxu0 0.0
    %1031 = vmatprep.mubr.f32.mxu0 0.0
    %1032 = vmatmul.mubr.f32.gmra.mxu0 %v965
    %v1033 = vpop.f32.mrf.mxu0
    %v1034 = vadd.f32 %v961, %v1033
    %v1035 = vpop.f32.mrf.mxu0
    %1036 = vdwg.mxu0
    %1038 = vrot.lane.b32.xlu0 %v1034, 96
    %v1039 = vpop.permute.xlu0 %1038
    %v1040 = vsel %vm51, %v1034, 0
    %v1042 = vsel %vm51, %v1039, 0
    %1044 = vmatprep.subr.mxu0 0.0
    %1045 = vmatpush1.xpose.msra.mxu0 0.0
    %1046 = vmatprep.subr.mxu0 0.0
    %1047 = vmatpush1.xpose.msra.mxu0 0.0
    %1048 = vmatprep.subr.mxu0 0.0
    %1049 = vmatpush1.xpose.msra.mxu0 0.0
    %1050 = vmatprep.subr.mxu0 0.0
    %1051 = vmatpush1.xpose.msra.mxu0 0.0
    %1052 = vmatprep.subr.mxu0 0.0
    %1053 = vmatpush1.xpose.msra.mxu0 0.0
    %1054 = vmatprep.subr.mxu0 0.0
    %1055 = vmatpush1.xpose.msra.mxu0 0.0
    %1056 = vmatprep.subr.mxu0 0.0
    %1057 = vmatpush1.xpose.msra.mxu0 0.0
    %1058 = vmatprep.subr.mxu0 0.0
    %1059 = vmatpush1.xpose.msra.mxu0 0.0
    %1060 = vmatprep.subr.mxu0 0.0
    %1061 = vmatpush1.xpose.msra.mxu0 0.0
    %1062 = vmatprep.subr.mxu0 0.0
    %1063 = vmatpush1.xpose.msra.mxu0 0.0
    %1064 = vmatprep.subr.mxu0 0.0
    %1065 = vmatpush1.xpose.msra.mxu0 0.0
    %1066 = vmatprep.subr.mxu0 0.0
    %1067 = vmatpush1.xpose.msra.mxu0 0.0
    %1068 = vmatprep.subr.mxu0 0.0
    %1069 = vmatpush1.xpose.msra.mxu0 0.0
    %1070 = vmatprep.subr.mxu0 0.0
    %1071 = vmatpush1.xpose.msra.mxu0 0.0
    %1072 = vmatprep.subr.mxu0 0.0
    %1073 = vmatpush1.xpose.msra.mxu0 0.0
    %1074 = vmatprep.subr.mxu0 0.0
    %1075 = vmatpush1.xpose.msra.mxu0 %v1042
    %1076 = vmatprep.subr.mxu0 0.0
    %1077 = vmatpush2.xpose.msra.mxu0 0.0
    %1078 = vmatprep.subr.mxu0 0.0
    %1079 = vmatpush2.xpose.msra.mxu0 0.0
    %1080 = vmatprep.subr.mxu0 0.0
    %1081 = vmatpush2.xpose.msra.mxu0 0.0
    %1082 = vmatprep.subr.mxu0 0.0
    %1083 = vmatpush2.xpose.msra.mxu0 0.0
    %1084 = vmatprep.subr.mxu0 0.0
    %1085 = vmatpush2.xpose.msra.mxu0 0.0
    %1086 = vmatprep.subr.mxu0 0.0
    %1087 = vmatpush2.xpose.msra.mxu0 0.0
    %1088 = vmatprep.subr.mxu0 0.0
    %1089 = vmatpush2.xpose.msra.mxu0 0.0
    %1090 = vmatprep.subr.mxu0 0.0
    %1091 = vmatpush2.xpose.msra.mxu0 0.0
    %1092 = vmatprep.subr.mxu0 0.0
    %1093 = vmatpush2.xpose.msra.mxu0 0.0
    %1094 = vmatprep.subr.mxu0 0.0
    %1095 = vmatpush2.xpose.msra.mxu0 0.0
    %1096 = vmatprep.subr.mxu0 0.0
    %1097 = vmatpush2.xpose.msra.mxu0 0.0
    %1098 = vmatprep.subr.mxu0 0.0
    %1099 = vmatpush2.xpose.msra.mxu0 0.0
    %1100 = vmatprep.subr.mxu0 0.0
    %1101 = vmatpush2.xpose.msra.mxu0 0.0
    %1102 = vmatprep.subr.mxu0 0.0
    %1103 = vmatpush2.xpose.msra.mxu0 0.0
    %1104 = vmatprep.subr.mxu0 0.0
    %1105 = vmatpush2.xpose.msra.mxu0 0.0
    %1106 = vmatprep.subr.mxu0 0.0
    %1107 = vmatpush2.xpose.msra.mxu0 0.0
    %1108 = vmatprep.mubr.f32.mxu0 0.0
    %1109 = vmatmul.mubr.f32.gmra.mxu0 %v1040
    %v1110 = vpop.f32.mrf.mxu0
    %v1111 = vadd.f32 0.0, %v1110
    %v1112 = vpop.f32.mrf.mxu0
    %1113 = vdwg.mxu0
    %v1114 = vmul.f32 %v1111, 0.17677669
    %v1115 = vld [vmem:[%s2] sm:$0xf]
    %vm1116 = vcmp.gt.f32.partialorder %v1115, 0.5
    %v1117 = vsel %vm1116, %v1114, -1e+30
    %vm1118 = vcmask 27648
    %v1119 = vsel %vm1118, %v1117, -inf
    %1120 = vmax.xlane.f32.xlu0 %v1119
    %v1121 = vpop.xlane.xlu0 %1120
    %v1122 = vsub.f32 %v1117, %v1121
    %v1123 = vmul.f32 %v1122, 1.442695
    %v1124 = vpow.pop %v1123
    %v1125 = vsel %vm1118, %v1124, 0.0
    %1126 = vadd.xlane.f32.xlu0 %v1125
    %v1127 = vpop.xlane.xlu0 %1126
    %v1128 = vrcp.pop %v1127
    %v1129 = vmul.f32 %v1124, %v1128
    %1130 = vrot.lane.b32.xlu0 %v1034, 64
    %v1131 = vpop.permute.xlu0 %1130
    %vm1132 = vcmask 31744
    %v1134 = vsel %vm1132, %v1129, 0
    %vm1136 = vcmask 1043456
    %v1137 = vsel %vm1136, %v1131, 0
    %1139 = vmatprep.subr.mxu0 0.0
    %1140 = vmatpush1.msra.mxu0 0.0
    %1141 = vmatprep.subr.mxu0 0.0
    %1142 = vmatpush1.msra.mxu0 0.0
    %1143 = vmatprep.subr.mxu0 0.0
    %1144 = vmatpush1.msra.mxu0 0.0
    %1145 = vmatprep.subr.mxu0 0.0
    %1146 = vmatpush1.msra.mxu0 0.0
    %1147 = vmatprep.subr.mxu0 0.0
    %1148 = vmatpush1.msra.mxu0 0.0
    %1149 = vmatprep.subr.mxu0 0.0
    %1150 = vmatpush1.msra.mxu0 0.0
    %1151 = vmatprep.subr.mxu0 0.0
    %1152 = vmatpush1.msra.mxu0 0.0
    %1153 = vmatprep.subr.mxu0 0.0
    %1154 = vmatpush1.msra.mxu0 0.0
    %1155 = vmatprep.subr.mxu0 0.0
    %1156 = vmatpush1.msra.mxu0 0.0
    %1157 = vmatprep.subr.mxu0 0.0
    %1158 = vmatpush1.msra.mxu0 0.0
    %1159 = vmatprep.subr.mxu0 0.0
    %1160 = vmatpush1.msra.mxu0 0.0
    %1161 = vmatprep.subr.mxu0 0.0
    %1162 = vmatpush1.msra.mxu0 0.0
    %1163 = vmatprep.subr.mxu0 0.0
    %1164 = vmatpush1.msra.mxu0 0.0
    %1165 = vmatprep.subr.mxu0 0.0
    %1166 = vmatpush1.msra.mxu0 0.0
    %1167 = vmatprep.subr.mxu0 0.0
    %1168 = vmatpush1.msra.mxu0 0.0
    %1169 = vmatprep.subr.mxu0 0.0
    %1170 = vmatpush1.msra.mxu0 %v1137
    %1171 = vmatprep.subr.mxu0 0.0
    %1172 = vmatpush2.msra.mxu0 0.0
    %1173 = vmatprep.subr.mxu0 0.0
    %1174 = vmatpush2.msra.mxu0 0.0
    %1175 = vmatprep.subr.mxu0 0.0
    %1176 = vmatpush2.msra.mxu0 0.0
    %1177 = vmatprep.subr.mxu0 0.0
    %1178 = vmatpush2.msra.mxu0 0.0
    %1179 = vmatprep.subr.mxu0 0.0
    %1180 = vmatpush2.msra.mxu0 0.0
    %1181 = vmatprep.subr.mxu0 0.0
    %1182 = vmatpush2.msra.mxu0 0.0
    %1183 = vmatprep.subr.mxu0 0.0
    %1184 = vmatpush2.msra.mxu0 0.0
    %1185 = vmatprep.subr.mxu0 0.0
    %1186 = vmatpush2.msra.mxu0 0.0
    %1187 = vmatprep.subr.mxu0 0.0
    %1188 = vmatpush2.msra.mxu0 0.0
    %1189 = vmatprep.subr.mxu0 0.0
    %1190 = vmatpush2.msra.mxu0 0.0
    %1191 = vmatprep.subr.mxu0 0.0
    %1192 = vmatpush2.msra.mxu0 0.0
    %1193 = vmatprep.subr.mxu0 0.0
    %1194 = vmatpush2.msra.mxu0 0.0
    %1195 = vmatprep.subr.mxu0 0.0
    %1196 = vmatpush2.msra.mxu0 0.0
    %1197 = vmatprep.subr.mxu0 0.0
    %1198 = vmatpush2.msra.mxu0 0.0
    %1199 = vmatprep.subr.mxu0 0.0
    %1200 = vmatpush2.msra.mxu0 0.0
    %1201 = vmatprep.subr.mxu0 0.0
    %1202 = vmatpush2.msra.mxu0 0.0
    %1203 = vmatprep.mubr.f32.mxu0 0.0
    %1204 = vmatmul.mubr.f32.gmra.mxu0 %v1134
    %v1205 = vpop.f32.mrf.mxu0
    %v1206 = vadd.f32 0.0, %v1205
    %v1207 = vpop.f32.mrf.mxu0
    %1208 = vdwg.mxu0
    %v1209 = vld [vmem:[%s9] sm:$0xff]
    %v1210 = vld [vmem:[%s9 + $0x8] sm:$0xff]
    %v1211 = vld [vmem:[%s9 + $0x10] sm:$0xff]
    %v1212 = vld [vmem:[%s9 + $0x18] sm:$0xff]
    %v1213 = vlaneseq
    %v1214 = vshrl.u32 %v1213, 7
    %v1215 = vsub.s32 2, %v1214
    %v1216 = vrot.slane %v904, %v1215
    %v1218 = vsel %vm51, %v1206, 0
    %1220 = vmatprep.subr.mxu0 0.0
    %1221 = vmatpush1.msra.mxu0 0.0
    %1222 = vmatprep.subr.mxu0 0.0
    %1223 = vmatpush1.msra.mxu0 0.0
    %1224 = vmatprep.subr.mxu0 0.0
    %1225 = vmatpush1.msra.mxu0 0.0
    %1226 = vmatprep.subr.mxu0 0.0
    %1227 = vmatpush1.msra.mxu0 0.0
    %1228 = vmatprep.subr.mxu0 0.0
    %1229 = vmatpush1.msra.mxu0 0.0
    %1230 = vmatprep.subr.mxu0 0.0
    %1231 = vmatpush1.msra.mxu0 0.0
    %1232 = vmatprep.subr.mxu0 0.0
    %1233 = vmatpush1.msra.mxu0 0.0
    %1234 = vmatprep.subr.mxu0 0.0
    %1235 = vmatpush1.msra.mxu0 0.0
    %1236 = vmatprep.subr.mxu0 0.0
    %1237 = vmatpush1.msra.mxu0 0.0
    %1238 = vmatprep.subr.mxu0 0.0
    %1239 = vmatpush1.msra.mxu0 0.0
    %1240 = vmatprep.subr.mxu0 0.0
    %1241 = vmatpush1.msra.mxu0 0.0
    %1242 = vmatprep.subr.mxu0 0.0
    %1243 = vmatpush1.msra.mxu0 0.0
    %1244 = vmatprep.subr.mxu0 0.0
    %1245 = vmatpush1.msra.mxu0 %v1212
    %1246 = vmatprep.subr.mxu0 0.0
    %1247 = vmatpush1.msra.mxu0 %v1211
    %1248 = vmatprep.subr.mxu0 0.0
    %1249 = vmatpush1.msra.mxu0 %v1210
    %1250 = vmatprep.subr.mxu0 0.0
    %1251 = vmatpush1.msra.mxu0 %v1209
    %1252 = vmatprep.subr.mxu0 0.0
    %1253 = vmatpush2.msra.mxu0 0.0
    %1254 = vmatprep.subr.mxu0 0.0
    %1255 = vmatpush2.msra.mxu0 0.0
    %1256 = vmatprep.subr.mxu0 0.0
    %1257 = vmatpush2.msra.mxu0 0.0
    %1258 = vmatprep.subr.mxu0 0.0
    %1259 = vmatpush2.msra.mxu0 0.0
    %1260 = vmatprep.subr.mxu0 0.0
    %1261 = vmatpush2.msra.mxu0 0.0
    %1262 = vmatprep.subr.mxu0 0.0
    %1263 = vmatpush2.msra.mxu0 0.0
    %1264 = vmatprep.subr.mxu0 0.0
    %1265 = vmatpush2.msra.mxu0 0.0
    %1266 = vmatprep.subr.mxu0 0.0
    %1267 = vmatpush2.msra.mxu0 0.0
    %1268 = vmatprep.subr.mxu0 0.0
    %1269 = vmatpush2.msra.mxu0 0.0
    %1270 = vmatprep.subr.mxu0 0.0
    %1271 = vmatpush2.msra.mxu0 0.0
    %1272 = vmatprep.subr.mxu0 0.0
    %1273 = vmatpush2.msra.mxu0 0.0
    %1274 = vmatprep.subr.mxu0 0.0
    %1275 = vmatpush2.msra.mxu0 0.0
    %1276 = vmatprep.subr.mxu0 0.0
    %1277 = vmatpush2.msra.mxu0 0.0
    %1278 = vmatprep.subr.mxu0 0.0
    %1279 = vmatpush2.msra.mxu0 0.0
    %1280 = vmatprep.subr.mxu0 0.0
    %1281 = vmatpush2.msra.mxu0 0.0
    %1282 = vmatprep.subr.mxu0 0.0
    %1283 = vmatpush2.msra.mxu0 0.0
    %1284 = vmatprep.mubr.f32.mxu0 0.0
    %1285 = vmatmul.mubr.f32.gmra.mxu0 %v1218
    %v1286 = vpop.f32.mrf.mxu0
    %v1287 = vadd.f32 %v1216, %v1286
    %v1288 = vpop.f32.mrf.mxu0
    %1289 = vdwg.mxu0
    %1291 = vrot.lane.b32.xlu0 %v1287, 96
    %v1292 = vpop.permute.xlu0 %1291
    %v1294 = vadd.f32 %v903, %v1292
    %1296 = vrot.lane.b32.xlu0 %v1294, 32
    %v1297 = vpop.permute.xlu0 %1296
    %1299 = vst.msk [vmem:[#allocation2] sm:$0xf] %vm909, %v1297
    %v1300 = vld [vmem:[%s9 + $0x20] sm:$0xff]
    %v1301 = vld [vmem:[%s9 + $0x28] sm:$0xff]
    %v1302 = vld [vmem:[%s9 + $0x30] sm:$0xff]
    %v1303 = vld [vmem:[%s9 + $0x38] sm:$0xff]
    %v1304 = vlaneseq
    %v1305 = vshrl.u32 %v1304, 7
    %v1306 = vsub.s32 3, %v1305
    %v1307 = vrot.slane %v904, %v1306
    %v1308 = vsel %vm51, %v1297, 0
    %1310 = vmatprep.subr.mxu0 0.0
    %1311 = vmatpush1.msra.mxu0 0.0
    %1312 = vmatprep.subr.mxu0 0.0
    %1313 = vmatpush1.msra.mxu0 0.0
    %1314 = vmatprep.subr.mxu0 0.0
    %1315 = vmatpush1.msra.mxu0 0.0
    %1316 = vmatprep.subr.mxu0 0.0
    %1317 = vmatpush1.msra.mxu0 0.0
    %1318 = vmatprep.subr.mxu0 0.0
    %1319 = vmatpush1.msra.mxu0 0.0
    %1320 = vmatprep.subr.mxu0 0.0
    %1321 = vmatpush1.msra.mxu0 0.0
    %1322 = vmatprep.subr.mxu0 0.0
    %1323 = vmatpush1.msra.mxu0 0.0
    %1324 = vmatprep.subr.mxu0 0.0
    %1325 = vmatpush1.msra.mxu0 0.0
    %1326 = vmatprep.subr.mxu0 0.0
    %1327 = vmatpush1.msra.mxu0 0.0
    %1328 = vmatprep.subr.mxu0 0.0
    %1329 = vmatpush1.msra.mxu0 0.0
    %1330 = vmatprep.subr.mxu0 0.0
    %1331 = vmatpush1.msra.mxu0 0.0
    %1332 = vmatprep.subr.mxu0 0.0
    %1333 = vmatpush1.msra.mxu0 0.0
    %1334 = vmatprep.subr.mxu0 0.0
    %1335 = vmatpush1.msra.mxu0 %v1303
    %1336 = vmatprep.subr.mxu0 0.0
    %1337 = vmatpush1.msra.mxu0 %v1302
    %1338 = vmatprep.subr.mxu0 0.0
    %1339 = vmatpush1.msra.mxu0 %v1301
    %1340 = vmatprep.subr.mxu0 0.0
    %1341 = vmatpush1.msra.mxu0 %v1300
    %1342 = vmatprep.subr.mxu0 0.0
    %1343 = vmatpush2.msra.mxu0 0.0
    %1344 = vmatprep.subr.mxu0 0.0
    %1345 = vmatpush2.msra.mxu0 0.0
    %1346 = vmatprep.subr.mxu0 0.0
    %1347 = vmatpush2.msra.mxu0 0.0
    %1348 = vmatprep.subr.mxu0 0.0
    %1349 = vmatpush2.msra.mxu0 0.0
    %1350 = vmatprep.subr.mxu0 0.0
    %1351 = vmatpush2.msra.mxu0 0.0
    %1352 = vmatprep.subr.mxu0 0.0
    %1353 = vmatpush2.msra.mxu0 0.0
    %1354 = vmatprep.subr.mxu0 0.0
    %1355 = vmatpush2.msra.mxu0 0.0
    %1356 = vmatprep.subr.mxu0 0.0
    %1357 = vmatpush2.msra.mxu0 0.0
    %1358 = vmatprep.subr.mxu0 0.0
    %1359 = vmatpush2.msra.mxu0 0.0
    %1360 = vmatprep.subr.mxu0 0.0
    %1361 = vmatpush2.msra.mxu0 0.0
    %1362 = vmatprep.subr.mxu0 0.0
    %1363 = vmatpush2.msra.mxu0 0.0
    %1364 = vmatprep.subr.mxu0 0.0
    %1365 = vmatpush2.msra.mxu0 0.0
    %1366 = vmatprep.subr.mxu0 0.0
    %1367 = vmatpush2.msra.mxu0 0.0
    %1368 = vmatprep.subr.mxu0 0.0
    %1369 = vmatpush2.msra.mxu0 0.0
    %1370 = vmatprep.subr.mxu0 0.0
    %1371 = vmatpush2.msra.mxu0 0.0
    %1372 = vmatprep.subr.mxu0 0.0
    %1373 = vmatpush2.msra.mxu0 0.0
    %1374 = vmatprep.mubr.f32.mxu0 0.0
    %1375 = vmatmul.mubr.f32.gmra.mxu0 %v1308
    %v1376 = vpop.f32.mrf.mxu0
    %v1377 = vadd.f32 %v1307, %v1376
    %v1378 = vpop.f32.mrf.mxu0
    %1379 = vdwg.mxu0
    %vm1380 = vcmp.gt.f32.partialorder %v1377, 20.0
    %v1381 = vmin.f32 %v1377, 20.0
    %v1382 = vmul.f32 %v1381, 1.442695
    %v1383 = vpow.pop %v1382
    %v1384 = vadd.f32 %v1383, 1.0
    %v1385 = vlog2.pop %v1384
    %v1386 = vmul.f32 %v1385, 0.6931472
    %v1387 = vsel %vm1380, %v1377, %v1386
    %v1388 = vld [vmem:[%s9 + $0x40] sm:$0xff]
    %v1389 = vld [vmem:[%s9 + $0x48] sm:$0xff]
    %v1390 = vld [vmem:[%s9 + $0x50] sm:$0xff]
    %v1391 = vld [vmem:[%s9 + $0x58] sm:$0xff]
    %v1392 = vlaneseq
    %v1393 = vshrl.u32 %v1392, 7
    %v1394 = vsub.s32 4, %v1393
    %v1395 = vrot.slane %v904, %v1394
    %v1397 = vsel %vm51, %v1387, 0
    %1399 = vmatprep.subr.mxu0 0.0
    %1400 = vmatpush1.msra.mxu0 0.0
    %1401 = vmatprep.subr.mxu0 0.0
    %1402 = vmatpush1.msra.mxu0 0.0
    %1403 = vmatprep.subr.mxu0 0.0
    %1404 = vmatpush1.msra.mxu0 0.0
    %1405 = vmatprep.subr.mxu0 0.0
    %1406 = vmatpush1.msra.mxu0 0.0
    %1407 = vmatprep.subr.mxu0 0.0
    %1408 = vmatpush1.msra.mxu0 0.0
    %1409 = vmatprep.subr.mxu0 0.0
    %1410 = vmatpush1.msra.mxu0 0.0
    %1411 = vmatprep.subr.mxu0 0.0
    %1412 = vmatpush1.msra.mxu0 0.0
    %1413 = vmatprep.subr.mxu0 0.0
    %1414 = vmatpush1.msra.mxu0 0.0
    %1415 = vmatprep.subr.mxu0 0.0
    %1416 = vmatpush1.msra.mxu0 0.0
    %1417 = vmatprep.subr.mxu0 0.0
    %1418 = vmatpush1.msra.mxu0 0.0
    %1419 = vmatprep.subr.mxu0 0.0
    %1420 = vmatpush1.msra.mxu0 0.0
    %1421 = vmatprep.subr.mxu0 0.0
    %1422 = vmatpush1.msra.mxu0 0.0
    %1423 = vmatprep.subr.mxu0 0.0
    %1424 = vmatpush1.msra.mxu0 %v1391
    %1425 = vmatprep.subr.mxu0 0.0
    %1426 = vmatpush1.msra.mxu0 %v1390
    %1427 = vmatprep.subr.mxu0 0.0
    %1428 = vmatpush1.msra.mxu0 %v1389
    %1429 = vmatprep.subr.mxu0 0.0
    %1430 = vmatpush1.msra.mxu0 %v1388
    %1431 = vmatprep.subr.mxu0 0.0
    %1432 = vmatpush2.msra.mxu0 0.0
    %1433 = vmatprep.subr.mxu0 0.0
    %1434 = vmatpush2.msra.mxu0 0.0
    %1435 = vmatprep.subr.mxu0 0.0
    %1436 = vmatpush2.msra.mxu0 0.0
    %1437 = vmatprep.subr.mxu0 0.0
    %1438 = vmatpush2.msra.mxu0 0.0
    %1439 = vmatprep.subr.mxu0 0.0
    %1440 = vmatpush2.msra.mxu0 0.0
    %1441 = vmatprep.subr.mxu0 0.0
    %1442 = vmatpush2.msra.mxu0 0.0
    %1443 = vmatprep.subr.mxu0 0.0
    %1444 = vmatpush2.msra.mxu0 0.0
    %1445 = vmatprep.subr.mxu0 0.0
    %1446 = vmatpush2.msra.mxu0 0.0
    %1447 = vmatprep.subr.mxu0 0.0
    %1448 = vmatpush2.msra.mxu0 0.0
    %1449 = vmatprep.subr.mxu0 0.0
    %1450 = vmatpush2.msra.mxu0 0.0
    %1451 = vmatprep.subr.mxu0 0.0
    %1452 = vmatpush2.msra.mxu0 0.0
    %1453 = vmatprep.subr.mxu0 0.0
    %1454 = vmatpush2.msra.mxu0 0.0
    %1455 = vmatprep.subr.mxu0 0.0
    %1456 = vmatpush2.msra.mxu0 0.0
    %1457 = vmatprep.subr.mxu0 0.0
    %1458 = vmatpush2.msra.mxu0 0.0
    %1459 = vmatprep.subr.mxu0 0.0
    %1460 = vmatpush2.msra.mxu0 0.0
    %1461 = vmatprep.subr.mxu0 0.0
    %1462 = vmatpush2.msra.mxu0 0.0
    %1463 = vmatprep.mubr.f32.mxu0 0.0
    %1464 = vmatmul.mubr.f32.gmra.mxu0 %v1397
    %v1465 = vpop.f32.mrf.mxu0
    %v1466 = vadd.f32 %v1395, %v1465
    %v1467 = vpop.f32.mrf.mxu0
    %1468 = vdwg.mxu0
    %vm1469 = vcmp.gt.f32.partialorder %v1466, 20.0
    %v1470 = vmin.f32 %v1466, 20.0
    %v1471 = vmul.f32 %v1470, 1.442695
    %v1472 = vpow.pop %v1471
    %v1473 = vadd.f32 %v1472, 1.0
    %v1474 = vlog2.pop %v1473
    %v1475 = vmul.f32 %v1474, 0.6931472
    %v1476 = vsel %vm1469, %v1466, %v1475
    %v1477 = vld [vmem:[%s9 + $0x60] sm:$0xff]
    %v1478 = vld [vmem:[%s9 + $0x68] sm:$0xff]
    %v1479 = vld [vmem:[%s9 + $0x70] sm:$0xff]
    %v1480 = vld [vmem:[%s9 + $0x78] sm:$0xff]
    %v1481 = vlaneseq
    %v1482 = vshrl.u32 %v1481, 7
    %v1483 = vsub.s32 5, %v1482
    %v1484 = vrot.slane %v904, %v1483
    %v1486 = vsel %vm51, %v1476, 0
    %1488 = vmatprep.subr.mxu0 0.0
    %1489 = vmatpush1.msra.mxu0 0.0
    %1490 = vmatprep.subr.mxu0 0.0
    %1491 = vmatpush1.msra.mxu0 0.0
    %1492 = vmatprep.subr.mxu0 0.0
    %1493 = vmatpush1.msra.mxu0 0.0
    %1494 = vmatprep.subr.mxu0 0.0
    %1495 = vmatpush1.msra.mxu0 0.0
    %1496 = vmatprep.subr.mxu0 0.0
    %1497 = vmatpush1.msra.mxu0 0.0
    %1498 = vmatprep.subr.mxu0 0.0
    %1499 = vmatpush1.msra.mxu0 0.0
    %1500 = vmatprep.subr.mxu0 0.0
    %1501 = vmatpush1.msra.mxu0 0.0
    %1502 = vmatprep.subr.mxu0 0.0
    %1503 = vmatpush1.msra.mxu0 0.0
    %1504 = vmatprep.subr.mxu0 0.0
    %1505 = vmatpush1.msra.mxu0 0.0
    %1506 = vmatprep.subr.mxu0 0.0
    %1507 = vmatpush1.msra.mxu0 0.0
    %1508 = vmatprep.subr.mxu0 0.0
    %1509 = vmatpush1.msra.mxu0 0.0
    %1510 = vmatprep.subr.mxu0 0.0
    %1511 = vmatpush1.msra.mxu0 0.0
    %1512 = vmatprep.subr.mxu0 0.0
    %1513 = vmatpush1.msra.mxu0 %v1480
    %1514 = vmatprep.subr.mxu0 0.0
    %1515 = vmatpush1.msra.mxu0 %v1479
    %1516 = vmatprep.subr.mxu0 0.0
    %1517 = vmatpush1.msra.mxu0 %v1478
    %1518 = vmatprep.subr.mxu0 0.0
    %1519 = vmatpush1.msra.mxu0 %v1477
    %1520 = vmatprep.subr.mxu0 0.0
    %1521 = vmatpush2.msra.mxu0 0.0
    %1522 = vmatprep.subr.mxu0 0.0
    %1523 = vmatpush2.msra.mxu0 0.0
    %1524 = vmatprep.subr.mxu0 0.0
    %1525 = vmatpush2.msra.mxu0 0.0
    %1526 = vmatprep.subr.mxu0 0.0
    %1527 = vmatpush2.msra.mxu0 0.0
    %1528 = vmatprep.subr.mxu0 0.0
    %1529 = vmatpush2.msra.mxu0 0.0
    %1530 = vmatprep.subr.mxu0 0.0
    %1531 = vmatpush2.msra.mxu0 0.0
    %1532 = vmatprep.subr.mxu0 0.0
    %1533 = vmatpush2.msra.mxu0 0.0
    %1534 = vmatprep.subr.mxu0 0.0
    %1535 = vmatpush2.msra.mxu0 0.0
    %1536 = vmatprep.subr.mxu0 0.0
    %1537 = vmatpush2.msra.mxu0 0.0
    %1538 = vmatprep.subr.mxu0 0.0
    %1539 = vmatpush2.msra.mxu0 0.0
    %1540 = vmatprep.subr.mxu0 0.0
    %1541 = vmatpush2.msra.mxu0 0.0
    %1542 = vmatprep.subr.mxu0 0.0
    %1543 = vmatpush2.msra.mxu0 0.0
    %1544 = vmatprep.subr.mxu0 0.0
    %1545 = vmatpush2.msra.mxu0 0.0
    %1546 = vmatprep.subr.mxu0 0.0
    %1547 = vmatpush2.msra.mxu0 0.0
    %1548 = vmatprep.subr.mxu0 0.0
    %1549 = vmatpush2.msra.mxu0 0.0
    %1550 = vmatprep.subr.mxu0 0.0
    %1551 = vmatpush2.msra.mxu0 0.0
    %1552 = vmatprep.mubr.f32.mxu0 0.0
    %1553 = vmatmul.mubr.f32.gmra.mxu0 %v1486
    %v1554 = vpop.f32.mrf.mxu0
    %v1555 = vadd.f32 %v1484, %v1554
    %v1556 = vpop.f32.mrf.mxu0
    %1557 = vdwg.mxu0
    %v1558 = vld [vmem:[%s3] sm:$0xff]
    %v1559 = vld [vmem:[%s3 + $0x8] sm:$0xf]
    %v1561 = vsel %vm1132, %v1558, 0
    %v1564 = vsel %vm1132, %v1559, 0
    %v1567 = vsel %vm1136, %v1555, 0
    %1569 = vmatprep.subr.mxu0 0.0
    %1570 = vmatpush1.msra.mxu0 0.0
    %1571 = vmatprep.subr.mxu0 0.0
    %1572 = vmatpush1.msra.mxu0 0.0
    %1573 = vmatprep.subr.mxu0 0.0
    %1574 = vmatpush1.msra.mxu0 0.0
    %1575 = vmatprep.subr.mxu0 0.0
    %1576 = vmatpush1.msra.mxu0 0.0
    %1577 = vmatprep.subr.mxu0 0.0
    %1578 = vmatpush1.msra.mxu0 0.0
    %1579 = vmatprep.subr.mxu0 0.0
    %1580 = vmatpush1.msra.mxu0 0.0
    %1581 = vmatprep.subr.mxu0 0.0
    %1582 = vmatpush1.msra.mxu0 0.0
    %1583 = vmatprep.subr.mxu0 0.0
    %1584 = vmatpush1.msra.mxu0 0.0
    %1585 = vmatprep.subr.mxu0 0.0
    %1586 = vmatpush1.msra.mxu0 0.0
    %1587 = vmatprep.subr.mxu0 0.0
    %1588 = vmatpush1.msra.mxu0 0.0
    %1589 = vmatprep.subr.mxu0 0.0
    %1590 = vmatpush1.msra.mxu0 0.0
    %1591 = vmatprep.subr.mxu0 0.0
    %1592 = vmatpush1.msra.mxu0 0.0
    %1593 = vmatprep.subr.mxu0 0.0
    %1594 = vmatpush1.msra.mxu0 0.0
    %1595 = vmatprep.subr.mxu0 0.0
    %1596 = vmatpush1.msra.mxu0 0.0
    %1597 = vmatprep.subr.mxu0 0.0
    %1598 = vmatpush1.msra.mxu0 0.0
    %1599 = vmatprep.subr.mxu0 0.0
    %1600 = vmatpush1.msra.mxu0 %v1567
    %1601 = vmatprep.subr.mxu0 0.0
    %1602 = vmatpush2.msra.mxu0 0.0
    %1603 = vmatprep.subr.mxu0 0.0
    %1604 = vmatpush2.msra.mxu0 0.0
    %1605 = vmatprep.subr.mxu0 0.0
    %1606 = vmatpush2.msra.mxu0 0.0
    %1607 = vmatprep.subr.mxu0 0.0
    %1608 = vmatpush2.msra.mxu0 0.0
    %1609 = vmatprep.subr.mxu0 0.0
    %1610 = vmatpush2.msra.mxu0 0.0
    %1611 = vmatprep.subr.mxu0 0.0
    %1612 = vmatpush2.msra.mxu0 0.0
    %1613 = vmatprep.subr.mxu0 0.0
    %1614 = vmatpush2.msra.mxu0 0.0
    %1615 = vmatprep.subr.mxu0 0.0
    %1616 = vmatpush2.msra.mxu0 0.0
    %1617 = vmatprep.subr.mxu0 0.0
    %1618 = vmatpush2.msra.mxu0 0.0
    %1619 = vmatprep.subr.mxu0 0.0
    %1620 = vmatpush2.msra.mxu0 0.0
    %1621 = vmatprep.subr.mxu0 0.0
    %1622 = vmatpush2.msra.mxu0 0.0
    %1623 = vmatprep.subr.mxu0 0.0
    %1624 = vmatpush2.msra.mxu0 0.0
    %1625 = vmatprep.subr.mxu0 0.0
    %1626 = vmatpush2.msra.mxu0 0.0
    %1627 = vmatprep.subr.mxu0 0.0
    %1628 = vmatpush2.msra.mxu0 0.0
    %1629 = vmatprep.subr.mxu0 0.0
    %1630 = vmatpush2.msra.mxu0 0.0
    %1631 = vmatprep.subr.mxu0 0.0
    %1632 = vmatpush2.msra.mxu0 0.0
    %1633 = vmatprep.mubr.f32.mxu0 0.0
    %1634 = vmatmul.mubr.f32.gmra.mxu0 %v1561
    %v1635 = vpop.f32.mrf.mxu0
    %v1636 = vadd.f32 0.0, %v1635
    %v1637 = vpop.f32.mrf.mxu0
    %1638 = vmatprep.mubr.f32.mxu0 0.0
    %1639 = vmatmul.mubr.f32.gmra.mxu0 %v1564
    %v1640 = vpop.f32.mrf.mxu0
    %v1641 = vadd.f32 0.0, %v1640
    %v1642 = vpop.f32.mrf.mxu0
    %1643 = vdwg.mxu0
    %v1644 = vld [vmem:[%s4] sm:$0xf]
    %v1646 = vsel %vm1136, %v1644, 0
    %1648 = vmatprep.subr.mxu0 0.0
    %1649 = vmatpush1.msra.mxu0 0.0
    %1650 = vmatprep.subr.mxu0 0.0
    %1651 = vmatpush1.msra.mxu0 0.0
    %1652 = vmatprep.subr.mxu0 0.0
    %1653 = vmatpush1.msra.mxu0 0.0
    %1654 = vmatprep.subr.mxu0 0.0
    %1655 = vmatpush1.msra.mxu0 0.0
    %1656 = vmatprep.subr.mxu0 0.0
    %1657 = vmatpush1.msra.mxu0 0.0
    %1658 = vmatprep.subr.mxu0 0.0
    %1659 = vmatpush1.msra.mxu0 0.0
    %1660 = vmatprep.subr.mxu0 0.0
    %1661 = vmatpush1.msra.mxu0 0.0
    %1662 = vmatprep.subr.mxu0 0.0
    %1663 = vmatpush1.msra.mxu0 0.0
    %1664 = vmatprep.subr.mxu0 0.0
    %1665 = vmatpush1.msra.mxu0 0.0
    %1666 = vmatprep.subr.mxu0 0.0
    %1667 = vmatpush1.msra.mxu0 0.0
    %1668 = vmatprep.subr.mxu0 0.0
    %1669 = vmatpush1.msra.mxu0 0.0
    %1670 = vmatprep.subr.mxu0 0.0
    %1671 = vmatpush1.msra.mxu0 0.0
    %1672 = vmatprep.subr.mxu0 0.0
    %1673 = vmatpush1.msra.mxu0 0.0
    %1674 = vmatprep.subr.mxu0 0.0
    %1675 = vmatpush1.msra.mxu0 0.0
    %1676 = vmatprep.subr.mxu0 0.0
    %1677 = vmatpush1.msra.mxu0 0.0
    %1678 = vmatprep.subr.mxu0 0.0
    %1679 = vmatpush1.msra.mxu0 %v1646
    %1680 = vmatprep.subr.mxu0 0.0
    %1681 = vmatpush2.msra.mxu0 0.0
    %1682 = vmatprep.subr.mxu0 0.0
    %1683 = vmatpush2.msra.mxu0 0.0
    %1684 = vmatprep.subr.mxu0 0.0
    %1685 = vmatpush2.msra.mxu0 0.0
    %1686 = vmatprep.subr.mxu0 0.0
    %1687 = vmatpush2.msra.mxu0 0.0
    %1688 = vmatprep.subr.mxu0 0.0
    %1689 = vmatpush2.msra.mxu0 0.0
    %1690 = vmatprep.subr.mxu0 0.0
    %1691 = vmatpush2.msra.mxu0 0.0
    %1692 = vmatprep.subr.mxu0 0.0
    %1693 = vmatpush2.msra.mxu0 0.0
    %1694 = vmatprep.subr.mxu0 0.0
    %1695 = vmatpush2.msra.mxu0 0.0
    %1696 = vmatprep.subr.mxu0 0.0
    %1697 = vmatpush2.msra.mxu0 0.0
    %1698 = vmatprep.subr.mxu0 0.0
    %1699 = vmatpush2.msra.mxu0 0.0
    %1700 = vmatprep.subr.mxu0 0.0
    %1701 = vmatpush2.msra.mxu0 0.0
    %1702 = vmatprep.subr.mxu0 0.0
    %1703 = vmatpush2.msra.mxu0 0.0
    %1704 = vmatprep.subr.mxu0 0.0
    %1705 = vmatpush2.msra.mxu0 0.0
    %1706 = vmatprep.subr.mxu0 0.0
    %1707 = vmatpush2.msra.mxu0 0.0
    %1708 = vmatprep.subr.mxu0 0.0
    %1709 = vmatpush2.msra.mxu0 0.0
    %1710 = vmatprep.subr.mxu0 0.0
    %1711 = vmatpush2.msra.mxu0 0.0
    %1712 = vmatprep.mubr.f32.mxu0 0.0
    %1713 = vmatmul.mubr.f32.gmra.mxu0 %v1561
    %v1714 = vpop.f32.mrf.mxu0
    %v1715 = vadd.f32 0.0, %v1714
    %v1716 = vpop.f32.mrf.mxu0
    %1717 = vmatprep.mubr.f32.mxu0 0.0
    %1718 = vmatmul.mubr.f32.gmra.mxu0 %v1564
    %v1719 = vpop.f32.mrf.mxu0
    %v1720 = vadd.f32 0.0, %v1719
    %v1721 = vpop.f32.mrf.mxu0
    %1722 = vdwg.mxu0
    %v1723 = vld [vmem:[%s11 + $0x1] sm:$0x1]
    %v1724 = vld [vmem:[%s11 + $0x2] sm:$0x1]
    %v1725 = vld [vmem:[%s9 + $0x80] sm:$0xff]
    %v1726 = vld [vmem:[%s9 + $0x88] sm:$0xff]
    %v1727 = vld [vmem:[%s9 + $0x90] sm:$0xff]
    %v1728 = vld [vmem:[%s9 + $0x98] sm:$0xff]
    %v1729 = vld [vmem:[%s9 + $0xa0] sm:$0xff]
    %v1730 = vld [vmem:[%s9 + $0xa8] sm:$0xff]
    %v1731 = vld [vmem:[%s9 + $0xb0] sm:$0xff]
    %v1732 = vld [vmem:[%s9 + $0xb8] sm:$0xff]
    %v1733 = vld [vmem:[%s9 + $0xc0] sm:$0xff]
    %v1734 = vld [vmem:[%s9 + $0xc8] sm:$0xff]
    %v1735 = vld [vmem:[%s9 + $0xd0] sm:$0xff]
    %v1736 = vld [vmem:[%s9 + $0xd8] sm:$0xff]
    %v1737 = vld [vmem:[%s5] sm:$0xff]
    %v1738 = vld [vmem:[%s5 + $0x8] sm:$0xf]
    %vm1739 = vcmask 15360
    %v1740 = vsel %vm1739, %v1715, 0.0
    %v1741 = vsel %vm1739, %v1720, 0.0
    %v1742 = vsel %vm1132, %v1740, 0.0
    %v1743 = vsel %vm1132, %v1741, 0.0
    %vm1744 = vcmask 48128
    %v1745 = vsel %vm1744, %v1742, 0.0
    %v1746 = vsel %vm1744, %v1743, 0.0
    %vm1747 = vcmask 64512
    %v1748 = vsel %vm1747, %v1745, 0.0
    %v1749 = vsel %vm1747, %v1746, 0.0
    %vm1750 = vcmask 80896
    %v1751 = vsel %vm1750, %v1748, 0.0
    %v1752 = vsel %vm1750, %v1749, 0.0
    %vm1753 = vcmask 97280
    %v1754 = vsel %vm1753, %v1751, 0.0
    %v1755 = vsel %vm1753, %v1752, 0.0
    %vm1756 = vcmask 130048
    %v1757 = vsel %vm1756, %v1754, 0.0
    %v1758 = vsel %vm1756, %v1755, 0.0
    %v1759 = vld [vmem:[%s8] sm:$0xff]
    %v1760 = vld [vmem:[%s8 + $0x8] sm:$0xff]
    %v1761 = vld [vmem:[%s8 + $0x10] sm:$0xff]
    %v1762 = vld [vmem:[%s8 + $0x18] sm:$0xff]
    %v1763 = vld [vmem:[%s8 + $0x20] sm:$0xff]
    %v1764 = vld [vmem:[%s8 + $0x28] sm:$0xff]
    %v1765 = vld [vmem:[%s8 + $0x30] sm:$0xff]
    %v1766 = vld [vmem:[%s8 + $0x38] sm:$0xff]
    %v1767 = vld [vmem:[%s8 + $0x40] sm:$0xff]
    %v1768 = vld [vmem:[%s8 + $0x48] sm:$0xff]
    %v1769 = vld [vmem:[%s8 + $0x50] sm:$0xff]
    %v1770 = vld [vmem:[%s8 + $0x58] sm:$0xff]
    %vm1771 = vcmask 392192
    %v1773 = vsel %vm1771, %v1757, 0
    %v1776 = vsel %vm1771, %v1758, 0
    %1778 = vmatprep.subr.mxu0 0.0
    %1779 = vmatpush1.msra.mxu0 0.0
    %1780 = vmatprep.subr.mxu0 0.0
    %1781 = vmatpush1.msra.mxu0 0.0
    %1782 = vmatprep.subr.mxu0 0.0
    %1783 = vmatpush1.msra.mxu0 0.0
    %1784 = vmatprep.subr.mxu0 0.0
    %1785 = vmatpush1.msra.mxu0 0.0
    %1786 = vmatprep.subr.mxu0 0.0
    %1787 = vmatpush1.msra.mxu0 0.0
    %1788 = vmatprep.subr.mxu0 0.0
    %1789 = vmatpush1.msra.mxu0 0.0
    %1790 = vmatprep.subr.mxu0 0.0
    %1791 = vmatpush1.msra.mxu0 0.0
    %1792 = vmatprep.subr.mxu0 0.0
    %1793 = vmatpush1.msra.mxu0 0.0
    %1794 = vmatprep.subr.mxu0 0.0
    %1795 = vmatpush1.msra.mxu0 0.0
    %1796 = vmatprep.subr.mxu0 0.0
    %1797 = vmatpush1.msra.mxu0 0.0
    %1798 = vmatprep.subr.mxu0 %v1770
    %1799 = vmatpush1.msra.mxu0 %v1769
    %1800 = vmatprep.subr.mxu0 %v1768
    %1801 = vmatpush1.msra.mxu0 %v1767
    %1802 = vmatprep.subr.mxu0 %v1766
    %1803 = vmatpush1.msra.mxu0 %v1765
    %1804 = vmatprep.subr.mxu0 %v1764
    %1805 = vmatpush1.msra.mxu0 %v1763
    %1806 = vmatprep.subr.mxu0 %v1762
    %1807 = vmatpush1.msra.mxu0 %v1761
    %1808 = vmatprep.subr.mxu0 %v1760
    %1809 = vmatpush1.msra.mxu0 %v1759
    %1810 = vmatprep.subr.mxu0 0.0
    %1811 = vmatpush2.msra.mxu0 0.0
    %1812 = vmatprep.subr.mxu0 0.0
    %1813 = vmatpush2.msra.mxu0 0.0
    %1814 = vmatprep.subr.mxu0 0.0
    %1815 = vmatpush2.msra.mxu0 0.0
    %1816 = vmatprep.subr.mxu0 0.0
    %1817 = vmatpush2.msra.mxu0 0.0
    %1818 = vmatprep.subr.mxu0 0.0
    %1819 = vmatpush2.msra.mxu0 0.0
    %1820 = vmatprep.subr.mxu0 0.0
    %1821 = vmatpush2.msra.mxu0 0.0
    %1822 = vmatprep.subr.mxu0 0.0
    %1823 = vmatpush2.msra.mxu0 0.0
    %1824 = vmatprep.subr.mxu0 0.0
    %1825 = vmatpush2.msra.mxu0 0.0
    %1826 = vmatprep.subr.mxu0 0.0
    %1827 = vmatpush2.msra.mxu0 0.0
    %1828 = vmatprep.subr.mxu0 0.0
    %1829 = vmatpush2.msra.mxu0 0.0
    %1830 = vmatprep.subr.mxu0 0.0
    %1831 = vmatpush2.msra.mxu0 0.0
    %1832 = vmatprep.subr.mxu0 0.0
    %1833 = vmatpush2.msra.mxu0 0.0
    %1834 = vmatprep.subr.mxu0 0.0
    %1835 = vmatpush2.msra.mxu0 0.0
    %1836 = vmatprep.subr.mxu0 0.0
    %1837 = vmatpush2.msra.mxu0 0.0
    %1838 = vmatprep.subr.mxu0 0.0
    %1839 = vmatpush2.msra.mxu0 0.0
    %1840 = vmatprep.subr.mxu0 0.0
    %1841 = vmatpush2.msra.mxu0 0.0
    %1842 = vmatprep.mubr.f32.mxu0 0.0
    %1843 = vmatmul.mubr.f32.gmra.mxu0 %v1773
    %v1844 = vpop.f32.mrf.mxu0
    %v1845 = vadd.f32 0.0, %v1844
    %v1846 = vpop.f32.mrf.mxu0
    %v1847 = vadd.f32 0.0, %v1846
    %1848 = vmatprep.mubr.f32.mxu0 0.0
    %1849 = vmatmul.mubr.f32.gmra.mxu0 %v1776
    %v1850 = vpop.f32.mrf.mxu0
    %v1851 = vadd.f32 0.0, %v1850
    %v1852 = vpop.f32.mrf.mxu0
    %v1853 = vadd.f32 0.0, %v1852
    %1854 = vdwg.mxu0
    %v1855 = vlaneseq
    %v1856 = vshrl.u32 %v1855, 7
    %v1857 = vsub.s32 0, %v1856
    %v1858 = vrot.slane %v1723, %v1857
    %v1859 = vadd.f32 %v1845, %v1858
    %v1860 = vadd.f32 %v1851, %v1858
    %v1861 = vlaneseq
    %v1862 = vshrl.u32 %v1861, 7
    %v1863 = vsub.s32 0, %v1862
    %v1864 = vrot.slane %v1724, %v1863
    %v1865 = vadd.f32 %v1847, %v1864
    %v1866 = vadd.f32 %v1853, %v1864
    %v1867 = vadd.f32 %v1859, %v1865
    %v1868 = vadd.f32 %v1860, %v1866
    %v1869 = vmul.f32 %v1867, 0.5
    %v1870 = vmul.f32 %v1868, 0.5
    %v1871 = vtanh.pop %v1869
    %v1872 = vtanh.pop %v1870
    %v1873 = vadd.f32 %v1871, 1.0
    %v1874 = vadd.f32 %v1872, 1.0
    %v1875 = vmul.f32 %v1873, 0.5
    %v1876 = vmul.f32 %v1874, 0.5
    %1879 = vrot.lane.b32.xlu0 %v1865, 64
    %v1880 = vpop.permute.xlu0 %1879
    %1881 = vrot.lane.b32.xlu0 %v1866, 64
    %v1882 = vpop.permute.xlu0 %1881
    %v1885 = vmul.f32 %v1875, %v1880
    %v1886 = vmul.f32 %v1876, %v1882
    %1889 = vrot.lane.b32.xlu0 %v1885, 64
    %v1890 = vpop.permute.xlu0 %1889
    %1891 = vrot.lane.b32.xlu0 %v1886, 64
    %v1892 = vpop.permute.xlu0 %1891
    %v1895 = vadd.f32 %v1859, %v1890
    %v1896 = vadd.f32 %v1860, %v1892
    %v1897 = vtanh.pop %v1895
    %v1898 = vtanh.pop %v1896
    %v1899 = vsub.f32 1.0, %v1875
    %v1900 = vsub.f32 1.0, %v1876
    %1903 = vrot.lane.b32.xlu0 %v1897, 96
    %v1904 = vpop.permute.xlu0 %1903
    %1905 = vrot.lane.b32.xlu0 %v1898, 96
    %v1906 = vpop.permute.xlu0 %1905
    %v1909 = vmul.f32 %v1899, %v1904
    %v1910 = vmul.f32 %v1900, %v1906
    %v1911 = vmul.f32 %v1875, 0.0
    %v1912 = vmul.f32 %v1876, 0.0
    %v1913 = vadd.f32 %v1909, %v1911
    %v1914 = vadd.f32 %v1910, %v1912
    %1917 = vrot.lane.b32.xlu0 %v1913, 96
    %v1918 = vpop.permute.xlu0 %1917
    %1919 = vrot.lane.b32.xlu0 %v1914, 96
    %v1920 = vpop.permute.xlu0 %1919
    %v1921 = vsel %vm51, %v1918, 0
    %v1923 = vsel %vm51, %v1920, 0
    %1925 = vmatprep.subr.mxu0 0.0
    %1926 = vmatpush1.msra.mxu0 0.0
    %1927 = vmatprep.subr.mxu0 0.0
    %1928 = vmatpush1.msra.mxu0 0.0
    %1929 = vmatprep.subr.mxu0 0.0
    %1930 = vmatpush1.msra.mxu0 0.0
    %1931 = vmatprep.subr.mxu0 0.0
    %1932 = vmatpush1.msra.mxu0 0.0
    %1933 = vmatprep.subr.mxu0 0.0
    %1934 = vmatpush1.msra.mxu0 0.0
    %1935 = vmatprep.subr.mxu0 0.0
    %1936 = vmatpush1.msra.mxu0 0.0
    %1937 = vmatprep.subr.mxu0 0.0
    %1938 = vmatpush1.msra.mxu0 0.0
    %1939 = vmatprep.subr.mxu0 0.0
    %1940 = vmatpush1.msra.mxu0 0.0
    %1941 = vmatprep.subr.mxu0 0.0
    %1942 = vmatpush1.msra.mxu0 0.0
    %1943 = vmatprep.subr.mxu0 0.0
    %1944 = vmatpush1.msra.mxu0 0.0
    %1945 = vmatprep.subr.mxu0 0.0
    %1946 = vmatpush1.msra.mxu0 0.0
    %1947 = vmatprep.subr.mxu0 0.0
    %1948 = vmatpush1.msra.mxu0 0.0
    %1949 = vmatprep.subr.mxu0 0.0
    %1950 = vmatpush1.msra.mxu0 %v1728
    %1951 = vmatprep.subr.mxu0 0.0
    %1952 = vmatpush1.msra.mxu0 %v1727
    %1953 = vmatprep.subr.mxu0 0.0
    %1954 = vmatpush1.msra.mxu0 %v1726
    %1955 = vmatprep.subr.mxu0 0.0
    %1956 = vmatpush1.msra.mxu0 %v1725
    %1957 = vmatprep.subr.mxu0 0.0
    %1958 = vmatpush2.msra.mxu0 0.0
    %1959 = vmatprep.subr.mxu0 0.0
    %1960 = vmatpush2.msra.mxu0 0.0
    %1961 = vmatprep.subr.mxu0 0.0
    %1962 = vmatpush2.msra.mxu0 0.0
    %1963 = vmatprep.subr.mxu0 0.0
    %1964 = vmatpush2.msra.mxu0 0.0
    %1965 = vmatprep.subr.mxu0 0.0
    %1966 = vmatpush2.msra.mxu0 0.0
    %1967 = vmatprep.subr.mxu0 0.0
    %1968 = vmatpush2.msra.mxu0 0.0
    %1969 = vmatprep.subr.mxu0 0.0
    %1970 = vmatpush2.msra.mxu0 0.0
    %1971 = vmatprep.subr.mxu0 0.0
    %1972 = vmatpush2.msra.mxu0 0.0
    %1973 = vmatprep.subr.mxu0 0.0
    %1974 = vmatpush2.msra.mxu0 0.0
    %1975 = vmatprep.subr.mxu0 0.0
    %1976 = vmatpush2.msra.mxu0 0.0
    %1977 = vmatprep.subr.mxu0 0.0
    %1978 = vmatpush2.msra.mxu0 0.0
    %1979 = vmatprep.subr.mxu0 0.0
    %1980 = vmatpush2.msra.mxu0 0.0
    %1981 = vmatprep.subr.mxu0 0.0
    %1982 = vmatpush2.msra.mxu0 0.0
    %1983 = vmatprep.subr.mxu0 0.0
    %1984 = vmatpush2.msra.mxu0 0.0
    %1985 = vmatprep.subr.mxu0 0.0
    %1986 = vmatpush2.msra.mxu0 0.0
    %1987 = vmatprep.subr.mxu0 0.0
    %1988 = vmatpush2.msra.mxu0 0.0
    %1989 = vmatprep.mubr.f32.mxu0 0.0
    %1990 = vmatmul.mubr.f32.gmra.mxu0 %v1921
    %v1991 = vpop.f32.mrf.mxu0
    %v1992 = vadd.f32 %v1636, %v1991
    %v1993 = vpop.f32.mrf.mxu0
    %1994 = vmatprep.mubr.f32.mxu0 0.0
    %1995 = vmatmul.mubr.f32.gmra.mxu0 %v1923
    %v1996 = vpop.f32.mrf.mxu0
    %v1997 = vadd.f32 %v1641, %v1996
    %v1998 = vpop.f32.mrf.mxu0
    %1999 = vdwg.mxu0
    %vm2000 = vcmp.gt.f32.partialorder %v1992, 20.0
    %vm2001 = vcmp.gt.f32.partialorder %v1997, 20.0
    %v2002 = vmin.f32 %v1992, 20.0
    %v2003 = vmin.f32 %v1997, 20.0
    %v2004 = vmul.f32 %v2002, 1.442695
    %v2005 = vpow.pop %v2004
    %v2006 = vmul.f32 %v2003, 1.442695
    %v2007 = vpow.pop %v2006
    %v2008 = vadd.f32 %v2005, 1.0
    %v2009 = vadd.f32 %v2007, 1.0
    %v2010 = vlog2.pop %v2008
    %v2011 = vmul.f32 %v2010, 0.6931472
    %v2012 = vlog2.pop %v2009
    %v2013 = vmul.f32 %v2012, 0.6931472
    %v2014 = vsel %vm2000, %v1992, %v2011
    %v2015 = vsel %vm2001, %v1997, %v2013
    %v2016 = vlaneseq
    %v2017 = vshrl.u32 %v2016, 7
    %v2018 = vsub.s32 6, %v2017
    %v2019 = vrot.slane %v904, %v2018
    %v2021 = vsel %vm51, %v2014, 0
    %v2024 = vsel %vm51, %v2015, 0
    %2026 = vmatprep.subr.mxu0 0.0
    %2027 = vmatpush1.msra.mxu0 0.0
    %2028 = vmatprep.subr.mxu0 0.0
    %2029 = vmatpush1.msra.mxu0 0.0
    %2030 = vmatprep.subr.mxu0 0.0
    %2031 = vmatpush1.msra.mxu0 0.0
    %2032 = vmatprep.subr.mxu0 0.0
    %2033 = vmatpush1.msra.mxu0 0.0
    %2034 = vmatprep.subr.mxu0 0.0
    %2035 = vmatpush1.msra.mxu0 0.0
    %2036 = vmatprep.subr.mxu0 0.0
    %2037 = vmatpush1.msra.mxu0 0.0
    %2038 = vmatprep.subr.mxu0 0.0
    %2039 = vmatpush1.msra.mxu0 0.0
    %2040 = vmatprep.subr.mxu0 0.0
    %2041 = vmatpush1.msra.mxu0 0.0
    %2042 = vmatprep.subr.mxu0 0.0
    %2043 = vmatpush1.msra.mxu0 0.0
    %2044 = vmatprep.subr.mxu0 0.0
    %2045 = vmatpush1.msra.mxu0 0.0
    %2046 = vmatprep.subr.mxu0 0.0
    %2047 = vmatpush1.msra.mxu0 0.0
    %2048 = vmatprep.subr.mxu0 0.0
    %2049 = vmatpush1.msra.mxu0 0.0
    %2050 = vmatprep.subr.mxu0 0.0
    %2051 = vmatpush1.msra.mxu0 %v1732
    %2052 = vmatprep.subr.mxu0 0.0
    %2053 = vmatpush1.msra.mxu0 %v1731
    %2054 = vmatprep.subr.mxu0 0.0
    %2055 = vmatpush1.msra.mxu0 %v1730
    %2056 = vmatprep.subr.mxu0 0.0
    %2057 = vmatpush1.msra.mxu0 %v1729
    %2058 = vmatprep.subr.mxu0 0.0
    %2059 = vmatpush2.msra.mxu0 0.0
    %2060 = vmatprep.subr.mxu0 0.0
    %2061 = vmatpush2.msra.mxu0 0.0
    %2062 = vmatprep.subr.mxu0 0.0
    %2063 = vmatpush2.msra.mxu0 0.0
    %2064 = vmatprep.subr.mxu0 0.0
    %2065 = vmatpush2.msra.mxu0 0.0
    %2066 = vmatprep.subr.mxu0 0.0
    %2067 = vmatpush2.msra.mxu0 0.0
    %2068 = vmatprep.subr.mxu0 0.0
    %2069 = vmatpush2.msra.mxu0 0.0
    %2070 = vmatprep.subr.mxu0 0.0
    %2071 = vmatpush2.msra.mxu0 0.0
    %2072 = vmatprep.subr.mxu0 0.0
    %2073 = vmatpush2.msra.mxu0 0.0
    %2074 = vmatprep.subr.mxu0 0.0
    %2075 = vmatpush2.msra.mxu0 0.0
    %2076 = vmatprep.subr.mxu0 0.0
    %2077 = vmatpush2.msra.mxu0 0.0
    %2078 = vmatprep.subr.mxu0 0.0
    %2079 = vmatpush2.msra.mxu0 0.0
    %2080 = vmatprep.subr.mxu0 0.0
    %2081 = vmatpush2.msra.mxu0 0.0
    %2082 = vmatprep.subr.mxu0 0.0
    %2083 = vmatpush2.msra.mxu0 0.0
    %2084 = vmatprep.subr.mxu0 0.0
    %2085 = vmatpush2.msra.mxu0 0.0
    %2086 = vmatprep.subr.mxu0 0.0
    %2087 = vmatpush2.msra.mxu0 0.0
    %2088 = vmatprep.subr.mxu0 0.0
    %2089 = vmatpush2.msra.mxu0 0.0
    %2090 = vmatprep.mubr.f32.mxu0 0.0
    %2091 = vmatmul.mubr.f32.gmra.mxu0 %v2021
    %v2092 = vpop.f32.mrf.mxu0
    %v2093 = vadd.f32 %v2019, %v2092
    %v2094 = vpop.f32.mrf.mxu0
    %2095 = vmatprep.mubr.f32.mxu0 0.0
    %2096 = vmatmul.mubr.f32.gmra.mxu0 %v2024
    %v2097 = vpop.f32.mrf.mxu0
    %v2098 = vadd.f32 %v2019, %v2097
    %v2099 = vpop.f32.mrf.mxu0
    %2100 = vdwg.mxu0
    %vm2101 = vcmp.gt.f32.partialorder %v2093, 20.0
    %vm2102 = vcmp.gt.f32.partialorder %v2098, 20.0
    %v2103 = vmin.f32 %v2093, 20.0
    %v2104 = vmin.f32 %v2098, 20.0
    %v2105 = vmul.f32 %v2103, 1.442695
    %v2106 = vpow.pop %v2105
    %v2107 = vmul.f32 %v2104, 1.442695
    %v2108 = vpow.pop %v2107
    %v2109 = vadd.f32 %v2106, 1.0
    %v2110 = vadd.f32 %v2108, 1.0
    %v2111 = vlog2.pop %v2109
    %v2112 = vmul.f32 %v2111, 0.6931472
    %v2113 = vlog2.pop %v2110
    %v2114 = vmul.f32 %v2113, 0.6931472
    %v2115 = vsel %vm2101, %v2093, %v2112
    %v2116 = vsel %vm2102, %v2098, %v2114
    %v2117 = vlaneseq
    %v2118 = vshrl.u32 %v2117, 7
    %v2119 = vsub.s32 7, %v2118
    %v2120 = vrot.slane %v904, %v2119
    %v2122 = vsel %vm51, %v2115, 0
    %v2125 = vsel %vm51, %v2116, 0
    %2127 = vmatprep.subr.mxu0 0.0
    %2128 = vmatpush1.msra.mxu0 0.0
    %2129 = vmatprep.subr.mxu0 0.0
    %2130 = vmatpush1.msra.mxu0 0.0
    %2131 = vmatprep.subr.mxu0 0.0
    %2132 = vmatpush1.msra.mxu0 0.0
    %2133 = vmatprep.subr.mxu0 0.0
    %2134 = vmatpush1.msra.mxu0 0.0
    %2135 = vmatprep.subr.mxu0 0.0
    %2136 = vmatpush1.msra.mxu0 0.0
    %2137 = vmatprep.subr.mxu0 0.0
    %2138 = vmatpush1.msra.mxu0 0.0
    %2139 = vmatprep.subr.mxu0 0.0
    %2140 = vmatpush1.msra.mxu0 0.0
    %2141 = vmatprep.subr.mxu0 0.0
    %2142 = vmatpush1.msra.mxu0 0.0
    %2143 = vmatprep.subr.mxu0 0.0
    %2144 = vmatpush1.msra.mxu0 0.0
    %2145 = vmatprep.subr.mxu0 0.0
    %2146 = vmatpush1.msra.mxu0 0.0
    %2147 = vmatprep.subr.mxu0 0.0
    %2148 = vmatpush1.msra.mxu0 0.0
    %2149 = vmatprep.subr.mxu0 0.0
    %2150 = vmatpush1.msra.mxu0 0.0
    %2151 = vmatprep.subr.mxu0 0.0
    %2152 = vmatpush1.msra.mxu0 %v1736
    %2153 = vmatprep.subr.mxu0 0.0
    %2154 = vmatpush1.msra.mxu0 %v1735
    %2155 = vmatprep.subr.mxu0 0.0
    %2156 = vmatpush1.msra.mxu0 %v1734
    %2157 = vmatprep.subr.mxu0 0.0
    %2158 = vmatpush1.msra.mxu0 %v1733
    %2159 = vmatprep.subr.mxu0 0.0
    %2160 = vmatpush2.msra.mxu0 0.0
    %2161 = vmatprep.subr.mxu0 0.0
    %2162 = vmatpush2.msra.mxu0 0.0
    %2163 = vmatprep.subr.mxu0 0.0
    %2164 = vmatpush2.msra.mxu0 0.0
    %2165 = vmatprep.subr.mxu0 0.0
    %2166 = vmatpush2.msra.mxu0 0.0
    %2167 = vmatprep.subr.mxu0 0.0
    %2168 = vmatpush2.msra.mxu0 0.0
    %2169 = vmatprep.subr.mxu0 0.0
    %2170 = vmatpush2.msra.mxu0 0.0
    %2171 = vmatprep.subr.mxu0 0.0
    %2172 = vmatpush2.msra.mxu0 0.0
    %2173 = vmatprep.subr.mxu0 0.0
    %2174 = vmatpush2.msra.mxu0 0.0
    %2175 = vmatprep.subr.mxu0 0.0
    %2176 = vmatpush2.msra.mxu0 0.0
    %2177 = vmatprep.subr.mxu0 0.0
    %2178 = vmatpush2.msra.mxu0 0.0
    %2179 = vmatprep.subr.mxu0 0.0
    %2180 = vmatpush2.msra.mxu0 0.0
    %2181 = vmatprep.subr.mxu0 0.0
    %2182 = vmatpush2.msra.mxu0 0.0
    %2183 = vmatprep.subr.mxu0 0.0
    %2184 = vmatpush2.msra.mxu0 0.0
    %2185 = vmatprep.subr.mxu0 0.0
    %2186 = vmatpush2.msra.mxu0 0.0
    %2187 = vmatprep.subr.mxu0 0.0
    %2188 = vmatpush2.msra.mxu0 0.0
    %2189 = vmatprep.subr.mxu0 0.0
    %2190 = vmatpush2.msra.mxu0 0.0
    %2191 = vmatprep.mubr.f32.mxu0 0.0
    %2192 = vmatmul.mubr.f32.gmra.mxu0 %v2122
    %v2193 = vpop.f32.mrf.mxu0
    %v2194 = vadd.f32 %v2120, %v2193
    %v2195 = vpop.f32.mrf.mxu0
    %2196 = vmatprep.mubr.f32.mxu0 0.0
    %2197 = vmatmul.mubr.f32.gmra.mxu0 %v2125
    %v2198 = vpop.f32.mrf.mxu0
    %v2199 = vadd.f32 %v2120, %v2198
    %v2200 = vpop.f32.mrf.mxu0
    %2201 = vdwg.mxu0
    %v2202 = vmul.f32 %v1715, 0.5
    %v2203 = vmul.f32 %v1720, 0.5
    %2206 = vrot.lane.b32.xlu0 %v2202, 126
    %v2207 = vpop.permute.xlu0 %2206
    %2208 = vrot.lane.b32.xlu0 %v2203, 126
    %v2209 = vpop.permute.xlu0 %2208
    %v2212 = vadd.f32 %v1715, %v2207
    %v2213 = vadd.f32 %v1720, %v2209
    %v2214 = vadd.f32 %v2212, %v2194
    %v2215 = vadd.f32 %v2213, %v2199
    %2218 = vrot.lane.b32.xlu0 %v2194, 125
    %v2219 = vpop.permute.xlu0 %2218
    %2220 = vrot.lane.b32.xlu0 %v2199, 125
    %v2221 = vpop.permute.xlu0 %2220
    %v2224 = vadd.f32 %v2194, %v2219
    %v2225 = vadd.f32 %v2199, %v2221
    %v2226 = vmul.f32 %v2224, 0.5
    %v2227 = vmul.f32 %v2225, 0.5
    %v2228 = vsub.f32 %v2194, %v2219
    %v2229 = vsub.f32 %v2199, %v2221
    %v2230 = vmul.f32 %v2228, 0.5
    %v2231 = vmul.f32 %v2229, 0.5
    %v2232 = vmul.f32 %v2230, %v2230
    %v2233 = vmul.f32 %v2231, %v2231
    %2234 = vrot.lane.b32.xlu0 %v2194, 127
    %v2235 = vpop.permute.xlu0 %2234
    %2236 = vrot.lane.b32.xlu0 %v2199, 127
    %v2237 = vpop.permute.xlu0 %2236
    %v2240 = vmul.f32 %v2194, %v2235
    %v2241 = vmul.f32 %v2199, %v2237
    %2244 = vrot.lane.b32.xlu0 %v2240, 127
    %v2245 = vpop.permute.xlu0 %2244
    %2246 = vrot.lane.b32.xlu0 %v2241, 127
    %v2247 = vpop.permute.xlu0 %2246
    %v2250 = vadd.f32 %v2232, %v2245
    %v2251 = vadd.f32 %v2233, %v2247
    %v2252 = vmul.f32 %v2250, 0.00024414063
    %v2253 = vmul.f32 %v2251, 0.00024414063
    %v2254 = vmul.f32 %v2252, 2.4801588e-05
    %v2255 = vmul.f32 %v2253, 2.4801588e-05
    %v2256 = vadd.f32 %v2254, 0.0013888889
    %v2257 = vadd.f32 %v2255, 0.0013888889
    %v2258 = vmul.f32 %v2252, %v2256
    %v2259 = vmul.f32 %v2253, %v2257
    %v2260 = vadd.f32 %v2258, 0.041666668
    %v2261 = vadd.f32 %v2259, 0.041666668
    %v2262 = vmul.f32 %v2252, %v2260
    %v2263 = vmul.f32 %v2253, %v2261
    %v2264 = vadd.f32 %v2262, 0.5
    %v2265 = vadd.f32 %v2263, 0.5
    %v2266 = vmul.f32 %v2252, %v2264
    %v2267 = vmul.f32 %v2253, %v2265
    %v2268 = vadd.f32 %v2266, 1.0
    %v2269 = vadd.f32 %v2267, 1.0
    %v2270 = vmul.f32 %v2252, 2.7557319e-06
    %v2271 = vmul.f32 %v2253, 2.7557319e-06
    %v2272 = vadd.f32 %v2270, 0.0001984127
    %v2273 = vadd.f32 %v2271, 0.0001984127
    %v2274 = vmul.f32 %v2252, %v2272
    %v2275 = vmul.f32 %v2253, %v2273
    %v2276 = vadd.f32 %v2274, 0.008333334
    %v2277 = vadd.f32 %v2275, 0.008333334
    %v2278 = vmul.f32 %v2252, %v2276
    %v2279 = vmul.f32 %v2253, %v2277
    %v2280 = vadd.f32 %v2278, 0.16666667
    %v2281 = vadd.f32 %v2279, 0.16666667
    %v2282 = vmul.f32 %v2252, %v2280
    %v2283 = vmul.f32 %v2253, %v2281
    %v2284 = vadd.f32 %v2282, 1.0
    %v2285 = vadd.f32 %v2283, 1.0
    %v2286 = vmul.f32 %v2284, %v2268
    %v2287 = vmul.f32 %v2285, %v2269
    %v2288 = vmul.f32 %v2268, 2.0
    %v2289 = vmul.f32 %v2269, 2.0
    %v2290 = vmul.f32 %v2288, %v2268
    %v2291 = vmul.f32 %v2289, %v2269
    %v2292 = vsub.f32 %v2290, 1.0
    %v2293 = vsub.f32 %v2291, 1.0
    %v2294 = vmul.f32 %v2286, %v2292
    %v2295 = vmul.f32 %v2287, %v2293
    %v2296 = vmul.f32 %v2292, 2.0
    %v2297 = vmul.f32 %v2293, 2.0
    %v2298 = vmul.f32 %v2296, %v2292
    %v2299 = vmul.f32 %v2297, %v2293
    %v2300 = vsub.f32 %v2298, 1.0
    %v2301 = vsub.f32 %v2299, 1.0
    %v2302 = vmul.f32 %v2294, %v2300
    %v2303 = vmul.f32 %v2295, %v2301
    %v2304 = vmul.f32 %v2300, 2.0
    %v2305 = vmul.f32 %v2301, 2.0
    %v2306 = vmul.f32 %v2304, %v2300
    %v2307 = vmul.f32 %v2305, %v2301
    %v2308 = vsub.f32 %v2306, 1.0
    %v2309 = vsub.f32 %v2307, 1.0
    %v2310 = vmul.f32 %v2302, %v2308
    %v2311 = vmul.f32 %v2303, %v2309
    %v2312 = vmul.f32 %v2308, 2.0
    %v2313 = vmul.f32 %v2309, 2.0
    %v2314 = vmul.f32 %v2312, %v2308
    %v2315 = vmul.f32 %v2313, %v2309
    %v2316 = vsub.f32 %v2314, 1.0
    %v2317 = vsub.f32 %v2315, 1.0
    %v2318 = vmul.f32 %v2310, %v2316
    %v2319 = vmul.f32 %v2311, %v2317
    %v2320 = vmul.f32 %v2316, 2.0
    %v2321 = vmul.f32 %v2317, 2.0
    %v2322 = vmul.f32 %v2320, %v2316
    %v2323 = vmul.f32 %v2321, %v2317
    %v2324 = vsub.f32 %v2322, 1.0
    %v2325 = vsub.f32 %v2323, 1.0
    %v2326 = vmul.f32 %v2318, %v2324
    %v2327 = vmul.f32 %v2319, %v2325
    %v2328 = vmul.f32 %v2324, 2.0
    %v2329 = vmul.f32 %v2325, 2.0
    %v2330 = vmul.f32 %v2328, %v2324
    %v2331 = vmul.f32 %v2329, %v2325
    %v2332 = vsub.f32 %v2330, 1.0
    %v2333 = vsub.f32 %v2331, 1.0
    %v2334 = vmul.f32 %v2226, 1.442695
    %v2335 = vpow.pop %v2334
    %v2336 = vmul.f32 %v2227, 1.442695
    %v2337 = vpow.pop %v2336
    %v2338 = vmul.f32 %v2326, %v2230
    %v2339 = vmul.f32 %v2327, %v2231
    %v2340 = vadd.f32 %v2332, %v2338
    %v2341 = vadd.f32 %v2333, %v2339
    %v2342 = vmul.f32 %v2335, %v2340
    %v2343 = vmul.f32 %v2337, %v2341
    %v2344 = vmul.f32 %v2326, %v2235
    %v2345 = vmul.f32 %v2327, %v2237
    %v2346 = vmul.f32 %v2335, %v2344
    %v2347 = vmul.f32 %v2337, %v2345
    %2348 = vrot.lane.b32.xlu0 %v2194, 126
    %v2349 = vpop.permute.xlu0 %2348
    %2350 = vrot.lane.b32.xlu0 %v2199, 126
    %v2351 = vpop.permute.xlu0 %2350
    %v2354 = vmul.f32 %v2326, %v2349
    %v2355 = vmul.f32 %v2327, %v2351
    %v2356 = vmul.f32 %v2335, %v2354
    %v2357 = vmul.f32 %v2337, %v2355
    %v2358 = vsub.f32 %v2332, %v2338
    %v2359 = vsub.f32 %v2333, %v2339
    %v2360 = vmul.f32 %v2335, %v2358
    %v2361 = vmul.f32 %v2337, %v2359
    %2364 = vrot.lane.b32.xlu0 %v1737, 2
    %v2365 = vpop.permute.xlu0 %2364
    %2366 = vrot.lane.b32.xlu0 %v1738, 2
    %v2367 = vpop.permute.xlu0 %2366
    %v2370 = vmul.f32 %v2342, %v2365
    %v2371 = vmul.f32 %v2343, %v2367
    %2374 = vrot.lane.b32.xlu0 %v2370, 126
    %v2375 = vpop.permute.xlu0 %2374
    %2376 = vrot.lane.b32.xlu0 %v2371, 126
    %v2377 = vpop.permute.xlu0 %2376
    %v2380 = vadd.f32 %v2214, %v2375
    %v2381 = vadd.f32 %v2215, %v2377
    %2382 = vrot.lane.b32.xlu0 %v1737, 1
    %v2383 = vpop.permute.xlu0 %2382
    %2384 = vrot.lane.b32.xlu0 %v1738, 1
    %v2385 = vpop.permute.xlu0 %2384
    %v2388 = vmul.f32 %v2346, %v2383
    %v2389 = vmul.f32 %v2347, %v2385
    %2392 = vrot.lane.b32.xlu0 %v2388, 126
    %v2393 = vpop.permute.xlu0 %2392
    %2394 = vrot.lane.b32.xlu0 %v2389, 126
    %v2395 = vpop.permute.xlu0 %2394
    %v2398 = vadd.f32 %v2380, %v2393
    %v2399 = vadd.f32 %v2381, %v2395
    %v2400 = vmul.f32 %v2356, %v2365
    %v2401 = vmul.f32 %v2357, %v2367
    %2404 = vrot.lane.b32.xlu0 %v2400, 127
    %v2405 = vpop.permute.xlu0 %2404
    %2406 = vrot.lane.b32.xlu0 %v2401, 127
    %v2407 = vpop.permute.xlu0 %2406
    %v2410 = vadd.f32 %v2214, %v2405
    %v2411 = vadd.f32 %v2215, %v2407
    %v2412 = vmul.f32 %v2360, %v2383
    %v2413 = vmul.f32 %v2361, %v2385
    %2416 = vrot.lane.b32.xlu0 %v2412, 127
    %v2417 = vpop.permute.xlu0 %2416
    %2418 = vrot.lane.b32.xlu0 %v2413, 127
    %v2419 = vpop.permute.xlu0 %2418
    %v2422 = vadd.f32 %v2410, %v2417
    %v2423 = vadd.f32 %v2411, %v2419
    %2426 = vrot.lane.b32.xlu0 %v2214, 2
    %v2427 = vpop.permute.xlu0 %2426
    %2428 = vrot.lane.b32.xlu0 %v2215, 2
    %v2429 = vpop.permute.xlu0 %2428
    %2434 = vrot.lane.b32.xlu0 %v2342, 2
    %v2435 = vpop.permute.xlu0 %2434
    %2436 = vrot.lane.b32.xlu0 %v2343, 2
    %v2437 = vpop.permute.xlu0 %2436
    %2442 = vrot.lane.b32.xlu0 %v2346, 3
    %v2443 = vpop.permute.xlu0 %2442
    %2444 = vrot.lane.b32.xlu0 %v2347, 3
    %v2445 = vpop.permute.xlu0 %2444
    %2450 = vrot.lane.b32.xlu0 %v2356, 4
    %v2451 = vpop.permute.xlu0 %2450
    %2452 = vrot.lane.b32.xlu0 %v2357, 4
    %v2453 = vpop.permute.xlu0 %2452
    %2458 = vrot.lane.b32.xlu0 %v2360, 5
    %v2459 = vpop.permute.xlu0 %2458
    %2460 = vrot.lane.b32.xlu0 %v2361, 5
    %v2461 = vpop.permute.xlu0 %2460
    %vm2464 = vcmask 7168
    %v2465 = vsel %vm2464, %v2398, %v2422
    %v2466 = vsel %vm2464, %v2399, %v2423
    %v2467 = vsel %vm1739, %v2465, %v2427
    %v2468 = vsel %vm1739, %v2466, %v2429
    %vm2469 = vcmask 23552
    %v2470 = vsel %vm2469, %v2467, %v2427
    %v2471 = vsel %vm2469, %v2468, %v2429
    %v2472 = vsel %vm1132, %v2470, %v2435
    %v2473 = vsel %vm1132, %v2471, %v2437
    %vm2474 = vcmask 39936
    %v2475 = vsel %vm2474, %v2472, %v2443
    %v2476 = vsel %vm2474, %v2473, %v2445
    %v2477 = vsel %vm1744, %v2475, %v2451
    %v2478 = vsel %vm1744, %v2476, %v2453
    %vm2479 = vcmask 56320
    %v2480 = vsel %vm2479, %v2477, %v2459
    %v2481 = vsel %vm2479, %v2478, %v2461
    %2482 = vst.msk [vmem:[#allocation4] sm:$0xff] %vm1747, %v2480
    %vm2483 = vcmask 60416
    %2484 = vst.msk [vmem:[#allocation4 + $0x8] sm:$0xf] %vm2483, %v2481
    %v2485 = vsub.f32 %v2465, %v1715
    %v2486 = vsub.f32 %v2466, %v1720
    %2489 = vrot.lane.b32.xlu0 %v2465, 2
    %v2490 = vpop.permute.xlu0 %2489
    %2491 = vrot.lane.b32.xlu0 %v2466, 2
    %v2492 = vpop.permute.xlu0 %2491
    %2495 = vrot.lane.b32.xlu0 %v1913, 112
    %v2496 = vpop.permute.xlu0 %2495
    %2497 = vrot.lane.b32.xlu0 %v1914, 112
    %v2498 = vpop.permute.xlu0 %2497
    %v2501 = vsel %vm1739, %v1715, %v2490
    %v2502 = vsel %vm1739, %v1720, %v2492
    %v2503 = vsel %vm1132, %v2501, 0.0
    %v2504 = vsel %vm1132, %v2502, 0.0
    %v2505 = vsel %vm1744, %v2503, 0.0
    %v2506 = vsel %vm1744, %v2504, 0.0
    %v2507 = vsel %vm1747, %v2505, 0.0
    %v2508 = vsel %vm1747, %v2506, 0.0
    %v2509 = vsel %vm1750, %v2507, 0.0
    %v2510 = vsel %vm1750, %v2508, 0.0
    %v2511 = vsel %vm1753, %v2509, 0.0
    %v2512 = vsel %vm1753, %v2510, 0.0
    %v2513 = vsel %vm1756, %v2511, %v2496
    %v2514 = vsel %vm1756, %v2512, %v2498
    %v2515 = vld [vmem:[%s8] sm:$0xff]
    %v2516 = vld [vmem:[%s8 + $0x8] sm:$0xff]
    %v2517 = vld [vmem:[%s8 + $0x10] sm:$0xff]
    %v2518 = vld [vmem:[%s8 + $0x18] sm:$0xff]
    %v2519 = vld [vmem:[%s8 + $0x20] sm:$0xff]
    %v2520 = vld [vmem:[%s8 + $0x28] sm:$0xff]
    %v2521 = vld [vmem:[%s8 + $0x30] sm:$0xff]
    %v2522 = vld [vmem:[%s8 + $0x38] sm:$0xff]
    %v2523 = vld [vmem:[%s8 + $0x40] sm:$0xff]
    %v2524 = vld [vmem:[%s8 + $0x48] sm:$0xff]
    %v2525 = vld [vmem:[%s8 + $0x50] sm:$0xff]
    %v2526 = vld [vmem:[%s8 + $0x58] sm:$0xff]
    %v2528 = vsel %vm1771, %v2513, 0
    %v2531 = vsel %vm1771, %v2514, 0
    %2533 = vmatprep.subr.mxu0 0.0
    %2534 = vmatpush1.msra.mxu0 0.0
    %2535 = vmatprep.subr.mxu0 0.0
    %2536 = vmatpush1.msra.mxu0 0.0
    %2537 = vmatprep.subr.mxu0 0.0
    %2538 = vmatpush1.msra.mxu0 0.0
    %2539 = vmatprep.subr.mxu0 0.0
    %2540 = vmatpush1.msra.mxu0 0.0
    %2541 = vmatprep.subr.mxu0 0.0
    %2542 = vmatpush1.msra.mxu0 0.0
    %2543 = vmatprep.subr.mxu0 0.0
    %2544 = vmatpush1.msra.mxu0 0.0
    %2545 = vmatprep.subr.mxu0 0.0
    %2546 = vmatpush1.msra.mxu0 0.0
    %2547 = vmatprep.subr.mxu0 0.0
    %2548 = vmatpush1.msra.mxu0 0.0
    %2549 = vmatprep.subr.mxu0 0.0
    %2550 = vmatpush1.msra.mxu0 0.0
    %2551 = vmatprep.subr.mxu0 0.0
    %2552 = vmatpush1.msra.mxu0 0.0
    %2553 = vmatprep.subr.mxu0 %v2526
    %2554 = vmatpush1.msra.mxu0 %v2525
    %2555 = vmatprep.subr.mxu0 %v2524
    %2556 = vmatpush1.msra.mxu0 %v2523
    %2557 = vmatprep.subr.mxu0 %v2522
    %2558 = vmatpush1.msra.mxu0 %v2521
    %2559 = vmatprep.subr.mxu0 %v2520
    %2560 = vmatpush1.msra.mxu0 %v2519
    %2561 = vmatprep.subr.mxu0 %v2518
    %2562 = vmatpush1.msra.mxu0 %v2517
    %2563 = vmatprep.subr.mxu0 %v2516
    %2564 = vmatpush1.msra.mxu0 %v2515
    %2565 = vmatprep.subr.mxu0 0.0
    %2566 = vmatpush2.msra.mxu0 0.0
    %2567 = vmatprep.subr.mxu0 0.0
    %2568 = vmatpush2.msra.mxu0 0.0
    %2569 = vmatprep.subr.mxu0 0.0
    %2570 = vmatpush2.msra.mxu0 0.0
    %2571 = vmatprep.subr.mxu0 0.0
    %2572 = vmatpush2.msra.mxu0 0.0
    %2573 = vmatprep.subr.mxu0 0.0
    %2574 = vmatpush2.msra.mxu0 0.0
    %2575 = vmatprep.subr.mxu0 0.0
    %2576 = vmatpush2.msra.mxu0 0.0
    %2577 = vmatprep.subr.mxu0 0.0
    %2578 = vmatpush2.msra.mxu0 0.0
    %2579 = vmatprep.subr.mxu0 0.0
    %2580 = vmatpush2.msra.mxu0 0.0
    %2581 = vmatprep.subr.mxu0 0.0
    %2582 = vmatpush2.msra.mxu0 0.0
    %2583 = vmatprep.subr.mxu0 0.0
    %2584 = vmatpush2.msra.mxu0 0.0
    %2585 = vmatprep.subr.mxu0 0.0
    %2586 = vmatpush2.msra.mxu0 0.0
    %2587 = vmatprep.subr.mxu0 0.0
    %2588 = vmatpush2.msra.mxu0 0.0
    %2589 = vmatprep.subr.mxu0 0.0
    %2590 = vmatpush2.msra.mxu0 0.0
    %2591 = vmatprep.subr.mxu0 0.0
    %2592 = vmatpush2.msra.mxu0 0.0
    %2593 = vmatprep.subr.mxu0 0.0
    %2594 = vmatpush2.msra.mxu0 0.0
    %2595 = vmatprep.subr.mxu0 0.0
    %2596 = vmatpush2.msra.mxu0 0.0
    %2597 = vmatprep.mubr.f32.mxu0 0.0
    %2598 = vmatmul.mubr.f32.gmra.mxu0 %v2528
    %v2599 = vpop.f32.mrf.mxu0
    %v2600 = vadd.f32 0.0, %v2599
    %v2601 = vpop.f32.mrf.mxu0
    %v2602 = vadd.f32 0.0, %v2601
    %2603 = vmatprep.mubr.f32.mxu0 0.0
    %2604 = vmatmul.mubr.f32.gmra.mxu0 %v2531
    %v2605 = vpop.f32.mrf.mxu0
    %v2606 = vadd.f32 0.0, %v2605
    %v2607 = vpop.f32.mrf.mxu0
    %v2608 = vadd.f32 0.0, %v2607
    %2609 = vdwg.mxu0
    %v2610 = vadd.f32 %v2600, %v1858
    %v2611 = vadd.f32 %v2606, %v1858
    %v2612 = vadd.f32 %v2602, %v1864
    %v2613 = vadd.f32 %v2608, %v1864
    %v2614 = vadd.f32 %v2610, %v2612
    %v2615 = vadd.f32 %v2611, %v2613
    %v2616 = vmul.f32 %v2614, 0.5
    %v2617 = vmul.f32 %v2615, 0.5
    %v2618 = vtanh.pop %v2616
    %v2619 = vtanh.pop %v2617
    %v2620 = vadd.f32 %v2618, 1.0
    %v2621 = vadd.f32 %v2619, 1.0
    %v2622 = vmul.f32 %v2620, 0.5
    %v2623 = vmul.f32 %v2621, 0.5
    %2626 = vrot.lane.b32.xlu0 %v2612, 64
    %v2627 = vpop.permute.xlu0 %2626
    %2628 = vrot.lane.b32.xlu0 %v2613, 64
    %v2629 = vpop.permute.xlu0 %2628
    %v2632 = vmul.f32 %v2622, %v2627
    %v2633 = vmul.f32 %v2623, %v2629
    %2636 = vrot.lane.b32.xlu0 %v2632, 64
    %v2637 = vpop.permute.xlu0 %2636
    %2638 = vrot.lane.b32.xlu0 %v2633, 64
    %v2639 = vpop.permute.xlu0 %2638
    %v2642 = vadd.f32 %v2610, %v2637
    %v2643 = vadd.f32 %v2611, %v2639
    %v2644 = vtanh.pop %v2642
    %v2645 = vtanh.pop %v2643
    %v2646 = vsub.f32 1.0, %v2622
    %v2647 = vsub.f32 1.0, %v2623
    %2650 = vrot.lane.b32.xlu0 %v2644, 96
    %v2651 = vpop.permute.xlu0 %2650
    %2652 = vrot.lane.b32.xlu0 %v2645, 96
    %v2653 = vpop.permute.xlu0 %2652
    %v2656 = vmul.f32 %v2646, %v2651
    %v2657 = vmul.f32 %v2647, %v2653
    %v2658 = vmul.f32 %v2622, %v1913
    %v2659 = vmul.f32 %v2623, %v1914
    %v2660 = vadd.f32 %v2656, %v2658
    %v2661 = vadd.f32 %v2657, %v2659
    %2664 = vrot.lane.b32.xlu0 %v2660, 96
    %v2665 = vpop.permute.xlu0 %2664
    %2666 = vrot.lane.b32.xlu0 %v2661, 96
    %v2667 = vpop.permute.xlu0 %2666
    %v2668 = vsel %vm51, %v2665, 0
    %v2670 = vsel %vm51, %v2667, 0
    %2672 = vmatprep.subr.mxu0 0.0
    %2673 = vmatpush1.msra.mxu0 0.0
    %2674 = vmatprep.subr.mxu0 0.0
    %2675 = vmatpush1.msra.mxu0 0.0
    %2676 = vmatprep.subr.mxu0 0.0
    %2677 = vmatpush1.msra.mxu0 0.0
    %2678 = vmatprep.subr.mxu0 0.0
    %2679 = vmatpush1.msra.mxu0 0.0
    %2680 = vmatprep.subr.mxu0 0.0
    %2681 = vmatpush1.msra.mxu0 0.0
    %2682 = vmatprep.subr.mxu0 0.0
    %2683 = vmatpush1.msra.mxu0 0.0
    %2684 = vmatprep.subr.mxu0 0.0
    %2685 = vmatpush1.msra.mxu0 0.0
    %2686 = vmatprep.subr.mxu0 0.0
    %2687 = vmatpush1.msra.mxu0 0.0
    %2688 = vmatprep.subr.mxu0 0.0
    %2689 = vmatpush1.msra.mxu0 0.0
    %2690 = vmatprep.subr.mxu0 0.0
    %2691 = vmatpush1.msra.mxu0 0.0
    %2692 = vmatprep.subr.mxu0 0.0
    %2693 = vmatpush1.msra.mxu0 0.0
    %2694 = vmatprep.subr.mxu0 0.0
    %2695 = vmatpush1.msra.mxu0 0.0
    %2696 = vmatprep.subr.mxu0 0.0
    %2697 = vmatpush1.msra.mxu0 %v1728
    %2698 = vmatprep.subr.mxu0 0.0
    %2699 = vmatpush1.msra.mxu0 %v1727
    %2700 = vmatprep.subr.mxu0 0.0
    %2701 = vmatpush1.msra.mxu0 %v1726
    %2702 = vmatprep.subr.mxu0 0.0
    %2703 = vmatpush1.msra.mxu0 %v1725
    %2704 = vmatprep.subr.mxu0 0.0
    %2705 = vmatpush2.msra.mxu0 0.0
    %2706 = vmatprep.subr.mxu0 0.0
    %2707 = vmatpush2.msra.mxu0 0.0
    %2708 = vmatprep.subr.mxu0 0.0
    %2709 = vmatpush2.msra.mxu0 0.0
    %2710 = vmatprep.subr.mxu0 0.0
    %2711 = vmatpush2.msra.mxu0 0.0
    %2712 = vmatprep.subr.mxu0 0.0
    %2713 = vmatpush2.msra.mxu0 0.0
    %2714 = vmatprep.subr.mxu0 0.0
    %2715 = vmatpush2.msra.mxu0 0.0
    %2716 = vmatprep.subr.mxu0 0.0
    %2717 = vmatpush2.msra.mxu0 0.0
    %2718 = vmatprep.subr.mxu0 0.0
    %2719 = vmatpush2.msra.mxu0 0.0
    %2720 = vmatprep.subr.mxu0 0.0
    %2721 = vmatpush2.msra.mxu0 0.0
    %2722 = vmatprep.subr.mxu0 0.0
    %2723 = vmatpush2.msra.mxu0 0.0
    %2724 = vmatprep.subr.mxu0 0.0
    %2725 = vmatpush2.msra.mxu0 0.0
    %2726 = vmatprep.subr.mxu0 0.0
    %2727 = vmatpush2.msra.mxu0 0.0
    %2728 = vmatprep.subr.mxu0 0.0
    %2729 = vmatpush2.msra.mxu0 0.0
    %2730 = vmatprep.subr.mxu0 0.0
    %2731 = vmatpush2.msra.mxu0 0.0
    %2732 = vmatprep.subr.mxu0 0.0
    %2733 = vmatpush2.msra.mxu0 0.0
    %2734 = vmatprep.subr.mxu0 0.0
    %2735 = vmatpush2.msra.mxu0 0.0
    %2736 = vmatprep.mubr.f32.mxu0 0.0
    %2737 = vmatmul.mubr.f32.gmra.mxu0 %v2668
    %v2738 = vpop.f32.mrf.mxu0
    %v2739 = vadd.f32 %v1636, %v2738
    %v2740 = vpop.f32.mrf.mxu0
    %2741 = vmatprep.mubr.f32.mxu0 0.0
    %2742 = vmatmul.mubr.f32.gmra.mxu0 %v2670
    %v2743 = vpop.f32.mrf.mxu0
    %v2744 = vadd.f32 %v1641, %v2743
    %v2745 = vpop.f32.mrf.mxu0
    %2746 = vdwg.mxu0
    %vm2747 = vcmp.gt.f32.partialorder %v2739, 20.0
    %vm2748 = vcmp.gt.f32.partialorder %v2744, 20.0
    %v2749 = vmin.f32 %v2739, 20.0
    %v2750 = vmin.f32 %v2744, 20.0
    %v2751 = vmul.f32 %v2749, 1.442695
    %v2752 = vpow.pop %v2751
    %v2753 = vmul.f32 %v2750, 1.442695
    %v2754 = vpow.pop %v2753
    %v2755 = vadd.f32 %v2752, 1.0
    %v2756 = vadd.f32 %v2754, 1.0
    %v2757 = vlog2.pop %v2755
    %v2758 = vmul.f32 %v2757, 0.6931472
    %v2759 = vlog2.pop %v2756
    %v2760 = vmul.f32 %v2759, 0.6931472
    %v2761 = vsel %vm2747, %v2739, %v2758
    %v2762 = vsel %vm2748, %v2744, %v2760
    %v2764 = vsel %vm51, %v2761, 0
    %v2767 = vsel %vm51, %v2762, 0
    %2769 = vmatprep.subr.mxu0 0.0
    %2770 = vmatpush1.msra.mxu0 0.0
    %2771 = vmatprep.subr.mxu0 0.0
    %2772 = vmatpush1.msra.mxu0 0.0
    %2773 = vmatprep.subr.mxu0 0.0
    %2774 = vmatpush1.msra.mxu0 0.0
    %2775 = vmatprep.subr.mxu0 0.0
    %2776 = vmatpush1.msra.mxu0 0.0
    %2777 = vmatprep.subr.mxu0 0.0
    %2778 = vmatpush1.msra.mxu0 0.0
    %2779 = vmatprep.subr.mxu0 0.0
    %2780 = vmatpush1.msra.mxu0 0.0
    %2781 = vmatprep.subr.mxu0 0.0
    %2782 = vmatpush1.msra.mxu0 0.0
    %2783 = vmatprep.subr.mxu0 0.0
    %2784 = vmatpush1.msra.mxu0 0.0
    %2785 = vmatprep.subr.mxu0 0.0
    %2786 = vmatpush1.msra.mxu0 0.0
    %2787 = vmatprep.subr.mxu0 0.0
    %2788 = vmatpush1.msra.mxu0 0.0
    %2789 = vmatprep.subr.mxu0 0.0
    %2790 = vmatpush1.msra.mxu0 0.0
    %2791 = vmatprep.subr.mxu0 0.0
    %2792 = vmatpush1.msra.mxu0 0.0
    %2793 = vmatprep.subr.mxu0 0.0
    %2794 = vmatpush1.msra.mxu0 %v1732
    %2795 = vmatprep.subr.mxu0 0.0
    %2796 = vmatpush1.msra.mxu0 %v1731
    %2797 = vmatprep.subr.mxu0 0.0
    %2798 = vmatpush1.msra.mxu0 %v1730
    %2799 = vmatprep.subr.mxu0 0.0
    %2800 = vmatpush1.msra.mxu0 %v1729
    %2801 = vmatprep.subr.mxu0 0.0
    %2802 = vmatpush2.msra.mxu0 0.0
    %2803 = vmatprep.subr.mxu0 0.0
    %2804 = vmatpush2.msra.mxu0 0.0
    %2805 = vmatprep.subr.mxu0 0.0
    %2806 = vmatpush2.msra.mxu0 0.0
    %2807 = vmatprep.subr.mxu0 0.0
    %2808 = vmatpush2.msra.mxu0 0.0
    %2809 = vmatprep.subr.mxu0 0.0
    %2810 = vmatpush2.msra.mxu0 0.0
    %2811 = vmatprep.subr.mxu0 0.0
    %2812 = vmatpush2.msra.mxu0 0.0
    %2813 = vmatprep.subr.mxu0 0.0
    %2814 = vmatpush2.msra.mxu0 0.0
    %2815 = vmatprep.subr.mxu0 0.0
    %2816 = vmatpush2.msra.mxu0 0.0
    %2817 = vmatprep.subr.mxu0 0.0
    %2818 = vmatpush2.msra.mxu0 0.0
    %2819 = vmatprep.subr.mxu0 0.0
    %2820 = vmatpush2.msra.mxu0 0.0
    %2821 = vmatprep.subr.mxu0 0.0
    %2822 = vmatpush2.msra.mxu0 0.0
    %2823 = vmatprep.subr.mxu0 0.0
    %2824 = vmatpush2.msra.mxu0 0.0
    %2825 = vmatprep.subr.mxu0 0.0
    %2826 = vmatpush2.msra.mxu0 0.0
    %2827 = vmatprep.subr.mxu0 0.0
    %2828 = vmatpush2.msra.mxu0 0.0
    %2829 = vmatprep.subr.mxu0 0.0
    %2830 = vmatpush2.msra.mxu0 0.0
    %2831 = vmatprep.subr.mxu0 0.0
    %2832 = vmatpush2.msra.mxu0 0.0
    %2833 = vmatprep.mubr.f32.mxu0 0.0
    %2834 = vmatmul.mubr.f32.gmra.mxu0 %v2764
    %v2835 = vpop.f32.mrf.mxu0
    %v2836 = vadd.f32 %v2019, %v2835
    %v2837 = vpop.f32.mrf.mxu0
    %2838 = vmatprep.mubr.f32.mxu0 0.0
    %2839 = vmatmul.mubr.f32.gmra.mxu0 %v2767
    %v2840 = vpop.f32.mrf.mxu0
    %v2841 = vadd.f32 %v2019, %v2840
    %v2842 = vpop.f32.mrf.mxu0
    %2843 = vdwg.mxu0
    %vm2844 = vcmp.gt.f32.partialorder %v2836, 20.0
    %vm2845 = vcmp.gt.f32.partialorder %v2841, 20.0
    %v2846 = vmin.f32 %v2836, 20.0
    %v2847 = vmin.f32 %v2841, 20.0
    %v2848 = vmul.f32 %v2846, 1.442695
    %v2849 = vpow.pop %v2848
    %v2850 = vmul.f32 %v2847, 1.442695
    %v2851 = vpow.pop %v2850
    %v2852 = vadd.f32 %v2849, 1.0
    %v2853 = vadd.f32 %v2851, 1.0
    %v2854 = vlog2.pop %v2852
    %v2855 = vmul.f32 %v2854, 0.6931472
    %v2856 = vlog2.pop %v2853
    %v2857 = vmul.f32 %v2856, 0.6931472
    %v2858 = vsel %vm2844, %v2836, %v2855
    %v2859 = vsel %vm2845, %v2841, %v2857
    %v2861 = vsel %vm51, %v2858, 0
    %v2864 = vsel %vm51, %v2859, 0
    %2866 = vmatprep.subr.mxu0 0.0
    %2867 = vmatpush1.msra.mxu0 0.0
    %2868 = vmatprep.subr.mxu0 0.0
    %2869 = vmatpush1.msra.mxu0 0.0
    %2870 = vmatprep.subr.mxu0 0.0
    %2871 = vmatpush1.msra.mxu0 0.0
    %2872 = vmatprep.subr.mxu0 0.0
    %2873 = vmatpush1.msra.mxu0 0.0
    %2874 = vmatprep.subr.mxu0 0.0
    %2875 = vmatpush1.msra.mxu0 0.0
    %2876 = vmatprep.subr.mxu0 0.0
    %2877 = vmatpush1.msra.mxu0 0.0
    %2878 = vmatprep.subr.mxu0 0.0
    %2879 = vmatpush1.msra.mxu0 0.0
    %2880 = vmatprep.subr.mxu0 0.0
    %2881 = vmatpush1.msra.mxu0 0.0
    %2882 = vmatprep.subr.mxu0 0.0
    %2883 = vmatpush1.msra.mxu0 0.0
    %2884 = vmatprep.subr.mxu0 0.0
    %2885 = vmatpush1.msra.mxu0 0.0
    %2886 = vmatprep.subr.mxu0 0.0
    %2887 = vmatpush1.msra.mxu0 0.0
    %2888 = vmatprep.subr.mxu0 0.0
    %2889 = vmatpush1.msra.mxu0 0.0
    %2890 = vmatprep.subr.mxu0 0.0
    %2891 = vmatpush1.msra.mxu0 %v1736
    %2892 = vmatprep.subr.mxu0 0.0
    %2893 = vmatpush1.msra.mxu0 %v1735
    %2894 = vmatprep.subr.mxu0 0.0
    %2895 = vmatpush1.msra.mxu0 %v1734
    %2896 = vmatprep.subr.mxu0 0.0
    %2897 = vmatpush1.msra.mxu0 %v1733
    %2898 = vmatprep.subr.mxu0 0.0
    %2899 = vmatpush2.msra.mxu0 0.0
    %2900 = vmatprep.subr.mxu0 0.0
    %2901 = vmatpush2.msra.mxu0 0.0
    %2902 = vmatprep.subr.mxu0 0.0
    %2903 = vmatpush2.msra.mxu0 0.0
    %2904 = vmatprep.subr.mxu0 0.0
    %2905 = vmatpush2.msra.mxu0 0.0
    %2906 = vmatprep.subr.mxu0 0.0
    %2907 = vmatpush2.msra.mxu0 0.0
    %2908 = vmatprep.subr.mxu0 0.0
    %2909 = vmatpush2.msra.mxu0 0.0
    %2910 = vmatprep.subr.mxu0 0.0
    %2911 = vmatpush2.msra.mxu0 0.0
    %2912 = vmatprep.subr.mxu0 0.0
    %2913 = vmatpush2.msra.mxu0 0.0
    %2914 = vmatprep.subr.mxu0 0.0
    %2915 = vmatpush2.msra.mxu0 0.0
    %2916 = vmatprep.subr.mxu0 0.0
    %2917 = vmatpush2.msra.mxu0 0.0
    %2918 = vmatprep.subr.mxu0 0.0
    %2919 = vmatpush2.msra.mxu0 0.0
    %2920 = vmatprep.subr.mxu0 0.0
    %2921 = vmatpush2.msra.mxu0 0.0
    %2922 = vmatprep.subr.mxu0 0.0
    %2923 = vmatpush2.msra.mxu0 0.0
    %2924 = vmatprep.subr.mxu0 0.0
    %2925 = vmatpush2.msra.mxu0 0.0
    %2926 = vmatprep.subr.mxu0 0.0
    %2927 = vmatpush2.msra.mxu0 0.0
    %2928 = vmatprep.subr.mxu0 0.0
    %2929 = vmatpush2.msra.mxu0 0.0
    %2930 = vmatprep.mubr.f32.mxu0 0.0
    %2931 = vmatmul.mubr.f32.gmra.mxu0 %v2861
    %v2932 = vpop.f32.mrf.mxu0
    %v2933 = vadd.f32 %v2120, %v2932
    %v2934 = vpop.f32.mrf.mxu0
    %2935 = vmatprep.mubr.f32.mxu0 0.0
    %2936 = vmatmul.mubr.f32.gmra.mxu0 %v2864
    %v2937 = vpop.f32.mrf.mxu0
    %v2938 = vadd.f32 %v2120, %v2937
    %v2939 = vpop.f32.mrf.mxu0
    %2940 = vdwg.mxu0
    %v2941 = vmul.f32 %v2485, 0.5
    %v2942 = vmul.f32 %v2486, 0.5
    %v2943 = vadd.f32 %v2465, %v2941
    %v2944 = vadd.f32 %v2466, %v2942
    %v2945 = vadd.f32 %v2943, %v2933
    %v2946 = vadd.f32 %v2944, %v2938
    %2949 = vrot.lane.b32.xlu0 %v2933, 125
    %v2950 = vpop.permute.xlu0 %2949
    %2951 = vrot.lane.b32.xlu0 %v2938, 125
    %v2952 = vpop.permute.xlu0 %2951
    %v2955 = vadd.f32 %v2933, %v2950
    %v2956 = vadd.f32 %v2938, %v2952
    %v2957 = vmul.f32 %v2955, 0.5
    %v2958 = vmul.f32 %v2956, 0.5
    %v2959 = vsub.f32 %v2933, %v2950
    %v2960 = vsub.f32 %v2938, %v2952
    %v2961 = vmul.f32 %v2959, 0.5
    %v2962 = vmul.f32 %v2960, 0.5
    %v2963 = vmul.f32 %v2961, %v2961
    %v2964 = vmul.f32 %v2962, %v2962
    %2965 = vrot.lane.b32.xlu0 %v2933, 127
    %v2966 = vpop.permute.xlu0 %2965
    %2967 = vrot.lane.b32.xlu0 %v2938, 127
    %v2968 = vpop.permute.xlu0 %2967
    %v2971 = vmul.f32 %v2933, %v2966
    %v2972 = vmul.f32 %v2938, %v2968
    %2975 = vrot.lane.b32.xlu0 %v2971, 127
    %v2976 = vpop.permute.xlu0 %2975
    %2977 = vrot.lane.b32.xlu0 %v2972, 127
    %v2978 = vpop.permute.xlu0 %2977
    %v2981 = vadd.f32 %v2963, %v2976
    %v2982 = vadd.f32 %v2964, %v2978
    %v2983 = vmul.f32 %v2981, 0.00024414063
    %v2984 = vmul.f32 %v2982, 0.00024414063
    %v2985 = vmul.f32 %v2983, 2.4801588e-05
    %v2986 = vmul.f32 %v2984, 2.4801588e-05
    %v2987 = vadd.f32 %v2985, 0.0013888889
    %v2988 = vadd.f32 %v2986, 0.0013888889
    %v2989 = vmul.f32 %v2983, %v2987
    %v2990 = vmul.f32 %v2984, %v2988
    %v2991 = vadd.f32 %v2989, 0.041666668
    %v2992 = vadd.f32 %v2990, 0.041666668
    %v2993 = vmul.f32 %v2983, %v2991
    %v2994 = vmul.f32 %v2984, %v2992
    %v2995 = vadd.f32 %v2993, 0.5
    %v2996 = vadd.f32 %v2994, 0.5
    %v2997 = vmul.f32 %v2983, %v2995
    %v2998 = vmul.f32 %v2984, %v2996
    %v2999 = vadd.f32 %v2997, 1.0
    %v3000 = vadd.f32 %v2998, 1.0
    %v3001 = vmul.f32 %v2983, 2.7557319e-06
    %v3002 = vmul.f32 %v2984, 2.7557319e-06
    %v3003 = vadd.f32 %v3001, 0.0001984127
    %v3004 = vadd.f32 %v3002, 0.0001984127
    %v3005 = vmul.f32 %v2983, %v3003
    %v3006 = vmul.f32 %v2984, %v3004
    %v3007 = vadd.f32 %v3005, 0.008333334
    %v3008 = vadd.f32 %v3006, 0.008333334
    %v3009 = vmul.f32 %v2983, %v3007
    %v3010 = vmul.f32 %v2984, %v3008
    %v3011 = vadd.f32 %v3009, 0.16666667
    %v3012 = vadd.f32 %v3010, 0.16666667
    %v3013 = vmul.f32 %v2983, %v3011
    %v3014 = vmul.f32 %v2984, %v3012
    %v3015 = vadd.f32 %v3013, 1.0
    %v3016 = vadd.f32 %v3014, 1.0
    %v3017 = vmul.f32 %v3015, %v2999
    %v3018 = vmul.f32 %v3016, %v3000
    %v3019 = vmul.f32 %v2999, 2.0
    %v3020 = vmul.f32 %v3000, 2.0
    %v3021 = vmul.f32 %v3019, %v2999
    %v3022 = vmul.f32 %v3020, %v3000
    %v3023 = vsub.f32 %v3021, 1.0
    %v3024 = vsub.f32 %v3022, 1.0
    %v3025 = vmul.f32 %v3017, %v3023
    %v3026 = vmul.f32 %v3018, %v3024
    %v3027 = vmul.f32 %v3023, 2.0
    %v3028 = vmul.f32 %v3024, 2.0
    %v3029 = vmul.f32 %v3027, %v3023
    %v3030 = vmul.f32 %v3028, %v3024
    %v3031 = vsub.f32 %v3029, 1.0
    %v3032 = vsub.f32 %v3030, 1.0
    %v3033 = vmul.f32 %v3025, %v3031
    %v3034 = vmul.f32 %v3026, %v3032
    %v3035 = vmul.f32 %v3031, 2.0
    %v3036 = vmul.f32 %v3032, 2.0
    %v3037 = vmul.f32 %v3035, %v3031
    %v3038 = vmul.f32 %v3036, %v3032
    %v3039 = vsub.f32 %v3037, 1.0
    %v3040 = vsub.f32 %v3038, 1.0
    %v3041 = vmul.f32 %v3033, %v3039
    %v3042 = vmul.f32 %v3034, %v3040
    %v3043 = vmul.f32 %v3039, 2.0
    %v3044 = vmul.f32 %v3040, 2.0
    %v3045 = vmul.f32 %v3043, %v3039
    %v3046 = vmul.f32 %v3044, %v3040
    %v3047 = vsub.f32 %v3045, 1.0
    %v3048 = vsub.f32 %v3046, 1.0
    %v3049 = vmul.f32 %v3041, %v3047
    %v3050 = vmul.f32 %v3042, %v3048
    %v3051 = vmul.f32 %v3047, 2.0
    %v3052 = vmul.f32 %v3048, 2.0
    %v3053 = vmul.f32 %v3051, %v3047
    %v3054 = vmul.f32 %v3052, %v3048
    %v3055 = vsub.f32 %v3053, 1.0
    %v3056 = vsub.f32 %v3054, 1.0
    %v3057 = vmul.f32 %v3049, %v3055
    %v3058 = vmul.f32 %v3050, %v3056
    %v3059 = vmul.f32 %v3055, 2.0
    %v3060 = vmul.f32 %v3056, 2.0
    %v3061 = vmul.f32 %v3059, %v3055
    %v3062 = vmul.f32 %v3060, %v3056
    %v3063 = vsub.f32 %v3061, 1.0
    %v3064 = vsub.f32 %v3062, 1.0
    %v3065 = vmul.f32 %v2957, 1.442695
    %v3066 = vpow.pop %v3065
    %v3067 = vmul.f32 %v2958, 1.442695
    %v3068 = vpow.pop %v3067
    %v3069 = vmul.f32 %v3057, %v2961
    %v3070 = vmul.f32 %v3058, %v2962
    %v3071 = vadd.f32 %v3063, %v3069
    %v3072 = vadd.f32 %v3064, %v3070
    %v3073 = vmul.f32 %v3066, %v3071
    %v3074 = vmul.f32 %v3068, %v3072
    %v3075 = vmul.f32 %v3057, %v2966
    %v3076 = vmul.f32 %v3058, %v2968
    %v3077 = vmul.f32 %v3066, %v3075
    %v3078 = vmul.f32 %v3068, %v3076
    %3079 = vrot.lane.b32.xlu0 %v2933, 126
    %v3080 = vpop.permute.xlu0 %3079
    %3081 = vrot.lane.b32.xlu0 %v2938, 126
    %v3082 = vpop.permute.xlu0 %3081
    %v3085 = vmul.f32 %v3057, %v3080
    %v3086 = vmul.f32 %v3058, %v3082
    %v3087 = vmul.f32 %v3066, %v3085
    %v3088 = vmul.f32 %v3068, %v3086
    %v3089 = vsub.f32 %v3063, %v3069
    %v3090 = vsub.f32 %v3064, %v3070
    %v3091 = vmul.f32 %v3066, %v3089
    %v3092 = vmul.f32 %v3068, %v3090
    %v3093 = vmul.f32 %v3073, %v1737
    %v3094 = vmul.f32 %v3074, %v1738
    %3097 = vrot.lane.b32.xlu0 %v3093, 126
    %v3098 = vpop.permute.xlu0 %3097
    %3099 = vrot.lane.b32.xlu0 %v3094, 126
    %v3100 = vpop.permute.xlu0 %3099
    %v3103 = vadd.f32 %v2945, %v3098
    %v3104 = vadd.f32 %v2946, %v3100
    %3105 = vrot.lane.b32.xlu0 %v1737, 127
    %v3106 = vpop.permute.xlu0 %3105
    %3107 = vrot.lane.b32.xlu0 %v1738, 127
    %v3108 = vpop.permute.xlu0 %3107
    %v3111 = vmul.f32 %v3077, %v3106
    %v3112 = vmul.f32 %v3078, %v3108
    %3115 = vrot.lane.b32.xlu0 %v3111, 126
    %v3116 = vpop.permute.xlu0 %3115
    %3117 = vrot.lane.b32.xlu0 %v3112, 126
    %v3118 = vpop.permute.xlu0 %3117
    %v3121 = vadd.f32 %v3103, %v3116
    %v3122 = vadd.f32 %v3104, %v3118
    %v3123 = vmul.f32 %v3087, %v1737
    %v3124 = vmul.f32 %v3088, %v1738
    %3127 = vrot.lane.b32.xlu0 %v3123, 127
    %v3128 = vpop.permute.xlu0 %3127
    %3129 = vrot.lane.b32.xlu0 %v3124, 127
    %v3130 = vpop.permute.xlu0 %3129
    %v3133 = vadd.f32 %v2945, %v3128
    %v3134 = vadd.f32 %v2946, %v3130
    %v3135 = vmul.f32 %v3091, %v3106
    %v3136 = vmul.f32 %v3092, %v3108
    %3139 = vrot.lane.b32.xlu0 %v3135, 127
    %v3140 = vpop.permute.xlu0 %3139
    %3141 = vrot.lane.b32.xlu0 %v3136, 127
    %v3142 = vpop.permute.xlu0 %3141
    %v3145 = vadd.f32 %v3133, %v3140
    %v3146 = vadd.f32 %v3134, %v3142
    %3149 = vrot.lane.b32.xlu0 %v2945, 2
    %v3150 = vpop.permute.xlu0 %3149
    %3151 = vrot.lane.b32.xlu0 %v2946, 2
    %v3152 = vpop.permute.xlu0 %3151
    %3157 = vrot.lane.b32.xlu0 %v3073, 2
    %v3158 = vpop.permute.xlu0 %3157
    %3159 = vrot.lane.b32.xlu0 %v3074, 2
    %v3160 = vpop.permute.xlu0 %3159
    %3165 = vrot.lane.b32.xlu0 %v3077, 3
    %v3166 = vpop.permute.xlu0 %3165
    %3167 = vrot.lane.b32.xlu0 %v3078, 3
    %v3168 = vpop.permute.xlu0 %3167
    %3173 = vrot.lane.b32.xlu0 %v3087, 4
    %v3174 = vpop.permute.xlu0 %3173
    %3175 = vrot.lane.b32.xlu0 %v3088, 4
    %v3176 = vpop.permute.xlu0 %3175
    %3181 = vrot.lane.b32.xlu0 %v3091, 5
    %v3182 = vpop.permute.xlu0 %3181
    %3183 = vrot.lane.b32.xlu0 %v3092, 5
    %v3184 = vpop.permute.xlu0 %3183
    %v3187 = vsel %vm2464, %v3121, %v3145
    %v3188 = vsel %vm2464, %v3122, %v3146
    %v3189 = vsel %vm1739, %v3187, %v3150
    %v3190 = vsel %vm1739, %v3188, %v3152
    %v3191 = vsel %vm2469, %v3189, %v3150
    %v3192 = vsel %vm2469, %v3190, %v3152
    %v3193 = vsel %vm1132, %v3191, %v3158
    %v3194 = vsel %vm1132, %v3192, %v3160
    %v3195 = vsel %vm2474, %v3193, %v3166
    %v3196 = vsel %vm2474, %v3194, %v3168
    %v3197 = vsel %vm1744, %v3195, %v3174
    %v3198 = vsel %vm1744, %v3196, %v3176
    %v3199 = vsel %vm2479, %v3197, %v3182
    %v3200 = vsel %vm2479, %v3198, %v3184
    %3203 = vrot.lane.b32.xlu0 %v3199, 8
    %v3204 = vpop.permute.xlu0 %3203
    %3205 = vrot.lane.b32.xlu0 %v3200, 8
    %v3206 = vpop.permute.xlu0 %3205
    %vm3209 = vcmask 130112
    %3210 = vst.msk [vmem:[#allocation4] sm:$0xff] %vm3209, %v3204
    %vm3211 = vcmask 126016
    %3212 = vst.msk [vmem:[#allocation4 + $0x8] sm:$0xf] %vm3211, %v3206
    %v3213 = vsub.f32 %v3187, %v2465
    %v3214 = vsub.f32 %v3188, %v2466
    %3217 = vrot.lane.b32.xlu0 %v3187, 4
    %v3218 = vpop.permute.xlu0 %3217
    %3219 = vrot.lane.b32.xlu0 %v3188, 4
    %v3220 = vpop.permute.xlu0 %3219
    %3223 = vrot.lane.b32.xlu0 %v2660, 112
    %v3224 = vpop.permute.xlu0 %3223
    %3225 = vrot.lane.b32.xlu0 %v2661, 112
    %v3226 = vpop.permute.xlu0 %3225
    %v3229 = vsel %vm1132, %v2501, %v3218
    %v3230 = vsel %vm1132, %v2502, %v3220
    %v3231 = vsel %vm1744, %v3229, 0.0
    %v3232 = vsel %vm1744, %v3230, 0.0
    %v3233 = vsel %vm1747, %v3231, 0.0
    %v3234 = vsel %vm1747, %v3232, 0.0
    %v3235 = vsel %vm1750, %v3233, 0.0
    %v3236 = vsel %vm1750, %v3234, 0.0
    %v3237 = vsel %vm1753, %v3235, 0.0
    %v3238 = vsel %vm1753, %v3236, 0.0
    %v3239 = vsel %vm1756, %v3237, %v3224
    %v3240 = vsel %vm1756, %v3238, %v3226
    %v3241 = vld [vmem:[%s8] sm:$0xff]
    %v3242 = vld [vmem:[%s8 + $0x8] sm:$0xff]
    %v3243 = vld [vmem:[%s8 + $0x10] sm:$0xff]
    %v3244 = vld [vmem:[%s8 + $0x18] sm:$0xff]
    %v3245 = vld [vmem:[%s8 + $0x20] sm:$0xff]
    %v3246 = vld [vmem:[%s8 + $0x28] sm:$0xff]
    %v3247 = vld [vmem:[%s8 + $0x30] sm:$0xff]
    %v3248 = vld [vmem:[%s8 + $0x38] sm:$0xff]
    %v3249 = vld [vmem:[%s8 + $0x40] sm:$0xff]
    %v3250 = vld [vmem:[%s8 + $0x48] sm:$0xff]
    %v3251 = vld [vmem:[%s8 + $0x50] sm:$0xff]
    %v3252 = vld [vmem:[%s8 + $0x58] sm:$0xff]
    %v3254 = vsel %vm1771, %v3239, 0
    %v3257 = vsel %vm1771, %v3240, 0
    %3259 = vmatprep.subr.mxu0 0.0
    %3260 = vmatpush1.msra.mxu0 0.0
    %3261 = vmatprep.subr.mxu0 0.0
    %3262 = vmatpush1.msra.mxu0 0.0
    %3263 = vmatprep.subr.mxu0 0.0
    %3264 = vmatpush1.msra.mxu0 0.0
    %3265 = vmatprep.subr.mxu0 0.0
    %3266 = vmatpush1.msra.mxu0 0.0
    %3267 = vmatprep.subr.mxu0 0.0
    %3268 = vmatpush1.msra.mxu0 0.0
    %3269 = vmatprep.subr.mxu0 0.0
    %3270 = vmatpush1.msra.mxu0 0.0
    %3271 = vmatprep.subr.mxu0 0.0
    %3272 = vmatpush1.msra.mxu0 0.0
    %3273 = vmatprep.subr.mxu0 0.0
    %3274 = vmatpush1.msra.mxu0 0.0
    %3275 = vmatprep.subr.mxu0 0.0
    %3276 = vmatpush1.msra.mxu0 0.0
    %3277 = vmatprep.subr.mxu0 0.0
    %3278 = vmatpush1.msra.mxu0 0.0
    %3279 = vmatprep.subr.mxu0 %v3252
    %3280 = vmatpush1.msra.mxu0 %v3251
    %3281 = vmatprep.subr.mxu0 %v3250
    %3282 = vmatpush1.msra.mxu0 %v3249
    %3283 = vmatprep.subr.mxu0 %v3248
    %3284 = vmatpush1.msra.mxu0 %v3247
    %3285 = vmatprep.subr.mxu0 %v3246
    %3286 = vmatpush1.msra.mxu0 %v3245
    %3287 = vmatprep.subr.mxu0 %v3244
    %3288 = vmatpush1.msra.mxu0 %v3243
    %3289 = vmatprep.subr.mxu0 %v3242
    %3290 = vmatpush1.msra.mxu0 %v3241
    %3291 = vmatprep.subr.mxu0 0.0
    %3292 = vmatpush2.msra.mxu0 0.0
    %3293 = vmatprep.subr.mxu0 0.0
    %3294 = vmatpush2.msra.mxu0 0.0
    %3295 = vmatprep.subr.mxu0 0.0
    %3296 = vmatpush2.msra.mxu0 0.0
    %3297 = vmatprep.subr.mxu0 0.0
    %3298 = vmatpush2.msra.mxu0 0.0
    %3299 = vmatprep.subr.mxu0 0.0
    %3300 = vmatpush2.msra.mxu0 0.0
    %3301 = vmatprep.subr.mxu0 0.0
    %3302 = vmatpush2.msra.mxu0 0.0
    %3303 = vmatprep.subr.mxu0 0.0
    %3304 = vmatpush2.msra.mxu0 0.0
    %3305 = vmatprep.subr.mxu0 0.0
    %3306 = vmatpush2.msra.mxu0 0.0
    %3307 = vmatprep.subr.mxu0 0.0
    %3308 = vmatpush2.msra.mxu0 0.0
    %3309 = vmatprep.subr.mxu0 0.0
    %3310 = vmatpush2.msra.mxu0 0.0
    %3311 = vmatprep.subr.mxu0 0.0
    %3312 = vmatpush2.msra.mxu0 0.0
    %3313 = vmatprep.subr.mxu0 0.0
    %3314 = vmatpush2.msra.mxu0 0.0
    %3315 = vmatprep.subr.mxu0 0.0
    %3316 = vmatpush2.msra.mxu0 0.0
    %3317 = vmatprep.subr.mxu0 0.0
    %3318 = vmatpush2.msra.mxu0 0.0
    %3319 = vmatprep.subr.mxu0 0.0
    %3320 = vmatpush2.msra.mxu0 0.0
    %3321 = vmatprep.subr.mxu0 0.0
    %3322 = vmatpush2.msra.mxu0 0.0
    %3323 = vmatprep.mubr.f32.mxu0 0.0
    %3324 = vmatmul.mubr.f32.gmra.mxu0 %v3254
    %v3325 = vpop.f32.mrf.mxu0
    %v3326 = vadd.f32 0.0, %v3325
    %v3327 = vpop.f32.mrf.mxu0
    %v3328 = vadd.f32 0.0, %v3327
    %3329 = vmatprep.mubr.f32.mxu0 0.0
    %3330 = vmatmul.mubr.f32.gmra.mxu0 %v3257
    %v3331 = vpop.f32.mrf.mxu0
    %v3332 = vadd.f32 0.0, %v3331
    %v3333 = vpop.f32.mrf.mxu0
    %v3334 = vadd.f32 0.0, %v3333
    %3335 = vdwg.mxu0
    %v3336 = vadd.f32 %v3326, %v1858
    %v3337 = vadd.f32 %v3332, %v1858
    %v3338 = vadd.f32 %v3328, %v1864
    %v3339 = vadd.f32 %v3334, %v1864
    %v3340 = vadd.f32 %v3336, %v3338
    %v3341 = vadd.f32 %v3337, %v3339
    %v3342 = vmul.f32 %v3340, 0.5
    %v3343 = vmul.f32 %v3341, 0.5
    %v3344 = vtanh.pop %v3342
    %v3345 = vtanh.pop %v3343
    %v3346 = vadd.f32 %v3344, 1.0
    %v3347 = vadd.f32 %v3345, 1.0
    %v3348 = vmul.f32 %v3346, 0.5
    %v3349 = vmul.f32 %v3347, 0.5
    %3352 = vrot.lane.b32.xlu0 %v3338, 64
    %v3353 = vpop.permute.xlu0 %3352
    %3354 = vrot.lane.b32.xlu0 %v3339, 64
    %v3355 = vpop.permute.xlu0 %3354
    %v3358 = vmul.f32 %v3348, %v3353
    %v3359 = vmul.f32 %v3349, %v3355
    %3362 = vrot.lane.b32.xlu0 %v3358, 64
    %v3363 = vpop.permute.xlu0 %3362
    %3364 = vrot.lane.b32.xlu0 %v3359, 64
    %v3365 = vpop.permute.xlu0 %3364
    %v3368 = vadd.f32 %v3336, %v3363
    %v3369 = vadd.f32 %v3337, %v3365
    %v3370 = vtanh.pop %v3368
    %v3371 = vtanh.pop %v3369
    %v3372 = vsub.f32 1.0, %v3348
    %v3373 = vsub.f32 1.0, %v3349
    %3376 = vrot.lane.b32.xlu0 %v3370, 96
    %v3377 = vpop.permute.xlu0 %3376
    %3378 = vrot.lane.b32.xlu0 %v3371, 96
    %v3379 = vpop.permute.xlu0 %3378
    %v3382 = vmul.f32 %v3372, %v3377
    %v3383 = vmul.f32 %v3373, %v3379
    %v3384 = vmul.f32 %v3348, %v2660
    %v3385 = vmul.f32 %v3349, %v2661
    %v3386 = vadd.f32 %v3382, %v3384
    %v3387 = vadd.f32 %v3383, %v3385
    %3390 = vrot.lane.b32.xlu0 %v3386, 96
    %v3391 = vpop.permute.xlu0 %3390
    %3392 = vrot.lane.b32.xlu0 %v3387, 96
    %v3393 = vpop.permute.xlu0 %3392
    %v3394 = vsel %vm51, %v3391, 0
    %v3396 = vsel %vm51, %v3393, 0
    %3398 = vmatprep.subr.mxu0 0.0
    %3399 = vmatpush1.msra.mxu0 0.0
    %3400 = vmatprep.subr.mxu0 0.0
    %3401 = vmatpush1.msra.mxu0 0.0
    %3402 = vmatprep.subr.mxu0 0.0
    %3403 = vmatpush1.msra.mxu0 0.0
    %3404 = vmatprep.subr.mxu0 0.0
    %3405 = vmatpush1.msra.mxu0 0.0
    %3406 = vmatprep.subr.mxu0 0.0
    %3407 = vmatpush1.msra.mxu0 0.0
    %3408 = vmatprep.subr.mxu0 0.0
    %3409 = vmatpush1.msra.mxu0 0.0
    %3410 = vmatprep.subr.mxu0 0.0
    %3411 = vmatpush1.msra.mxu0 0.0
    %3412 = vmatprep.subr.mxu0 0.0
    %3413 = vmatpush1.msra.mxu0 0.0
    %3414 = vmatprep.subr.mxu0 0.0
    %3415 = vmatpush1.msra.mxu0 0.0
    %3416 = vmatprep.subr.mxu0 0.0
    %3417 = vmatpush1.msra.mxu0 0.0
    %3418 = vmatprep.subr.mxu0 0.0
    %3419 = vmatpush1.msra.mxu0 0.0
    %3420 = vmatprep.subr.mxu0 0.0
    %3421 = vmatpush1.msra.mxu0 0.0
    %3422 = vmatprep.subr.mxu0 0.0
    %3423 = vmatpush1.msra.mxu0 %v1728
    %3424 = vmatprep.subr.mxu0 0.0
    %3425 = vmatpush1.msra.mxu0 %v1727
    %3426 = vmatprep.subr.mxu0 0.0
    %3427 = vmatpush1.msra.mxu0 %v1726
    %3428 = vmatprep.subr.mxu0 0.0
    %3429 = vmatpush1.msra.mxu0 %v1725
    %3430 = vmatprep.subr.mxu0 0.0
    %3431 = vmatpush2.msra.mxu0 0.0
    %3432 = vmatprep.subr.mxu0 0.0
    %3433 = vmatpush2.msra.mxu0 0.0
    %3434 = vmatprep.subr.mxu0 0.0
    %3435 = vmatpush2.msra.mxu0 0.0
    %3436 = vmatprep.subr.mxu0 0.0
    %3437 = vmatpush2.msra.mxu0 0.0
    %3438 = vmatprep.subr.mxu0 0.0
    %3439 = vmatpush2.msra.mxu0 0.0
    %3440 = vmatprep.subr.mxu0 0.0
    %3441 = vmatpush2.msra.mxu0 0.0
    %3442 = vmatprep.subr.mxu0 0.0
    %3443 = vmatpush2.msra.mxu0 0.0
    %3444 = vmatprep.subr.mxu0 0.0
    %3445 = vmatpush2.msra.mxu0 0.0
    %3446 = vmatprep.subr.mxu0 0.0
    %3447 = vmatpush2.msra.mxu0 0.0
    %3448 = vmatprep.subr.mxu0 0.0
    %3449 = vmatpush2.msra.mxu0 0.0
    %3450 = vmatprep.subr.mxu0 0.0
    %3451 = vmatpush2.msra.mxu0 0.0
    %3452 = vmatprep.subr.mxu0 0.0
    %3453 = vmatpush2.msra.mxu0 0.0
    %3454 = vmatprep.subr.mxu0 0.0
    %3455 = vmatpush2.msra.mxu0 0.0
    %3456 = vmatprep.subr.mxu0 0.0
    %3457 = vmatpush2.msra.mxu0 0.0
    %3458 = vmatprep.subr.mxu0 0.0
    %3459 = vmatpush2.msra.mxu0 0.0
    %3460 = vmatprep.subr.mxu0 0.0
    %3461 = vmatpush2.msra.mxu0 0.0
    %3462 = vmatprep.mubr.f32.mxu0 0.0
    %3463 = vmatmul.mubr.f32.gmra.mxu0 %v3394
    %v3464 = vpop.f32.mrf.mxu0
    %v3465 = vadd.f32 %v1636, %v3464
    %v3466 = vpop.f32.mrf.mxu0
    %3467 = vmatprep.mubr.f32.mxu0 0.0
    %3468 = vmatmul.mubr.f32.gmra.mxu0 %v3396
    %v3469 = vpop.f32.mrf.mxu0
    %v3470 = vadd.f32 %v1641, %v3469
    %v3471 = vpop.f32.mrf.mxu0
    %3472 = vdwg.mxu0
    %vm3473 = vcmp.gt.f32.partialorder %v3465, 20.0
    %vm3474 = vcmp.gt.f32.partialorder %v3470, 20.0
    %v3475 = vmin.f32 %v3465, 20.0
    %v3476 = vmin.f32 %v3470, 20.0
    %v3477 = vmul.f32 %v3475, 1.442695
    %v3478 = vpow.pop %v3477
    %v3479 = vmul.f32 %v3476, 1.442695
    %v3480 = vpow.pop %v3479
    %v3481 = vadd.f32 %v3478, 1.0
    %v3482 = vadd.f32 %v3480, 1.0
    %v3483 = vlog2.pop %v3481
    %v3484 = vmul.f32 %v3483, 0.6931472
    %v3485 = vlog2.pop %v3482
    %v3486 = vmul.f32 %v3485, 0.6931472
    %v3487 = vsel %vm3473, %v3465, %v3484
    %v3488 = vsel %vm3474, %v3470, %v3486
    %v3490 = vsel %vm51, %v3487, 0
    %v3493 = vsel %vm51, %v3488, 0
    %3495 = vmatprep.subr.mxu0 0.0
    %3496 = vmatpush1.msra.mxu0 0.0
    %3497 = vmatprep.subr.mxu0 0.0
    %3498 = vmatpush1.msra.mxu0 0.0
    %3499 = vmatprep.subr.mxu0 0.0
    %3500 = vmatpush1.msra.mxu0 0.0
    %3501 = vmatprep.subr.mxu0 0.0
    %3502 = vmatpush1.msra.mxu0 0.0
    %3503 = vmatprep.subr.mxu0 0.0
    %3504 = vmatpush1.msra.mxu0 0.0
    %3505 = vmatprep.subr.mxu0 0.0
    %3506 = vmatpush1.msra.mxu0 0.0
    %3507 = vmatprep.subr.mxu0 0.0
    %3508 = vmatpush1.msra.mxu0 0.0
    %3509 = vmatprep.subr.mxu0 0.0
    %3510 = vmatpush1.msra.mxu0 0.0
    %3511 = vmatprep.subr.mxu0 0.0
    %3512 = vmatpush1.msra.mxu0 0.0
    %3513 = vmatprep.subr.mxu0 0.0
    %3514 = vmatpush1.msra.mxu0 0.0
    %3515 = vmatprep.subr.mxu0 0.0
    %3516 = vmatpush1.msra.mxu0 0.0
    %3517 = vmatprep.subr.mxu0 0.0
    %3518 = vmatpush1.msra.mxu0 0.0
    %3519 = vmatprep.subr.mxu0 0.0
    %3520 = vmatpush1.msra.mxu0 %v1732
    %3521 = vmatprep.subr.mxu0 0.0
    %3522 = vmatpush1.msra.mxu0 %v1731
    %3523 = vmatprep.subr.mxu0 0.0
    %3524 = vmatpush1.msra.mxu0 %v1730
    %3525 = vmatprep.subr.mxu0 0.0
    %3526 = vmatpush1.msra.mxu0 %v1729
    %3527 = vmatprep.subr.mxu0 0.0
    %3528 = vmatpush2.msra.mxu0 0.0
    %3529 = vmatprep.subr.mxu0 0.0
    %3530 = vmatpush2.msra.mxu0 0.0
    %3531 = vmatprep.subr.mxu0 0.0
    %3532 = vmatpush2.msra.mxu0 0.0
    %3533 = vmatprep.subr.mxu0 0.0
    %3534 = vmatpush2.msra.mxu0 0.0
    %3535 = vmatprep.subr.mxu0 0.0
    %3536 = vmatpush2.msra.mxu0 0.0
    %3537 = vmatprep.subr.mxu0 0.0
    %3538 = vmatpush2.msra.mxu0 0.0
    %3539 = vmatprep.subr.mxu0 0.0
    %3540 = vmatpush2.msra.mxu0 0.0
    %3541 = vmatprep.subr.mxu0 0.0
    %3542 = vmatpush2.msra.mxu0 0.0
    %3543 = vmatprep.subr.mxu0 0.0
    %3544 = vmatpush2.msra.mxu0 0.0
    %3545 = vmatprep.subr.mxu0 0.0
    %3546 = vmatpush2.msra.mxu0 0.0
    %3547 = vmatprep.subr.mxu0 0.0
    %3548 = vmatpush2.msra.mxu0 0.0
    %3549 = vmatprep.subr.mxu0 0.0
    %3550 = vmatpush2.msra.mxu0 0.0
    %3551 = vmatprep.subr.mxu0 0.0
    %3552 = vmatpush2.msra.mxu0 0.0
    %3553 = vmatprep.subr.mxu0 0.0
    %3554 = vmatpush2.msra.mxu0 0.0
    %3555 = vmatprep.subr.mxu0 0.0
    %3556 = vmatpush2.msra.mxu0 0.0
    %3557 = vmatprep.subr.mxu0 0.0
    %3558 = vmatpush2.msra.mxu0 0.0
    %3559 = vmatprep.mubr.f32.mxu0 0.0
    %3560 = vmatmul.mubr.f32.gmra.mxu0 %v3490
    %v3561 = vpop.f32.mrf.mxu0
    %v3562 = vadd.f32 %v2019, %v3561
    %v3563 = vpop.f32.mrf.mxu0
    %3564 = vmatprep.mubr.f32.mxu0 0.0
    %3565 = vmatmul.mubr.f32.gmra.mxu0 %v3493
    %v3566 = vpop.f32.mrf.mxu0
    %v3567 = vadd.f32 %v2019, %v3566
    %v3568 = vpop.f32.mrf.mxu0
    %3569 = vdwg.mxu0
    %vm3570 = vcmp.gt.f32.partialorder %v3562, 20.0
    %vm3571 = vcmp.gt.f32.partialorder %v3567, 20.0
    %v3572 = vmin.f32 %v3562, 20.0
    %v3573 = vmin.f32 %v3567, 20.0
    %v3574 = vmul.f32 %v3572, 1.442695
    %v3575 = vpow.pop %v3574
    %v3576 = vmul.f32 %v3573, 1.442695
    %v3577 = vpow.pop %v3576
    %v3578 = vadd.f32 %v3575, 1.0
    %v3579 = vadd.f32 %v3577, 1.0
    %v3580 = vlog2.pop %v3578
    %v3581 = vmul.f32 %v3580, 0.6931472
    %v3582 = vlog2.pop %v3579
    %v3583 = vmul.f32 %v3582, 0.6931472
    %v3584 = vsel %vm3570, %v3562, %v3581
    %v3585 = vsel %vm3571, %v3567, %v3583
    %v3587 = vsel %vm51, %v3584, 0
    %v3590 = vsel %vm51, %v3585, 0
    %3592 = vmatprep.subr.mxu0 0.0
    %3593 = vmatpush1.msra.mxu0 0.0
    %3594 = vmatprep.subr.mxu0 0.0
    %3595 = vmatpush1.msra.mxu0 0.0
    %3596 = vmatprep.subr.mxu0 0.0
    %3597 = vmatpush1.msra.mxu0 0.0
    %3598 = vmatprep.subr.mxu0 0.0
    %3599 = vmatpush1.msra.mxu0 0.0
    %3600 = vmatprep.subr.mxu0 0.0
    %3601 = vmatpush1.msra.mxu0 0.0
    %3602 = vmatprep.subr.mxu0 0.0
    %3603 = vmatpush1.msra.mxu0 0.0
    %3604 = vmatprep.subr.mxu0 0.0
    %3605 = vmatpush1.msra.mxu0 0.0
    %3606 = vmatprep.subr.mxu0 0.0
    %3607 = vmatpush1.msra.mxu0 0.0
    %3608 = vmatprep.subr.mxu0 0.0
    %3609 = vmatpush1.msra.mxu0 0.0
    %3610 = vmatprep.subr.mxu0 0.0
    %3611 = vmatpush1.msra.mxu0 0.0
    %3612 = vmatprep.subr.mxu0 0.0
    %3613 = vmatpush1.msra.mxu0 0.0
    %3614 = vmatprep.subr.mxu0 0.0
    %3615 = vmatpush1.msra.mxu0 0.0
    %3616 = vmatprep.subr.mxu0 0.0
    %3617 = vmatpush1.msra.mxu0 %v1736
    %3618 = vmatprep.subr.mxu0 0.0
    %3619 = vmatpush1.msra.mxu0 %v1735
    %3620 = vmatprep.subr.mxu0 0.0
    %3621 = vmatpush1.msra.mxu0 %v1734
    %3622 = vmatprep.subr.mxu0 0.0
    %3623 = vmatpush1.msra.mxu0 %v1733
    %3624 = vmatprep.subr.mxu0 0.0
    %3625 = vmatpush2.msra.mxu0 0.0
    %3626 = vmatprep.subr.mxu0 0.0
    %3627 = vmatpush2.msra.mxu0 0.0
    %3628 = vmatprep.subr.mxu0 0.0
    %3629 = vmatpush2.msra.mxu0 0.0
    %3630 = vmatprep.subr.mxu0 0.0
    %3631 = vmatpush2.msra.mxu0 0.0
    %3632 = vmatprep.subr.mxu0 0.0
    %3633 = vmatpush2.msra.mxu0 0.0
    %3634 = vmatprep.subr.mxu0 0.0
    %3635 = vmatpush2.msra.mxu0 0.0
    %3636 = vmatprep.subr.mxu0 0.0
    %3637 = vmatpush2.msra.mxu0 0.0
    %3638 = vmatprep.subr.mxu0 0.0
    %3639 = vmatpush2.msra.mxu0 0.0
    %3640 = vmatprep.subr.mxu0 0.0
    %3641 = vmatpush2.msra.mxu0 0.0
    %3642 = vmatprep.subr.mxu0 0.0
    %3643 = vmatpush2.msra.mxu0 0.0
    %3644 = vmatprep.subr.mxu0 0.0
    %3645 = vmatpush2.msra.mxu0 0.0
    %3646 = vmatprep.subr.mxu0 0.0
    %3647 = vmatpush2.msra.mxu0 0.0
    %3648 = vmatprep.subr.mxu0 0.0
    %3649 = vmatpush2.msra.mxu0 0.0
    %3650 = vmatprep.subr.mxu0 0.0
    %3651 = vmatpush2.msra.mxu0 0.0
    %3652 = vmatprep.subr.mxu0 0.0
    %3653 = vmatpush2.msra.mxu0 0.0
    %3654 = vmatprep.subr.mxu0 0.0
    %3655 = vmatpush2.msra.mxu0 0.0
    %3656 = vmatprep.mubr.f32.mxu0 0.0
    %3657 = vmatmul.mubr.f32.gmra.mxu0 %v3587
    %v3658 = vpop.f32.mrf.mxu0
    %v3659 = vadd.f32 %v2120, %v3658
    %v3660 = vpop.f32.mrf.mxu0
    %3661 = vmatprep.mubr.f32.mxu0 0.0
    %3662 = vmatmul.mubr.f32.gmra.mxu0 %v3590
    %v3663 = vpop.f32.mrf.mxu0
    %v3664 = vadd.f32 %v2120, %v3663
    %v3665 = vpop.f32.mrf.mxu0
    %3666 = vdwg.mxu0
    %v3667 = vmul.f32 %v3213, 0.5
    %v3668 = vmul.f32 %v3214, 0.5
    %v3669 = vadd.f32 %v3187, %v3667
    %v3670 = vadd.f32 %v3188, %v3668
    %v3671 = vadd.f32 %v3669, %v3659
    %v3672 = vadd.f32 %v3670, %v3664
    %3675 = vrot.lane.b32.xlu0 %v3659, 125
    %v3676 = vpop.permute.xlu0 %3675
    %3677 = vrot.lane.b32.xlu0 %v3664, 125
    %v3678 = vpop.permute.xlu0 %3677
    %v3681 = vadd.f32 %v3659, %v3676
    %v3682 = vadd.f32 %v3664, %v3678
    %v3683 = vmul.f32 %v3681, 0.5
    %v3684 = vmul.f32 %v3682, 0.5
    %v3685 = vsub.f32 %v3659, %v3676
    %v3686 = vsub.f32 %v3664, %v3678
    %v3687 = vmul.f32 %v3685, 0.5
    %v3688 = vmul.f32 %v3686, 0.5
    %v3689 = vmul.f32 %v3687, %v3687
    %v3690 = vmul.f32 %v3688, %v3688
    %3691 = vrot.lane.b32.xlu0 %v3659, 127
    %v3692 = vpop.permute.xlu0 %3691
    %3693 = vrot.lane.b32.xlu0 %v3664, 127
    %v3694 = vpop.permute.xlu0 %3693
    %v3697 = vmul.f32 %v3659, %v3692
    %v3698 = vmul.f32 %v3664, %v3694
    %3701 = vrot.lane.b32.xlu0 %v3697, 127
    %v3702 = vpop.permute.xlu0 %3701
    %3703 = vrot.lane.b32.xlu0 %v3698, 127
    %v3704 = vpop.permute.xlu0 %3703
    %v3707 = vadd.f32 %v3689, %v3702
    %v3708 = vadd.f32 %v3690, %v3704
    %v3709 = vmul.f32 %v3707, 0.00024414063
    %v3710 = vmul.f32 %v3708, 0.00024414063
    %v3711 = vmul.f32 %v3709, 2.4801588e-05
    %v3712 = vmul.f32 %v3710, 2.4801588e-05
    %v3713 = vadd.f32 %v3711, 0.0013888889
    %v3714 = vadd.f32 %v3712, 0.0013888889
    %v3715 = vmul.f32 %v3709, %v3713
    %v3716 = vmul.f32 %v3710, %v3714
    %v3717 = vadd.f32 %v3715, 0.041666668
    %v3718 = vadd.f32 %v3716, 0.041666668
    %v3719 = vmul.f32 %v3709, %v3717
    %v3720 = vmul.f32 %v3710, %v3718
    %v3721 = vadd.f32 %v3719, 0.5
    %v3722 = vadd.f32 %v3720, 0.5
    %v3723 = vmul.f32 %v3709, %v3721
    %v3724 = vmul.f32 %v3710, %v3722
    %v3725 = vadd.f32 %v3723, 1.0
    %v3726 = vadd.f32 %v3724, 1.0
    %v3727 = vmul.f32 %v3709, 2.7557319e-06
    %v3728 = vmul.f32 %v3710, 2.7557319e-06
    %v3729 = vadd.f32 %v3727, 0.0001984127
    %v3730 = vadd.f32 %v3728, 0.0001984127
    %v3731 = vmul.f32 %v3709, %v3729
    %v3732 = vmul.f32 %v3710, %v3730
    %v3733 = vadd.f32 %v3731, 0.008333334
    %v3734 = vadd.f32 %v3732, 0.008333334
    %v3735 = vmul.f32 %v3709, %v3733
    %v3736 = vmul.f32 %v3710, %v3734
    %v3737 = vadd.f32 %v3735, 0.16666667
    %v3738 = vadd.f32 %v3736, 0.16666667
    %v3739 = vmul.f32 %v3709, %v3737
    %v3740 = vmul.f32 %v3710, %v3738
    %v3741 = vadd.f32 %v3739, 1.0
    %v3742 = vadd.f32 %v3740, 1.0
    %v3743 = vmul.f32 %v3741, %v3725
    %v3744 = vmul.f32 %v3742, %v3726
    %v3745 = vmul.f32 %v3725, 2.0
    %v3746 = vmul.f32 %v3726, 2.0
    %v3747 = vmul.f32 %v3745, %v3725
    %v3748 = vmul.f32 %v3746, %v3726
    %v3749 = vsub.f32 %v3747, 1.0
    %v3750 = vsub.f32 %v3748, 1.0
    %v3751 = vmul.f32 %v3743, %v3749
    %v3752 = vmul.f32 %v3744, %v3750
    %v3753 = vmul.f32 %v3749, 2.0
    %v3754 = vmul.f32 %v3750, 2.0
    %v3755 = vmul.f32 %v3753, %v3749
    %v3756 = vmul.f32 %v3754, %v3750
    %v3757 = vsub.f32 %v3755, 1.0
    %v3758 = vsub.f32 %v3756, 1.0
    %v3759 = vmul.f32 %v3751, %v3757
    %v3760 = vmul.f32 %v3752, %v3758
    %v3761 = vmul.f32 %v3757, 2.0
    %v3762 = vmul.f32 %v3758, 2.0
    %v3763 = vmul.f32 %v3761, %v3757
    %v3764 = vmul.f32 %v3762, %v3758
    %v3765 = vsub.f32 %v3763, 1.0
    %v3766 = vsub.f32 %v3764, 1.0
    %v3767 = vmul.f32 %v3759, %v3765
    %v3768 = vmul.f32 %v3760, %v3766
    %v3769 = vmul.f32 %v3765, 2.0
    %v3770 = vmul.f32 %v3766, 2.0
    %v3771 = vmul.f32 %v3769, %v3765
    %v3772 = vmul.f32 %v3770, %v3766
    %v3773 = vsub.f32 %v3771, 1.0
    %v3774 = vsub.f32 %v3772, 1.0
    %v3775 = vmul.f32 %v3767, %v3773
    %v3776 = vmul.f32 %v3768, %v3774
    %v3777 = vmul.f32 %v3773, 2.0
    %v3778 = vmul.f32 %v3774, 2.0
    %v3779 = vmul.f32 %v3777, %v3773
    %v3780 = vmul.f32 %v3778, %v3774
    %v3781 = vsub.f32 %v3779, 1.0
    %v3782 = vsub.f32 %v3780, 1.0
    %v3783 = vmul.f32 %v3775, %v3781
    %v3784 = vmul.f32 %v3776, %v3782
    %v3785 = vmul.f32 %v3781, 2.0
    %v3786 = vmul.f32 %v3782, 2.0
    %v3787 = vmul.f32 %v3785, %v3781
    %v3788 = vmul.f32 %v3786, %v3782
    %v3789 = vsub.f32 %v3787, 1.0
    %v3790 = vsub.f32 %v3788, 1.0
    %v3791 = vmul.f32 %v3683, 1.442695
    %v3792 = vpow.pop %v3791
    %v3793 = vmul.f32 %v3684, 1.442695
    %v3794 = vpow.pop %v3793
    %v3795 = vmul.f32 %v3783, %v3687
    %v3796 = vmul.f32 %v3784, %v3688
    %v3797 = vadd.f32 %v3789, %v3795
    %v3798 = vadd.f32 %v3790, %v3796
    %v3799 = vmul.f32 %v3792, %v3797
    %v3800 = vmul.f32 %v3794, %v3798
    %v3801 = vmul.f32 %v3783, %v3692
    %v3802 = vmul.f32 %v3784, %v3694
    %v3803 = vmul.f32 %v3792, %v3801
    %v3804 = vmul.f32 %v3794, %v3802
    %3805 = vrot.lane.b32.xlu0 %v3659, 126
    %v3806 = vpop.permute.xlu0 %3805
    %3807 = vrot.lane.b32.xlu0 %v3664, 126
    %v3808 = vpop.permute.xlu0 %3807
    %v3811 = vmul.f32 %v3783, %v3806
    %v3812 = vmul.f32 %v3784, %v3808
    %v3813 = vmul.f32 %v3792, %v3811
    %v3814 = vmul.f32 %v3794, %v3812
    %v3815 = vsub.f32 %v3789, %v3795
    %v3816 = vsub.f32 %v3790, %v3796
    %v3817 = vmul.f32 %v3792, %v3815
    %v3818 = vmul.f32 %v3794, %v3816
    %3819 = vrot.lane.b32.xlu0 %v1737, 126
    %v3820 = vpop.permute.xlu0 %3819
    %3821 = vrot.lane.b32.xlu0 %v1738, 126
    %v3822 = vpop.permute.xlu0 %3821
    %v3825 = vmul.f32 %v3799, %v3820
    %v3826 = vmul.f32 %v3800, %v3822
    %3829 = vrot.lane.b32.xlu0 %v3825, 126
    %v3830 = vpop.permute.xlu0 %3829
    %3831 = vrot.lane.b32.xlu0 %v3826, 126
    %v3832 = vpop.permute.xlu0 %3831
    %v3835 = vadd.f32 %v3671, %v3830
    %v3836 = vadd.f32 %v3672, %v3832
    %3837 = vrot.lane.b32.xlu0 %v1737, 125
    %v3838 = vpop.permute.xlu0 %3837
    %3839 = vrot.lane.b32.xlu0 %v1738, 125
    %v3840 = vpop.permute.xlu0 %3839
    %v3843 = vmul.f32 %v3803, %v3838
    %v3844 = vmul.f32 %v3804, %v3840
    %3847 = vrot.lane.b32.xlu0 %v3843, 126
    %v3848 = vpop.permute.xlu0 %3847
    %3849 = vrot.lane.b32.xlu0 %v3844, 126
    %v3850 = vpop.permute.xlu0 %3849
    %v3853 = vadd.f32 %v3835, %v3848
    %v3854 = vadd.f32 %v3836, %v3850
    %v3855 = vmul.f32 %v3813, %v3820
    %v3856 = vmul.f32 %v3814, %v3822
    %3859 = vrot.lane.b32.xlu0 %v3855, 127
    %v3860 = vpop.permute.xlu0 %3859
    %3861 = vrot.lane.b32.xlu0 %v3856, 127
    %v3862 = vpop.permute.xlu0 %3861
    %v3865 = vadd.f32 %v3671, %v3860
    %v3866 = vadd.f32 %v3672, %v3862
    %v3867 = vmul.f32 %v3817, %v3838
    %v3868 = vmul.f32 %v3818, %v3840
    %3871 = vrot.lane.b32.xlu0 %v3867, 127
    %v3872 = vpop.permute.xlu0 %3871
    %3873 = vrot.lane.b32.xlu0 %v3868, 127
    %v3874 = vpop.permute.xlu0 %3873
    %v3877 = vadd.f32 %v3865, %v3872
    %v3878 = vadd.f32 %v3866, %v3874
    %3881 = vrot.lane.b32.xlu0 %v3671, 2
    %v3882 = vpop.permute.xlu0 %3881
    %3883 = vrot.lane.b32.xlu0 %v3672, 2
    %v3884 = vpop.permute.xlu0 %3883
    %3889 = vrot.lane.b32.xlu0 %v3799, 2
    %v3890 = vpop.permute.xlu0 %3889
    %3891 = vrot.lane.b32.xlu0 %v3800, 2
    %v3892 = vpop.permute.xlu0 %3891
    %3897 = vrot.lane.b32.xlu0 %v3803, 3
    %v3898 = vpop.permute.xlu0 %3897
    %3899 = vrot.lane.b32.xlu0 %v3804, 3
    %v3900 = vpop.permute.xlu0 %3899
    %3905 = vrot.lane.b32.xlu0 %v3813, 4
    %v3906 = vpop.permute.xlu0 %3905
    %3907 = vrot.lane.b32.xlu0 %v3814, 4
    %v3908 = vpop.permute.xlu0 %3907
    %3913 = vrot.lane.b32.xlu0 %v3817, 5
    %v3914 = vpop.permute.xlu0 %3913
    %3915 = vrot.lane.b32.xlu0 %v3818, 5
    %v3916 = vpop.permute.xlu0 %3915
    %v3919 = vsel %vm2464, %v3853, %v3877
    %v3920 = vsel %vm2464, %v3854, %v3878
    %v3921 = vsel %vm1739, %v3919, %v3882
    %v3922 = vsel %vm1739, %v3920, %v3884
    %v3923 = vsel %vm2469, %v3921, %v3882
    %v3924 = vsel %vm2469, %v3922, %v3884
    %v3925 = vsel %vm1132, %v3923, %v3890
    %v3926 = vsel %vm1132, %v3924, %v3892
    %v3927 = vsel %vm2474, %v3925, %v3898
    %v3928 = vsel %vm2474, %v3926, %v3900
    %v3929 = vsel %vm1744, %v3927, %v3906
    %v3930 = vsel %vm1744, %v3928, %v3908
    %v3931 = vsel %vm2479, %v3929, %v3914
    %v3932 = vsel %vm2479, %v3930, %v3916
    %3935 = vrot.lane.b32.xlu0 %v3931, 16
    %v3936 = vpop.permute.xlu0 %3935
    %3937 = vrot.lane.b32.xlu0 %v3932, 16
    %v3938 = vpop.permute.xlu0 %3937
    %vm3941 = vcmask 195712
    %3942 = vst.msk [vmem:[#allocation4] sm:$0xff] %vm3941, %v3936
    %vm3943 = vcmask 191616
    %3944 = vst.msk [vmem:[#allocation4 + $0x8] sm:$0xf] %vm3943, %v3938
    %v3945 = vsub.f32 %v3919, %v3187
    %v3946 = vsub.f32 %v3920, %v3188
    %3949 = vrot.lane.b32.xlu0 %v3919, 6
    %v3950 = vpop.permute.xlu0 %3949
    %3951 = vrot.lane.b32.xlu0 %v3920, 6
    %v3952 = vpop.permute.xlu0 %3951
    %3955 = vrot.lane.b32.xlu0 %v3386, 112
    %v3956 = vpop.permute.xlu0 %3955
    %3957 = vrot.lane.b32.xlu0 %v3387, 112
    %v3958 = vpop.permute.xlu0 %3957
    %v3961 = vsel %vm1744, %v3229, %v3950
    %v3962 = vsel %vm1744, %v3230, %v3952
    %v3963 = vsel %vm1747, %v3961, 0.0
    %v3964 = vsel %vm1747, %v3962, 0.0
    %v3965 = vsel %vm1750, %v3963, 0.0
    %v3966 = vsel %vm1750, %v3964, 0.0
    %v3967 = vsel %vm1753, %v3965, 0.0
    %v3968 = vsel %vm1753, %v3966, 0.0
    %v3969 = vsel %vm1756, %v3967, %v3956
    %v3970 = vsel %vm1756, %v3968, %v3958
    %v3971 = vld [vmem:[%s8] sm:$0xff]
    %v3972 = vld [vmem:[%s8 + $0x8] sm:$0xff]
    %v3973 = vld [vmem:[%s8 + $0x10] sm:$0xff]
    %v3974 = vld [vmem:[%s8 + $0x18] sm:$0xff]
    %v3975 = vld [vmem:[%s8 + $0x20] sm:$0xff]
    %v3976 = vld [vmem:[%s8 + $0x28] sm:$0xff]
    %v3977 = vld [vmem:[%s8 + $0x30] sm:$0xff]
    %v3978 = vld [vmem:[%s8 + $0x38] sm:$0xff]
    %v3979 = vld [vmem:[%s8 + $0x40] sm:$0xff]
    %v3980 = vld [vmem:[%s8 + $0x48] sm:$0xff]
    %v3981 = vld [vmem:[%s8 + $0x50] sm:$0xff]
    %v3982 = vld [vmem:[%s8 + $0x58] sm:$0xff]
    %v3984 = vsel %vm1771, %v3969, 0
    %v3987 = vsel %vm1771, %v3970, 0
    %3989 = vmatprep.subr.mxu0 0.0
    %3990 = vmatpush1.msra.mxu0 0.0
    %3991 = vmatprep.subr.mxu0 0.0
    %3992 = vmatpush1.msra.mxu0 0.0
    %3993 = vmatprep.subr.mxu0 0.0
    %3994 = vmatpush1.msra.mxu0 0.0
    %3995 = vmatprep.subr.mxu0 0.0
    %3996 = vmatpush1.msra.mxu0 0.0
    %3997 = vmatprep.subr.mxu0 0.0
    %3998 = vmatpush1.msra.mxu0 0.0
    %3999 = vmatprep.subr.mxu0 0.0
    %4000 = vmatpush1.msra.mxu0 0.0
    %4001 = vmatprep.subr.mxu0 0.0
    %4002 = vmatpush1.msra.mxu0 0.0
    %4003 = vmatprep.subr.mxu0 0.0
    %4004 = vmatpush1.msra.mxu0 0.0
    %4005 = vmatprep.subr.mxu0 0.0
    %4006 = vmatpush1.msra.mxu0 0.0
    %4007 = vmatprep.subr.mxu0 0.0
    %4008 = vmatpush1.msra.mxu0 0.0
    %4009 = vmatprep.subr.mxu0 %v3982
    %4010 = vmatpush1.msra.mxu0 %v3981
    %4011 = vmatprep.subr.mxu0 %v3980
    %4012 = vmatpush1.msra.mxu0 %v3979
    %4013 = vmatprep.subr.mxu0 %v3978
    %4014 = vmatpush1.msra.mxu0 %v3977
    %4015 = vmatprep.subr.mxu0 %v3976
    %4016 = vmatpush1.msra.mxu0 %v3975
    %4017 = vmatprep.subr.mxu0 %v3974
    %4018 = vmatpush1.msra.mxu0 %v3973
    %4019 = vmatprep.subr.mxu0 %v3972
    %4020 = vmatpush1.msra.mxu0 %v3971
    %4021 = vmatprep.subr.mxu0 0.0
    %4022 = vmatpush2.msra.mxu0 0.0
    %4023 = vmatprep.subr.mxu0 0.0
    %4024 = vmatpush2.msra.mxu0 0.0
    %4025 = vmatprep.subr.mxu0 0.0
    %4026 = vmatpush2.msra.mxu0 0.0
    %4027 = vmatprep.subr.mxu0 0.0
    %4028 = vmatpush2.msra.mxu0 0.0
    %4029 = vmatprep.subr.mxu0 0.0
    %4030 = vmatpush2.msra.mxu0 0.0
    %4031 = vmatprep.subr.mxu0 0.0
    %4032 = vmatpush2.msra.mxu0 0.0
    %4033 = vmatprep.subr.mxu0 0.0
    %4034 = vmatpush2.msra.mxu0 0.0
    %4035 = vmatprep.subr.mxu0 0.0
    %4036 = vmatpush2.msra.mxu0 0.0
    %4037 = vmatprep.subr.mxu0 0.0
    %4038 = vmatpush2.msra.mxu0 0.0
    %4039 = vmatprep.subr.mxu0 0.0
    %4040 = vmatpush2.msra.mxu0 0.0
    %4041 = vmatprep.subr.mxu0 0.0
    %4042 = vmatpush2.msra.mxu0 0.0
    %4043 = vmatprep.subr.mxu0 0.0
    %4044 = vmatpush2.msra.mxu0 0.0
    %4045 = vmatprep.subr.mxu0 0.0
    %4046 = vmatpush2.msra.mxu0 0.0
    %4047 = vmatprep.subr.mxu0 0.0
    %4048 = vmatpush2.msra.mxu0 0.0
    %4049 = vmatprep.subr.mxu0 0.0
    %4050 = vmatpush2.msra.mxu0 0.0
    %4051 = vmatprep.subr.mxu0 0.0
    %4052 = vmatpush2.msra.mxu0 0.0
    %4053 = vmatprep.mubr.f32.mxu0 0.0
    %4054 = vmatmul.mubr.f32.gmra.mxu0 %v3984
    %v4055 = vpop.f32.mrf.mxu0
    %v4056 = vadd.f32 0.0, %v4055
    %v4057 = vpop.f32.mrf.mxu0
    %v4058 = vadd.f32 0.0, %v4057
    %4059 = vmatprep.mubr.f32.mxu0 0.0
    %4060 = vmatmul.mubr.f32.gmra.mxu0 %v3987
    %v4061 = vpop.f32.mrf.mxu0
    %v4062 = vadd.f32 0.0, %v4061
    %v4063 = vpop.f32.mrf.mxu0
    %v4064 = vadd.f32 0.0, %v4063
    %4065 = vdwg.mxu0
    %v4066 = vadd.f32 %v4056, %v1858
    %v4067 = vadd.f32 %v4062, %v1858
    %v4068 = vadd.f32 %v4058, %v1864
    %v4069 = vadd.f32 %v4064, %v1864
    %v4070 = vadd.f32 %v4066, %v4068
    %v4071 = vadd.f32 %v4067, %v4069
    %v4072 = vmul.f32 %v4070, 0.5
    %v4073 = vmul.f32 %v4071, 0.5
    %v4074 = vtanh.pop %v4072
    %v4075 = vtanh.pop %v4073
    %v4076 = vadd.f32 %v4074, 1.0
    %v4077 = vadd.f32 %v4075, 1.0
    %v4078 = vmul.f32 %v4076, 0.5
    %v4079 = vmul.f32 %v4077, 0.5
    %4082 = vrot.lane.b32.xlu0 %v4068, 64
    %v4083 = vpop.permute.xlu0 %4082
    %4084 = vrot.lane.b32.xlu0 %v4069, 64
    %v4085 = vpop.permute.xlu0 %4084
    %v4088 = vmul.f32 %v4078, %v4083
    %v4089 = vmul.f32 %v4079, %v4085
    %4092 = vrot.lane.b32.xlu0 %v4088, 64
    %v4093 = vpop.permute.xlu0 %4092
    %4094 = vrot.lane.b32.xlu0 %v4089, 64
    %v4095 = vpop.permute.xlu0 %4094
    %v4098 = vadd.f32 %v4066, %v4093
    %v4099 = vadd.f32 %v4067, %v4095
    %v4100 = vtanh.pop %v4098
    %v4101 = vtanh.pop %v4099
    %v4102 = vsub.f32 1.0, %v4078
    %v4103 = vsub.f32 1.0, %v4079
    %4106 = vrot.lane.b32.xlu0 %v4100, 96
    %v4107 = vpop.permute.xlu0 %4106
    %4108 = vrot.lane.b32.xlu0 %v4101, 96
    %v4109 = vpop.permute.xlu0 %4108
    %v4112 = vmul.f32 %v4102, %v4107
    %v4113 = vmul.f32 %v4103, %v4109
    %v4114 = vmul.f32 %v4078, %v3386
    %v4115 = vmul.f32 %v4079, %v3387
    %v4116 = vadd.f32 %v4112, %v4114
    %v4117 = vadd.f32 %v4113, %v4115
    %4120 = vrot.lane.b32.xlu0 %v4116, 96
    %v4121 = vpop.permute.xlu0 %4120
    %4122 = vrot.lane.b32.xlu0 %v4117, 96
    %v4123 = vpop.permute.xlu0 %4122
    %v4124 = vsel %vm51, %v4121, 0
    %v4126 = vsel %vm51, %v4123, 0
    %4128 = vmatprep.subr.mxu0 0.0
    %4129 = vmatpush1.msra.mxu0 0.0
    %4130 = vmatprep.subr.mxu0 0.0
    %4131 = vmatpush1.msra.mxu0 0.0
    %4132 = vmatprep.subr.mxu0 0.0
    %4133 = vmatpush1.msra.mxu0 0.0
    %4134 = vmatprep.subr.mxu0 0.0
    %4135 = vmatpush1.msra.mxu0 0.0
    %4136 = vmatprep.subr.mxu0 0.0
    %4137 = vmatpush1.msra.mxu0 0.0
    %4138 = vmatprep.subr.mxu0 0.0
    %4139 = vmatpush1.msra.mxu0 0.0
    %4140 = vmatprep.subr.mxu0 0.0
    %4141 = vmatpush1.msra.mxu0 0.0
    %4142 = vmatprep.subr.mxu0 0.0
    %4143 = vmatpush1.msra.mxu0 0.0
    %4144 = vmatprep.subr.mxu0 0.0
    %4145 = vmatpush1.msra.mxu0 0.0
    %4146 = vmatprep.subr.mxu0 0.0
    %4147 = vmatpush1.msra.mxu0 0.0
    %4148 = vmatprep.subr.mxu0 0.0
    %4149 = vmatpush1.msra.mxu0 0.0
    %4150 = vmatprep.subr.mxu0 0.0
    %4151 = vmatpush1.msra.mxu0 0.0
    %4152 = vmatprep.subr.mxu0 0.0
    %4153 = vmatpush1.msra.mxu0 %v1728
    %4154 = vmatprep.subr.mxu0 0.0
    %4155 = vmatpush1.msra.mxu0 %v1727
    %4156 = vmatprep.subr.mxu0 0.0
    %4157 = vmatpush1.msra.mxu0 %v1726
    %4158 = vmatprep.subr.mxu0 0.0
    %4159 = vmatpush1.msra.mxu0 %v1725
    %4160 = vmatprep.subr.mxu0 0.0
    %4161 = vmatpush2.msra.mxu0 0.0
    %4162 = vmatprep.subr.mxu0 0.0
    %4163 = vmatpush2.msra.mxu0 0.0
    %4164 = vmatprep.subr.mxu0 0.0
    %4165 = vmatpush2.msra.mxu0 0.0
    %4166 = vmatprep.subr.mxu0 0.0
    %4167 = vmatpush2.msra.mxu0 0.0
    %4168 = vmatprep.subr.mxu0 0.0
    %4169 = vmatpush2.msra.mxu0 0.0
    %4170 = vmatprep.subr.mxu0 0.0
    %4171 = vmatpush2.msra.mxu0 0.0
    %4172 = vmatprep.subr.mxu0 0.0
    %4173 = vmatpush2.msra.mxu0 0.0
    %4174 = vmatprep.subr.mxu0 0.0
    %4175 = vmatpush2.msra.mxu0 0.0
    %4176 = vmatprep.subr.mxu0 0.0
    %4177 = vmatpush2.msra.mxu0 0.0
    %4178 = vmatprep.subr.mxu0 0.0
    %4179 = vmatpush2.msra.mxu0 0.0
    %4180 = vmatprep.subr.mxu0 0.0
    %4181 = vmatpush2.msra.mxu0 0.0
    %4182 = vmatprep.subr.mxu0 0.0
    %4183 = vmatpush2.msra.mxu0 0.0
    %4184 = vmatprep.subr.mxu0 0.0
    %4185 = vmatpush2.msra.mxu0 0.0
    %4186 = vmatprep.subr.mxu0 0.0
    %4187 = vmatpush2.msra.mxu0 0.0
    %4188 = vmatprep.subr.mxu0 0.0
    %4189 = vmatpush2.msra.mxu0 0.0
    %4190 = vmatprep.subr.mxu0 0.0
    %4191 = vmatpush2.msra.mxu0 0.0
    %4192 = vmatprep.mubr.f32.mxu0 0.0
    %4193 = vmatmul.mubr.f32.gmra.mxu0 %v4124
    %v4194 = vpop.f32.mrf.mxu0
    %v4195 = vadd.f32 %v1636, %v4194
    %v4196 = vpop.f32.mrf.mxu0
    %4197 = vmatprep.mubr.f32.mxu0 0.0
    %4198 = vmatmul.mubr.f32.gmra.mxu0 %v4126
    %v4199 = vpop.f32.mrf.mxu0
    %v4200 = vadd.f32 %v1641, %v4199
    %v4201 = vpop.f32.mrf.mxu0
    %4202 = vdwg.mxu0
    %vm4203 = vcmp.gt.f32.partialorder %v4195, 20.0
    %vm4204 = vcmp.gt.f32.partialorder %v4200, 20.0
    %v4205 = vmin.f32 %v4195, 20.0
    %v4206 = vmin.f32 %v4200, 20.0
    %v4207 = vmul.f32 %v4205, 1.442695
    %v4208 = vpow.pop %v4207
    %v4209 = vmul.f32 %v4206, 1.442695
    %v4210 = vpow.pop %v4209
    %v4211 = vadd.f32 %v4208, 1.0
    %v4212 = vadd.f32 %v4210, 1.0
    %v4213 = vlog2.pop %v4211
    %v4214 = vmul.f32 %v4213, 0.6931472
    %v4215 = vlog2.pop %v4212
    %v4216 = vmul.f32 %v4215, 0.6931472
    %v4217 = vsel %vm4203, %v4195, %v4214
    %v4218 = vsel %vm4204, %v4200, %v4216
    %v4220 = vsel %vm51, %v4217, 0
    %v4223 = vsel %vm51, %v4218, 0
    %4225 = vmatprep.subr.mxu0 0.0
    %4226 = vmatpush1.msra.mxu0 0.0
    %4227 = vmatprep.subr.mxu0 0.0
    %4228 = vmatpush1.msra.mxu0 0.0
    %4229 = vmatprep.subr.mxu0 0.0
    %4230 = vmatpush1.msra.mxu0 0.0
    %4231 = vmatprep.subr.mxu0 0.0
    %4232 = vmatpush1.msra.mxu0 0.0
    %4233 = vmatprep.subr.mxu0 0.0
    %4234 = vmatpush1.msra.mxu0 0.0
    %4235 = vmatprep.subr.mxu0 0.0
    %4236 = vmatpush1.msra.mxu0 0.0
    %4237 = vmatprep.subr.mxu0 0.0
    %4238 = vmatpush1.msra.mxu0 0.0
    %4239 = vmatprep.subr.mxu0 0.0
    %4240 = vmatpush1.msra.mxu0 0.0
    %4241 = vmatprep.subr.mxu0 0.0
    %4242 = vmatpush1.msra.mxu0 0.0
    %4243 = vmatprep.subr.mxu0 0.0
    %4244 = vmatpush1.msra.mxu0 0.0
    %4245 = vmatprep.subr.mxu0 0.0
    %4246 = vmatpush1.msra.mxu0 0.0
    %4247 = vmatprep.subr.mxu0 0.0
    %4248 = vmatpush1.msra.mxu0 0.0
    %4249 = vmatprep.subr.mxu0 0.0
    %4250 = vmatpush1.msra.mxu0 %v1732
    %4251 = vmatprep.subr.mxu0 0.0
    %4252 = vmatpush1.msra.mxu0 %v1731
    %4253 = vmatprep.subr.mxu0 0.0
    %4254 = vmatpush1.msra.mxu0 %v1730
    %4255 = vmatprep.subr.mxu0 0.0
    %4256 = vmatpush1.msra.mxu0 %v1729
    %4257 = vmatprep.subr.mxu0 0.0
    %4258 = vmatpush2.msra.mxu0 0.0
    %4259 = vmatprep.subr.mxu0 0.0
    %4260 = vmatpush2.msra.mxu0 0.0
    %4261 = vmatprep.subr.mxu0 0.0
    %4262 = vmatpush2.msra.mxu0 0.0
    %4263 = vmatprep.subr.mxu0 0.0
    %4264 = vmatpush2.msra.mxu0 0.0
    %4265 = vmatprep.subr.mxu0 0.0
    %4266 = vmatpush2.msra.mxu0 0.0
    %4267 = vmatprep.subr.mxu0 0.0
    %4268 = vmatpush2.msra.mxu0 0.0
    %4269 = vmatprep.subr.mxu0 0.0
    %4270 = vmatpush2.msra.mxu0 0.0
    %4271 = vmatprep.subr.mxu0 0.0
    %4272 = vmatpush2.msra.mxu0 0.0
    %4273 = vmatprep.subr.mxu0 0.0
    %4274 = vmatpush2.msra.mxu0 0.0
    %4275 = vmatprep.subr.mxu0 0.0
    %4276 = vmatpush2.msra.mxu0 0.0
    %4277 = vmatprep.subr.mxu0 0.0
    %4278 = vmatpush2.msra.mxu0 0.0
    %4279 = vmatprep.subr.mxu0 0.0
    %4280 = vmatpush2.msra.mxu0 0.0
    %4281 = vmatprep.subr.mxu0 0.0
    %4282 = vmatpush2.msra.mxu0 0.0
    %4283 = vmatprep.subr.mxu0 0.0
    %4284 = vmatpush2.msra.mxu0 0.0
    %4285 = vmatprep.subr.mxu0 0.0
    %4286 = vmatpush2.msra.mxu0 0.0
    %4287 = vmatprep.subr.mxu0 0.0
    %4288 = vmatpush2.msra.mxu0 0.0
    %4289 = vmatprep.mubr.f32.mxu0 0.0
    %4290 = vmatmul.mubr.f32.gmra.mxu0 %v4220
    %v4291 = vpop.f32.mrf.mxu0
    %v4292 = vadd.f32 %v2019, %v4291
    %v4293 = vpop.f32.mrf.mxu0
    %4294 = vmatprep.mubr.f32.mxu0 0.0
    %4295 = vmatmul.mubr.f32.gmra.mxu0 %v4223
    %v4296 = vpop.f32.mrf.mxu0
    %v4297 = vadd.f32 %v2019, %v4296
    %v4298 = vpop.f32.mrf.mxu0
    %4299 = vdwg.mxu0
    %vm4300 = vcmp.gt.f32.partialorder %v4292, 20.0
    %vm4301 = vcmp.gt.f32.partialorder %v4297, 20.0
    %v4302 = vmin.f32 %v4292, 20.0
    %v4303 = vmin.f32 %v4297, 20.0
    %v4304 = vmul.f32 %v4302, 1.442695
    %v4305 = vpow.pop %v4304
    %v4306 = vmul.f32 %v4303, 1.442695
    %v4307 = vpow.pop %v4306
    %v4308 = vadd.f32 %v4305, 1.0
    %v4309 = vadd.f32 %v4307, 1.0
    %v4310 = vlog2.pop %v4308
    %v4311 = vmul.f32 %v4310, 0.6931472
    %v4312 = vlog2.pop %v4309
    %v4313 = vmul.f32 %v4312, 0.6931472
    %v4314 = vsel %vm4300, %v4292, %v4311
    %v4315 = vsel %vm4301, %v4297, %v4313
    %v4317 = vsel %vm51, %v4314, 0
    %v4320 = vsel %vm51, %v4315, 0
    %4322 = vmatprep.subr.mxu0 0.0
    %4323 = vmatpush1.msra.mxu0 0.0
    %4324 = vmatprep.subr.mxu0 0.0
    %4325 = vmatpush1.msra.mxu0 0.0
    %4326 = vmatprep.subr.mxu0 0.0
    %4327 = vmatpush1.msra.mxu0 0.0
    %4328 = vmatprep.subr.mxu0 0.0
    %4329 = vmatpush1.msra.mxu0 0.0
    %4330 = vmatprep.subr.mxu0 0.0
    %4331 = vmatpush1.msra.mxu0 0.0
    %4332 = vmatprep.subr.mxu0 0.0
    %4333 = vmatpush1.msra.mxu0 0.0
    %4334 = vmatprep.subr.mxu0 0.0
    %4335 = vmatpush1.msra.mxu0 0.0
    %4336 = vmatprep.subr.mxu0 0.0
    %4337 = vmatpush1.msra.mxu0 0.0
    %4338 = vmatprep.subr.mxu0 0.0
    %4339 = vmatpush1.msra.mxu0 0.0
    %4340 = vmatprep.subr.mxu0 0.0
    %4341 = vmatpush1.msra.mxu0 0.0
    %4342 = vmatprep.subr.mxu0 0.0
    %4343 = vmatpush1.msra.mxu0 0.0
    %4344 = vmatprep.subr.mxu0 0.0
    %4345 = vmatpush1.msra.mxu0 0.0
    %4346 = vmatprep.subr.mxu0 0.0
    %4347 = vmatpush1.msra.mxu0 %v1736
    %4348 = vmatprep.subr.mxu0 0.0
    %4349 = vmatpush1.msra.mxu0 %v1735
    %4350 = vmatprep.subr.mxu0 0.0
    %4351 = vmatpush1.msra.mxu0 %v1734
    %4352 = vmatprep.subr.mxu0 0.0
    %4353 = vmatpush1.msra.mxu0 %v1733
    %4354 = vmatprep.subr.mxu0 0.0
    %4355 = vmatpush2.msra.mxu0 0.0
    %4356 = vmatprep.subr.mxu0 0.0
    %4357 = vmatpush2.msra.mxu0 0.0
    %4358 = vmatprep.subr.mxu0 0.0
    %4359 = vmatpush2.msra.mxu0 0.0
    %4360 = vmatprep.subr.mxu0 0.0
    %4361 = vmatpush2.msra.mxu0 0.0
    %4362 = vmatprep.subr.mxu0 0.0
    %4363 = vmatpush2.msra.mxu0 0.0
    %4364 = vmatprep.subr.mxu0 0.0
    %4365 = vmatpush2.msra.mxu0 0.0
    %4366 = vmatprep.subr.mxu0 0.0
    %4367 = vmatpush2.msra.mxu0 0.0
    %4368 = vmatprep.subr.mxu0 0.0
    %4369 = vmatpush2.msra.mxu0 0.0
    %4370 = vmatprep.subr.mxu0 0.0
    %4371 = vmatpush2.msra.mxu0 0.0
    %4372 = vmatprep.subr.mxu0 0.0
    %4373 = vmatpush2.msra.mxu0 0.0
    %4374 = vmatprep.subr.mxu0 0.0
    %4375 = vmatpush2.msra.mxu0 0.0
    %4376 = vmatprep.subr.mxu0 0.0
    %4377 = vmatpush2.msra.mxu0 0.0
    %4378 = vmatprep.subr.mxu0 0.0
    %4379 = vmatpush2.msra.mxu0 0.0
    %4380 = vmatprep.subr.mxu0 0.0
    %4381 = vmatpush2.msra.mxu0 0.0
    %4382 = vmatprep.subr.mxu0 0.0
    %4383 = vmatpush2.msra.mxu0 0.0
    %4384 = vmatprep.subr.mxu0 0.0
    %4385 = vmatpush2.msra.mxu0 0.0
    %4386 = vmatprep.mubr.f32.mxu0 0.0
    %4387 = vmatmul.mubr.f32.gmra.mxu0 %v4317
    %v4388 = vpop.f32.mrf.mxu0
    %v4389 = vadd.f32 %v2120, %v4388
    %v4390 = vpop.f32.mrf.mxu0
    %4391 = vmatprep.mubr.f32.mxu0 0.0
    %4392 = vmatmul.mubr.f32.gmra.mxu0 %v4320
    %v4393 = vpop.f32.mrf.mxu0
    %v4394 = vadd.f32 %v2120, %v4393
    %v4395 = vpop.f32.mrf.mxu0
    %4396 = vdwg.mxu0
    %v4397 = vmul.f32 %v3945, 0.5
    %v4398 = vmul.f32 %v3946, 0.5
    %v4399 = vadd.f32 %v3919, %v4397
    %v4400 = vadd.f32 %v3920, %v4398
    %v4401 = vadd.f32 %v4399, %v4389
    %v4402 = vadd.f32 %v4400, %v4394
    %4405 = vrot.lane.b32.xlu0 %v4389, 125
    %v4406 = vpop.permute.xlu0 %4405
    %4407 = vrot.lane.b32.xlu0 %v4394, 125
    %v4408 = vpop.permute.xlu0 %4407
    %v4411 = vadd.f32 %v4389, %v4406
    %v4412 = vadd.f32 %v4394, %v4408
    %v4413 = vmul.f32 %v4411, 0.5
    %v4414 = vmul.f32 %v4412, 0.5
    %v4415 = vsub.f32 %v4389, %v4406
    %v4416 = vsub.f32 %v4394, %v4408
    %v4417 = vmul.f32 %v4415, 0.5
    %v4418 = vmul.f32 %v4416, 0.5
    %v4419 = vmul.f32 %v4417, %v4417
    %v4420 = vmul.f32 %v4418, %v4418
    %4421 = vrot.lane.b32.xlu0 %v4389, 127
    %v4422 = vpop.permute.xlu0 %4421
    %4423 = vrot.lane.b32.xlu0 %v4394, 127
    %v4424 = vpop.permute.xlu0 %4423
    %v4427 = vmul.f32 %v4389, %v4422
    %v4428 = vmul.f32 %v4394, %v4424
    %4431 = vrot.lane.b32.xlu0 %v4427, 127
    %v4432 = vpop.permute.xlu0 %4431
    %4433 = vrot.lane.b32.xlu0 %v4428, 127
    %v4434 = vpop.permute.xlu0 %4433
    %v4437 = vadd.f32 %v4419, %v4432
    %v4438 = vadd.f32 %v4420, %v4434
    %v4439 = vmul.f32 %v4437, 0.00024414063
    %v4440 = vmul.f32 %v4438, 0.00024414063
    %v4441 = vmul.f32 %v4439, 2.4801588e-05
    %v4442 = vmul.f32 %v4440, 2.4801588e-05
    %v4443 = vadd.f32 %v4441, 0.0013888889
    %v4444 = vadd.f32 %v4442, 0.0013888889
    %v4445 = vmul.f32 %v4439, %v4443
    %v4446 = vmul.f32 %v4440, %v4444
    %v4447 = vadd.f32 %v4445, 0.041666668
    %v4448 = vadd.f32 %v4446, 0.041666668
    %v4449 = vmul.f32 %v4439, %v4447
    %v4450 = vmul.f32 %v4440, %v4448
    %v4451 = vadd.f32 %v4449, 0.5
    %v4452 = vadd.f32 %v4450, 0.5
    %v4453 = vmul.f32 %v4439, %v4451
    %v4454 = vmul.f32 %v4440, %v4452
    %v4455 = vadd.f32 %v4453, 1.0
    %v4456 = vadd.f32 %v4454, 1.0
    %v4457 = vmul.f32 %v4439, 2.7557319e-06
    %v4458 = vmul.f32 %v4440, 2.7557319e-06
    %v4459 = vadd.f32 %v4457, 0.0001984127
    %v4460 = vadd.f32 %v4458, 0.0001984127
    %v4461 = vmul.f32 %v4439, %v4459
    %v4462 = vmul.f32 %v4440, %v4460
    %v4463 = vadd.f32 %v4461, 0.008333334
    %v4464 = vadd.f32 %v4462, 0.008333334
    %v4465 = vmul.f32 %v4439, %v4463
    %v4466 = vmul.f32 %v4440, %v4464
    %v4467 = vadd.f32 %v4465, 0.16666667
    %v4468 = vadd.f32 %v4466, 0.16666667
    %v4469 = vmul.f32 %v4439, %v4467
    %v4470 = vmul.f32 %v4440, %v4468
    %v4471 = vadd.f32 %v4469, 1.0
    %v4472 = vadd.f32 %v4470, 1.0
    %v4473 = vmul.f32 %v4471, %v4455
    %v4474 = vmul.f32 %v4472, %v4456
    %v4475 = vmul.f32 %v4455, 2.0
    %v4476 = vmul.f32 %v4456, 2.0
    %v4477 = vmul.f32 %v4475, %v4455
    %v4478 = vmul.f32 %v4476, %v4456
    %v4479 = vsub.f32 %v4477, 1.0
    %v4480 = vsub.f32 %v4478, 1.0
    %v4481 = vmul.f32 %v4473, %v4479
    %v4482 = vmul.f32 %v4474, %v4480
    %v4483 = vmul.f32 %v4479, 2.0
    %v4484 = vmul.f32 %v4480, 2.0
    %v4485 = vmul.f32 %v4483, %v4479
    %v4486 = vmul.f32 %v4484, %v4480
    %v4487 = vsub.f32 %v4485, 1.0
    %v4488 = vsub.f32 %v4486, 1.0
    %v4489 = vmul.f32 %v4481, %v4487
    %v4490 = vmul.f32 %v4482, %v4488
    %v4491 = vmul.f32 %v4487, 2.0
    %v4492 = vmul.f32 %v4488, 2.0
    %v4493 = vmul.f32 %v4491, %v4487
    %v4494 = vmul.f32 %v4492, %v4488
    %v4495 = vsub.f32 %v4493, 1.0
    %v4496 = vsub.f32 %v4494, 1.0
    %v4497 = vmul.f32 %v4489, %v4495
    %v4498 = vmul.f32 %v4490, %v4496
    %v4499 = vmul.f32 %v4495, 2.0
    %v4500 = vmul.f32 %v4496, 2.0
    %v4501 = vmul.f32 %v4499, %v4495
    %v4502 = vmul.f32 %v4500, %v4496
    %v4503 = vsub.f32 %v4501, 1.0
    %v4504 = vsub.f32 %v4502, 1.0
    %v4505 = vmul.f32 %v4497, %v4503
    %v4506 = vmul.f32 %v4498, %v4504
    %v4507 = vmul.f32 %v4503, 2.0
    %v4508 = vmul.f32 %v4504, 2.0
    %v4509 = vmul.f32 %v4507, %v4503
    %v4510 = vmul.f32 %v4508, %v4504
    %v4511 = vsub.f32 %v4509, 1.0
    %v4512 = vsub.f32 %v4510, 1.0
    %v4513 = vmul.f32 %v4505, %v4511
    %v4514 = vmul.f32 %v4506, %v4512
    %v4515 = vmul.f32 %v4511, 2.0
    %v4516 = vmul.f32 %v4512, 2.0
    %v4517 = vmul.f32 %v4515, %v4511
    %v4518 = vmul.f32 %v4516, %v4512
    %v4519 = vsub.f32 %v4517, 1.0
    %v4520 = vsub.f32 %v4518, 1.0
    %v4521 = vmul.f32 %v4413, 1.442695
    %v4522 = vpow.pop %v4521
    %v4523 = vmul.f32 %v4414, 1.442695
    %v4524 = vpow.pop %v4523
    %v4525 = vmul.f32 %v4513, %v4417
    %v4526 = vmul.f32 %v4514, %v4418
    %v4527 = vadd.f32 %v4519, %v4525
    %v4528 = vadd.f32 %v4520, %v4526
    %v4529 = vmul.f32 %v4522, %v4527
    %v4530 = vmul.f32 %v4524, %v4528
    %v4531 = vmul.f32 %v4513, %v4422
    %v4532 = vmul.f32 %v4514, %v4424
    %v4533 = vmul.f32 %v4522, %v4531
    %v4534 = vmul.f32 %v4524, %v4532
    %4535 = vrot.lane.b32.xlu0 %v4389, 126
    %v4536 = vpop.permute.xlu0 %4535
    %4537 = vrot.lane.b32.xlu0 %v4394, 126
    %v4538 = vpop.permute.xlu0 %4537
    %v4541 = vmul.f32 %v4513, %v4536
    %v4542 = vmul.f32 %v4514, %v4538
    %v4543 = vmul.f32 %v4522, %v4541
    %v4544 = vmul.f32 %v4524, %v4542
    %v4545 = vsub.f32 %v4519, %v4525
    %v4546 = vsub.f32 %v4520, %v4526
    %v4547 = vmul.f32 %v4522, %v4545
    %v4548 = vmul.f32 %v4524, %v4546
    %4549 = vrot.lane.b32.xlu0 %v1737, 124
    %v4550 = vpop.permute.xlu0 %4549
    %4551 = vrot.lane.b32.xlu0 %v1738, 124
    %v4552 = vpop.permute.xlu0 %4551
    %v4555 = vmul.f32 %v4529, %v4550
    %v4556 = vmul.f32 %v4530, %v4552
    %4559 = vrot.lane.b32.xlu0 %v4555, 126
    %v4560 = vpop.permute.xlu0 %4559
    %4561 = vrot.lane.b32.xlu0 %v4556, 126
    %v4562 = vpop.permute.xlu0 %4561
    %v4565 = vadd.f32 %v4401, %v4560
    %v4566 = vadd.f32 %v4402, %v4562
    %4567 = vrot.lane.b32.xlu0 %v1737, 123
    %v4568 = vpop.permute.xlu0 %4567
    %4569 = vrot.lane.b32.xlu0 %v1738, 123
    %v4570 = vpop.permute.xlu0 %4569
    %v4573 = vmul.f32 %v4533, %v4568
    %v4574 = vmul.f32 %v4534, %v4570
    %4577 = vrot.lane.b32.xlu0 %v4573, 126
    %v4578 = vpop.permute.xlu0 %4577
    %4579 = vrot.lane.b32.xlu0 %v4574, 126
    %v4580 = vpop.permute.xlu0 %4579
    %v4583 = vadd.f32 %v4565, %v4578
    %v4584 = vadd.f32 %v4566, %v4580
    %v4585 = vmul.f32 %v4543, %v4550
    %v4586 = vmul.f32 %v4544, %v4552
    %4589 = vrot.lane.b32.xlu0 %v4585, 127
    %v4590 = vpop.permute.xlu0 %4589
    %4591 = vrot.lane.b32.xlu0 %v4586, 127
    %v4592 = vpop.permute.xlu0 %4591
    %v4595 = vadd.f32 %v4401, %v4590
    %v4596 = vadd.f32 %v4402, %v4592
    %v4597 = vmul.f32 %v4547, %v4568
    %v4598 = vmul.f32 %v4548, %v4570
    %4601 = vrot.lane.b32.xlu0 %v4597, 127
    %v4602 = vpop.permute.xlu0 %4601
    %4603 = vrot.lane.b32.xlu0 %v4598, 127
    %v4604 = vpop.permute.xlu0 %4603
    %v4607 = vadd.f32 %v4595, %v4602
    %v4608 = vadd.f32 %v4596, %v4604
    %4611 = vrot.lane.b32.xlu0 %v4401, 2
    %v4612 = vpop.permute.xlu0 %4611
    %4613 = vrot.lane.b32.xlu0 %v4402, 2
    %v4614 = vpop.permute.xlu0 %4613
    %4619 = vrot.lane.b32.xlu0 %v4529, 2
    %v4620 = vpop.permute.xlu0 %4619
    %4621 = vrot.lane.b32.xlu0 %v4530, 2
    %v4622 = vpop.permute.xlu0 %4621
    %4627 = vrot.lane.b32.xlu0 %v4533, 3
    %v4628 = vpop.permute.xlu0 %4627
    %4629 = vrot.lane.b32.xlu0 %v4534, 3
    %v4630 = vpop.permute.xlu0 %4629
    %4635 = vrot.lane.b32.xlu0 %v4543, 4
    %v4636 = vpop.permute.xlu0 %4635
    %4637 = vrot.lane.b32.xlu0 %v4544, 4
    %v4638 = vpop.permute.xlu0 %4637
    %4643 = vrot.lane.b32.xlu0 %v4547, 5
    %v4644 = vpop.permute.xlu0 %4643
    %4645 = vrot.lane.b32.xlu0 %v4548, 5
    %v4646 = vpop.permute.xlu0 %4645
    %v4649 = vsel %vm2464, %v4583, %v4607
    %v4650 = vsel %vm2464, %v4584, %v4608
    %v4651 = vsel %vm1739, %v4649, %v4612
    %v4652 = vsel %vm1739, %v4650, %v4614
    %v4653 = vsel %vm2469, %v4651, %v4612
    %v4654 = vsel %vm2469, %v4652, %v4614
    %v4655 = vsel %vm1132, %v4653, %v4620
    %v4656 = vsel %vm1132, %v4654, %v4622
    %v4657 = vsel %vm2474, %v4655, %v4628
    %v4658 = vsel %vm2474, %v4656, %v4630
    %v4659 = vsel %vm1744, %v4657, %v4636
    %v4660 = vsel %vm1744, %v4658, %v4638
    %v4661 = vsel %vm2479, %v4659, %v4644
    %v4662 = vsel %vm2479, %v4660, %v4646
    %4665 = vrot.lane.b32.xlu0 %v4661, 24
    %v4666 = vpop.permute.xlu0 %4665
    %4667 = vrot.lane.b32.xlu0 %v4662, 24
    %v4668 = vpop.permute.xlu0 %4667
    %vm4671 = vcmask 261312
    %4672 = vst.msk [vmem:[#allocation4] sm:$0xff] %vm4671, %v4666
    %vm4673 = vcmask 257216
    %4674 = vst.msk [vmem:[#allocation4 + $0x8] sm:$0xf] %vm4673, %v4668
    %v4675 = vsub.f32 %v4649, %v3919
    %v4676 = vsub.f32 %v4650, %v3920
    %4679 = vrot.lane.b32.xlu0 %v4649, 8
    %v4680 = vpop.permute.xlu0 %4679
    %4681 = vrot.lane.b32.xlu0 %v4650, 8
    %v4682 = vpop.permute.xlu0 %4681
    %4685 = vrot.lane.b32.xlu0 %v4116, 112
    %v4686 = vpop.permute.xlu0 %4685
    %4687 = vrot.lane.b32.xlu0 %v4117, 112
    %v4688 = vpop.permute.xlu0 %4687
    %v4691 = vsel %vm1747, %v3961, %v4680
    %v4692 = vsel %vm1747, %v3962, %v4682
    %v4693 = vsel %vm1750, %v4691, 0.0
    %v4694 = vsel %vm1750, %v4692, 0.0
    %v4695 = vsel %vm1753, %v4693, 0.0
    %v4696 = vsel %vm1753, %v4694, 0.0
    %v4697 = vsel %vm1756, %v4695, %v4686
    %v4698 = vsel %vm1756, %v4696, %v4688
    %v4699 = vld [vmem:[%s8] sm:$0xff]
    %v4700 = vld [vmem:[%s8 + $0x8] sm:$0xff]
    %v4701 = vld [vmem:[%s8 + $0x10] sm:$0xff]
    %v4702 = vld [vmem:[%s8 + $0x18] sm:$0xff]
    %v4703 = vld [vmem:[%s8 + $0x20] sm:$0xff]
    %v4704 = vld [vmem:[%s8 + $0x28] sm:$0xff]
    %v4705 = vld [vmem:[%s8 + $0x30] sm:$0xff]
    %v4706 = vld [vmem:[%s8 + $0x38] sm:$0xff]
    %v4707 = vld [vmem:[%s8 + $0x40] sm:$0xff]
    %v4708 = vld [vmem:[%s8 + $0x48] sm:$0xff]
    %v4709 = vld [vmem:[%s8 + $0x50] sm:$0xff]
    %v4710 = vld [vmem:[%s8 + $0x58] sm:$0xff]
    %v4712 = vsel %vm1771, %v4697, 0
    %v4715 = vsel %vm1771, %v4698, 0
    %4717 = vmatprep.subr.mxu0 0.0
    %4718 = vmatpush1.msra.mxu0 0.0
    %4719 = vmatprep.subr.mxu0 0.0
    %4720 = vmatpush1.msra.mxu0 0.0
    %4721 = vmatprep.subr.mxu0 0.0
    %4722 = vmatpush1.msra.mxu0 0.0
    %4723 = vmatprep.subr.mxu0 0.0
    %4724 = vmatpush1.msra.mxu0 0.0
    %4725 = vmatprep.subr.mxu0 0.0
    %4726 = vmatpush1.msra.mxu0 0.0
    %4727 = vmatprep.subr.mxu0 0.0
    %4728 = vmatpush1.msra.mxu0 0.0
    %4729 = vmatprep.subr.mxu0 0.0
    %4730 = vmatpush1.msra.mxu0 0.0
    %4731 = vmatprep.subr.mxu0 0.0
    %4732 = vmatpush1.msra.mxu0 0.0
    %4733 = vmatprep.subr.mxu0 0.0
    %4734 = vmatpush1.msra.mxu0 0.0
    %4735 = vmatprep.subr.mxu0 0.0
    %4736 = vmatpush1.msra.mxu0 0.0
    %4737 = vmatprep.subr.mxu0 %v4710
    %4738 = vmatpush1.msra.mxu0 %v4709
    %4739 = vmatprep.subr.mxu0 %v4708
    %4740 = vmatpush1.msra.mxu0 %v4707
    %4741 = vmatprep.subr.mxu0 %v4706
    %4742 = vmatpush1.msra.mxu0 %v4705
    %4743 = vmatprep.subr.mxu0 %v4704
    %4744 = vmatpush1.msra.mxu0 %v4703
    %4745 = vmatprep.subr.mxu0 %v4702
    %4746 = vmatpush1.msra.mxu0 %v4701
    %4747 = vmatprep.subr.mxu0 %v4700
    %4748 = vmatpush1.msra.mxu0 %v4699
    %4749 = vmatprep.subr.mxu0 0.0
    %4750 = vmatpush2.msra.mxu0 0.0
    %4751 = vmatprep.subr.mxu0 0.0
    %4752 = vmatpush2.msra.mxu0 0.0
    %4753 = vmatprep.subr.mxu0 0.0
    %4754 = vmatpush2.msra.mxu0 0.0
    %4755 = vmatprep.subr.mxu0 0.0
    %4756 = vmatpush2.msra.mxu0 0.0
    %4757 = vmatprep.subr.mxu0 0.0
    %4758 = vmatpush2.msra.mxu0 0.0
    %4759 = vmatprep.subr.mxu0 0.0
    %4760 = vmatpush2.msra.mxu0 0.0
    %4761 = vmatprep.subr.mxu0 0.0
    %4762 = vmatpush2.msra.mxu0 0.0
    %4763 = vmatprep.subr.mxu0 0.0
    %4764 = vmatpush2.msra.mxu0 0.0
    %4765 = vmatprep.subr.mxu0 0.0
    %4766 = vmatpush2.msra.mxu0 0.0
    %4767 = vmatprep.subr.mxu0 0.0
    %4768 = vmatpush2.msra.mxu0 0.0
    %4769 = vmatprep.subr.mxu0 0.0
    %4770 = vmatpush2.msra.mxu0 0.0
    %4771 = vmatprep.subr.mxu0 0.0
    %4772 = vmatpush2.msra.mxu0 0.0
    %4773 = vmatprep.subr.mxu0 0.0
    %4774 = vmatpush2.msra.mxu0 0.0
    %4775 = vmatprep.subr.mxu0 0.0
    %4776 = vmatpush2.msra.mxu0 0.0
    %4777 = vmatprep.subr.mxu0 0.0
    %4778 = vmatpush2.msra.mxu0 0.0
    %4779 = vmatprep.subr.mxu0 0.0
    %4780 = vmatpush2.msra.mxu0 0.0
    %4781 = vmatprep.mubr.f32.mxu0 0.0
    %4782 = vmatmul.mubr.f32.gmra.mxu0 %v4712
    %v4783 = vpop.f32.mrf.mxu0
    %v4784 = vadd.f32 0.0, %v4783
    %v4785 = vpop.f32.mrf.mxu0
    %v4786 = vadd.f32 0.0, %v4785
    %4787 = vmatprep.mubr.f32.mxu0 0.0
    %4788 = vmatmul.mubr.f32.gmra.mxu0 %v4715
    %v4789 = vpop.f32.mrf.mxu0
    %v4790 = vadd.f32 0.0, %v4789
    %v4791 = vpop.f32.mrf.mxu0
    %v4792 = vadd.f32 0.0, %v4791
    %4793 = vdwg.mxu0
    %v4794 = vadd.f32 %v4784, %v1858
    %v4795 = vadd.f32 %v4790, %v1858
    %v4796 = vadd.f32 %v4786, %v1864
    %v4797 = vadd.f32 %v4792, %v1864
    %v4798 = vadd.f32 %v4794, %v4796
    %v4799 = vadd.f32 %v4795, %v4797
    %v4800 = vmul.f32 %v4798, 0.5
    %v4801 = vmul.f32 %v4799, 0.5
    %v4802 = vtanh.pop %v4800
    %v4803 = vtanh.pop %v4801
    %v4804 = vadd.f32 %v4802, 1.0
    %v4805 = vadd.f32 %v4803, 1.0
    %v4806 = vmul.f32 %v4804, 0.5
    %v4807 = vmul.f32 %v4805, 0.5
    %4810 = vrot.lane.b32.xlu0 %v4796, 64
    %v4811 = vpop.permute.xlu0 %4810
    %4812 = vrot.lane.b32.xlu0 %v4797, 64
    %v4813 = vpop.permute.xlu0 %4812
    %v4816 = vmul.f32 %v4806, %v4811
    %v4817 = vmul.f32 %v4807, %v4813
    %4820 = vrot.lane.b32.xlu0 %v4816, 64
    %v4821 = vpop.permute.xlu0 %4820
    %4822 = vrot.lane.b32.xlu0 %v4817, 64
    %v4823 = vpop.permute.xlu0 %4822
    %v4826 = vadd.f32 %v4794, %v4821
    %v4827 = vadd.f32 %v4795, %v4823
    %v4828 = vtanh.pop %v4826
    %v4829 = vtanh.pop %v4827
    %v4830 = vsub.f32 1.0, %v4806
    %v4831 = vsub.f32 1.0, %v4807
    %4834 = vrot.lane.b32.xlu0 %v4828, 96
    %v4835 = vpop.permute.xlu0 %4834
    %4836 = vrot.lane.b32.xlu0 %v4829, 96
    %v4837 = vpop.permute.xlu0 %4836
    %v4840 = vmul.f32 %v4830, %v4835
    %v4841 = vmul.f32 %v4831, %v4837
    %v4842 = vmul.f32 %v4806, %v4116
    %v4843 = vmul.f32 %v4807, %v4117
    %v4844 = vadd.f32 %v4840, %v4842
    %v4845 = vadd.f32 %v4841, %v4843
    %4848 = vrot.lane.b32.xlu0 %v4844, 96
    %v4849 = vpop.permute.xlu0 %4848
    %4850 = vrot.lane.b32.xlu0 %v4845, 96
    %v4851 = vpop.permute.xlu0 %4850
    %v4852 = vsel %vm51, %v4849, 0
    %v4854 = vsel %vm51, %v4851, 0
    %4856 = vmatprep.subr.mxu0 0.0
    %4857 = vmatpush1.msra.mxu0 0.0
    %4858 = vmatprep.subr.mxu0 0.0
    %4859 = vmatpush1.msra.mxu0 0.0
    %4860 = vmatprep.subr.mxu0 0.0
    %4861 = vmatpush1.msra.mxu0 0.0
    %4862 = vmatprep.subr.mxu0 0.0
    %4863 = vmatpush1.msra.mxu0 0.0
    %4864 = vmatprep.subr.mxu0 0.0
    %4865 = vmatpush1.msra.mxu0 0.0
    %4866 = vmatprep.subr.mxu0 0.0
    %4867 = vmatpush1.msra.mxu0 0.0
    %4868 = vmatprep.subr.mxu0 0.0
    %4869 = vmatpush1.msra.mxu0 0.0
    %4870 = vmatprep.subr.mxu0 0.0
    %4871 = vmatpush1.msra.mxu0 0.0
    %4872 = vmatprep.subr.mxu0 0.0
    %4873 = vmatpush1.msra.mxu0 0.0
    %4874 = vmatprep.subr.mxu0 0.0
    %4875 = vmatpush1.msra.mxu0 0.0
    %4876 = vmatprep.subr.mxu0 0.0
    %4877 = vmatpush1.msra.mxu0 0.0
    %4878 = vmatprep.subr.mxu0 0.0
    %4879 = vmatpush1.msra.mxu0 0.0
    %4880 = vmatprep.subr.mxu0 0.0
    %4881 = vmatpush1.msra.mxu0 %v1728
    %4882 = vmatprep.subr.mxu0 0.0
    %4883 = vmatpush1.msra.mxu0 %v1727
    %4884 = vmatprep.subr.mxu0 0.0
    %4885 = vmatpush1.msra.mxu0 %v1726
    %4886 = vmatprep.subr.mxu0 0.0
    %4887 = vmatpush1.msra.mxu0 %v1725
    %4888 = vmatprep.subr.mxu0 0.0
    %4889 = vmatpush2.msra.mxu0 0.0
    %4890 = vmatprep.subr.mxu0 0.0
    %4891 = vmatpush2.msra.mxu0 0.0
    %4892 = vmatprep.subr.mxu0 0.0
    %4893 = vmatpush2.msra.mxu0 0.0
    %4894 = vmatprep.subr.mxu0 0.0
    %4895 = vmatpush2.msra.mxu0 0.0
    %4896 = vmatprep.subr.mxu0 0.0
    %4897 = vmatpush2.msra.mxu0 0.0
    %4898 = vmatprep.subr.mxu0 0.0
    %4899 = vmatpush2.msra.mxu0 0.0
    %4900 = vmatprep.subr.mxu0 0.0
    %4901 = vmatpush2.msra.mxu0 0.0
    %4902 = vmatprep.subr.mxu0 0.0
    %4903 = vmatpush2.msra.mxu0 0.0
    %4904 = vmatprep.subr.mxu0 0.0
    %4905 = vmatpush2.msra.mxu0 0.0
    %4906 = vmatprep.subr.mxu0 0.0
    %4907 = vmatpush2.msra.mxu0 0.0
    %4908 = vmatprep.subr.mxu0 0.0
    %4909 = vmatpush2.msra.mxu0 0.0
    %4910 = vmatprep.subr.mxu0 0.0
    %4911 = vmatpush2.msra.mxu0 0.0
    %4912 = vmatprep.subr.mxu0 0.0
    %4913 = vmatpush2.msra.mxu0 0.0
    %4914 = vmatprep.subr.mxu0 0.0
    %4915 = vmatpush2.msra.mxu0 0.0
    %4916 = vmatprep.subr.mxu0 0.0
    %4917 = vmatpush2.msra.mxu0 0.0
    %4918 = vmatprep.subr.mxu0 0.0
    %4919 = vmatpush2.msra.mxu0 0.0
    %4920 = vmatprep.mubr.f32.mxu0 0.0
    %4921 = vmatmul.mubr.f32.gmra.mxu0 %v4852
    %v4922 = vpop.f32.mrf.mxu0
    %v4923 = vadd.f32 %v1636, %v4922
    %v4924 = vpop.f32.mrf.mxu0
    %4925 = vmatprep.mubr.f32.mxu0 0.0
    %4926 = vmatmul.mubr.f32.gmra.mxu0 %v4854
    %v4927 = vpop.f32.mrf.mxu0
    %v4928 = vadd.f32 %v1641, %v4927
    %v4929 = vpop.f32.mrf.mxu0
    %4930 = vdwg.mxu0
    %vm4931 = vcmp.gt.f32.partialorder %v4923, 20.0
    %vm4932 = vcmp.gt.f32.partialorder %v4928, 20.0
    %v4933 = vmin.f32 %v4923, 20.0
    %v4934 = vmin.f32 %v4928, 20.0
    %v4935 = vmul.f32 %v4933, 1.442695
    %v4936 = vpow.pop %v4935
    %v4937 = vmul.f32 %v4934, 1.442695
    %v4938 = vpow.pop %v4937
    %v4939 = vadd.f32 %v4936, 1.0
    %v4940 = vadd.f32 %v4938, 1.0
    %v4941 = vlog2.pop %v4939
    %v4942 = vmul.f32 %v4941, 0.6931472
    %v4943 = vlog2.pop %v4940
    %v4944 = vmul.f32 %v4943, 0.6931472
    %v4945 = vsel %vm4931, %v4923, %v4942
    %v4946 = vsel %vm4932, %v4928, %v4944
    %v4948 = vsel %vm51, %v4945, 0
    %v4951 = vsel %vm51, %v4946, 0
    %4953 = vmatprep.subr.mxu0 0.0
    %4954 = vmatpush1.msra.mxu0 0.0
    %4955 = vmatprep.subr.mxu0 0.0
    %4956 = vmatpush1.msra.mxu0 0.0
    %4957 = vmatprep.subr.mxu0 0.0
    %4958 = vmatpush1.msra.mxu0 0.0
    %4959 = vmatprep.subr.mxu0 0.0
    %4960 = vmatpush1.msra.mxu0 0.0
    %4961 = vmatprep.subr.mxu0 0.0
    %4962 = vmatpush1.msra.mxu0 0.0
    %4963 = vmatprep.subr.mxu0 0.0
    %4964 = vmatpush1.msra.mxu0 0.0
    %4965 = vmatprep.subr.mxu0 0.0
    %4966 = vmatpush1.msra.mxu0 0.0
    %4967 = vmatprep.subr.mxu0 0.0
    %4968 = vmatpush1.msra.mxu0 0.0
    %4969 = vmatprep.subr.mxu0 0.0
    %4970 = vmatpush1.msra.mxu0 0.0
    %4971 = vmatprep.subr.mxu0 0.0
    %4972 = vmatpush1.msra.mxu0 0.0
    %4973 = vmatprep.subr.mxu0 0.0
    %4974 = vmatpush1.msra.mxu0 0.0
    %4975 = vmatprep.subr.mxu0 0.0
    %4976 = vmatpush1.msra.mxu0 0.0
    %4977 = vmatprep.subr.mxu0 0.0
    %4978 = vmatpush1.msra.mxu0 %v1732
    %4979 = vmatprep.subr.mxu0 0.0
    %4980 = vmatpush1.msra.mxu0 %v1731
    %4981 = vmatprep.subr.mxu0 0.0
    %4982 = vmatpush1.msra.mxu0 %v1730
    %4983 = vmatprep.subr.mxu0 0.0
    %4984 = vmatpush1.msra.mxu0 %v1729
    %4985 = vmatprep.subr.mxu0 0.0
    %4986 = vmatpush2.msra.mxu0 0.0
    %4987 = vmatprep.subr.mxu0 0.0
    %4988 = vmatpush2.msra.mxu0 0.0
    %4989 = vmatprep.subr.mxu0 0.0
    %4990 = vmatpush2.msra.mxu0 0.0
    %4991 = vmatprep.subr.mxu0 0.0
    %4992 = vmatpush2.msra.mxu0 0.0
    %4993 = vmatprep.subr.mxu0 0.0
    %4994 = vmatpush2.msra.mxu0 0.0
    %4995 = vmatprep.subr.mxu0 0.0
    %4996 = vmatpush2.msra.mxu0 0.0
    %4997 = vmatprep.subr.mxu0 0.0
    %4998 = vmatpush2.msra.mxu0 0.0
    %4999 = vmatprep.subr.mxu0 0.0
    %5000 = vmatpush2.msra.mxu0 0.0
    %5001 = vmatprep.subr.mxu0 0.0
    %5002 = vmatpush2.msra.mxu0 0.0
    %5003 = vmatprep.subr.mxu0 0.0
    %5004 = vmatpush2.msra.mxu0 0.0
    %5005 = vmatprep.subr.mxu0 0.0
    %5006 = vmatpush2.msra.mxu0 0.0
    %5007 = vmatprep.subr.mxu0 0.0
    %5008 = vmatpush2.msra.mxu0 0.0
    %5009 = vmatprep.subr.mxu0 0.0
    %5010 = vmatpush2.msra.mxu0 0.0
    %5011 = vmatprep.subr.mxu0 0.0
    %5012 = vmatpush2.msra.mxu0 0.0
    %5013 = vmatprep.subr.mxu0 0.0
    %5014 = vmatpush2.msra.mxu0 0.0
    %5015 = vmatprep.subr.mxu0 0.0
    %5016 = vmatpush2.msra.mxu0 0.0
    %5017 = vmatprep.mubr.f32.mxu0 0.0
    %5018 = vmatmul.mubr.f32.gmra.mxu0 %v4948
    %v5019 = vpop.f32.mrf.mxu0
    %v5020 = vadd.f32 %v2019, %v5019
    %v5021 = vpop.f32.mrf.mxu0
    %5022 = vmatprep.mubr.f32.mxu0 0.0
    %5023 = vmatmul.mubr.f32.gmra.mxu0 %v4951
    %v5024 = vpop.f32.mrf.mxu0
    %v5025 = vadd.f32 %v2019, %v5024
    %v5026 = vpop.f32.mrf.mxu0
    %5027 = vdwg.mxu0
    %vm5028 = vcmp.gt.f32.partialorder %v5020, 20.0
    %vm5029 = vcmp.gt.f32.partialorder %v5025, 20.0
    %v5030 = vmin.f32 %v5020, 20.0
    %v5031 = vmin.f32 %v5025, 20.0
    %v5032 = vmul.f32 %v5030, 1.442695
    %v5033 = vpow.pop %v5032
    %v5034 = vmul.f32 %v5031, 1.442695
    %v5035 = vpow.pop %v5034
    %v5036 = vadd.f32 %v5033, 1.0
    %v5037 = vadd.f32 %v5035, 1.0
    %v5038 = vlog2.pop %v5036
    %v5039 = vmul.f32 %v5038, 0.6931472
    %v5040 = vlog2.pop %v5037
    %v5041 = vmul.f32 %v5040, 0.6931472
    %v5042 = vsel %vm5028, %v5020, %v5039
    %v5043 = vsel %vm5029, %v5025, %v5041
    %v5045 = vsel %vm51, %v5042, 0
    %v5048 = vsel %vm51, %v5043, 0
    %5050 = vmatprep.subr.mxu0 0.0
    %5051 = vmatpush1.msra.mxu0 0.0
    %5052 = vmatprep.subr.mxu0 0.0
    %5053 = vmatpush1.msra.mxu0 0.0
    %5054 = vmatprep.subr.mxu0 0.0
    %5055 = vmatpush1.msra.mxu0 0.0
    %5056 = vmatprep.subr.mxu0 0.0
    %5057 = vmatpush1.msra.mxu0 0.0
    %5058 = vmatprep.subr.mxu0 0.0
    %5059 = vmatpush1.msra.mxu0 0.0
    %5060 = vmatprep.subr.mxu0 0.0
    %5061 = vmatpush1.msra.mxu0 0.0
    %5062 = vmatprep.subr.mxu0 0.0
    %5063 = vmatpush1.msra.mxu0 0.0
    %5064 = vmatprep.subr.mxu0 0.0
    %5065 = vmatpush1.msra.mxu0 0.0
    %5066 = vmatprep.subr.mxu0 0.0
    %5067 = vmatpush1.msra.mxu0 0.0
    %5068 = vmatprep.subr.mxu0 0.0
    %5069 = vmatpush1.msra.mxu0 0.0
    %5070 = vmatprep.subr.mxu0 0.0
    %5071 = vmatpush1.msra.mxu0 0.0
    %5072 = vmatprep.subr.mxu0 0.0
    %5073 = vmatpush1.msra.mxu0 0.0
    %5074 = vmatprep.subr.mxu0 0.0
    %5075 = vmatpush1.msra.mxu0 %v1736
    %5076 = vmatprep.subr.mxu0 0.0
    %5077 = vmatpush1.msra.mxu0 %v1735
    %5078 = vmatprep.subr.mxu0 0.0
    %5079 = vmatpush1.msra.mxu0 %v1734
    %5080 = vmatprep.subr.mxu0 0.0
    %5081 = vmatpush1.msra.mxu0 %v1733
    %5082 = vmatprep.subr.mxu0 0.0
    %5083 = vmatpush2.msra.mxu0 0.0
    %5084 = vmatprep.subr.mxu0 0.0
    %5085 = vmatpush2.msra.mxu0 0.0
    %5086 = vmatprep.subr.mxu0 0.0
    %5087 = vmatpush2.msra.mxu0 0.0
    %5088 = vmatprep.subr.mxu0 0.0
    %5089 = vmatpush2.msra.mxu0 0.0
    %5090 = vmatprep.subr.mxu0 0.0
    %5091 = vmatpush2.msra.mxu0 0.0
    %5092 = vmatprep.subr.mxu0 0.0
    %5093 = vmatpush2.msra.mxu0 0.0
    %5094 = vmatprep.subr.mxu0 0.0
    %5095 = vmatpush2.msra.mxu0 0.0
    %5096 = vmatprep.subr.mxu0 0.0
    %5097 = vmatpush2.msra.mxu0 0.0
    %5098 = vmatprep.subr.mxu0 0.0
    %5099 = vmatpush2.msra.mxu0 0.0
    %5100 = vmatprep.subr.mxu0 0.0
    %5101 = vmatpush2.msra.mxu0 0.0
    %5102 = vmatprep.subr.mxu0 0.0
    %5103 = vmatpush2.msra.mxu0 0.0
    %5104 = vmatprep.subr.mxu0 0.0
    %5105 = vmatpush2.msra.mxu0 0.0
    %5106 = vmatprep.subr.mxu0 0.0
    %5107 = vmatpush2.msra.mxu0 0.0
    %5108 = vmatprep.subr.mxu0 0.0
    %5109 = vmatpush2.msra.mxu0 0.0
    %5110 = vmatprep.subr.mxu0 0.0
    %5111 = vmatpush2.msra.mxu0 0.0
    %5112 = vmatprep.subr.mxu0 0.0
    %5113 = vmatpush2.msra.mxu0 0.0
    %5114 = vmatprep.mubr.f32.mxu0 0.0
    %5115 = vmatmul.mubr.f32.gmra.mxu0 %v5045
    %v5116 = vpop.f32.mrf.mxu0
    %v5117 = vadd.f32 %v2120, %v5116
    %v5118 = vpop.f32.mrf.mxu0
    %5119 = vmatprep.mubr.f32.mxu0 0.0
    %5120 = vmatmul.mubr.f32.gmra.mxu0 %v5048
    %v5121 = vpop.f32.mrf.mxu0
    %v5122 = vadd.f32 %v2120, %v5121
    %v5123 = vpop.f32.mrf.mxu0
    %5124 = vdwg.mxu0
    %v5125 = vmul.f32 %v4675, 0.5
    %v5126 = vmul.f32 %v4676, 0.5
    %v5127 = vadd.f32 %v4649, %v5125
    %v5128 = vadd.f32 %v4650, %v5126
    %v5129 = vadd.f32 %v5127, %v5117
    %v5130 = vadd.f32 %v5128, %v5122
    %5133 = vrot.lane.b32.xlu0 %v5117, 125
    %v5134 = vpop.permute.xlu0 %5133
    %5135 = vrot.lane.b32.xlu0 %v5122, 125
    %v5136 = vpop.permute.xlu0 %5135
    %v5139 = vadd.f32 %v5117, %v5134
    %v5140 = vadd.f32 %v5122, %v5136
    %v5141 = vmul.f32 %v5139, 0.5
    %v5142 = vmul.f32 %v5140, 0.5
    %v5143 = vsub.f32 %v5117, %v5134
    %v5144 = vsub.f32 %v5122, %v5136
    %v5145 = vmul.f32 %v5143, 0.5
    %v5146 = vmul.f32 %v5144, 0.5
    %v5147 = vmul.f32 %v5145, %v5145
    %v5148 = vmul.f32 %v5146, %v5146
    %5149 = vrot.lane.b32.xlu0 %v5117, 127
    %v5150 = vpop.permute.xlu0 %5149
    %5151 = vrot.lane.b32.xlu0 %v5122, 127
    %v5152 = vpop.permute.xlu0 %5151
    %v5155 = vmul.f32 %v5117, %v5150
    %v5156 = vmul.f32 %v5122, %v5152
    %5159 = vrot.lane.b32.xlu0 %v5155, 127
    %v5160 = vpop.permute.xlu0 %5159
    %5161 = vrot.lane.b32.xlu0 %v5156, 127
    %v5162 = vpop.permute.xlu0 %5161
    %v5165 = vadd.f32 %v5147, %v5160
    %v5166 = vadd.f32 %v5148, %v5162
    %v5167 = vmul.f32 %v5165, 0.00024414063
    %v5168 = vmul.f32 %v5166, 0.00024414063
    %v5169 = vmul.f32 %v5167, 2.4801588e-05
    %v5170 = vmul.f32 %v5168, 2.4801588e-05
    %v5171 = vadd.f32 %v5169, 0.0013888889
    %v5172 = vadd.f32 %v5170, 0.0013888889
    %v5173 = vmul.f32 %v5167, %v5171
    %v5174 = vmul.f32 %v5168, %v5172
    %v5175 = vadd.f32 %v5173, 0.041666668
    %v5176 = vadd.f32 %v5174, 0.041666668
    %v5177 = vmul.f32 %v5167, %v5175
    %v5178 = vmul.f32 %v5168, %v5176
    %v5179 = vadd.f32 %v5177, 0.5
    %v5180 = vadd.f32 %v5178, 0.5
    %v5181 = vmul.f32 %v5167, %v5179
    %v5182 = vmul.f32 %v5168, %v5180
    %v5183 = vadd.f32 %v5181, 1.0
    %v5184 = vadd.f32 %v5182, 1.0
    %v5185 = vmul.f32 %v5167, 2.7557319e-06
    %v5186 = vmul.f32 %v5168, 2.7557319e-06
    %v5187 = vadd.f32 %v5185, 0.0001984127
    %v5188 = vadd.f32 %v5186, 0.0001984127
    %v5189 = vmul.f32 %v5167, %v5187
    %v5190 = vmul.f32 %v5168, %v5188
    %v5191 = vadd.f32 %v5189, 0.008333334
    %v5192 = vadd.f32 %v5190, 0.008333334
    %v5193 = vmul.f32 %v5167, %v5191
    %v5194 = vmul.f32 %v5168, %v5192
    %v5195 = vadd.f32 %v5193, 0.16666667
    %v5196 = vadd.f32 %v5194, 0.16666667
    %v5197 = vmul.f32 %v5167, %v5195
    %v5198 = vmul.f32 %v5168, %v5196
    %v5199 = vadd.f32 %v5197, 1.0
    %v5200 = vadd.f32 %v5198, 1.0
    %v5201 = vmul.f32 %v5199, %v5183
    %v5202 = vmul.f32 %v5200, %v5184
    %v5203 = vmul.f32 %v5183, 2.0
    %v5204 = vmul.f32 %v5184, 2.0
    %v5205 = vmul.f32 %v5203, %v5183
    %v5206 = vmul.f32 %v5204, %v5184
    %v5207 = vsub.f32 %v5205, 1.0
    %v5208 = vsub.f32 %v5206, 1.0
    %v5209 = vmul.f32 %v5201, %v5207
    %v5210 = vmul.f32 %v5202, %v5208
    %v5211 = vmul.f32 %v5207, 2.0
    %v5212 = vmul.f32 %v5208, 2.0
    %v5213 = vmul.f32 %v5211, %v5207
    %v5214 = vmul.f32 %v5212, %v5208
    %v5215 = vsub.f32 %v5213, 1.0
    %v5216 = vsub.f32 %v5214, 1.0
    %v5217 = vmul.f32 %v5209, %v5215
    %v5218 = vmul.f32 %v5210, %v5216
    %v5219 = vmul.f32 %v5215, 2.0
    %v5220 = vmul.f32 %v5216, 2.0
    %v5221 = vmul.f32 %v5219, %v5215
    %v5222 = vmul.f32 %v5220, %v5216
    %v5223 = vsub.f32 %v5221, 1.0
    %v5224 = vsub.f32 %v5222, 1.0
    %v5225 = vmul.f32 %v5217, %v5223
    %v5226 = vmul.f32 %v5218, %v5224
    %v5227 = vmul.f32 %v5223, 2.0
    %v5228 = vmul.f32 %v5224, 2.0
    %v5229 = vmul.f32 %v5227, %v5223
    %v5230 = vmul.f32 %v5228, %v5224
    %v5231 = vsub.f32 %v5229, 1.0
    %v5232 = vsub.f32 %v5230, 1.0
    %v5233 = vmul.f32 %v5225, %v5231
    %v5234 = vmul.f32 %v5226, %v5232
    %v5235 = vmul.f32 %v5231, 2.0
    %v5236 = vmul.f32 %v5232, 2.0
    %v5237 = vmul.f32 %v5235, %v5231
    %v5238 = vmul.f32 %v5236, %v5232
    %v5239 = vsub.f32 %v5237, 1.0
    %v5240 = vsub.f32 %v5238, 1.0
    %v5241 = vmul.f32 %v5233, %v5239
    %v5242 = vmul.f32 %v5234, %v5240
    %v5243 = vmul.f32 %v5239, 2.0
    %v5244 = vmul.f32 %v5240, 2.0
    %v5245 = vmul.f32 %v5243, %v5239
    %v5246 = vmul.f32 %v5244, %v5240
    %v5247 = vsub.f32 %v5245, 1.0
    %v5248 = vsub.f32 %v5246, 1.0
    %v5249 = vmul.f32 %v5141, 1.442695
    %v5250 = vpow.pop %v5249
    %v5251 = vmul.f32 %v5142, 1.442695
    %v5252 = vpow.pop %v5251
    %v5253 = vmul.f32 %v5241, %v5145
    %v5254 = vmul.f32 %v5242, %v5146
    %v5255 = vadd.f32 %v5247, %v5253
    %v5256 = vadd.f32 %v5248, %v5254
    %v5257 = vmul.f32 %v5250, %v5255
    %v5258 = vmul.f32 %v5252, %v5256
    %v5259 = vmul.f32 %v5241, %v5150
    %v5260 = vmul.f32 %v5242, %v5152
    %v5261 = vmul.f32 %v5250, %v5259
    %v5262 = vmul.f32 %v5252, %v5260
    %5263 = vrot.lane.b32.xlu0 %v5117, 126
    %v5264 = vpop.permute.xlu0 %5263
    %5265 = vrot.lane.b32.xlu0 %v5122, 126
    %v5266 = vpop.permute.xlu0 %5265
    %v5269 = vmul.f32 %v5241, %v5264
    %v5270 = vmul.f32 %v5242, %v5266
    %v5271 = vmul.f32 %v5250, %v5269
    %v5272 = vmul.f32 %v5252, %v5270
    %v5273 = vsub.f32 %v5247, %v5253
    %v5274 = vsub.f32 %v5248, %v5254
    %v5275 = vmul.f32 %v5250, %v5273
    %v5276 = vmul.f32 %v5252, %v5274
    %5277 = vrot.lane.b32.xlu0 %v1737, 122
    %v5278 = vpop.permute.xlu0 %5277
    %5279 = vrot.lane.b32.xlu0 %v1738, 122
    %v5280 = vpop.permute.xlu0 %5279
    %v5283 = vmul.f32 %v5257, %v5278
    %v5284 = vmul.f32 %v5258, %v5280
    %5287 = vrot.lane.b32.xlu0 %v5283, 126
    %v5288 = vpop.permute.xlu0 %5287
    %5289 = vrot.lane.b32.xlu0 %v5284, 126
    %v5290 = vpop.permute.xlu0 %5289
    %v5293 = vadd.f32 %v5129, %v5288
    %v5294 = vadd.f32 %v5130, %v5290
    %5295 = vrot.lane.b32.xlu0 %v1737, 121
    %v5296 = vpop.permute.xlu0 %5295
    %5297 = vrot.lane.b32.xlu0 %v1738, 121
    %v5298 = vpop.permute.xlu0 %5297
    %v5301 = vmul.f32 %v5261, %v5296
    %v5302 = vmul.f32 %v5262, %v5298
    %5305 = vrot.lane.b32.xlu0 %v5301, 126
    %v5306 = vpop.permute.xlu0 %5305
    %5307 = vrot.lane.b32.xlu0 %v5302, 126
    %v5308 = vpop.permute.xlu0 %5307
    %v5311 = vadd.f32 %v5293, %v5306
    %v5312 = vadd.f32 %v5294, %v5308
    %v5313 = vmul.f32 %v5271, %v5278
    %v5314 = vmul.f32 %v5272, %v5280
    %5317 = vrot.lane.b32.xlu0 %v5313, 127
    %v5318 = vpop.permute.xlu0 %5317
    %5319 = vrot.lane.b32.xlu0 %v5314, 127
    %v5320 = vpop.permute.xlu0 %5319
    %v5323 = vadd.f32 %v5129, %v5318
    %v5324 = vadd.f32 %v5130, %v5320
    %v5325 = vmul.f32 %v5275, %v5296
    %v5326 = vmul.f32 %v5276, %v5298
    %5329 = vrot.lane.b32.xlu0 %v5325, 127
    %v5330 = vpop.permute.xlu0 %5329
    %5331 = vrot.lane.b32.xlu0 %v5326, 127
    %v5332 = vpop.permute.xlu0 %5331
    %v5335 = vadd.f32 %v5323, %v5330
    %v5336 = vadd.f32 %v5324, %v5332
    %5339 = vrot.lane.b32.xlu0 %v5129, 2
    %v5340 = vpop.permute.xlu0 %5339
    %5341 = vrot.lane.b32.xlu0 %v5130, 2
    %v5342 = vpop.permute.xlu0 %5341
    %5347 = vrot.lane.b32.xlu0 %v5257, 2
    %v5348 = vpop.permute.xlu0 %5347
    %5349 = vrot.lane.b32.xlu0 %v5258, 2
    %v5350 = vpop.permute.xlu0 %5349
    %5355 = vrot.lane.b32.xlu0 %v5261, 3
    %v5356 = vpop.permute.xlu0 %5355
    %5357 = vrot.lane.b32.xlu0 %v5262, 3
    %v5358 = vpop.permute.xlu0 %5357
    %5363 = vrot.lane.b32.xlu0 %v5271, 4
    %v5364 = vpop.permute.xlu0 %5363
    %5365 = vrot.lane.b32.xlu0 %v5272, 4
    %v5366 = vpop.permute.xlu0 %5365
    %5371 = vrot.lane.b32.xlu0 %v5275, 5
    %v5372 = vpop.permute.xlu0 %5371
    %5373 = vrot.lane.b32.xlu0 %v5276, 5
    %v5374 = vpop.permute.xlu0 %5373
    %v5377 = vsel %vm2464, %v5311, %v5335
    %v5378 = vsel %vm2464, %v5312, %v5336
    %v5379 = vsel %vm1739, %v5377, %v5340
    %v5380 = vsel %vm1739, %v5378, %v5342
    %v5381 = vsel %vm2469, %v5379, %v5340
    %v5382 = vsel %vm2469, %v5380, %v5342
    %v5383 = vsel %vm1132, %v5381, %v5348
    %v5384 = vsel %vm1132, %v5382, %v5350
    %v5385 = vsel %vm2474, %v5383, %v5356
    %v5386 = vsel %vm2474, %v5384, %v5358
    %v5387 = vsel %vm1744, %v5385, %v5364
    %v5388 = vsel %vm1744, %v5386, %v5366
    %v5389 = vsel %vm2479, %v5387, %v5372
    %v5390 = vsel %vm2479, %v5388, %v5374
    %5393 = vrot.lane.b32.xlu0 %v5389, 32
    %v5394 = vpop.permute.xlu0 %5393
    %5395 = vrot.lane.b32.xlu0 %v5390, 32
    %v5396 = vpop.permute.xlu0 %5395
    %vm5399 = vcmask 326912
    %5400 = vst.msk [vmem:[#allocation4] sm:$0xff] %vm5399, %v5394
    %vm5401 = vcmask 322816
    %5402 = vst.msk [vmem:[#allocation4 + $0x8] sm:$0xf] %vm5401, %v5396
    %v5403 = vsub.f32 %v5377, %v4649
    %v5404 = vsub.f32 %v5378, %v4650
    %5407 = vrot.lane.b32.xlu0 %v5377, 10
    %v5408 = vpop.permute.xlu0 %5407
    %5409 = vrot.lane.b32.xlu0 %v5378, 10
    %v5410 = vpop.permute.xlu0 %5409
    %5413 = vrot.lane.b32.xlu0 %v4844, 112
    %v5414 = vpop.permute.xlu0 %5413
    %5415 = vrot.lane.b32.xlu0 %v4845, 112
    %v5416 = vpop.permute.xlu0 %5415
    %v5419 = vsel %vm1750, %v4691, %v5408
    %v5420 = vsel %vm1750, %v4692, %v5410
    %v5421 = vsel %vm1753, %v5419, 0.0
    %v5422 = vsel %vm1753, %v5420, 0.0
    %v5423 = vsel %vm1756, %v5421, %v5414
    %v5424 = vsel %vm1756, %v5422, %v5416
    %v5425 = vld [vmem:[%s8] sm:$0xff]
    %v5426 = vld [vmem:[%s8 + $0x8] sm:$0xff]
    %v5427 = vld [vmem:[%s8 + $0x10] sm:$0xff]
    %v5428 = vld [vmem:[%s8 + $0x18] sm:$0xff]
    %v5429 = vld [vmem:[%s8 + $0x20] sm:$0xff]
    %v5430 = vld [vmem:[%s8 + $0x28] sm:$0xff]
    %v5431 = vld [vmem:[%s8 + $0x30] sm:$0xff]
    %v5432 = vld [vmem:[%s8 + $0x38] sm:$0xff]
    %v5433 = vld [vmem:[%s8 + $0x40] sm:$0xff]
    %v5434 = vld [vmem:[%s8 + $0x48] sm:$0xff]
    %v5435 = vld [vmem:[%s8 + $0x50] sm:$0xff]
    %v5436 = vld [vmem:[%s8 + $0x58] sm:$0xff]
    %v5438 = vsel %vm1771, %v5423, 0
    %v5441 = vsel %vm1771, %v5424, 0
    %5443 = vmatprep.subr.mxu0 0.0
    %5444 = vmatpush1.msra.mxu0 0.0
    %5445 = vmatprep.subr.mxu0 0.0
    %5446 = vmatpush1.msra.mxu0 0.0
    %5447 = vmatprep.subr.mxu0 0.0
    %5448 = vmatpush1.msra.mxu0 0.0
    %5449 = vmatprep.subr.mxu0 0.0
    %5450 = vmatpush1.msra.mxu0 0.0
    %5451 = vmatprep.subr.mxu0 0.0
    %5452 = vmatpush1.msra.mxu0 0.0
    %5453 = vmatprep.subr.mxu0 0.0
    %5454 = vmatpush1.msra.mxu0 0.0
    %5455 = vmatprep.subr.mxu0 0.0
    %5456 = vmatpush1.msra.mxu0 0.0
    %5457 = vmatprep.subr.mxu0 0.0
    %5458 = vmatpush1.msra.mxu0 0.0
    %5459 = vmatprep.subr.mxu0 0.0
    %5460 = vmatpush1.msra.mxu0 0.0
    %5461 = vmatprep.subr.mxu0 0.0
    %5462 = vmatpush1.msra.mxu0 0.0
    %5463 = vmatprep.subr.mxu0 %v5436
    %5464 = vmatpush1.msra.mxu0 %v5435
    %5465 = vmatprep.subr.mxu0 %v5434
    %5466 = vmatpush1.msra.mxu0 %v5433
    %5467 = vmatprep.subr.mxu0 %v5432
    %5468 = vmatpush1.msra.mxu0 %v5431
    %5469 = vmatprep.subr.mxu0 %v5430
    %5470 = vmatpush1.msra.mxu0 %v5429
    %5471 = vmatprep.subr.mxu0 %v5428
    %5472 = vmatpush1.msra.mxu0 %v5427
    %5473 = vmatprep.subr.mxu0 %v5426
    %5474 = vmatpush1.msra.mxu0 %v5425
    %5475 = vmatprep.subr.mxu0 0.0
    %5476 = vmatpush2.msra.mxu0 0.0
    %5477 = vmatprep.subr.mxu0 0.0
    %5478 = vmatpush2.msra.mxu0 0.0
    %5479 = vmatprep.subr.mxu0 0.0
    %5480 = vmatpush2.msra.mxu0 0.0
    %5481 = vmatprep.subr.mxu0 0.0
    %5482 = vmatpush2.msra.mxu0 0.0
    %5483 = vmatprep.subr.mxu0 0.0
    %5484 = vmatpush2.msra.mxu0 0.0
    %5485 = vmatprep.subr.mxu0 0.0
    %5486 = vmatpush2.msra.mxu0 0.0
    %5487 = vmatprep.subr.mxu0 0.0
    %5488 = vmatpush2.msra.mxu0 0.0
    %5489 = vmatprep.subr.mxu0 0.0
    %5490 = vmatpush2.msra.mxu0 0.0
    %5491 = vmatprep.subr.mxu0 0.0
    %5492 = vmatpush2.msra.mxu0 0.0
    %5493 = vmatprep.subr.mxu0 0.0
    %5494 = vmatpush2.msra.mxu0 0.0
    %5495 = vmatprep.subr.mxu0 0.0
    %5496 = vmatpush2.msra.mxu0 0.0
    %5497 = vmatprep.subr.mxu0 0.0
    %5498 = vmatpush2.msra.mxu0 0.0
    %5499 = vmatprep.subr.mxu0 0.0
    %5500 = vmatpush2.msra.mxu0 0.0
    %5501 = vmatprep.subr.mxu0 0.0
    %5502 = vmatpush2.msra.mxu0 0.0
    %5503 = vmatprep.subr.mxu0 0.0
    %5504 = vmatpush2.msra.mxu0 0.0
    %5505 = vmatprep.subr.mxu0 0.0
    %5506 = vmatpush2.msra.mxu0 0.0
    %5507 = vmatprep.mubr.f32.mxu0 0.0
    %5508 = vmatmul.mubr.f32.gmra.mxu0 %v5438
    %v5509 = vpop.f32.mrf.mxu0
    %v5510 = vadd.f32 0.0, %v5509
    %v5511 = vpop.f32.mrf.mxu0
    %v5512 = vadd.f32 0.0, %v5511
    %5513 = vmatprep.mubr.f32.mxu0 0.0
    %5514 = vmatmul.mubr.f32.gmra.mxu0 %v5441
    %v5515 = vpop.f32.mrf.mxu0
    %v5516 = vadd.f32 0.0, %v5515
    %v5517 = vpop.f32.mrf.mxu0
    %v5518 = vadd.f32 0.0, %v5517
    %5519 = vdwg.mxu0
    %v5520 = vadd.f32 %v5510, %v1858
    %v5521 = vadd.f32 %v5516, %v1858
    %v5522 = vadd.f32 %v5512, %v1864
    %v5523 = vadd.f32 %v5518, %v1864
    %v5524 = vadd.f32 %v5520, %v5522
    %v5525 = vadd.f32 %v5521, %v5523
    %v5526 = vmul.f32 %v5524, 0.5
    %v5527 = vmul.f32 %v5525, 0.5
    %v5528 = vtanh.pop %v5526
    %v5529 = vtanh.pop %v5527
    %v5530 = vadd.f32 %v5528, 1.0
    %v5531 = vadd.f32 %v5529, 1.0
    %v5532 = vmul.f32 %v5530, 0.5
    %v5533 = vmul.f32 %v5531, 0.5
    %5536 = vrot.lane.b32.xlu0 %v5522, 64
    %v5537 = vpop.permute.xlu0 %5536
    %5538 = vrot.lane.b32.xlu0 %v5523, 64
    %v5539 = vpop.permute.xlu0 %5538
    %v5542 = vmul.f32 %v5532, %v5537
    %v5543 = vmul.f32 %v5533, %v5539
    %5546 = vrot.lane.b32.xlu0 %v5542, 64
    %v5547 = vpop.permute.xlu0 %5546
    %5548 = vrot.lane.b32.xlu0 %v5543, 64
    %v5549 = vpop.permute.xlu0 %5548
    %v5552 = vadd.f32 %v5520, %v5547
    %v5553 = vadd.f32 %v5521, %v5549
    %v5554 = vtanh.pop %v5552
    %v5555 = vtanh.pop %v5553
    %v5556 = vsub.f32 1.0, %v5532
    %v5557 = vsub.f32 1.0, %v5533
    %5560 = vrot.lane.b32.xlu0 %v5554, 96
    %v5561 = vpop.permute.xlu0 %5560
    %5562 = vrot.lane.b32.xlu0 %v5555, 96
    %v5563 = vpop.permute.xlu0 %5562
    %v5566 = vmul.f32 %v5556, %v5561
    %v5567 = vmul.f32 %v5557, %v5563
    %v5568 = vmul.f32 %v5532, %v4844
    %v5569 = vmul.f32 %v5533, %v4845
    %v5570 = vadd.f32 %v5566, %v5568
    %v5571 = vadd.f32 %v5567, %v5569
    %5574 = vrot.lane.b32.xlu0 %v5570, 96
    %v5575 = vpop.permute.xlu0 %5574
    %5576 = vrot.lane.b32.xlu0 %v5571, 96
    %v5577 = vpop.permute.xlu0 %5576
    %v5578 = vsel %vm51, %v5575, 0
    %v5580 = vsel %vm51, %v5577, 0
    %5582 = vmatprep.subr.mxu0 0.0
    %5583 = vmatpush1.msra.mxu0 0.0
    %5584 = vmatprep.subr.mxu0 0.0
    %5585 = vmatpush1.msra.mxu0 0.0
    %5586 = vmatprep.subr.mxu0 0.0
    %5587 = vmatpush1.msra.mxu0 0.0
    %5588 = vmatprep.subr.mxu0 0.0
    %5589 = vmatpush1.msra.mxu0 0.0
    %5590 = vmatprep.subr.mxu0 0.0
    %5591 = vmatpush1.msra.mxu0 0.0
    %5592 = vmatprep.subr.mxu0 0.0
    %5593 = vmatpush1.msra.mxu0 0.0
    %5594 = vmatprep.subr.mxu0 0.0
    %5595 = vmatpush1.msra.mxu0 0.0
    %5596 = vmatprep.subr.mxu0 0.0
    %5597 = vmatpush1.msra.mxu0 0.0
    %5598 = vmatprep.subr.mxu0 0.0
    %5599 = vmatpush1.msra.mxu0 0.0
    %5600 = vmatprep.subr.mxu0 0.0
    %5601 = vmatpush1.msra.mxu0 0.0
    %5602 = vmatprep.subr.mxu0 0.0
    %5603 = vmatpush1.msra.mxu0 0.0
    %5604 = vmatprep.subr.mxu0 0.0
    %5605 = vmatpush1.msra.mxu0 0.0
    %5606 = vmatprep.subr.mxu0 0.0
    %5607 = vmatpush1.msra.mxu0 %v1728
    %5608 = vmatprep.subr.mxu0 0.0
    %5609 = vmatpush1.msra.mxu0 %v1727
    %5610 = vmatprep.subr.mxu0 0.0
    %5611 = vmatpush1.msra.mxu0 %v1726
    %5612 = vmatprep.subr.mxu0 0.0
    %5613 = vmatpush1.msra.mxu0 %v1725
    %5614 = vmatprep.subr.mxu0 0.0
    %5615 = vmatpush2.msra.mxu0 0.0
    %5616 = vmatprep.subr.mxu0 0.0
    %5617 = vmatpush2.msra.mxu0 0.0
    %5618 = vmatprep.subr.mxu0 0.0
    %5619 = vmatpush2.msra.mxu0 0.0
    %5620 = vmatprep.subr.mxu0 0.0
    %5621 = vmatpush2.msra.mxu0 0.0
    %5622 = vmatprep.subr.mxu0 0.0
    %5623 = vmatpush2.msra.mxu0 0.0
    %5624 = vmatprep.subr.mxu0 0.0
    %5625 = vmatpush2.msra.mxu0 0.0
    %5626 = vmatprep.subr.mxu0 0.0
    %5627 = vmatpush2.msra.mxu0 0.0
    %5628 = vmatprep.subr.mxu0 0.0
    %5629 = vmatpush2.msra.mxu0 0.0
    %5630 = vmatprep.subr.mxu0 0.0
    %5631 = vmatpush2.msra.mxu0 0.0
    %5632 = vmatprep.subr.mxu0 0.0
    %5633 = vmatpush2.msra.mxu0 0.0
    %5634 = vmatprep.subr.mxu0 0.0
    %5635 = vmatpush2.msra.mxu0 0.0
    %5636 = vmatprep.subr.mxu0 0.0
    %5637 = vmatpush2.msra.mxu0 0.0
    %5638 = vmatprep.subr.mxu0 0.0
    %5639 = vmatpush2.msra.mxu0 0.0
    %5640 = vmatprep.subr.mxu0 0.0
    %5641 = vmatpush2.msra.mxu0 0.0
    %5642 = vmatprep.subr.mxu0 0.0
    %5643 = vmatpush2.msra.mxu0 0.0
    %5644 = vmatprep.subr.mxu0 0.0
    %5645 = vmatpush2.msra.mxu0 0.0
    %5646 = vmatprep.mubr.f32.mxu0 0.0
    %5647 = vmatmul.mubr.f32.gmra.mxu0 %v5578
    %v5648 = vpop.f32.mrf.mxu0
    %v5649 = vadd.f32 %v1636, %v5648
    %v5650 = vpop.f32.mrf.mxu0
    %5651 = vmatprep.mubr.f32.mxu0 0.0
    %5652 = vmatmul.mubr.f32.gmra.mxu0 %v5580
    %v5653 = vpop.f32.mrf.mxu0
    %v5654 = vadd.f32 %v1641, %v5653
    %v5655 = vpop.f32.mrf.mxu0
    %5656 = vdwg.mxu0
    %vm5657 = vcmp.gt.f32.partialorder %v5649, 20.0
    %vm5658 = vcmp.gt.f32.partialorder %v5654, 20.0
    %v5659 = vmin.f32 %v5649, 20.0
    %v5660 = vmin.f32 %v5654, 20.0
    %v5661 = vmul.f32 %v5659, 1.442695
    %v5662 = vpow.pop %v5661
    %v5663 = vmul.f32 %v5660, 1.442695
    %v5664 = vpow.pop %v5663
    %v5665 = vadd.f32 %v5662, 1.0
    %v5666 = vadd.f32 %v5664, 1.0
    %v5667 = vlog2.pop %v5665
    %v5668 = vmul.f32 %v5667, 0.6931472
    %v5669 = vlog2.pop %v5666
    %v5670 = vmul.f32 %v5669, 0.6931472
    %v5671 = vsel %vm5657, %v5649, %v5668
    %v5672 = vsel %vm5658, %v5654, %v5670
    %v5674 = vsel %vm51, %v5671, 0
    %v5677 = vsel %vm51, %v5672, 0
    %5679 = vmatprep.subr.mxu0 0.0
    %5680 = vmatpush1.msra.mxu0 0.0
    %5681 = vmatprep.subr.mxu0 0.0
    %5682 = vmatpush1.msra.mxu0 0.0
    %5683 = vmatprep.subr.mxu0 0.0
    %5684 = vmatpush1.msra.mxu0 0.0
    %5685 = vmatprep.subr.mxu0 0.0
    %5686 = vmatpush1.msra.mxu0 0.0
    %5687 = vmatprep.subr.mxu0 0.0
    %5688 = vmatpush1.msra.mxu0 0.0
    %5689 = vmatprep.subr.mxu0 0.0
    %5690 = vmatpush1.msra.mxu0 0.0
    %5691 = vmatprep.subr.mxu0 0.0
    %5692 = vmatpush1.msra.mxu0 0.0
    %5693 = vmatprep.subr.mxu0 0.0
    %5694 = vmatpush1.msra.mxu0 0.0
    %5695 = vmatprep.subr.mxu0 0.0
    %5696 = vmatpush1.msra.mxu0 0.0
    %5697 = vmatprep.subr.mxu0 0.0
    %5698 = vmatpush1.msra.mxu0 0.0
    %5699 = vmatprep.subr.mxu0 0.0
    %5700 = vmatpush1.msra.mxu0 0.0
    %5701 = vmatprep.subr.mxu0 0.0
    %5702 = vmatpush1.msra.mxu0 0.0
    %5703 = vmatprep.subr.mxu0 0.0
    %5704 = vmatpush1.msra.mxu0 %v1732
    %5705 = vmatprep.subr.mxu0 0.0
    %5706 = vmatpush1.msra.mxu0 %v1731
    %5707 = vmatprep.subr.mxu0 0.0
    %5708 = vmatpush1.msra.mxu0 %v1730
    %5709 = vmatprep.subr.mxu0 0.0
    %5710 = vmatpush1.msra.mxu0 %v1729
    %5711 = vmatprep.subr.mxu0 0.0
    %5712 = vmatpush2.msra.mxu0 0.0
    %5713 = vmatprep.subr.mxu0 0.0
    %5714 = vmatpush2.msra.mxu0 0.0
    %5715 = vmatprep.subr.mxu0 0.0
    %5716 = vmatpush2.msra.mxu0 0.0
    %5717 = vmatprep.subr.mxu0 0.0
    %5718 = vmatpush2.msra.mxu0 0.0
    %5719 = vmatprep.subr.mxu0 0.0
    %5720 = vmatpush2.msra.mxu0 0.0
    %5721 = vmatprep.subr.mxu0 0.0
    %5722 = vmatpush2.msra.mxu0 0.0
    %5723 = vmatprep.subr.mxu0 0.0
    %5724 = vmatpush2.msra.mxu0 0.0
    %5725 = vmatprep.subr.mxu0 0.0
    %5726 = vmatpush2.msra.mxu0 0.0
    %5727 = vmatprep.subr.mxu0 0.0
    %5728 = vmatpush2.msra.mxu0 0.0
    %5729 = vmatprep.subr.mxu0 0.0
    %5730 = vmatpush2.msra.mxu0 0.0
    %5731 = vmatprep.subr.mxu0 0.0
    %5732 = vmatpush2.msra.mxu0 0.0
    %5733 = vmatprep.subr.mxu0 0.0
    %5734 = vmatpush2.msra.mxu0 0.0
    %5735 = vmatprep.subr.mxu0 0.0
    %5736 = vmatpush2.msra.mxu0 0.0
    %5737 = vmatprep.subr.mxu0 0.0
    %5738 = vmatpush2.msra.mxu0 0.0
    %5739 = vmatprep.subr.mxu0 0.0
    %5740 = vmatpush2.msra.mxu0 0.0
    %5741 = vmatprep.subr.mxu0 0.0
    %5742 = vmatpush2.msra.mxu0 0.0
    %5743 = vmatprep.mubr.f32.mxu0 0.0
    %5744 = vmatmul.mubr.f32.gmra.mxu0 %v5674
    %v5745 = vpop.f32.mrf.mxu0
    %v5746 = vadd.f32 %v2019, %v5745
    %v5747 = vpop.f32.mrf.mxu0
    %5748 = vmatprep.mubr.f32.mxu0 0.0
    %5749 = vmatmul.mubr.f32.gmra.mxu0 %v5677
    %v5750 = vpop.f32.mrf.mxu0
    %v5751 = vadd.f32 %v2019, %v5750
    %v5752 = vpop.f32.mrf.mxu0
    %5753 = vdwg.mxu0
    %vm5754 = vcmp.gt.f32.partialorder %v5746, 20.0
    %vm5755 = vcmp.gt.f32.partialorder %v5751, 20.0
    %v5756 = vmin.f32 %v5746, 20.0
    %v5757 = vmin.f32 %v5751, 20.0
    %v5758 = vmul.f32 %v5756, 1.442695
    %v5759 = vpow.pop %v5758
    %v5760 = vmul.f32 %v5757, 1.442695
    %v5761 = vpow.pop %v5760
    %v5762 = vadd.f32 %v5759, 1.0
    %v5763 = vadd.f32 %v5761, 1.0
    %v5764 = vlog2.pop %v5762
    %v5765 = vmul.f32 %v5764, 0.6931472
    %v5766 = vlog2.pop %v5763
    %v5767 = vmul.f32 %v5766, 0.6931472
    %v5768 = vsel %vm5754, %v5746, %v5765
    %v5769 = vsel %vm5755, %v5751, %v5767
    %v5771 = vsel %vm51, %v5768, 0
    %v5774 = vsel %vm51, %v5769, 0
    %5776 = vmatprep.subr.mxu0 0.0
    %5777 = vmatpush1.msra.mxu0 0.0
    %5778 = vmatprep.subr.mxu0 0.0
    %5779 = vmatpush1.msra.mxu0 0.0
    %5780 = vmatprep.subr.mxu0 0.0
    %5781 = vmatpush1.msra.mxu0 0.0
    %5782 = vmatprep.subr.mxu0 0.0
    %5783 = vmatpush1.msra.mxu0 0.0
    %5784 = vmatprep.subr.mxu0 0.0
    %5785 = vmatpush1.msra.mxu0 0.0
    %5786 = vmatprep.subr.mxu0 0.0
    %5787 = vmatpush1.msra.mxu0 0.0
    %5788 = vmatprep.subr.mxu0 0.0
    %5789 = vmatpush1.msra.mxu0 0.0
    %5790 = vmatprep.subr.mxu0 0.0
    %5791 = vmatpush1.msra.mxu0 0.0
    %5792 = vmatprep.subr.mxu0 0.0
    %5793 = vmatpush1.msra.mxu0 0.0
    %5794 = vmatprep.subr.mxu0 0.0
    %5795 = vmatpush1.msra.mxu0 0.0
    %5796 = vmatprep.subr.mxu0 0.0
    %5797 = vmatpush1.msra.mxu0 0.0
    %5798 = vmatprep.subr.mxu0 0.0
    %5799 = vmatpush1.msra.mxu0 0.0
    %5800 = vmatprep.subr.mxu0 0.0
    %5801 = vmatpush1.msra.mxu0 %v1736
    %5802 = vmatprep.subr.mxu0 0.0
    %5803 = vmatpush1.msra.mxu0 %v1735
    %5804 = vmatprep.subr.mxu0 0.0
    %5805 = vmatpush1.msra.mxu0 %v1734
    %5806 = vmatprep.subr.mxu0 0.0
    %5807 = vmatpush1.msra.mxu0 %v1733
    %5808 = vmatprep.subr.mxu0 0.0
    %5809 = vmatpush2.msra.mxu0 0.0
    %5810 = vmatprep.subr.mxu0 0.0
    %5811 = vmatpush2.msra.mxu0 0.0
    %5812 = vmatprep.subr.mxu0 0.0
    %5813 = vmatpush2.msra.mxu0 0.0
    %5814 = vmatprep.subr.mxu0 0.0
    %5815 = vmatpush2.msra.mxu0 0.0
    %5816 = vmatprep.subr.mxu0 0.0
    %5817 = vmatpush2.msra.mxu0 0.0
    %5818 = vmatprep.subr.mxu0 0.0
    %5819 = vmatpush2.msra.mxu0 0.0
    %5820 = vmatprep.subr.mxu0 0.0
    %5821 = vmatpush2.msra.mxu0 0.0
    %5822 = vmatprep.subr.mxu0 0.0
    %5823 = vmatpush2.msra.mxu0 0.0
    %5824 = vmatprep.subr.mxu0 0.0
    %5825 = vmatpush2.msra.mxu0 0.0
    %5826 = vmatprep.subr.mxu0 0.0
    %5827 = vmatpush2.msra.mxu0 0.0
    %5828 = vmatprep.subr.mxu0 0.0
    %5829 = vmatpush2.msra.mxu0 0.0
    %5830 = vmatprep.subr.mxu0 0.0
    %5831 = vmatpush2.msra.mxu0 0.0
    %5832 = vmatprep.subr.mxu0 0.0
    %5833 = vmatpush2.msra.mxu0 0.0
    %5834 = vmatprep.subr.mxu0 0.0
    %5835 = vmatpush2.msra.mxu0 0.0
    %5836 = vmatprep.subr.mxu0 0.0
    %5837 = vmatpush2.msra.mxu0 0.0
    %5838 = vmatprep.subr.mxu0 0.0
    %5839 = vmatpush2.msra.mxu0 0.0
    %5840 = vmatprep.mubr.f32.mxu0 0.0
    %5841 = vmatmul.mubr.f32.gmra.mxu0 %v5771
    %v5842 = vpop.f32.mrf.mxu0
    %v5843 = vadd.f32 %v2120, %v5842
    %v5844 = vpop.f32.mrf.mxu0
    %5845 = vmatprep.mubr.f32.mxu0 0.0
    %5846 = vmatmul.mubr.f32.gmra.mxu0 %v5774
    %v5847 = vpop.f32.mrf.mxu0
    %v5848 = vadd.f32 %v2120, %v5847
    %v5849 = vpop.f32.mrf.mxu0
    %5850 = vdwg.mxu0
    %v5851 = vmul.f32 %v5403, 0.5
    %v5852 = vmul.f32 %v5404, 0.5
    %v5853 = vadd.f32 %v5377, %v5851
    %v5854 = vadd.f32 %v5378, %v5852
    %v5855 = vadd.f32 %v5853, %v5843
    %v5856 = vadd.f32 %v5854, %v5848
    %5859 = vrot.lane.b32.xlu0 %v5843, 125
    %v5860 = vpop.permute.xlu0 %5859
    %5861 = vrot.lane.b32.xlu0 %v5848, 125
    %v5862 = vpop.permute.xlu0 %5861
    %v5865 = vadd.f32 %v5843, %v5860
    %v5866 = vadd.f32 %v5848, %v5862
    %v5867 = vmul.f32 %v5865, 0.5
    %v5868 = vmul.f32 %v5866, 0.5
    %v5869 = vsub.f32 %v5843, %v5860
    %v5870 = vsub.f32 %v5848, %v5862
    %v5871 = vmul.f32 %v5869, 0.5
    %v5872 = vmul.f32 %v5870, 0.5
    %v5873 = vmul.f32 %v5871, %v5871
    %v5874 = vmul.f32 %v5872, %v5872
    %5875 = vrot.lane.b32.xlu0 %v5843, 127
    %v5876 = vpop.permute.xlu0 %5875
    %5877 = vrot.lane.b32.xlu0 %v5848, 127
    %v5878 = vpop.permute.xlu0 %5877
    %v5881 = vmul.f32 %v5843, %v5876
    %v5882 = vmul.f32 %v5848, %v5878
    %5885 = vrot.lane.b32.xlu0 %v5881, 127
    %v5886 = vpop.permute.xlu0 %5885
    %5887 = vrot.lane.b32.xlu0 %v5882, 127
    %v5888 = vpop.permute.xlu0 %5887
    %v5891 = vadd.f32 %v5873, %v5886
    %v5892 = vadd.f32 %v5874, %v5888
    %v5893 = vmul.f32 %v5891, 0.00024414063
    %v5894 = vmul.f32 %v5892, 0.00024414063
    %v5895 = vmul.f32 %v5893, 2.4801588e-05
    %v5896 = vmul.f32 %v5894, 2.4801588e-05
    %v5897 = vadd.f32 %v5895, 0.0013888889
    %v5898 = vadd.f32 %v5896, 0.0013888889
    %v5899 = vmul.f32 %v5893, %v5897
    %v5900 = vmul.f32 %v5894, %v5898
    %v5901 = vadd.f32 %v5899, 0.041666668
    %v5902 = vadd.f32 %v5900, 0.041666668
    %v5903 = vmul.f32 %v5893, %v5901
    %v5904 = vmul.f32 %v5894, %v5902
    %v5905 = vadd.f32 %v5903, 0.5
    %v5906 = vadd.f32 %v5904, 0.5
    %v5907 = vmul.f32 %v5893, %v5905
    %v5908 = vmul.f32 %v5894, %v5906
    %v5909 = vadd.f32 %v5907, 1.0
    %v5910 = vadd.f32 %v5908, 1.0
    %v5911 = vmul.f32 %v5893, 2.7557319e-06
    %v5912 = vmul.f32 %v5894, 2.7557319e-06
    %v5913 = vadd.f32 %v5911, 0.0001984127
    %v5914 = vadd.f32 %v5912, 0.0001984127
    %v5915 = vmul.f32 %v5893, %v5913
    %v5916 = vmul.f32 %v5894, %v5914
    %v5917 = vadd.f32 %v5915, 0.008333334
    %v5918 = vadd.f32 %v5916, 0.008333334
    %v5919 = vmul.f32 %v5893, %v5917
    %v5920 = vmul.f32 %v5894, %v5918
    %v5921 = vadd.f32 %v5919, 0.16666667
    %v5922 = vadd.f32 %v5920, 0.16666667
    %v5923 = vmul.f32 %v5893, %v5921
    %v5924 = vmul.f32 %v5894, %v5922
    %v5925 = vadd.f32 %v5923, 1.0
    %v5926 = vadd.f32 %v5924, 1.0
    %v5927 = vmul.f32 %v5925, %v5909
    %v5928 = vmul.f32 %v5926, %v5910
    %v5929 = vmul.f32 %v5909, 2.0
    %v5930 = vmul.f32 %v5910, 2.0
    %v5931 = vmul.f32 %v5929, %v5909
    %v5932 = vmul.f32 %v5930, %v5910
    %v5933 = vsub.f32 %v5931, 1.0
    %v5934 = vsub.f32 %v5932, 1.0
    %v5935 = vmul.f32 %v5927, %v5933
    %v5936 = vmul.f32 %v5928, %v5934
    %v5937 = vmul.f32 %v5933, 2.0
    %v5938 = vmul.f32 %v5934, 2.0
    %v5939 = vmul.f32 %v5937, %v5933
    %v5940 = vmul.f32 %v5938, %v5934
    %v5941 = vsub.f32 %v5939, 1.0
    %v5942 = vsub.f32 %v5940, 1.0
    %v5943 = vmul.f32 %v5935, %v5941
    %v5944 = vmul.f32 %v5936, %v5942
    %v5945 = vmul.f32 %v5941, 2.0
    %v5946 = vmul.f32 %v5942, 2.0
    %v5947 = vmul.f32 %v5945, %v5941
    %v5948 = vmul.f32 %v5946, %v5942
    %v5949 = vsub.f32 %v5947, 1.0
    %v5950 = vsub.f32 %v5948, 1.0
    %v5951 = vmul.f32 %v5943, %v5949
    %v5952 = vmul.f32 %v5944, %v5950
    %v5953 = vmul.f32 %v5949, 2.0
    %v5954 = vmul.f32 %v5950, 2.0
    %v5955 = vmul.f32 %v5953, %v5949
    %v5956 = vmul.f32 %v5954, %v5950
    %v5957 = vsub.f32 %v5955, 1.0
    %v5958 = vsub.f32 %v5956, 1.0
    %v5959 = vmul.f32 %v5951, %v5957
    %v5960 = vmul.f32 %v5952, %v5958
    %v5961 = vmul.f32 %v5957, 2.0
    %v5962 = vmul.f32 %v5958, 2.0
    %v5963 = vmul.f32 %v5961, %v5957
    %v5964 = vmul.f32 %v5962, %v5958
    %v5965 = vsub.f32 %v5963, 1.0
    %v5966 = vsub.f32 %v5964, 1.0
    %v5967 = vmul.f32 %v5959, %v5965
    %v5968 = vmul.f32 %v5960, %v5966
    %v5969 = vmul.f32 %v5965, 2.0
    %v5970 = vmul.f32 %v5966, 2.0
    %v5971 = vmul.f32 %v5969, %v5965
    %v5972 = vmul.f32 %v5970, %v5966
    %v5973 = vsub.f32 %v5971, 1.0
    %v5974 = vsub.f32 %v5972, 1.0
    %v5975 = vmul.f32 %v5867, 1.442695
    %v5976 = vpow.pop %v5975
    %v5977 = vmul.f32 %v5868, 1.442695
    %v5978 = vpow.pop %v5977
    %v5979 = vmul.f32 %v5967, %v5871
    %v5980 = vmul.f32 %v5968, %v5872
    %v5981 = vadd.f32 %v5973, %v5979
    %v5982 = vadd.f32 %v5974, %v5980
    %v5983 = vmul.f32 %v5976, %v5981
    %v5984 = vmul.f32 %v5978, %v5982
    %v5985 = vmul.f32 %v5967, %v5876
    %v5986 = vmul.f32 %v5968, %v5878
    %v5987 = vmul.f32 %v5976, %v5985
    %v5988 = vmul.f32 %v5978, %v5986
    %5989 = vrot.lane.b32.xlu0 %v5843, 126
    %v5990 = vpop.permute.xlu0 %5989
    %5991 = vrot.lane.b32.xlu0 %v5848, 126
    %v5992 = vpop.permute.xlu0 %5991
    %v5995 = vmul.f32 %v5967, %v5990
    %v5996 = vmul.f32 %v5968, %v5992
    %v5997 = vmul.f32 %v5976, %v5995
    %v5998 = vmul.f32 %v5978, %v5996
    %v5999 = vsub.f32 %v5973, %v5979
    %v6000 = vsub.f32 %v5974, %v5980
    %v6001 = vmul.f32 %v5976, %v5999
    %v6002 = vmul.f32 %v5978, %v6000
    %6003 = vrot.lane.b32.xlu0 %v1737, 120
    %v6004 = vpop.permute.xlu0 %6003
    %6005 = vrot.lane.b32.xlu0 %v1738, 120
    %v6006 = vpop.permute.xlu0 %6005
    %v6009 = vmul.f32 %v5983, %v6004
    %v6010 = vmul.f32 %v5984, %v6006
    %6013 = vrot.lane.b32.xlu0 %v6009, 126
    %v6014 = vpop.permute.xlu0 %6013
    %6015 = vrot.lane.b32.xlu0 %v6010, 126
    %v6016 = vpop.permute.xlu0 %6015
    %v6019 = vadd.f32 %v5855, %v6014
    %v6020 = vadd.f32 %v5856, %v6016
    %6021 = vrot.lane.b32.xlu0 %v1737, 119
    %v6022 = vpop.permute.xlu0 %6021
    %6023 = vrot.lane.b32.xlu0 %v1738, 119
    %v6024 = vpop.permute.xlu0 %6023
    %v6027 = vmul.f32 %v5987, %v6022
    %v6028 = vmul.f32 %v5988, %v6024
    %6031 = vrot.lane.b32.xlu0 %v6027, 126
    %v6032 = vpop.permute.xlu0 %6031
    %6033 = vrot.lane.b32.xlu0 %v6028, 126
    %v6034 = vpop.permute.xlu0 %6033
    %v6037 = vadd.f32 %v6019, %v6032
    %v6038 = vadd.f32 %v6020, %v6034
    %v6039 = vmul.f32 %v5997, %v6004
    %v6040 = vmul.f32 %v5998, %v6006
    %6043 = vrot.lane.b32.xlu0 %v6039, 127
    %v6044 = vpop.permute.xlu0 %6043
    %6045 = vrot.lane.b32.xlu0 %v6040, 127
    %v6046 = vpop.permute.xlu0 %6045
    %v6049 = vadd.f32 %v5855, %v6044
    %v6050 = vadd.f32 %v5856, %v6046
    %v6051 = vmul.f32 %v6001, %v6022
    %v6052 = vmul.f32 %v6002, %v6024
    %6055 = vrot.lane.b32.xlu0 %v6051, 127
    %v6056 = vpop.permute.xlu0 %6055
    %6057 = vrot.lane.b32.xlu0 %v6052, 127
    %v6058 = vpop.permute.xlu0 %6057
    %v6061 = vadd.f32 %v6049, %v6056
    %v6062 = vadd.f32 %v6050, %v6058
    %6065 = vrot.lane.b32.xlu0 %v5855, 2
    %v6066 = vpop.permute.xlu0 %6065
    %6067 = vrot.lane.b32.xlu0 %v5856, 2
    %v6068 = vpop.permute.xlu0 %6067
    %6073 = vrot.lane.b32.xlu0 %v5983, 2
    %v6074 = vpop.permute.xlu0 %6073
    %6075 = vrot.lane.b32.xlu0 %v5984, 2
    %v6076 = vpop.permute.xlu0 %6075
    %6081 = vrot.lane.b32.xlu0 %v5987, 3
    %v6082 = vpop.permute.xlu0 %6081
    %6083 = vrot.lane.b32.xlu0 %v5988, 3
    %v6084 = vpop.permute.xlu0 %6083
    %6089 = vrot.lane.b32.xlu0 %v5997, 4
    %v6090 = vpop.permute.xlu0 %6089
    %6091 = vrot.lane.b32.xlu0 %v5998, 4
    %v6092 = vpop.permute.xlu0 %6091
    %6097 = vrot.lane.b32.xlu0 %v6001, 5
    %v6098 = vpop.permute.xlu0 %6097
    %6099 = vrot.lane.b32.xlu0 %v6002, 5
    %v6100 = vpop.permute.xlu0 %6099
    %v6103 = vsel %vm2464, %v6037, %v6061
    %v6104 = vsel %vm2464, %v6038, %v6062
    %v6105 = vsel %vm1739, %v6103, %v6066
    %v6106 = vsel %vm1739, %v6104, %v6068
    %v6107 = vsel %vm2469, %v6105, %v6066
    %v6108 = vsel %vm2469, %v6106, %v6068
    %v6109 = vsel %vm1132, %v6107, %v6074
    %v6110 = vsel %vm1132, %v6108, %v6076
    %v6111 = vsel %vm2474, %v6109, %v6082
    %v6112 = vsel %vm2474, %v6110, %v6084
    %v6113 = vsel %vm1744, %v6111, %v6090
    %v6114 = vsel %vm1744, %v6112, %v6092
    %v6115 = vsel %vm2479, %v6113, %v6098
    %v6116 = vsel %vm2479, %v6114, %v6100
    %6119 = vrot.lane.b32.xlu0 %v6115, 40
    %v6120 = vpop.permute.xlu0 %6119
    %6121 = vrot.lane.b32.xlu0 %v6116, 40
    %v6122 = vpop.permute.xlu0 %6121
    %vm6125 = vcmask 392512
    %6126 = vst.msk [vmem:[#allocation4] sm:$0xff] %vm6125, %v6120
    %vm6127 = vcmask 388416
    %6128 = vst.msk [vmem:[#allocation4 + $0x8] sm:$0xf] %vm6127, %v6122
    %v6129 = vsub.f32 %v6103, %v5377
    %v6130 = vsub.f32 %v6104, %v5378
    %6131 = vrot.lane.b32.xlu0 %v3187, 2
    %v6132 = vpop.permute.xlu0 %6131
    %6133 = vrot.lane.b32.xlu0 %v3188, 2
    %v6134 = vpop.permute.xlu0 %6133
    %6137 = vrot.lane.b32.xlu0 %v3919, 4
    %v6138 = vpop.permute.xlu0 %6137
    %6139 = vrot.lane.b32.xlu0 %v3920, 4
    %v6140 = vpop.permute.xlu0 %6139
    %6143 = vrot.lane.b32.xlu0 %v4649, 6
    %v6144 = vpop.permute.xlu0 %6143
    %6145 = vrot.lane.b32.xlu0 %v4650, 6
    %v6146 = vpop.permute.xlu0 %6145
    %6149 = vrot.lane.b32.xlu0 %v5377, 8
    %v6150 = vpop.permute.xlu0 %6149
    %6151 = vrot.lane.b32.xlu0 %v5378, 8
    %v6152 = vpop.permute.xlu0 %6151
    %6157 = vrot.lane.b32.xlu0 %v6103, 10
    %v6158 = vpop.permute.xlu0 %6157
    %6159 = vrot.lane.b32.xlu0 %v6104, 10
    %v6160 = vpop.permute.xlu0 %6159
    %6163 = vrot.lane.b32.xlu0 %v5570, 112
    %v6164 = vpop.permute.xlu0 %6163
    %6165 = vrot.lane.b32.xlu0 %v5571, 112
    %v6166 = vpop.permute.xlu0 %6165
    %v6169 = vsel %vm1739, %v2465, %v6132
    %v6170 = vsel %vm1739, %v2466, %v6134
    %v6171 = vsel %vm1132, %v6169, %v6138
    %v6172 = vsel %vm1132, %v6170, %v6140
    %v6173 = vsel %vm1744, %v6171, %v6144
    %v6174 = vsel %vm1744, %v6172, %v6146
    %v6175 = vsel %vm1747, %v6173, %v6150
    %v6176 = vsel %vm1747, %v6174, %v6152
    %v6177 = vsel %vm1750, %v6175, %v6158
    %v6178 = vsel %vm1750, %v6176, %v6160
    %v6179 = vsel %vm1753, %v6177, 0.0
    %v6180 = vsel %vm1753, %v6178, 0.0
    %v6181 = vsel %vm1756, %v6179, %v6164
    %v6182 = vsel %vm1756, %v6180, %v6166
    %v6183 = vld [vmem:[%s8] sm:$0xff]
    %v6184 = vld [vmem:[%s8 + $0x8] sm:$0xff]
    %v6185 = vld [vmem:[%s8 + $0x10] sm:$0xff]
    %v6186 = vld [vmem:[%s8 + $0x18] sm:$0xff]
    %v6187 = vld [vmem:[%s8 + $0x20] sm:$0xff]
    %v6188 = vld [vmem:[%s8 + $0x28] sm:$0xff]
    %v6189 = vld [vmem:[%s8 + $0x30] sm:$0xff]
    %v6190 = vld [vmem:[%s8 + $0x38] sm:$0xff]
    %v6191 = vld [vmem:[%s8 + $0x40] sm:$0xff]
    %v6192 = vld [vmem:[%s8 + $0x48] sm:$0xff]
    %v6193 = vld [vmem:[%s8 + $0x50] sm:$0xff]
    %v6194 = vld [vmem:[%s8 + $0x58] sm:$0xff]
    %v6196 = vsel %vm1771, %v6181, 0
    %v6199 = vsel %vm1771, %v6182, 0
    %6201 = vmatprep.subr.mxu0 0.0
    %6202 = vmatpush1.msra.mxu0 0.0
    %6203 = vmatprep.subr.mxu0 0.0
    %6204 = vmatpush1.msra.mxu0 0.0
    %6205 = vmatprep.subr.mxu0 0.0
    %6206 = vmatpush1.msra.mxu0 0.0
    %6207 = vmatprep.subr.mxu0 0.0
    %6208 = vmatpush1.msra.mxu0 0.0
    %6209 = vmatprep.subr.mxu0 0.0
    %6210 = vmatpush1.msra.mxu0 0.0
    %6211 = vmatprep.subr.mxu0 0.0
    %6212 = vmatpush1.msra.mxu0 0.0
    %6213 = vmatprep.subr.mxu0 0.0
    %6214 = vmatpush1.msra.mxu0 0.0
    %6215 = vmatprep.subr.mxu0 0.0
    %6216 = vmatpush1.msra.mxu0 0.0
    %6217 = vmatprep.subr.mxu0 0.0
    %6218 = vmatpush1.msra.mxu0 0.0
    %6219 = vmatprep.subr.mxu0 0.0
    %6220 = vmatpush1.msra.mxu0 0.0
    %6221 = vmatprep.subr.mxu0 %v6194
    %6222 = vmatpush1.msra.mxu0 %v6193
    %6223 = vmatprep.subr.mxu0 %v6192
    %6224 = vmatpush1.msra.mxu0 %v6191
    %6225 = vmatprep.subr.mxu0 %v6190
    %6226 = vmatpush1.msra.mxu0 %v6189
    %6227 = vmatprep.subr.mxu0 %v6188
    %6228 = vmatpush1.msra.mxu0 %v6187
    %6229 = vmatprep.subr.mxu0 %v6186
    %6230 = vmatpush1.msra.mxu0 %v6185
    %6231 = vmatprep.subr.mxu0 %v6184
    %6232 = vmatpush1.msra.mxu0 %v6183
    %6233 = vmatprep.subr.mxu0 0.0
    %6234 = vmatpush2.msra.mxu0 0.0
    %6235 = vmatprep.subr.mxu0 0.0
    %6236 = vmatpush2.msra.mxu0 0.0
    %6237 = vmatprep.subr.mxu0 0.0
    %6238 = vmatpush2.msra.mxu0 0.0
    %6239 = vmatprep.subr.mxu0 0.0
    %6240 = vmatpush2.msra.mxu0 0.0
    %6241 = vmatprep.subr.mxu0 0.0
    %6242 = vmatpush2.msra.mxu0 0.0
    %6243 = vmatprep.subr.mxu0 0.0
    %6244 = vmatpush2.msra.mxu0 0.0
    %6245 = vmatprep.subr.mxu0 0.0
    %6246 = vmatpush2.msra.mxu0 0.0
    %6247 = vmatprep.subr.mxu0 0.0
    %6248 = vmatpush2.msra.mxu0 0.0
    %6249 = vmatprep.subr.mxu0 0.0
    %6250 = vmatpush2.msra.mxu0 0.0
    %6251 = vmatprep.subr.mxu0 0.0
    %6252 = vmatpush2.msra.mxu0 0.0
    %6253 = vmatprep.subr.mxu0 0.0
    %6254 = vmatpush2.msra.mxu0 0.0
    %6255 = vmatprep.subr.mxu0 0.0
    %6256 = vmatpush2.msra.mxu0 0.0
    %6257 = vmatprep.subr.mxu0 0.0
    %6258 = vmatpush2.msra.mxu0 0.0
    %6259 = vmatprep.subr.mxu0 0.0
    %6260 = vmatpush2.msra.mxu0 0.0
    %6261 = vmatprep.subr.mxu0 0.0
    %6262 = vmatpush2.msra.mxu0 0.0
    %6263 = vmatprep.subr.mxu0 0.0
    %6264 = vmatpush2.msra.mxu0 0.0
    %6265 = vmatprep.mubr.f32.mxu0 0.0
    %6266 = vmatmul.mubr.f32.gmra.mxu0 %v6196
    %v6267 = vpop.f32.mrf.mxu0
    %v6268 = vadd.f32 0.0, %v6267
    %v6269 = vpop.f32.mrf.mxu0
    %v6270 = vadd.f32 0.0, %v6269
    %6271 = vmatprep.mubr.f32.mxu0 0.0
    %6272 = vmatmul.mubr.f32.gmra.mxu0 %v6199
    %v6273 = vpop.f32.mrf.mxu0
    %v6274 = vadd.f32 0.0, %v6273
    %v6275 = vpop.f32.mrf.mxu0
    %v6276 = vadd.f32 0.0, %v6275
    %6277 = vdwg.mxu0
    %v6278 = vadd.f32 %v6268, %v1858
    %v6279 = vadd.f32 %v6274, %v1858
    %v6280 = vadd.f32 %v6270, %v1864
    %v6281 = vadd.f32 %v6276, %v1864
    %v6282 = vadd.f32 %v6278, %v6280
    %v6283 = vadd.f32 %v6279, %v6281
    %v6284 = vmul.f32 %v6282, 0.5
    %v6285 = vmul.f32 %v6283, 0.5
    %v6286 = vtanh.pop %v6284
    %v6287 = vtanh.pop %v6285
    %v6288 = vadd.f32 %v6286, 1.0
    %v6289 = vadd.f32 %v6287, 1.0
    %v6290 = vmul.f32 %v6288, 0.5
    %v6291 = vmul.f32 %v6289, 0.5
    %6294 = vrot.lane.b32.xlu0 %v6280, 64
    %v6295 = vpop.permute.xlu0 %6294
    %6296 = vrot.lane.b32.xlu0 %v6281, 64
    %v6297 = vpop.permute.xlu0 %6296
    %v6300 = vmul.f32 %v6290, %v6295
    %v6301 = vmul.f32 %v6291, %v6297
    %6304 = vrot.lane.b32.xlu0 %v6300, 64
    %v6305 = vpop.permute.xlu0 %6304
    %6306 = vrot.lane.b32.xlu0 %v6301, 64
    %v6307 = vpop.permute.xlu0 %6306
    %v6310 = vadd.f32 %v6278, %v6305
    %v6311 = vadd.f32 %v6279, %v6307
    %v6312 = vtanh.pop %v6310
    %v6313 = vtanh.pop %v6311
    %v6314 = vsub.f32 1.0, %v6290
    %v6315 = vsub.f32 1.0, %v6291
    %6318 = vrot.lane.b32.xlu0 %v6312, 96
    %v6319 = vpop.permute.xlu0 %6318
    %6320 = vrot.lane.b32.xlu0 %v6313, 96
    %v6321 = vpop.permute.xlu0 %6320
    %v6324 = vmul.f32 %v6314, %v6319
    %v6325 = vmul.f32 %v6315, %v6321
    %v6326 = vmul.f32 %v6290, %v5570
    %v6327 = vmul.f32 %v6291, %v5571
    %v6328 = vadd.f32 %v6324, %v6326
    %v6329 = vadd.f32 %v6325, %v6327
    %6332 = vrot.lane.b32.xlu0 %v6328, 96
    %v6333 = vpop.permute.xlu0 %6332
    %6334 = vrot.lane.b32.xlu0 %v6329, 96
    %v6335 = vpop.permute.xlu0 %6334
    %v6336 = vsel %vm51, %v6333, 0
    %v6338 = vsel %vm51, %v6335, 0
    %6340 = vmatprep.subr.mxu0 0.0
    %6341 = vmatpush1.msra.mxu0 0.0
    %6342 = vmatprep.subr.mxu0 0.0
    %6343 = vmatpush1.msra.mxu0 0.0
    %6344 = vmatprep.subr.mxu0 0.0
    %6345 = vmatpush1.msra.mxu0 0.0
    %6346 = vmatprep.subr.mxu0 0.0
    %6347 = vmatpush1.msra.mxu0 0.0
    %6348 = vmatprep.subr.mxu0 0.0
    %6349 = vmatpush1.msra.mxu0 0.0
    %6350 = vmatprep.subr.mxu0 0.0
    %6351 = vmatpush1.msra.mxu0 0.0
    %6352 = vmatprep.subr.mxu0 0.0
    %6353 = vmatpush1.msra.mxu0 0.0
    %6354 = vmatprep.subr.mxu0 0.0
    %6355 = vmatpush1.msra.mxu0 0.0
    %6356 = vmatprep.subr.mxu0 0.0
    %6357 = vmatpush1.msra.mxu0 0.0
    %6358 = vmatprep.subr.mxu0 0.0
    %6359 = vmatpush1.msra.mxu0 0.0
    %6360 = vmatprep.subr.mxu0 0.0
    %6361 = vmatpush1.msra.mxu0 0.0
    %6362 = vmatprep.subr.mxu0 0.0
    %6363 = vmatpush1.msra.mxu0 0.0
    %6364 = vmatprep.subr.mxu0 0.0
    %6365 = vmatpush1.msra.mxu0 %v1728
    %6366 = vmatprep.subr.mxu0 0.0
    %6367 = vmatpush1.msra.mxu0 %v1727
    %6368 = vmatprep.subr.mxu0 0.0
    %6369 = vmatpush1.msra.mxu0 %v1726
    %6370 = vmatprep.subr.mxu0 0.0
    %6371 = vmatpush1.msra.mxu0 %v1725
    %6372 = vmatprep.subr.mxu0 0.0
    %6373 = vmatpush2.msra.mxu0 0.0
    %6374 = vmatprep.subr.mxu0 0.0
    %6375 = vmatpush2.msra.mxu0 0.0
    %6376 = vmatprep.subr.mxu0 0.0
    %6377 = vmatpush2.msra.mxu0 0.0
    %6378 = vmatprep.subr.mxu0 0.0
    %6379 = vmatpush2.msra.mxu0 0.0
    %6380 = vmatprep.subr.mxu0 0.0
    %6381 = vmatpush2.msra.mxu0 0.0
    %6382 = vmatprep.subr.mxu0 0.0
    %6383 = vmatpush2.msra.mxu0 0.0
    %6384 = vmatprep.subr.mxu0 0.0
    %6385 = vmatpush2.msra.mxu0 0.0
    %6386 = vmatprep.subr.mxu0 0.0
    %6387 = vmatpush2.msra.mxu0 0.0
    %6388 = vmatprep.subr.mxu0 0.0
    %6389 = vmatpush2.msra.mxu0 0.0
    %6390 = vmatprep.subr.mxu0 0.0
    %6391 = vmatpush2.msra.mxu0 0.0
    %6392 = vmatprep.subr.mxu0 0.0
    %6393 = vmatpush2.msra.mxu0 0.0
    %6394 = vmatprep.subr.mxu0 0.0
    %6395 = vmatpush2.msra.mxu0 0.0
    %6396 = vmatprep.subr.mxu0 0.0
    %6397 = vmatpush2.msra.mxu0 0.0
    %6398 = vmatprep.subr.mxu0 0.0
    %6399 = vmatpush2.msra.mxu0 0.0
    %6400 = vmatprep.subr.mxu0 0.0
    %6401 = vmatpush2.msra.mxu0 0.0
    %6402 = vmatprep.subr.mxu0 0.0
    %6403 = vmatpush2.msra.mxu0 0.0
    %6404 = vmatprep.mubr.f32.mxu0 0.0
    %6405 = vmatmul.mubr.f32.gmra.mxu0 %v6336
    %v6406 = vpop.f32.mrf.mxu0
    %v6407 = vadd.f32 %v1636, %v6406
    %v6408 = vpop.f32.mrf.mxu0
    %6409 = vmatprep.mubr.f32.mxu0 0.0
    %6410 = vmatmul.mubr.f32.gmra.mxu0 %v6338
    %v6411 = vpop.f32.mrf.mxu0
    %v6412 = vadd.f32 %v1641, %v6411
    %v6413 = vpop.f32.mrf.mxu0
    %6414 = vdwg.mxu0
    %vm6415 = vcmp.gt.f32.partialorder %v6407, 20.0
    %vm6416 = vcmp.gt.f32.partialorder %v6412, 20.0
    %v6417 = vmin.f32 %v6407, 20.0
    %v6418 = vmin.f32 %v6412, 20.0
    %v6419 = vmul.f32 %v6417, 1.442695
    %v6420 = vpow.pop %v6419
    %v6421 = vmul.f32 %v6418, 1.442695
    %v6422 = vpow.pop %v6421
    %v6423 = vadd.f32 %v6420, 1.0
    %v6424 = vadd.f32 %v6422, 1.0
    %v6425 = vlog2.pop %v6423
    %v6426 = vmul.f32 %v6425, 0.6931472
    %v6427 = vlog2.pop %v6424
    %v6428 = vmul.f32 %v6427, 0.6931472
    %v6429 = vsel %vm6415, %v6407, %v6426
    %v6430 = vsel %vm6416, %v6412, %v6428
    %v6432 = vsel %vm51, %v6429, 0
    %v6435 = vsel %vm51, %v6430, 0
    %6437 = vmatprep.subr.mxu0 0.0
    %6438 = vmatpush1.msra.mxu0 0.0
    %6439 = vmatprep.subr.mxu0 0.0
    %6440 = vmatpush1.msra.mxu0 0.0
    %6441 = vmatprep.subr.mxu0 0.0
    %6442 = vmatpush1.msra.mxu0 0.0
    %6443 = vmatprep.subr.mxu0 0.0
    %6444 = vmatpush1.msra.mxu0 0.0
    %6445 = vmatprep.subr.mxu0 0.0
    %6446 = vmatpush1.msra.mxu0 0.0
    %6447 = vmatprep.subr.mxu0 0.0
    %6448 = vmatpush1.msra.mxu0 0.0
    %6449 = vmatprep.subr.mxu0 0.0
    %6450 = vmatpush1.msra.mxu0 0.0
    %6451 = vmatprep.subr.mxu0 0.0
    %6452 = vmatpush1.msra.mxu0 0.0
    %6453 = vmatprep.subr.mxu0 0.0
    %6454 = vmatpush1.msra.mxu0 0.0
    %6455 = vmatprep.subr.mxu0 0.0
    %6456 = vmatpush1.msra.mxu0 0.0
    %6457 = vmatprep.subr.mxu0 0.0
    %6458 = vmatpush1.msra.mxu0 0.0
    %6459 = vmatprep.subr.mxu0 0.0
    %6460 = vmatpush1.msra.mxu0 0.0
    %6461 = vmatprep.subr.mxu0 0.0
    %6462 = vmatpush1.msra.mxu0 %v1732
    %6463 = vmatprep.subr.mxu0 0.0
    %6464 = vmatpush1.msra.mxu0 %v1731
    %6465 = vmatprep.subr.mxu0 0.0
    %6466 = vmatpush1.msra.mxu0 %v1730
    %6467 = vmatprep.subr.mxu0 0.0
    %6468 = vmatpush1.msra.mxu0 %v1729
    %6469 = vmatprep.subr.mxu0 0.0
    %6470 = vmatpush2.msra.mxu0 0.0
    %6471 = vmatprep.subr.mxu0 0.0
    %6472 = vmatpush2.msra.mxu0 0.0
    %6473 = vmatprep.subr.mxu0 0.0
    %6474 = vmatpush2.msra.mxu0 0.0
    %6475 = vmatprep.subr.mxu0 0.0
    %6476 = vmatpush2.msra.mxu0 0.0
    %6477 = vmatprep.subr.mxu0 0.0
    %6478 = vmatpush2.msra.mxu0 0.0
    %6479 = vmatprep.subr.mxu0 0.0
    %6480 = vmatpush2.msra.mxu0 0.0
    %6481 = vmatprep.subr.mxu0 0.0
    %6482 = vmatpush2.msra.mxu0 0.0
    %6483 = vmatprep.subr.mxu0 0.0
    %6484 = vmatpush2.msra.mxu0 0.0
    %6485 = vmatprep.subr.mxu0 0.0
    %6486 = vmatpush2.msra.mxu0 0.0
    %6487 = vmatprep.subr.mxu0 0.0
    %6488 = vmatpush2.msra.mxu0 0.0
    %6489 = vmatprep.subr.mxu0 0.0
    %6490 = vmatpush2.msra.mxu0 0.0
    %6491 = vmatprep.subr.mxu0 0.0
    %6492 = vmatpush2.msra.mxu0 0.0
    %6493 = vmatprep.subr.mxu0 0.0
    %6494 = vmatpush2.msra.mxu0 0.0
    %6495 = vmatprep.subr.mxu0 0.0
    %6496 = vmatpush2.msra.mxu0 0.0
    %6497 = vmatprep.subr.mxu0 0.0
    %6498 = vmatpush2.msra.mxu0 0.0
    %6499 = vmatprep.subr.mxu0 0.0
    %6500 = vmatpush2.msra.mxu0 0.0
    %6501 = vmatprep.mubr.f32.mxu0 0.0
    %6502 = vmatmul.mubr.f32.gmra.mxu0 %v6432
    %v6503 = vpop.f32.mrf.mxu0
    %v6504 = vadd.f32 %v2019, %v6503
    %v6505 = vpop.f32.mrf.mxu0
    %6506 = vmatprep.mubr.f32.mxu0 0.0
    %6507 = vmatmul.mubr.f32.gmra.mxu0 %v6435
    %v6508 = vpop.f32.mrf.mxu0
    %v6509 = vadd.f32 %v2019, %v6508
    %v6510 = vpop.f32.mrf.mxu0
    %6511 = vdwg.mxu0
    %vm6512 = vcmp.gt.f32.partialorder %v6504, 20.0
    %vm6513 = vcmp.gt.f32.partialorder %v6509, 20.0
    %v6514 = vmin.f32 %v6504, 20.0
    %v6515 = vmin.f32 %v6509, 20.0
    %v6516 = vmul.f32 %v6514, 1.442695
    %v6517 = vpow.pop %v6516
    %v6518 = vmul.f32 %v6515, 1.442695
    %v6519 = vpow.pop %v6518
    %v6520 = vadd.f32 %v6517, 1.0
    %v6521 = vadd.f32 %v6519, 1.0
    %v6522 = vlog2.pop %v6520
    %v6523 = vmul.f32 %v6522, 0.6931472
    %v6524 = vlog2.pop %v6521
    %v6525 = vmul.f32 %v6524, 0.6931472
    %v6526 = vsel %vm6512, %v6504, %v6523
    %v6527 = vsel %vm6513, %v6509, %v6525
    %v6529 = vsel %vm51, %v6526, 0
    %v6532 = vsel %vm51, %v6527, 0
    %6534 = vmatprep.subr.mxu0 0.0
    %6535 = vmatpush1.msra.mxu0 0.0
    %6536 = vmatprep.subr.mxu0 0.0
    %6537 = vmatpush1.msra.mxu0 0.0
    %6538 = vmatprep.subr.mxu0 0.0
    %6539 = vmatpush1.msra.mxu0 0.0
    %6540 = vmatprep.subr.mxu0 0.0
    %6541 = vmatpush1.msra.mxu0 0.0
    %6542 = vmatprep.subr.mxu0 0.0
    %6543 = vmatpush1.msra.mxu0 0.0
    %6544 = vmatprep.subr.mxu0 0.0
    %6545 = vmatpush1.msra.mxu0 0.0
    %6546 = vmatprep.subr.mxu0 0.0
    %6547 = vmatpush1.msra.mxu0 0.0
    %6548 = vmatprep.subr.mxu0 0.0
    %6549 = vmatpush1.msra.mxu0 0.0
    %6550 = vmatprep.subr.mxu0 0.0
    %6551 = vmatpush1.msra.mxu0 0.0
    %6552 = vmatprep.subr.mxu0 0.0
    %6553 = vmatpush1.msra.mxu0 0.0
    %6554 = vmatprep.subr.mxu0 0.0
    %6555 = vmatpush1.msra.mxu0 0.0
    %6556 = vmatprep.subr.mxu0 0.0
    %6557 = vmatpush1.msra.mxu0 0.0
    %6558 = vmatprep.subr.mxu0 0.0
    %6559 = vmatpush1.msra.mxu0 %v1736
    %6560 = vmatprep.subr.mxu0 0.0
    %6561 = vmatpush1.msra.mxu0 %v1735
    %6562 = vmatprep.subr.mxu0 0.0
    %6563 = vmatpush1.msra.mxu0 %v1734
    %6564 = vmatprep.subr.mxu0 0.0
    %6565 = vmatpush1.msra.mxu0 %v1733
    %6566 = vmatprep.subr.mxu0 0.0
    %6567 = vmatpush2.msra.mxu0 0.0
    %6568 = vmatprep.subr.mxu0 0.0
    %6569 = vmatpush2.msra.mxu0 0.0
    %6570 = vmatprep.subr.mxu0 0.0
    %6571 = vmatpush2.msra.mxu0 0.0
    %6572 = vmatprep.subr.mxu0 0.0
    %6573 = vmatpush2.msra.mxu0 0.0
    %6574 = vmatprep.subr.mxu0 0.0
    %6575 = vmatpush2.msra.mxu0 0.0
    %6576 = vmatprep.subr.mxu0 0.0
    %6577 = vmatpush2.msra.mxu0 0.0
    %6578 = vmatprep.subr.mxu0 0.0
    %6579 = vmatpush2.msra.mxu0 0.0
    %6580 = vmatprep.subr.mxu0 0.0
    %6581 = vmatpush2.msra.mxu0 0.0
    %6582 = vmatprep.subr.mxu0 0.0
    %6583 = vmatpush2.msra.mxu0 0.0
    %6584 = vmatprep.subr.mxu0 0.0
    %6585 = vmatpush2.msra.mxu0 0.0
    %6586 = vmatprep.subr.mxu0 0.0
    %6587 = vmatpush2.msra.mxu0 0.0
    %6588 = vmatprep.subr.mxu0 0.0
    %6589 = vmatpush2.msra.mxu0 0.0
    %6590 = vmatprep.subr.mxu0 0.0
    %6591 = vmatpush2.msra.mxu0 0.0
    %6592 = vmatprep.subr.mxu0 0.0
    %6593 = vmatpush2.msra.mxu0 0.0
    %6594 = vmatprep.subr.mxu0 0.0
    %6595 = vmatpush2.msra.mxu0 0.0
    %6596 = vmatprep.subr.mxu0 0.0
    %6597 = vmatpush2.msra.mxu0 0.0
    %6598 = vmatprep.mubr.f32.mxu0 0.0
    %6599 = vmatmul.mubr.f32.gmra.mxu0 %v6529
    %v6600 = vpop.f32.mrf.mxu0
    %v6601 = vadd.f32 %v2120, %v6600
    %v6602 = vpop.f32.mrf.mxu0
    %6603 = vmatprep.mubr.f32.mxu0 0.0
    %6604 = vmatmul.mubr.f32.gmra.mxu0 %v6532
    %v6605 = vpop.f32.mrf.mxu0
    %v6606 = vadd.f32 %v2120, %v6605
    %v6607 = vpop.f32.mrf.mxu0
    %6608 = vdwg.mxu0
    %v6609 = vmul.f32 %v6129, 0.5
    %v6610 = vmul.f32 %v6130, 0.5
    %v6611 = vadd.f32 %v6103, %v6609
    %v6612 = vadd.f32 %v6104, %v6610
    %v6613 = vadd.f32 %v6611, %v6601
    %v6614 = vadd.f32 %v6612, %v6606
    %6617 = vrot.lane.b32.xlu0 %v6601, 125
    %v6618 = vpop.permute.xlu0 %6617
    %6619 = vrot.lane.b32.xlu0 %v6606, 125
    %v6620 = vpop.permute.xlu0 %6619
    %v6623 = vadd.f32 %v6601, %v6618
    %v6624 = vadd.f32 %v6606, %v6620
    %v6625 = vmul.f32 %v6623, 0.5
    %v6626 = vmul.f32 %v6624, 0.5
    %v6627 = vsub.f32 %v6601, %v6618
    %v6628 = vsub.f32 %v6606, %v6620
    %v6629 = vmul.f32 %v6627, 0.5
    %v6630 = vmul.f32 %v6628, 0.5
    %v6631 = vmul.f32 %v6629, %v6629
    %v6632 = vmul.f32 %v6630, %v6630
    %6633 = vrot.lane.b32.xlu0 %v6601, 127
    %v6634 = vpop.permute.xlu0 %6633
    %6635 = vrot.lane.b32.xlu0 %v6606, 127
    %v6636 = vpop.permute.xlu0 %6635
    %v6639 = vmul.f32 %v6601, %v6634
    %v6640 = vmul.f32 %v6606, %v6636
    %6643 = vrot.lane.b32.xlu0 %v6639, 127
    %v6644 = vpop.permute.xlu0 %6643
    %6645 = vrot.lane.b32.xlu0 %v6640, 127
    %v6646 = vpop.permute.xlu0 %6645
    %v6649 = vadd.f32 %v6631, %v6644
    %v6650 = vadd.f32 %v6632, %v6646
    %v6651 = vmul.f32 %v6649, 0.00024414063
    %v6652 = vmul.f32 %v6650, 0.00024414063
    %v6653 = vmul.f32 %v6651, 2.4801588e-05
    %v6654 = vmul.f32 %v6652, 2.4801588e-05
    %v6655 = vadd.f32 %v6653, 0.0013888889
    %v6656 = vadd.f32 %v6654, 0.0013888889
    %v6657 = vmul.f32 %v6651, %v6655
    %v6658 = vmul.f32 %v6652, %v6656
    %v6659 = vadd.f32 %v6657, 0.041666668
    %v6660 = vadd.f32 %v6658, 0.041666668
    %v6661 = vmul.f32 %v6651, %v6659
    %v6662 = vmul.f32 %v6652, %v6660
    %v6663 = vadd.f32 %v6661, 0.5
    %v6664 = vadd.f32 %v6662, 0.5
    %v6665 = vmul.f32 %v6651, %v6663
    %v6666 = vmul.f32 %v6652, %v6664
    %v6667 = vadd.f32 %v6665, 1.0
    %v6668 = vadd.f32 %v6666, 1.0
    %v6669 = vmul.f32 %v6651, 2.7557319e-06
    %v6670 = vmul.f32 %v6652, 2.7557319e-06
    %v6671 = vadd.f32 %v6669, 0.0001984127
    %v6672 = vadd.f32 %v6670, 0.0001984127
    %v6673 = vmul.f32 %v6651, %v6671
    %v6674 = vmul.f32 %v6652, %v6672
    %v6675 = vadd.f32 %v6673, 0.008333334
    %v6676 = vadd.f32 %v6674, 0.008333334
    %v6677 = vmul.f32 %v6651, %v6675
    %v6678 = vmul.f32 %v6652, %v6676
    %v6679 = vadd.f32 %v6677, 0.16666667
    %v6680 = vadd.f32 %v6678, 0.16666667
    %v6681 = vmul.f32 %v6651, %v6679
    %v6682 = vmul.f32 %v6652, %v6680
    %v6683 = vadd.f32 %v6681, 1.0
    %v6684 = vadd.f32 %v6682, 1.0
    %v6685 = vmul.f32 %v6683, %v6667
    %v6686 = vmul.f32 %v6684, %v6668
    %v6687 = vmul.f32 %v6667, 2.0
    %v6688 = vmul.f32 %v6668, 2.0
    %v6689 = vmul.f32 %v6687, %v6667
    %v6690 = vmul.f32 %v6688, %v6668
    %v6691 = vsub.f32 %v6689, 1.0
    %v6692 = vsub.f32 %v6690, 1.0
    %v6693 = vmul.f32 %v6685, %v6691
    %v6694 = vmul.f32 %v6686, %v6692
    %v6695 = vmul.f32 %v6691, 2.0
    %v6696 = vmul.f32 %v6692, 2.0
    %v6697 = vmul.f32 %v6695, %v6691
    %v6698 = vmul.f32 %v6696, %v6692
    %v6699 = vsub.f32 %v6697, 1.0
    %v6700 = vsub.f32 %v6698, 1.0
    %v6701 = vmul.f32 %v6693, %v6699
    %v6702 = vmul.f32 %v6694, %v6700
    %v6703 = vmul.f32 %v6699, 2.0
    %v6704 = vmul.f32 %v6700, 2.0
    %v6705 = vmul.f32 %v6703, %v6699
    %v6706 = vmul.f32 %v6704, %v6700
    %v6707 = vsub.f32 %v6705, 1.0
    %v6708 = vsub.f32 %v6706, 1.0
    %v6709 = vmul.f32 %v6701, %v6707
    %v6710 = vmul.f32 %v6702, %v6708
    %v6711 = vmul.f32 %v6707, 2.0
    %v6712 = vmul.f32 %v6708, 2.0
    %v6713 = vmul.f32 %v6711, %v6707
    %v6714 = vmul.f32 %v6712, %v6708
    %v6715 = vsub.f32 %v6713, 1.0
    %v6716 = vsub.f32 %v6714, 1.0
    %v6717 = vmul.f32 %v6709, %v6715
    %v6718 = vmul.f32 %v6710, %v6716
    %v6719 = vmul.f32 %v6715, 2.0
    %v6720 = vmul.f32 %v6716, 2.0
    %v6721 = vmul.f32 %v6719, %v6715
    %v6722 = vmul.f32 %v6720, %v6716
    %v6723 = vsub.f32 %v6721, 1.0
    %v6724 = vsub.f32 %v6722, 1.0
    %v6725 = vmul.f32 %v6717, %v6723
    %v6726 = vmul.f32 %v6718, %v6724
    %v6727 = vmul.f32 %v6723, 2.0
    %v6728 = vmul.f32 %v6724, 2.0
    %v6729 = vmul.f32 %v6727, %v6723
    %v6730 = vmul.f32 %v6728, %v6724
    %v6731 = vsub.f32 %v6729, 1.0
    %v6732 = vsub.f32 %v6730, 1.0
    %v6733 = vmul.f32 %v6625, 1.442695
    %v6734 = vpow.pop %v6733
    %v6735 = vmul.f32 %v6626, 1.442695
    %v6736 = vpow.pop %v6735
    %v6737 = vmul.f32 %v6725, %v6629
    %v6738 = vmul.f32 %v6726, %v6630
    %v6739 = vadd.f32 %v6731, %v6737
    %v6740 = vadd.f32 %v6732, %v6738
    %v6741 = vmul.f32 %v6734, %v6739
    %v6742 = vmul.f32 %v6736, %v6740
    %v6743 = vmul.f32 %v6725, %v6634
    %v6744 = vmul.f32 %v6726, %v6636
    %v6745 = vmul.f32 %v6734, %v6743
    %v6746 = vmul.f32 %v6736, %v6744
    %6747 = vrot.lane.b32.xlu0 %v6601, 126
    %v6748 = vpop.permute.xlu0 %6747
    %6749 = vrot.lane.b32.xlu0 %v6606, 126
    %v6750 = vpop.permute.xlu0 %6749
    %v6753 = vmul.f32 %v6725, %v6748
    %v6754 = vmul.f32 %v6726, %v6750
    %v6755 = vmul.f32 %v6734, %v6753
    %v6756 = vmul.f32 %v6736, %v6754
    %v6757 = vsub.f32 %v6731, %v6737
    %v6758 = vsub.f32 %v6732, %v6738
    %v6759 = vmul.f32 %v6734, %v6757
    %v6760 = vmul.f32 %v6736, %v6758
    %6761 = vrot.lane.b32.xlu0 %v1737, 118
    %v6762 = vpop.permute.xlu0 %6761
    %6763 = vrot.lane.b32.xlu0 %v1738, 118
    %v6764 = vpop.permute.xlu0 %6763
    %v6767 = vmul.f32 %v6741, %v6762
    %v6768 = vmul.f32 %v6742, %v6764
    %6771 = vrot.lane.b32.xlu0 %v6767, 126
    %v6772 = vpop.permute.xlu0 %6771
    %6773 = vrot.lane.b32.xlu0 %v6768, 126
    %v6774 = vpop.permute.xlu0 %6773
    %v6777 = vadd.f32 %v6613, %v6772
    %v6778 = vadd.f32 %v6614, %v6774
    %6779 = vrot.lane.b32.xlu0 %v1737, 117
    %v6780 = vpop.permute.xlu0 %6779
    %6781 = vrot.lane.b32.xlu0 %v1738, 117
    %v6782 = vpop.permute.xlu0 %6781
    %v6785 = vmul.f32 %v6745, %v6780
    %v6786 = vmul.f32 %v6746, %v6782
    %6789 = vrot.lane.b32.xlu0 %v6785, 126
    %v6790 = vpop.permute.xlu0 %6789
    %6791 = vrot.lane.b32.xlu0 %v6786, 126
    %v6792 = vpop.permute.xlu0 %6791
    %v6795 = vadd.f32 %v6777, %v6790
    %v6796 = vadd.f32 %v6778, %v6792
    %v6797 = vmul.f32 %v6755, %v6762
    %v6798 = vmul.f32 %v6756, %v6764
    %6801 = vrot.lane.b32.xlu0 %v6797, 127
    %v6802 = vpop.permute.xlu0 %6801
    %6803 = vrot.lane.b32.xlu0 %v6798, 127
    %v6804 = vpop.permute.xlu0 %6803
    %v6807 = vadd.f32 %v6613, %v6802
    %v6808 = vadd.f32 %v6614, %v6804
    %v6809 = vmul.f32 %v6759, %v6780
    %v6810 = vmul.f32 %v6760, %v6782
    %6813 = vrot.lane.b32.xlu0 %v6809, 127
    %v6814 = vpop.permute.xlu0 %6813
    %6815 = vrot.lane.b32.xlu0 %v6810, 127
    %v6816 = vpop.permute.xlu0 %6815
    %v6819 = vadd.f32 %v6807, %v6814
    %v6820 = vadd.f32 %v6808, %v6816
    %6823 = vrot.lane.b32.xlu0 %v6613, 2
    %v6824 = vpop.permute.xlu0 %6823
    %6825 = vrot.lane.b32.xlu0 %v6614, 2
    %v6826 = vpop.permute.xlu0 %6825
    %6831 = vrot.lane.b32.xlu0 %v6741, 2
    %v6832 = vpop.permute.xlu0 %6831
    %6833 = vrot.lane.b32.xlu0 %v6742, 2
    %v6834 = vpop.permute.xlu0 %6833
    %6839 = vrot.lane.b32.xlu0 %v6745, 3
    %v6840 = vpop.permute.xlu0 %6839
    %6841 = vrot.lane.b32.xlu0 %v6746, 3
    %v6842 = vpop.permute.xlu0 %6841
    %6847 = vrot.lane.b32.xlu0 %v6755, 4
    %v6848 = vpop.permute.xlu0 %6847
    %6849 = vrot.lane.b32.xlu0 %v6756, 4
    %v6850 = vpop.permute.xlu0 %6849
    %6855 = vrot.lane.b32.xlu0 %v6759, 5
    %v6856 = vpop.permute.xlu0 %6855
    %6857 = vrot.lane.b32.xlu0 %v6760, 5
    %v6858 = vpop.permute.xlu0 %6857
    %v6861 = vsel %vm2464, %v6795, %v6819
    %v6862 = vsel %vm2464, %v6796, %v6820
    %v6863 = vsel %vm1739, %v6861, %v6824
    %v6864 = vsel %vm1739, %v6862, %v6826
    %v6865 = vsel %vm2469, %v6863, %v6824
    %v6866 = vsel %vm2469, %v6864, %v6826
    %v6867 = vsel %vm1132, %v6865, %v6832
    %v6868 = vsel %vm1132, %v6866, %v6834
    %v6869 = vsel %vm2474, %v6867, %v6840
    %v6870 = vsel %vm2474, %v6868, %v6842
    %v6871 = vsel %vm1744, %v6869, %v6848
    %v6872 = vsel %vm1744, %v6870, %v6850
    %v6873 = vsel %vm2479, %v6871, %v6856
    %v6874 = vsel %vm2479, %v6872, %v6858
    %6877 = vrot.lane.b32.xlu0 %v6873, 48
    %v6878 = vpop.permute.xlu0 %6877
    %6879 = vrot.lane.b32.xlu0 %v6874, 48
    %v6880 = vpop.permute.xlu0 %6879
    %vm6883 = vcmask 458112
    %6884 = vst.msk [vmem:[#allocation4] sm:$0xff] %vm6883, %v6878
    %vm6885 = vcmask 454016
    %6886 = vst.msk [vmem:[#allocation4 + $0x8] sm:$0xf] %vm6885, %v6880
    %v6887 = vsub.f32 %v6861, %v6103
    %v6888 = vsub.f32 %v6862, %v6104
    %6889 = vrot.lane.b32.xlu0 %v3919, 2
    %v6890 = vpop.permute.xlu0 %6889
    %6891 = vrot.lane.b32.xlu0 %v3920, 2
    %v6892 = vpop.permute.xlu0 %6891
    %6895 = vrot.lane.b32.xlu0 %v4649, 4
    %v6896 = vpop.permute.xlu0 %6895
    %6897 = vrot.lane.b32.xlu0 %v4650, 4
    %v6898 = vpop.permute.xlu0 %6897
    %6901 = vrot.lane.b32.xlu0 %v5377, 6
    %v6902 = vpop.permute.xlu0 %6901
    %6903 = vrot.lane.b32.xlu0 %v5378, 6
    %v6904 = vpop.permute.xlu0 %6903
    %6907 = vrot.lane.b32.xlu0 %v6103, 8
    %v6908 = vpop.permute.xlu0 %6907
    %6909 = vrot.lane.b32.xlu0 %v6104, 8
    %v6910 = vpop.permute.xlu0 %6909
    %6915 = vrot.lane.b32.xlu0 %v6861, 10
    %v6916 = vpop.permute.xlu0 %6915
    %6917 = vrot.lane.b32.xlu0 %v6862, 10
    %v6918 = vpop.permute.xlu0 %6917
    %6921 = vrot.lane.b32.xlu0 %v6328, 112
    %v6922 = vpop.permute.xlu0 %6921
    %6923 = vrot.lane.b32.xlu0 %v6329, 112
    %v6924 = vpop.permute.xlu0 %6923
    %v6927 = vsel %vm1739, %v3187, %v6890
    %v6928 = vsel %vm1739, %v3188, %v6892
    %v6929 = vsel %vm1132, %v6927, %v6896
    %v6930 = vsel %vm1132, %v6928, %v6898
    %v6931 = vsel %vm1744, %v6929, %v6902
    %v6932 = vsel %vm1744, %v6930, %v6904
    %v6933 = vsel %vm1747, %v6931, %v6908
    %v6934 = vsel %vm1747, %v6932, %v6910
    %v6935 = vsel %vm1750, %v6933, %v6916
    %v6936 = vsel %vm1750, %v6934, %v6918
    %v6937 = vsel %vm1753, %v6935, 0.0
    %v6938 = vsel %vm1753, %v6936, 0.0
    %v6939 = vsel %vm1756, %v6937, %v6922
    %v6940 = vsel %vm1756, %v6938, %v6924
    %v6941 = vld [vmem:[%s8] sm:$0xff]
    %v6942 = vld [vmem:[%s8 + $0x8] sm:$0xff]
    %v6943 = vld [vmem:[%s8 + $0x10] sm:$0xff]
    %v6944 = vld [vmem:[%s8 + $0x18] sm:$0xff]
    %v6945 = vld [vmem:[%s8 + $0x20] sm:$0xff]
    %v6946 = vld [vmem:[%s8 + $0x28] sm:$0xff]
    %v6947 = vld [vmem:[%s8 + $0x30] sm:$0xff]
    %v6948 = vld [vmem:[%s8 + $0x38] sm:$0xff]
    %v6949 = vld [vmem:[%s8 + $0x40] sm:$0xff]
    %v6950 = vld [vmem:[%s8 + $0x48] sm:$0xff]
    %v6951 = vld [vmem:[%s8 + $0x50] sm:$0xff]
    %v6952 = vld [vmem:[%s8 + $0x58] sm:$0xff]
    %v6954 = vsel %vm1771, %v6939, 0
    %v6957 = vsel %vm1771, %v6940, 0
    %6959 = vmatprep.subr.mxu0 0.0
    %6960 = vmatpush1.msra.mxu0 0.0
    %6961 = vmatprep.subr.mxu0 0.0
    %6962 = vmatpush1.msra.mxu0 0.0
    %6963 = vmatprep.subr.mxu0 0.0
    %6964 = vmatpush1.msra.mxu0 0.0
    %6965 = vmatprep.subr.mxu0 0.0
    %6966 = vmatpush1.msra.mxu0 0.0
    %6967 = vmatprep.subr.mxu0 0.0
    %6968 = vmatpush1.msra.mxu0 0.0
    %6969 = vmatprep.subr.mxu0 0.0
    %6970 = vmatpush1.msra.mxu0 0.0
    %6971 = vmatprep.subr.mxu0 0.0
    %6972 = vmatpush1.msra.mxu0 0.0
    %6973 = vmatprep.subr.mxu0 0.0
    %6974 = vmatpush1.msra.mxu0 0.0
    %6975 = vmatprep.subr.mxu0 0.0
    %6976 = vmatpush1.msra.mxu0 0.0
    %6977 = vmatprep.subr.mxu0 0.0
    %6978 = vmatpush1.msra.mxu0 0.0
    %6979 = vmatprep.subr.mxu0 %v6952
    %6980 = vmatpush1.msra.mxu0 %v6951
    %6981 = vmatprep.subr.mxu0 %v6950
    %6982 = vmatpush1.msra.mxu0 %v6949
    %6983 = vmatprep.subr.mxu0 %v6948
    %6984 = vmatpush1.msra.mxu0 %v6947
    %6985 = vmatprep.subr.mxu0 %v6946
    %6986 = vmatpush1.msra.mxu0 %v6945
    %6987 = vmatprep.subr.mxu0 %v6944
    %6988 = vmatpush1.msra.mxu0 %v6943
    %6989 = vmatprep.subr.mxu0 %v6942
    %6990 = vmatpush1.msra.mxu0 %v6941
    %6991 = vmatprep.subr.mxu0 0.0
    %6992 = vmatpush2.msra.mxu0 0.0
    %6993 = vmatprep.subr.mxu0 0.0
    %6994 = vmatpush2.msra.mxu0 0.0
    %6995 = vmatprep.subr.mxu0 0.0
    %6996 = vmatpush2.msra.mxu0 0.0
    %6997 = vmatprep.subr.mxu0 0.0
    %6998 = vmatpush2.msra.mxu0 0.0
    %6999 = vmatprep.subr.mxu0 0.0
    %7000 = vmatpush2.msra.mxu0 0.0
    %7001 = vmatprep.subr.mxu0 0.0
    %7002 = vmatpush2.msra.mxu0 0.0
    %7003 = vmatprep.subr.mxu0 0.0
    %7004 = vmatpush2.msra.mxu0 0.0
    %7005 = vmatprep.subr.mxu0 0.0
    %7006 = vmatpush2.msra.mxu0 0.0
    %7007 = vmatprep.subr.mxu0 0.0
    %7008 = vmatpush2.msra.mxu0 0.0
    %7009 = vmatprep.subr.mxu0 0.0
    %7010 = vmatpush2.msra.mxu0 0.0
    %7011 = vmatprep.subr.mxu0 0.0
    %7012 = vmatpush2.msra.mxu0 0.0
    %7013 = vmatprep.subr.mxu0 0.0
    %7014 = vmatpush2.msra.mxu0 0.0
    %7015 = vmatprep.subr.mxu0 0.0
    %7016 = vmatpush2.msra.mxu0 0.0
    %7017 = vmatprep.subr.mxu0 0.0
    %7018 = vmatpush2.msra.mxu0 0.0
    %7019 = vmatprep.subr.mxu0 0.0
    %7020 = vmatpush2.msra.mxu0 0.0
    %7021 = vmatprep.subr.mxu0 0.0
    %7022 = vmatpush2.msra.mxu0 0.0
    %7023 = vmatprep.mubr.f32.mxu0 0.0
    %7024 = vmatmul.mubr.f32.gmra.mxu0 %v6954
    %v7025 = vpop.f32.mrf.mxu0
    %v7026 = vadd.f32 0.0, %v7025
    %v7027 = vpop.f32.mrf.mxu0
    %v7028 = vadd.f32 0.0, %v7027
    %7029 = vmatprep.mubr.f32.mxu0 0.0
    %7030 = vmatmul.mubr.f32.gmra.mxu0 %v6957
    %v7031 = vpop.f32.mrf.mxu0
    %v7032 = vadd.f32 0.0, %v7031
    %v7033 = vpop.f32.mrf.mxu0
    %v7034 = vadd.f32 0.0, %v7033
    %7035 = vdwg.mxu0
    %v7036 = vadd.f32 %v7026, %v1858
    %v7037 = vadd.f32 %v7032, %v1858
    %v7038 = vadd.f32 %v7028, %v1864
    %v7039 = vadd.f32 %v7034, %v1864
    %v7040 = vadd.f32 %v7036, %v7038
    %v7041 = vadd.f32 %v7037, %v7039
    %v7042 = vmul.f32 %v7040, 0.5
    %v7043 = vmul.f32 %v7041, 0.5
    %v7044 = vtanh.pop %v7042
    %v7045 = vtanh.pop %v7043
    %v7046 = vadd.f32 %v7044, 1.0
    %v7047 = vadd.f32 %v7045, 1.0
    %v7048 = vmul.f32 %v7046, 0.5
    %v7049 = vmul.f32 %v7047, 0.5
    %7052 = vrot.lane.b32.xlu0 %v7038, 64
    %v7053 = vpop.permute.xlu0 %7052
    %7054 = vrot.lane.b32.xlu0 %v7039, 64
    %v7055 = vpop.permute.xlu0 %7054
    %v7058 = vmul.f32 %v7048, %v7053
    %v7059 = vmul.f32 %v7049, %v7055
    %7062 = vrot.lane.b32.xlu0 %v7058, 64
    %v7063 = vpop.permute.xlu0 %7062
    %7064 = vrot.lane.b32.xlu0 %v7059, 64
    %v7065 = vpop.permute.xlu0 %7064
    %v7068 = vadd.f32 %v7036, %v7063
    %v7069 = vadd.f32 %v7037, %v7065
    %v7070 = vtanh.pop %v7068
    %v7071 = vtanh.pop %v7069
    %v7072 = vsub.f32 1.0, %v7048
    %v7073 = vsub.f32 1.0, %v7049
    %7076 = vrot.lane.b32.xlu0 %v7070, 96
    %v7077 = vpop.permute.xlu0 %7076
    %7078 = vrot.lane.b32.xlu0 %v7071, 96
    %v7079 = vpop.permute.xlu0 %7078
    %v7082 = vmul.f32 %v7072, %v7077
    %v7083 = vmul.f32 %v7073, %v7079
    %v7084 = vmul.f32 %v7048, %v6328
    %v7085 = vmul.f32 %v7049, %v6329
    %v7086 = vadd.f32 %v7082, %v7084
    %v7087 = vadd.f32 %v7083, %v7085
    %7090 = vrot.lane.b32.xlu0 %v7086, 96
    %v7091 = vpop.permute.xlu0 %7090
    %7092 = vrot.lane.b32.xlu0 %v7087, 96
    %v7093 = vpop.permute.xlu0 %7092
    %v7094 = vsel %vm51, %v7091, 0
    %v7096 = vsel %vm51, %v7093, 0
    %7098 = vmatprep.subr.mxu0 0.0
    %7099 = vmatpush1.msra.mxu0 0.0
    %7100 = vmatprep.subr.mxu0 0.0
    %7101 = vmatpush1.msra.mxu0 0.0
    %7102 = vmatprep.subr.mxu0 0.0
    %7103 = vmatpush1.msra.mxu0 0.0
    %7104 = vmatprep.subr.mxu0 0.0
    %7105 = vmatpush1.msra.mxu0 0.0
    %7106 = vmatprep.subr.mxu0 0.0
    %7107 = vmatpush1.msra.mxu0 0.0
    %7108 = vmatprep.subr.mxu0 0.0
    %7109 = vmatpush1.msra.mxu0 0.0
    %7110 = vmatprep.subr.mxu0 0.0
    %7111 = vmatpush1.msra.mxu0 0.0
    %7112 = vmatprep.subr.mxu0 0.0
    %7113 = vmatpush1.msra.mxu0 0.0
    %7114 = vmatprep.subr.mxu0 0.0
    %7115 = vmatpush1.msra.mxu0 0.0
    %7116 = vmatprep.subr.mxu0 0.0
    %7117 = vmatpush1.msra.mxu0 0.0
    %7118 = vmatprep.subr.mxu0 0.0
    %7119 = vmatpush1.msra.mxu0 0.0
    %7120 = vmatprep.subr.mxu0 0.0
    %7121 = vmatpush1.msra.mxu0 0.0
    %7122 = vmatprep.subr.mxu0 0.0
    %7123 = vmatpush1.msra.mxu0 %v1728
    %7124 = vmatprep.subr.mxu0 0.0
    %7125 = vmatpush1.msra.mxu0 %v1727
    %7126 = vmatprep.subr.mxu0 0.0
    %7127 = vmatpush1.msra.mxu0 %v1726
    %7128 = vmatprep.subr.mxu0 0.0
    %7129 = vmatpush1.msra.mxu0 %v1725
    %7130 = vmatprep.subr.mxu0 0.0
    %7131 = vmatpush2.msra.mxu0 0.0
    %7132 = vmatprep.subr.mxu0 0.0
    %7133 = vmatpush2.msra.mxu0 0.0
    %7134 = vmatprep.subr.mxu0 0.0
    %7135 = vmatpush2.msra.mxu0 0.0
    %7136 = vmatprep.subr.mxu0 0.0
    %7137 = vmatpush2.msra.mxu0 0.0
    %7138 = vmatprep.subr.mxu0 0.0
    %7139 = vmatpush2.msra.mxu0 0.0
    %7140 = vmatprep.subr.mxu0 0.0
    %7141 = vmatpush2.msra.mxu0 0.0
    %7142 = vmatprep.subr.mxu0 0.0
    %7143 = vmatpush2.msra.mxu0 0.0
    %7144 = vmatprep.subr.mxu0 0.0
    %7145 = vmatpush2.msra.mxu0 0.0
    %7146 = vmatprep.subr.mxu0 0.0
    %7147 = vmatpush2.msra.mxu0 0.0
    %7148 = vmatprep.subr.mxu0 0.0
    %7149 = vmatpush2.msra.mxu0 0.0
    %7150 = vmatprep.subr.mxu0 0.0
    %7151 = vmatpush2.msra.mxu0 0.0
    %7152 = vmatprep.subr.mxu0 0.0
    %7153 = vmatpush2.msra.mxu0 0.0
    %7154 = vmatprep.subr.mxu0 0.0
    %7155 = vmatpush2.msra.mxu0 0.0
    %7156 = vmatprep.subr.mxu0 0.0
    %7157 = vmatpush2.msra.mxu0 0.0
    %7158 = vmatprep.subr.mxu0 0.0
    %7159 = vmatpush2.msra.mxu0 0.0
    %7160 = vmatprep.subr.mxu0 0.0
    %7161 = vmatpush2.msra.mxu0 0.0
    %7162 = vmatprep.mubr.f32.mxu0 0.0
    %7163 = vmatmul.mubr.f32.gmra.mxu0 %v7094
    %v7164 = vpop.f32.mrf.mxu0
    %v7165 = vadd.f32 %v1636, %v7164
    %v7166 = vpop.f32.mrf.mxu0
    %7167 = vmatprep.mubr.f32.mxu0 0.0
    %7168 = vmatmul.mubr.f32.gmra.mxu0 %v7096
    %v7169 = vpop.f32.mrf.mxu0
    %v7170 = vadd.f32 %v1641, %v7169
    %v7171 = vpop.f32.mrf.mxu0
    %7172 = vdwg.mxu0
    %vm7173 = vcmp.gt.f32.partialorder %v7165, 20.0
    %vm7174 = vcmp.gt.f32.partialorder %v7170, 20.0
    %v7175 = vmin.f32 %v7165, 20.0
    %v7176 = vmin.f32 %v7170, 20.0
    %v7177 = vmul.f32 %v7175, 1.442695
    %v7178 = vpow.pop %v7177
    %v7179 = vmul.f32 %v7176, 1.442695
    %v7180 = vpow.pop %v7179
    %v7181 = vadd.f32 %v7178, 1.0
    %v7182 = vadd.f32 %v7180, 1.0
    %v7183 = vlog2.pop %v7181
    %v7184 = vmul.f32 %v7183, 0.6931472
    %v7185 = vlog2.pop %v7182
    %v7186 = vmul.f32 %v7185, 0.6931472
    %v7187 = vsel %vm7173, %v7165, %v7184
    %v7188 = vsel %vm7174, %v7170, %v7186
    %v7190 = vsel %vm51, %v7187, 0
    %v7193 = vsel %vm51, %v7188, 0
    %7195 = vmatprep.subr.mxu0 0.0
    %7196 = vmatpush1.msra.mxu0 0.0
    %7197 = vmatprep.subr.mxu0 0.0
    %7198 = vmatpush1.msra.mxu0 0.0
    %7199 = vmatprep.subr.mxu0 0.0
    %7200 = vmatpush1.msra.mxu0 0.0
    %7201 = vmatprep.subr.mxu0 0.0
    %7202 = vmatpush1.msra.mxu0 0.0
    %7203 = vmatprep.subr.mxu0 0.0
    %7204 = vmatpush1.msra.mxu0 0.0
    %7205 = vmatprep.subr.mxu0 0.0
    %7206 = vmatpush1.msra.mxu0 0.0
    %7207 = vmatprep.subr.mxu0 0.0
    %7208 = vmatpush1.msra.mxu0 0.0
    %7209 = vmatprep.subr.mxu0 0.0
    %7210 = vmatpush1.msra.mxu0 0.0
    %7211 = vmatprep.subr.mxu0 0.0
    %7212 = vmatpush1.msra.mxu0 0.0
    %7213 = vmatprep.subr.mxu0 0.0
    %7214 = vmatpush1.msra.mxu0 0.0
    %7215 = vmatprep.subr.mxu0 0.0
    %7216 = vmatpush1.msra.mxu0 0.0
    %7217 = vmatprep.subr.mxu0 0.0
    %7218 = vmatpush1.msra.mxu0 0.0
    %7219 = vmatprep.subr.mxu0 0.0
    %7220 = vmatpush1.msra.mxu0 %v1732
    %7221 = vmatprep.subr.mxu0 0.0
    %7222 = vmatpush1.msra.mxu0 %v1731
    %7223 = vmatprep.subr.mxu0 0.0
    %7224 = vmatpush1.msra.mxu0 %v1730
    %7225 = vmatprep.subr.mxu0 0.0
    %7226 = vmatpush1.msra.mxu0 %v1729
    %7227 = vmatprep.subr.mxu0 0.0
    %7228 = vmatpush2.msra.mxu0 0.0
    %7229 = vmatprep.subr.mxu0 0.0
    %7230 = vmatpush2.msra.mxu0 0.0
    %7231 = vmatprep.subr.mxu0 0.0
    %7232 = vmatpush2.msra.mxu0 0.0
    %7233 = vmatprep.subr.mxu0 0.0
    %7234 = vmatpush2.msra.mxu0 0.0
    %7235 = vmatprep.subr.mxu0 0.0
    %7236 = vmatpush2.msra.mxu0 0.0
    %7237 = vmatprep.subr.mxu0 0.0
    %7238 = vmatpush2.msra.mxu0 0.0
    %7239 = vmatprep.subr.mxu0 0.0
    %7240 = vmatpush2.msra.mxu0 0.0
    %7241 = vmatprep.subr.mxu0 0.0
    %7242 = vmatpush2.msra.mxu0 0.0
    %7243 = vmatprep.subr.mxu0 0.0
    %7244 = vmatpush2.msra.mxu0 0.0
    %7245 = vmatprep.subr.mxu0 0.0
    %7246 = vmatpush2.msra.mxu0 0.0
    %7247 = vmatprep.subr.mxu0 0.0
    %7248 = vmatpush2.msra.mxu0 0.0
    %7249 = vmatprep.subr.mxu0 0.0
    %7250 = vmatpush2.msra.mxu0 0.0
    %7251 = vmatprep.subr.mxu0 0.0
    %7252 = vmatpush2.msra.mxu0 0.0
    %7253 = vmatprep.subr.mxu0 0.0
    %7254 = vmatpush2.msra.mxu0 0.0
    %7255 = vmatprep.subr.mxu0 0.0
    %7256 = vmatpush2.msra.mxu0 0.0
    %7257 = vmatprep.subr.mxu0 0.0
    %7258 = vmatpush2.msra.mxu0 0.0
    %7259 = vmatprep.mubr.f32.mxu0 0.0
    %7260 = vmatmul.mubr.f32.gmra.mxu0 %v7190
    %v7261 = vpop.f32.mrf.mxu0
    %v7262 = vadd.f32 %v2019, %v7261
    %v7263 = vpop.f32.mrf.mxu0
    %7264 = vmatprep.mubr.f32.mxu0 0.0
    %7265 = vmatmul.mubr.f32.gmra.mxu0 %v7193
    %v7266 = vpop.f32.mrf.mxu0
    %v7267 = vadd.f32 %v2019, %v7266
    %v7268 = vpop.f32.mrf.mxu0
    %7269 = vdwg.mxu0
    %vm7270 = vcmp.gt.f32.partialorder %v7262, 20.0
    %vm7271 = vcmp.gt.f32.partialorder %v7267, 20.0
    %v7272 = vmin.f32 %v7262, 20.0
    %v7273 = vmin.f32 %v7267, 20.0
    %v7274 = vmul.f32 %v7272, 1.442695
    %v7275 = vpow.pop %v7274
    %v7276 = vmul.f32 %v7273, 1.442695
    %v7277 = vpow.pop %v7276
    %v7278 = vadd.f32 %v7275, 1.0
    %v7279 = vadd.f32 %v7277, 1.0
    %v7280 = vlog2.pop %v7278
    %v7281 = vmul.f32 %v7280, 0.6931472
    %v7282 = vlog2.pop %v7279
    %v7283 = vmul.f32 %v7282, 0.6931472
    %v7284 = vsel %vm7270, %v7262, %v7281
    %v7285 = vsel %vm7271, %v7267, %v7283
    %v7287 = vsel %vm51, %v7284, 0
    %v7290 = vsel %vm51, %v7285, 0
    %7292 = vmatprep.subr.mxu0 0.0
    %7293 = vmatpush1.msra.mxu0 0.0
    %7294 = vmatprep.subr.mxu0 0.0
    %7295 = vmatpush1.msra.mxu0 0.0
    %7296 = vmatprep.subr.mxu0 0.0
    %7297 = vmatpush1.msra.mxu0 0.0
    %7298 = vmatprep.subr.mxu0 0.0
    %7299 = vmatpush1.msra.mxu0 0.0
    %7300 = vmatprep.subr.mxu0 0.0
    %7301 = vmatpush1.msra.mxu0 0.0
    %7302 = vmatprep.subr.mxu0 0.0
    %7303 = vmatpush1.msra.mxu0 0.0
    %7304 = vmatprep.subr.mxu0 0.0
    %7305 = vmatpush1.msra.mxu0 0.0
    %7306 = vmatprep.subr.mxu0 0.0
    %7307 = vmatpush1.msra.mxu0 0.0
    %7308 = vmatprep.subr.mxu0 0.0
    %7309 = vmatpush1.msra.mxu0 0.0
    %7310 = vmatprep.subr.mxu0 0.0
    %7311 = vmatpush1.msra.mxu0 0.0
    %7312 = vmatprep.subr.mxu0 0.0
    %7313 = vmatpush1.msra.mxu0 0.0
    %7314 = vmatprep.subr.mxu0 0.0
    %7315 = vmatpush1.msra.mxu0 0.0
    %7316 = vmatprep.subr.mxu0 0.0
    %7317 = vmatpush1.msra.mxu0 %v1736
    %7318 = vmatprep.subr.mxu0 0.0
    %7319 = vmatpush1.msra.mxu0 %v1735
    %7320 = vmatprep.subr.mxu0 0.0
    %7321 = vmatpush1.msra.mxu0 %v1734
    %7322 = vmatprep.subr.mxu0 0.0
    %7323 = vmatpush1.msra.mxu0 %v1733
    %7324 = vmatprep.subr.mxu0 0.0
    %7325 = vmatpush2.msra.mxu0 0.0
    %7326 = vmatprep.subr.mxu0 0.0
    %7327 = vmatpush2.msra.mxu0 0.0
    %7328 = vmatprep.subr.mxu0 0.0
    %7329 = vmatpush2.msra.mxu0 0.0
    %7330 = vmatprep.subr.mxu0 0.0
    %7331 = vmatpush2.msra.mxu0 0.0
    %7332 = vmatprep.subr.mxu0 0.0
    %7333 = vmatpush2.msra.mxu0 0.0
    %7334 = vmatprep.subr.mxu0 0.0
    %7335 = vmatpush2.msra.mxu0 0.0
    %7336 = vmatprep.subr.mxu0 0.0
    %7337 = vmatpush2.msra.mxu0 0.0
    %7338 = vmatprep.subr.mxu0 0.0
    %7339 = vmatpush2.msra.mxu0 0.0
    %7340 = vmatprep.subr.mxu0 0.0
    %7341 = vmatpush2.msra.mxu0 0.0
    %7342 = vmatprep.subr.mxu0 0.0
    %7343 = vmatpush2.msra.mxu0 0.0
    %7344 = vmatprep.subr.mxu0 0.0
    %7345 = vmatpush2.msra.mxu0 0.0
    %7346 = vmatprep.subr.mxu0 0.0
    %7347 = vmatpush2.msra.mxu0 0.0
    %7348 = vmatprep.subr.mxu0 0.0
    %7349 = vmatpush2.msra.mxu0 0.0
    %7350 = vmatprep.subr.mxu0 0.0
    %7351 = vmatpush2.msra.mxu0 0.0
    %7352 = vmatprep.subr.mxu0 0.0
    %7353 = vmatpush2.msra.mxu0 0.0
    %7354 = vmatprep.subr.mxu0 0.0
    %7355 = vmatpush2.msra.mxu0 0.0
    %7356 = vmatprep.mubr.f32.mxu0 0.0
    %7357 = vmatmul.mubr.f32.gmra.mxu0 %v7287
    %v7358 = vpop.f32.mrf.mxu0
    %v7359 = vadd.f32 %v2120, %v7358
    %v7360 = vpop.f32.mrf.mxu0
    %7361 = vmatprep.mubr.f32.mxu0 0.0
    %7362 = vmatmul.mubr.f32.gmra.mxu0 %v7290
    %v7363 = vpop.f32.mrf.mxu0
    %v7364 = vadd.f32 %v2120, %v7363
    %v7365 = vpop.f32.mrf.mxu0
    %7366 = vdwg.mxu0
    %v7367 = vmul.f32 %v6887, 0.5
    %v7368 = vmul.f32 %v6888, 0.5
    %v7369 = vadd.f32 %v6861, %v7367
    %v7370 = vadd.f32 %v6862, %v7368
    %v7371 = vadd.f32 %v7369, %v7359
    %v7372 = vadd.f32 %v7370, %v7364
    %7375 = vrot.lane.b32.xlu0 %v7359, 125
    %v7376 = vpop.permute.xlu0 %7375
    %7377 = vrot.lane.b32.xlu0 %v7364, 125
    %v7378 = vpop.permute.xlu0 %7377
    %v7381 = vadd.f32 %v7359, %v7376
    %v7382 = vadd.f32 %v7364, %v7378
    %v7383 = vmul.f32 %v7381, 0.5
    %v7384 = vmul.f32 %v7382, 0.5
    %v7385 = vsub.f32 %v7359, %v7376
    %v7386 = vsub.f32 %v7364, %v7378
    %v7387 = vmul.f32 %v7385, 0.5
    %v7388 = vmul.f32 %v7386, 0.5
    %v7389 = vmul.f32 %v7387, %v7387
    %v7390 = vmul.f32 %v7388, %v7388
    %7391 = vrot.lane.b32.xlu0 %v7359, 127
    %v7392 = vpop.permute.xlu0 %7391
    %7393 = vrot.lane.b32.xlu0 %v7364, 127
    %v7394 = vpop.permute.xlu0 %7393
    %v7397 = vmul.f32 %v7359, %v7392
    %v7398 = vmul.f32 %v7364, %v7394
    %7401 = vrot.lane.b32.xlu0 %v7397, 127
    %v7402 = vpop.permute.xlu0 %7401
    %7403 = vrot.lane.b32.xlu0 %v7398, 127
    %v7404 = vpop.permute.xlu0 %7403
    %v7407 = vadd.f32 %v7389, %v7402
    %v7408 = vadd.f32 %v7390, %v7404
    %v7409 = vmul.f32 %v7407, 0.00024414063
    %v7410 = vmul.f32 %v7408, 0.00024414063
    %v7411 = vmul.f32 %v7409, 2.4801588e-05
    %v7412 = vmul.f32 %v7410, 2.4801588e-05
    %v7413 = vadd.f32 %v7411, 0.0013888889
    %v7414 = vadd.f32 %v7412, 0.0013888889
    %v7415 = vmul.f32 %v7409, %v7413
    %v7416 = vmul.f32 %v7410, %v7414
    %v7417 = vadd.f32 %v7415, 0.041666668
    %v7418 = vadd.f32 %v7416, 0.041666668
    %v7419 = vmul.f32 %v7409, %v7417
    %v7420 = vmul.f32 %v7410, %v7418
    %v7421 = vadd.f32 %v7419, 0.5
    %v7422 = vadd.f32 %v7420, 0.5
    %v7423 = vmul.f32 %v7409, %v7421
    %v7424 = vmul.f32 %v7410, %v7422
    %v7425 = vadd.f32 %v7423, 1.0
    %v7426 = vadd.f32 %v7424, 1.0
    %v7427 = vmul.f32 %v7409, 2.7557319e-06
    %v7428 = vmul.f32 %v7410, 2.7557319e-06
    %v7429 = vadd.f32 %v7427, 0.0001984127
    %v7430 = vadd.f32 %v7428, 0.0001984127
    %v7431 = vmul.f32 %v7409, %v7429
    %v7432 = vmul.f32 %v7410, %v7430
    %v7433 = vadd.f32 %v7431, 0.008333334
    %v7434 = vadd.f32 %v7432, 0.008333334
    %v7435 = vmul.f32 %v7409, %v7433
    %v7436 = vmul.f32 %v7410, %v7434
    %v7437 = vadd.f32 %v7435, 0.16666667
    %v7438 = vadd.f32 %v7436, 0.16666667
    %v7439 = vmul.f32 %v7409, %v7437
    %v7440 = vmul.f32 %v7410, %v7438
    %v7441 = vadd.f32 %v7439, 1.0
    %v7442 = vadd.f32 %v7440, 1.0
    %v7443 = vmul.f32 %v7441, %v7425
    %v7444 = vmul.f32 %v7442, %v7426
    %v7445 = vmul.f32 %v7425, 2.0
    %v7446 = vmul.f32 %v7426, 2.0
    %v7447 = vmul.f32 %v7445, %v7425
    %v7448 = vmul.f32 %v7446, %v7426
    %v7449 = vsub.f32 %v7447, 1.0
    %v7450 = vsub.f32 %v7448, 1.0
    %v7451 = vmul.f32 %v7443, %v7449
    %v7452 = vmul.f32 %v7444, %v7450
    %v7453 = vmul.f32 %v7449, 2.0
    %v7454 = vmul.f32 %v7450, 2.0
    %v7455 = vmul.f32 %v7453, %v7449
    %v7456 = vmul.f32 %v7454, %v7450
    %v7457 = vsub.f32 %v7455, 1.0
    %v7458 = vsub.f32 %v7456, 1.0
    %v7459 = vmul.f32 %v7451, %v7457
    %v7460 = vmul.f32 %v7452, %v7458
    %v7461 = vmul.f32 %v7457, 2.0
    %v7462 = vmul.f32 %v7458, 2.0
    %v7463 = vmul.f32 %v7461, %v7457
    %v7464 = vmul.f32 %v7462, %v7458
    %v7465 = vsub.f32 %v7463, 1.0
    %v7466 = vsub.f32 %v7464, 1.0
    %v7467 = vmul.f32 %v7459, %v7465
    %v7468 = vmul.f32 %v7460, %v7466
    %v7469 = vmul.f32 %v7465, 2.0
    %v7470 = vmul.f32 %v7466, 2.0
    %v7471 = vmul.f32 %v7469, %v7465
    %v7472 = vmul.f32 %v7470, %v7466
    %v7473 = vsub.f32 %v7471, 1.0
    %v7474 = vsub.f32 %v7472, 1.0
    %v7475 = vmul.f32 %v7467, %v7473
    %v7476 = vmul.f32 %v7468, %v7474
    %v7477 = vmul.f32 %v7473, 2.0
    %v7478 = vmul.f32 %v7474, 2.0
    %v7479 = vmul.f32 %v7477, %v7473
    %v7480 = vmul.f32 %v7478, %v7474
    %v7481 = vsub.f32 %v7479, 1.0
    %v7482 = vsub.f32 %v7480, 1.0
    %v7483 = vmul.f32 %v7475, %v7481
    %v7484 = vmul.f32 %v7476, %v7482
    %v7485 = vmul.f32 %v7481, 2.0
    %v7486 = vmul.f32 %v7482, 2.0
    %v7487 = vmul.f32 %v7485, %v7481
    %v7488 = vmul.f32 %v7486, %v7482
    %v7489 = vsub.f32 %v7487, 1.0
    %v7490 = vsub.f32 %v7488, 1.0
    %v7491 = vmul.f32 %v7383, 1.442695
    %v7492 = vpow.pop %v7491
    %v7493 = vmul.f32 %v7384, 1.442695
    %v7494 = vpow.pop %v7493
    %v7495 = vmul.f32 %v7483, %v7387
    %v7496 = vmul.f32 %v7484, %v7388
    %v7497 = vadd.f32 %v7489, %v7495
    %v7498 = vadd.f32 %v7490, %v7496
    %v7499 = vmul.f32 %v7492, %v7497
    %v7500 = vmul.f32 %v7494, %v7498
    %v7501 = vmul.f32 %v7483, %v7392
    %v7502 = vmul.f32 %v7484, %v7394
    %v7503 = vmul.f32 %v7492, %v7501
    %v7504 = vmul.f32 %v7494, %v7502
    %7505 = vrot.lane.b32.xlu0 %v7359, 126
    %v7506 = vpop.permute.xlu0 %7505
    %7507 = vrot.lane.b32.xlu0 %v7364, 126
    %v7508 = vpop.permute.xlu0 %7507
    %v7511 = vmul.f32 %v7483, %v7506
    %v7512 = vmul.f32 %v7484, %v7508
    %v7513 = vmul.f32 %v7492, %v7511
    %v7514 = vmul.f32 %v7494, %v7512
    %v7515 = vsub.f32 %v7489, %v7495
    %v7516 = vsub.f32 %v7490, %v7496
    %v7517 = vmul.f32 %v7492, %v7515
    %v7518 = vmul.f32 %v7494, %v7516
    %7519 = vrot.lane.b32.xlu0 %v1737, 116
    %v7520 = vpop.permute.xlu0 %7519
    %7521 = vrot.lane.b32.xlu0 %v1738, 116
    %v7522 = vpop.permute.xlu0 %7521
    %v7525 = vmul.f32 %v7499, %v7520
    %v7526 = vmul.f32 %v7500, %v7522
    %7529 = vrot.lane.b32.xlu0 %v7525, 126
    %v7530 = vpop.permute.xlu0 %7529
    %7531 = vrot.lane.b32.xlu0 %v7526, 126
    %v7532 = vpop.permute.xlu0 %7531
    %v7535 = vadd.f32 %v7371, %v7530
    %v7536 = vadd.f32 %v7372, %v7532
    %7537 = vrot.lane.b32.xlu0 %v1737, 115
    %v7538 = vpop.permute.xlu0 %7537
    %7539 = vrot.lane.b32.xlu0 %v1738, 115
    %v7540 = vpop.permute.xlu0 %7539
    %v7543 = vmul.f32 %v7503, %v7538
    %v7544 = vmul.f32 %v7504, %v7540
    %7547 = vrot.lane.b32.xlu0 %v7543, 126
    %v7548 = vpop.permute.xlu0 %7547
    %7549 = vrot.lane.b32.xlu0 %v7544, 126
    %v7550 = vpop.permute.xlu0 %7549
    %v7553 = vadd.f32 %v7535, %v7548
    %v7554 = vadd.f32 %v7536, %v7550
    %v7555 = vmul.f32 %v7513, %v7520
    %v7556 = vmul.f32 %v7514, %v7522
    %7559 = vrot.lane.b32.xlu0 %v7555, 127
    %v7560 = vpop.permute.xlu0 %7559
    %7561 = vrot.lane.b32.xlu0 %v7556, 127
    %v7562 = vpop.permute.xlu0 %7561
    %v7565 = vadd.f32 %v7371, %v7560
    %v7566 = vadd.f32 %v7372, %v7562
    %v7567 = vmul.f32 %v7517, %v7538
    %v7568 = vmul.f32 %v7518, %v7540
    %7571 = vrot.lane.b32.xlu0 %v7567, 127
    %v7572 = vpop.permute.xlu0 %7571
    %7573 = vrot.lane.b32.xlu0 %v7568, 127
    %v7574 = vpop.permute.xlu0 %7573
    %v7577 = vadd.f32 %v7565, %v7572
    %v7578 = vadd.f32 %v7566, %v7574
    %7581 = vrot.lane.b32.xlu0 %v7371, 2
    %v7582 = vpop.permute.xlu0 %7581
    %7583 = vrot.lane.b32.xlu0 %v7372, 2
    %v7584 = vpop.permute.xlu0 %7583
    %7589 = vrot.lane.b32.xlu0 %v7499, 2
    %v7590 = vpop.permute.xlu0 %7589
    %7591 = vrot.lane.b32.xlu0 %v7500, 2
    %v7592 = vpop.permute.xlu0 %7591
    %7597 = vrot.lane.b32.xlu0 %v7503, 3
    %v7598 = vpop.permute.xlu0 %7597
    %7599 = vrot.lane.b32.xlu0 %v7504, 3
    %v7600 = vpop.permute.xlu0 %7599
    %7605 = vrot.lane.b32.xlu0 %v7513, 4
    %v7606 = vpop.permute.xlu0 %7605
    %7607 = vrot.lane.b32.xlu0 %v7514, 4
    %v7608 = vpop.permute.xlu0 %7607
    %7613 = vrot.lane.b32.xlu0 %v7517, 5
    %v7614 = vpop.permute.xlu0 %7613
    %7615 = vrot.lane.b32.xlu0 %v7518, 5
    %v7616 = vpop.permute.xlu0 %7615
    %v7619 = vsel %vm2464, %v7553, %v7577
    %v7620 = vsel %vm2464, %v7554, %v7578
    %v7621 = vsel %vm1739, %v7619, %v7582
    %v7622 = vsel %vm1739, %v7620, %v7584
    %v7623 = vsel %vm2469, %v7621, %v7582
    %v7624 = vsel %vm2469, %v7622, %v7584
    %v7625 = vsel %vm1132, %v7623, %v7590
    %v7626 = vsel %vm1132, %v7624, %v7592
    %v7627 = vsel %vm2474, %v7625, %v7598
    %v7628 = vsel %vm2474, %v7626, %v7600
    %v7629 = vsel %vm1744, %v7627, %v7606
    %v7630 = vsel %vm1744, %v7628, %v7608
    %v7631 = vsel %vm2479, %v7629, %v7614
    %v7632 = vsel %vm2479, %v7630, %v7616
    %7635 = vrot.lane.b32.xlu0 %v7631, 56
    %v7636 = vpop.permute.xlu0 %7635
    %7637 = vrot.lane.b32.xlu0 %v7632, 56
    %v7638 = vpop.permute.xlu0 %7637
    %vm7641 = vcmask 523712
    %7642 = vst.msk [vmem:[#allocation4] sm:$0xff] %vm7641, %v7636
    %vm7643 = vcmask 519616
    %7644 = vst.msk [vmem:[#allocation4 + $0x8] sm:$0xf] %vm7643, %v7638
    // Predicated region
    $region50: #{tpu_custom_call.1} parent=1 // pred_check
      _
    $region51: #{tpu_custom_call.1} parent=1 // pred_check_branch
      %7646 = sbr.rel (0) target = $region53
    $region52: #{tpu_custom_call.1} parent=1 // pred_region
      %s7648 = ssub.s32 64, 64
      %7649 = vsyncadd [#allocation3], %s7648
      %s7651 = sshll.u32 [#allocation2], 4
      %s7652 = int_to_ptr.vmem [resolvable:$true] %s7651
      %7654 = dma.vmem_to_hbm [thread:$0]  %s7652, 64, %s12, [#allocation3]
    $region53: #{tpu_custom_call.1} parent=1 // pred_fallthru
      _
    // Predicated region
    $region54: #{tpu_custom_call.1} parent=1 // pred_check
      _
    $region55: #{tpu_custom_call.1} parent=1 // pred_check_branch
      %7656 = sbr.rel (0) target = $region57
    $region56: #{tpu_custom_call.1} parent=1 // pred_region
      %s7658 = ssub.s32 256, 256
      %7659 = vsyncadd [#allocation5], %s7658
      %s7660 = sshll.u32 [#allocation4], 4
      %s7661 = int_to_ptr.vmem [resolvable:$true] %s7660
      %7666 = dma.vmem_to_hbm [thread:$0]  %s7661, 256, %s13, [#allocation5], 128, 128, 8
    $region57: #{tpu_custom_call.1} parent=1 // pred_fallthru
      _
    // Predicated region
    $region58: #{tpu_custom_call.1} parent=1 // pred_check
      _
    $region59: #{tpu_custom_call.1} parent=1 // pred_check_branch
      %7668 = sbr.rel (0) target = $region61
    $region60: #{tpu_custom_call.1} parent=1 // pred_region
      %7669 = dma.done [#allocation3], 64
    $region61: #{tpu_custom_call.1} parent=1 // pred_fallthru
      _
    // Predicated region
    $region62: #{tpu_custom_call.1} parent=1 // pred_check
      _
    $region63: #{tpu_custom_call.1} parent=1 // pred_check_branch
      %7671 = sbr.rel (0) target = $region65
    $region64: #{tpu_custom_call.1} parent=1 // pred_region
      %7672 = dma.done [#allocation5], 256
    $region65: #{tpu_custom_call.1} parent=1 // pred_fallthru
      _
    %7673 = vsyncpa [#allocation3], 1
    %7674 = vsyncpa [#allocation5], 1

</llo_original>
